<compile_context>
chip_gen: v5e
topology: v5e:2x2
jax: 0.10.0
libtpu: 0.0.40
codegen_flags: <defaults>
</compile_context>

<pallas_src>
import math

import jax
import jax.numpy as jnp
import numpy as np
from jax.experimental import pallas as pl
from jax.experimental.pallas import tpu as pltpu

_BATCH_TILE = 32          # per-grid-step batch tile (multiple of 8); fits v5e/v6e/v7x VMEM
_HIDDEN = 256


def _round_up(x, m):
    return ((x + m - 1) // m) * m


def _choose_batch_tile(n):
    """(padded_batch, tile).  Keeps >= 2 grid steps when N >= 16 (v7x megacore)."""
    if n < 16:
        return n, n                              # one block, no padding
    n_pad = _round_up(n, 8)
    nb, t = 8, 8
    while t <= min(_BATCH_TILE, n_pad // 2):
        if n_pad % t == 0:
            nb = t
        t += 8
    return n_pad, nb


# ----------------------------------------------------------------------------
# Fused kernel
# ----------------------------------------------------------------------------
def _make_kernel(ho1, ho2, ho3):
    def kernel(x_ref, w1_ref, b1_ref, w2_ref, b2_ref, w3_ref, b3_ref,
               wl1_ref, bl1_ref, wh_ref, bh_ref, o_ref,
               p1_ref, a1_ref, p2_ref, a2_ref, p3_ref, a3_ref, flat_ref):

        def conv3x3_relu(src_ref, ho, patch_ref, w_ref, b_ref, dst_ref):
            # src_ref : (nb, h_pad, w*cin) bf16, rows [0, ho+2) valid.
            # patch_ref: (nb, hp, 3*w*cin) bf16 — one wide lane-window store per kh;
            #            the kw tap shift lives in the block-banded weight.
            seg = src_ref.shape[2]
            for kh in range(3):
                patch_ref[:, :ho, kh * seg:(kh + 1) * seg] = src_ref[:, kh:kh + ho, :]
            nb, hp, k = patch_ref.shape
            lhs = patch_ref[...].reshape(nb * hp, k)       # leading-merge: free (hp % 8 == 0)
            y = jnp.dot(lhs, w_ref[...], preferred_element_type=jnp.float32)
            y = jnp.maximum(y + b_ref[...], 0.0)           # bias + ReLU in f32
            dst_ref[...] = y.reshape(nb, hp, -1).astype(dst_ref.dtype)

        conv3x3_relu(x_ref, ho1, p1_ref, w1_ref, b1_ref, a1_ref)   # (nb, hp1, wo1*32)
        conv3x3_relu(a1_ref, ho2, p2_ref, w2_ref, b2_ref, a2_ref)  # (nb, hp2, wo2*64)
        conv3x3_relu(a2_ref, ho3, p3_ref, w3_ref, b3_ref, a3_ref)  # (nb, hp3, wo3*32)

        # (h, w, c)-ordered flatten; wl1's rows were permuted to this order at init,
        # so no feature-map transpose is needed anywhere.
        wchunk = a3_ref.shape[2]
        for hi in range(ho3):
            flat_ref[:, hi * wchunk:(hi + 1) * wchunk] = a3_ref[:, hi, :]

        # linear1: single K = ho*wo*32 matmul (in-MXU accumulation), then fused heads.
        hdn = jnp.dot(flat_ref[...], wl1_ref[...], preferred_element_type=jnp.float32)
        hdn = jnp.maximum(hdn + bl1_ref[...], 0.0)                  # (nb, 256) f32
        out = jnp.dot(hdn.astype(jnp.bfloat16), wh_ref[...],
                      preferred_element_type=jnp.float32) + bh_ref[...]
        o_ref[...] = out                                            # (nb, 1 + A) f32

    return kernel


def _cost_estimate(n, H, W, Cin, A):
    ho1, wo1 = H - 2, W - 2
    ho2, wo2 = H - 4, W - 4
    ho3, wo3 = H - 6, W - 6
    flops = 2 * n * (ho1 * (3 * W * Cin) * (wo1 * 32)
                     + ho2 * (3 * wo1 * 32) * (wo2 * 64)
                     + ho3 * (3 * wo2 * 64) * (wo3 * 32)
                     + (ho3 * wo3 * 32) * _HIDDEN
                     + _HIDDEN * (1 + A))
    w_elems = (3 * W * Cin * wo1 * 32 + 3 * wo1 * 32 * wo2 * 64
               + 3 * wo2 * 64 * wo3 * 32 + ho3 * wo3 * 32 * _HIDDEN
               + _HIDDEN * (1 + A))
    bytes_accessed = 2 * (n * H * W * Cin + w_elems) + 4 * n * (1 + A)
    return pl.CostEstimate(flops=flops, transcendentals=0,
                           bytes_accessed=bytes_accessed)


# ----------------------------------------------------------------------------
# Wrapper
# ----------------------------------------------------------------------------
@jax.jit
def rollout_policy_forward(params, inputs_nchw):
    N, Cin, H, W = inputs_nchw.shape
    A = params["wh"].shape[1] - 1
    ho1, wo1 = H - 2, W - 2
    ho2, wo2 = H - 4, W - 4
    ho3, wo3 = H - 6, W - 6
    hp1, hp2, hp3 = (_round_up(h, 8) for h in (ho1, ho2, ho3))

    # NCHW -> (N, H, W*Cin) bf16 once at the boundary: width+channels share the
    # lane-dense minor axis, so every in-kernel access and the input DMA are wide.
    x = jnp.transpose(inputs_nchw, (0, 2, 3, 1)).reshape(N, H, W * Cin)
    x = x.astype(jnp.bfloat16)

    n_pad, nb = _choose_batch_tile(N)
    if n_pad != N:
        x = jnp.pad(x, ((0, n_pad - N), (0, 0), (0, 0)))

    wnames = ("w1", "b1", "w2", "b2", "w3", "b3", "wl1", "bl1", "wh", "bh")
    # Constant index_map -> weights stay VMEM-resident across grid steps.
    wspecs = [pl.BlockSpec(params[k].shape, lambda i: (0, 0)) for k in wnames]

    out = pl.pallas_call(
        _make_kernel(ho1, ho2, ho3),
        out_shape=jax.ShapeDtypeStruct((n_pad, 1 + A), jnp.float32),
        grid=(n_pad // nb,),
        in_specs=[pl.BlockSpec((nb, H, W * Cin), lambda i: (i, 0, 0))] + wspecs,
        out_specs=pl.BlockSpec((nb, 1 + A), lambda i: (i, 0)),
        scratch_shapes=[
            pltpu.VMEM((nb, hp1, 3 * W * Cin), jnp.bfloat16),    # patch 1
            pltpu.VMEM((nb, hp1, wo1 * 32), jnp.bfloat16),       # act   1
            pltpu.VMEM((nb, hp2, 3 * wo1 * 32), jnp.bfloat16),   # patch 2
            pltpu.VMEM((nb, hp2, wo2 * 64), jnp.bfloat16),       # act   2
            pltpu.VMEM((nb, hp3, 3 * wo2 * 64), jnp.bfloat16),   # patch 3
            pltpu.VMEM((nb, hp3, wo3 * 32), jnp.bfloat16),       # act   3
            pltpu.VMEM((nb, ho3 * wo3 * 32), jnp.bfloat16),      # flat
        ],
        compiler_params=pltpu.CompilerParams(
            dimension_semantics=("parallel",),
            vmem_limit_bytes=48 * 1024 * 1024),
        cost_estimate=_cost_estimate(n_pad, H, W, Cin, A),
    )(x, *(params[k] for k in wnames))

    return out[:N, :1], out[:N, 1:]


# ----------------------------------------------------------------------------
# Parameter construction: raw (PyTorch-layout, f32) + packed (kernel layout)
# ----------------------------------------------------------------------------
def _xavier_uniform(key, shape, fan_in, fan_out, gain=math.sqrt(2.0)):
    bound = gain * math.sqrt(6.0 / (fan_in + fan_out))
    return jax.random.uniform(key, shape, jnp.float32, -bound, bound)


def init_raw_params(key, obs_shape, action_space):
    """PyTorch-layout f32 parameters (xavier-uniform with ReLU gain; zero biases)."""
    in_ch, H, W = obs_shape
    lin_in = 32 * (H - 6) * (W - 6)
    ks = jax.random.split(key, 6)
    return {
        "w1": _xavier_uniform(ks[0], (32, in_ch, 3, 3), in_ch * 9, 32 * 9),
        "b1": jnp.zeros((32,), jnp.float32),
        "w2": _xavier_uniform(ks[1], (64, 32, 3, 3), 32 * 9, 64 * 9),
        "b2": jnp.zeros((64,), jnp.float32),
        "w3": _xavier_uniform(ks[2], (32, 64, 3, 3), 64 * 9, 32 * 9),
        "b3": jnp.zeros((32,), jnp.float32),
        "wl1": _xavier_uniform(ks[3], (_HIDDEN, lin_in), lin_in, _HIDDEN),
        "bl1": jnp.zeros((_HIDDEN,), jnp.float32),
        "wc": _xavier_uniform(ks[4], (1, _HIDDEN), _HIDDEN, 1),
        "bc": jnp.zeros((1,), jnp.float32),
        "wa": _xavier_uniform(ks[5], (action_space, _HIDDEN), _HIDDEN, action_space),
        "ba": jnp.zeros((action_space,), jnp.float32),
    }


def _banded_conv_weight(w_oihw, w_in, dtype=jnp.bfloat16):
    """Fold the kw tap shift of a valid 3x3 conv into a block-banded matrix.

    Row index  : kh*(w_in*cin) + wj*cin + c   (matches the kernel's patch layout)
    Col index  : wi*cout + co                 (lane-dense (w, c) output layout)
    M[row,col] = W_pt[co, c, kh, wj - wi]  if 0 <= wj - wi <= 2, else 0.
    """
    w = np.asarray(w_oihw, np.float32)                 # (cout, cin, 3, 3) OIHW
    cout, cin = w.shape[0], w.shape[1]
    wo = w_in - 2
    hwio = np.transpose(w, (2, 3, 1, 0))               # (3, 3, cin, cout)
    m = np.zeros((3 * w_in * cin, wo * cout), np.float32)
    for kh in range(3):
        for kw in range(3):
            for wi in range(wo):
                r0 = (kh * w_in + wi + kw) * cin
                c0 = wi * cout
                m[r0:r0 + cin, c0:c0 + cout] = hwio[kh, kw]
    return jnp.asarray(m, dtype)


def _tiled_bias(b, wo):
    return jnp.asarray(np.tile(np.asarray(b, np.float32), wo)[None, :], jnp.float32)


def pack_params(raw, obs_shape):
    """Convert PyTorch-layout params to the kernel's banded / permuted bf16 layout."""
    in_ch, H, W = obs_shape
    ho3, wo3 = H - 6, W - 6
    lin_in = 32 * ho3 * wo3

    # linear1: rows permuted (C,H,W) -> (H,W,C) so the NHWC-flattened feature map
    # can be consumed directly.
    wl1 = np.asarray(raw["wl1"], np.float32).T                       # (lin_in, 256)
    wl1 = wl1.reshape(32, ho3, wo3, _HIDDEN).transpose(1, 2, 0, 3).reshape(lin_in, _HIDDEN)

    wh = np.concatenate([np.asarray(raw["wc"], np.float32).T,
                         np.asarray(raw["wa"], np.float32).T], axis=1)   # (256, 1+A)
    bh = np.concatenate([np.asarray(raw["bc"], np.float32),
                         np.asarray(raw["ba"], np.float32)])[None, :]    # (1, 1+A)

    return {
        "w1": _banded_conv_weight(raw["w1"], W),
        "b1": _tiled_bias(raw["b1"], W - 2),
        "w2": _banded_conv_weight(raw["w2"], W - 2),
        "b2": _tiled_bias(raw["b2"], W - 4),
        "w3": _banded_conv_weight(raw["w3"], W - 4),
        "b3": _tiled_bias(raw["b3"], W - 6),
        "wl1": jnp.asarray(wl1, jnp.bfloat16),
        "bl1": jnp.asarray(np.asarray(raw["bl1"], np.float32)[None, :], jnp.float32),
        "wh": jnp.asarray(wh, jnp.bfloat16),
        "bh": jnp.asarray(bh, jnp.float32),
    }


# ----------------------------------------------------------------------------
# Pure-JAX f32 reference (for self-validation)
# ----------------------------------------------------------------------------
def reference_forward(raw, inputs_nchw):
    x = inputs_nchw.astype(jnp.float32)

    def conv(x, w, b):
        y = jax.lax.conv_general_dilated(
            x, w, window_strides=(1, 1), padding="VALID",
            dimension_numbers=("NCHW", "OIHW", "NCHW"))
        return jax.nn.relu(y + b[None, :, None, None])

    x = conv(x, raw["w1"], raw["b1"])
    x = conv(x, raw["w2"], raw["b2"])
    x = conv(x, raw["w3"], raw["b3"])
    x = x.reshape(x.shape[0], -1)                    # (C, H, W) flatten order
    x = jax.nn.relu(x @ raw["wl1"].T + raw["bl1"])
    value = x @ raw["wc"].T + raw["bc"]
    actor = x @ raw["wa"].T + raw["ba"]
    return value, actor


# TODO(synk): RolloutPolicy.sample / action_log_probs (multinomial sampling, gather) are
# host/control-flow utilities outside forward() and are not implemented as kernels.

if __name__ == "__main__":
    obs_shape = (4, 16, 16)        # (C, H, W)
    action_space = 6
    batch = 2

    key = jax.random.PRNGKey(0)
    pkey, xkey = jax.random.split(key)

    raw = init_raw_params(pkey, obs_shape, action_space)
    params = pack_params(raw, obs_shape)
    x = jax.random.normal(xkey, (batch,) + obs_shape, jnp.float32)

    value, actor = rollout_policy_forward(params, x)
    jax.block_until_ready((value, actor))

    assert value.shape == (batch, 1)
    assert actor.shape == (batch, action_space)
    assert bool(jnp.all(jnp.isfinite(value))) and bool(jnp.all(jnp.isfinite(actor)))

    # Validate against the pure-JAX f32 reference (kernel uses bf16 MXU operands, so a
    # loose, scale-relative tolerance is used).
    ref_v, ref_a = reference_forward(raw, x)
    got = np.concatenate([np.asarray(value, np.float32).ravel(),
                          np.asarray(actor, np.float32).ravel()])
    ref = np.concatenate([np.asarray(ref_v, np.float32).ravel(),
                          np.asarray(ref_a, np.float32).ravel()])
    rel = float(np.max(np.abs(got - ref)) / (np.max(np.abs(ref)) + 1e-6))
    assert rel < 0.25, f"kernel vs reference mismatch: rel={rel}"

    print("KERNEL_OK")
</pallas_src>

<mosaic_0001>
module attributes {stable_mosaic.version = 11 : i64} {
  func.func @kernel(%arg0: i32, %arg1: memref<2x16x64xbf16, #tpu.memory_space<vmem>>, %arg2: memref<192x448xbf16, #tpu.memory_space<vmem>>, %arg3: memref<1x448xf32, #tpu.memory_space<vmem>>, %arg4: memref<1344x768xbf16, #tpu.memory_space<vmem>>, %arg5: memref<1x768xf32, #tpu.memory_space<vmem>>, %arg6: memref<2304x320xbf16, #tpu.memory_space<vmem>>, %arg7: memref<1x320xf32, #tpu.memory_space<vmem>>, %arg8: memref<3200x256xbf16, #tpu.memory_space<vmem>>, %arg9: memref<1x256xf32, #tpu.memory_space<vmem>>, %arg10: memref<256x7xbf16, #tpu.memory_space<vmem>>, %arg11: memref<1x7xf32, #tpu.memory_space<vmem>>, %arg12: memref<2x7xf32, #tpu.memory_space<vmem>>, %arg13: memref<2x16x192xbf16, #tpu.memory_space<vmem>>, %arg14: memref<2x16x448xbf16, #tpu.memory_space<vmem>>, %arg15: memref<2x16x1344xbf16, #tpu.memory_space<vmem>>, %arg16: memref<2x16x768xbf16, #tpu.memory_space<vmem>>, %arg17: memref<2x16x2304xbf16, #tpu.memory_space<vmem>>, %arg18: memref<2x16x320xbf16, #tpu.memory_space<vmem>>, %arg19: memref<2x3200xbf16, #tpu.memory_space<vmem>>) attributes {dimension_semantics = [#tpu.dimension_semantics<parallel>], iteration_bounds = array<i64: 1>, scalar_prefetch = 0 : i64, scratch_operands = 7 : i64, tpu.core_type = #tpu.core_type<tc>, window_params = [{transform_indices = @transform_0, window_bounds = array<i64: 2, 16, 64>}, {pipeline_mode = #tpu.pipeline_mode<synchronous>, transform_indices = @transform_1, window_bounds = array<i64: 192, 448>}, {pipeline_mode = #tpu.pipeline_mode<synchronous>, transform_indices = @transform_2, window_bounds = array<i64: 1, 448>}, {pipeline_mode = #tpu.pipeline_mode<synchronous>, transform_indices = @transform_3, window_bounds = array<i64: 1344, 768>}, {pipeline_mode = #tpu.pipeline_mode<synchronous>, transform_indices = @transform_4, window_bounds = array<i64: 1, 768>}, {pipeline_mode = #tpu.pipeline_mode<synchronous>, transform_indices = @transform_5, window_bounds = array<i64: 2304, 320>}, {pipeline_mode = #tpu.pipeline_mode<synchronous>, transform_indices = @transform_6, window_bounds = array<i64: 1, 320>}, {pipeline_mode = #tpu.pipeline_mode<synchronous>, transform_indices = @transform_7, window_bounds = array<i64: 3200, 256>}, {pipeline_mode = #tpu.pipeline_mode<synchronous>, transform_indices = @transform_8, window_bounds = array<i64: 1, 256>}, {pipeline_mode = #tpu.pipeline_mode<synchronous>, transform_indices = @transform_9, window_bounds = array<i64: 256, 7>}, {pipeline_mode = #tpu.pipeline_mode<synchronous>, transform_indices = @transform_10, window_bounds = array<i64: 1, 7>}, {transform_indices = @transform_11, window_bounds = array<i64: 2, 7>}]} {
    %c0 = arith.constant 0 : index
    %c0_0 = arith.constant 0 : index
    %c0_1 = arith.constant 0 : index
    %0 = vector.load %arg1[%c0, %c0_0, %c0_1] : memref<2x16x64xbf16, #tpu.memory_space<vmem>>, vector<2x14x64xbf16>
    %c0_2 = arith.constant 0 : index
    %c0_3 = arith.constant 0 : index
    %c0_4 = arith.constant 0 : index
    %1 = vector.load %arg13[%c0_2, %c0_3, %c0_4] : memref<2x16x192xbf16, #tpu.memory_space<vmem>>, vector<2x14x64xbf16>
    tpu.vector_store %arg13[%c0_2, %c0_3, %c0_4], %0 {strides = array<i32>} : memref<2x16x192xbf16, #tpu.memory_space<vmem>>, vector<2x14x64xbf16>,
    %c0_5 = arith.constant 0 : index
    %c1 = arith.constant 1 : index
    %c0_6 = arith.constant 0 : index
    %2 = vector.load %arg1[%c0_5, %c1, %c0_6] : memref<2x16x64xbf16, #tpu.memory_space<vmem>>, vector<2x14x64xbf16>
    %c0_7 = arith.constant 0 : index
    %c0_8 = arith.constant 0 : index
    %c64 = arith.constant 64 : index
    %3 = vector.load %arg13[%c0_7, %c0_8, %c64] : memref<2x16x192xbf16, #tpu.memory_space<vmem>>, vector<2x14x64xbf16>
    tpu.vector_store %arg13[%c0_7, %c0_8, %c64], %2 {strides = array<i32>} : memref<2x16x192xbf16, #tpu.memory_space<vmem>>, vector<2x14x64xbf16>,
    %c0_9 = arith.constant 0 : index
    %c2 = arith.constant 2 : index
    %c0_10 = arith.constant 0 : index
    %4 = vector.load %arg1[%c0_9, %c2, %c0_10] : memref<2x16x64xbf16, #tpu.memory_space<vmem>>, vector<2x14x64xbf16>
    %c0_11 = arith.constant 0 : index
    %c0_12 = arith.constant 0 : index
    %c128 = arith.constant 128 : index
    %5 = vector.load %arg13[%c0_11, %c0_12, %c128] : memref<2x16x192xbf16, #tpu.memory_space<vmem>>, vector<2x14x64xbf16>
    tpu.vector_store %arg13[%c0_11, %c0_12, %c128], %4 {strides = array<i32>} : memref<2x16x192xbf16, #tpu.memory_space<vmem>>, vector<2x14x64xbf16>,
    %c0_13 = arith.constant 0 : index
    %c0_14 = arith.constant 0 : index
    %c0_15 = arith.constant 0 : index
    %6 = vector.load %arg13[%c0_13, %c0_14, %c0_15] : memref<2x16x192xbf16, #tpu.memory_space<vmem>>, vector<2x16x192xbf16>
    %7 = vector.shape_cast %6 : vector<2x16x192xbf16> to vector<32x192xbf16>
    %c0_16 = arith.constant 0 : index
    %c0_17 = arith.constant 0 : index
    %8 = vector.load %arg2[%c0_16, %c0_17] : memref<192x448xbf16, #tpu.memory_space<vmem>>, vector<192x448xbf16>
    %cst = arith.constant dense<0.000000e+00> : vector<32x448xf32>
    %9 = tpu.matmul %7, %8, %cst {dimension_numbers = #tpu.dot_dimension_numbers<[1], [0], [0], [1], [0, 0, 1, 1], [], []>} : vector<32x192xbf16>, vector<192x448xbf16>, vector<32x448xf32> -> vector<32x448xf32>
    %c0_18 = arith.constant 0 : index
    %c0_19 = arith.constant 0 : index
    %10 = vector.load %arg3[%c0_18, %c0_19] : memref<1x448xf32, #tpu.memory_space<vmem>>, vector<1x448xf32>
    %11 = vector.broadcast %10 : vector<1x448xf32> to vector<32x448xf32>
    %12 = arith.addf %9, %11 : vector<32x448xf32>
    %cst_20 = arith.constant 0.000000e+00 : f32
    %13 = vector.broadcast %cst_20 : f32 to vector<32x448xf32>
    %14 = arith.maximumf %12, %13 : vector<32x448xf32>
    %15 = vector.shape_cast %14 : vector<32x448xf32> to vector<2x16x448xf32>
    %16 = arith.truncf %15 : vector<2x16x448xf32> to vector<2x16x448xbf16>
    %c0_21 = arith.constant 0 : index
    %c0_22 = arith.constant 0 : index
    %c0_23 = arith.constant 0 : index
    %17 = vector.load %arg14[%c0_21, %c0_22, %c0_23] : memref<2x16x448xbf16, #tpu.memory_space<vmem>>, vector<2x16x448xbf16>
    tpu.vector_store %arg14[%c0_21, %c0_22, %c0_23], %16 {strides = array<i32>} : memref<2x16x448xbf16, #tpu.memory_space<vmem>>, vector<2x16x448xbf16>,
    %c0_24 = arith.constant 0 : index
    %c0_25 = arith.constant 0 : index
    %c0_26 = arith.constant 0 : index
    %18 = vector.load %arg14[%c0_24, %c0_25, %c0_26] : memref<2x16x448xbf16, #tpu.memory_space<vmem>>, vector<2x12x448xbf16>
    %c0_27 = arith.constant 0 : index
    %c0_28 = arith.constant 0 : index
    %c0_29 = arith.constant 0 : index
    %19 = vector.load %arg15[%c0_27, %c0_28, %c0_29] : memref<2x16x1344xbf16, #tpu.memory_space<vmem>>, vector<2x12x448xbf16>
    tpu.vector_store %arg15[%c0_27, %c0_28, %c0_29], %18 {strides = array<i32>} : memref<2x16x1344xbf16, #tpu.memory_space<vmem>>, vector<2x12x448xbf16>,
    %c0_30 = arith.constant 0 : index
    %c1_31 = arith.constant 1 : index
    %c0_32 = arith.constant 0 : index
    %20 = vector.load %arg14[%c0_30, %c1_31, %c0_32] : memref<2x16x448xbf16, #tpu.memory_space<vmem>>, vector<2x12x448xbf16>
    %c0_33 = arith.constant 0 : index
    %c0_34 = arith.constant 0 : index
    %c448 = arith.constant 448 : index
    %21 = vector.load %arg15[%c0_33, %c0_34, %c448] : memref<2x16x1344xbf16, #tpu.memory_space<vmem>>, vector<2x12x448xbf16>
    tpu.vector_store %arg15[%c0_33, %c0_34, %c448], %20 {strides = array<i32>} : memref<2x16x1344xbf16, #tpu.memory_space<vmem>>, vector<2x12x448xbf16>,
    %c0_35 = arith.constant 0 : index
    %c2_36 = arith.constant 2 : index
    %c0_37 = arith.constant 0 : index
    %22 = vector.load %arg14[%c0_35, %c2_36, %c0_37] : memref<2x16x448xbf16, #tpu.memory_space<vmem>>, vector<2x12x448xbf16>
    %c0_38 = arith.constant 0 : index
    %c0_39 = arith.constant 0 : index
    %c896 = arith.constant 896 : index
    %23 = vector.load %arg15[%c0_38, %c0_39, %c896] : memref<2x16x1344xbf16, #tpu.memory_space<vmem>>, vector<2x12x448xbf16>
    tpu.vector_store %arg15[%c0_38, %c0_39, %c896], %22 {strides = array<i32>} : memref<2x16x1344xbf16, #tpu.memory_space<vmem>>, vector<2x12x448xbf16>,
    %c0_40 = arith.constant 0 : index
    %c0_41 = arith.constant 0 : index
    %c0_42 = arith.constant 0 : index
    %24 = vector.load %arg15[%c0_40, %c0_41, %c0_42] : memref<2x16x1344xbf16, #tpu.memory_space<vmem>>, vector<2x16x1344xbf16>
    %25 = vector.shape_cast %24 : vector<2x16x1344xbf16> to vector<32x1344xbf16>
    %c0_43 = arith.constant 0 : index
    %c0_44 = arith.constant 0 : index
    %26 = vector.load %arg4[%c0_43, %c0_44] : memref<1344x768xbf16, #tpu.memory_space<vmem>>, vector<1344x768xbf16>
    %cst_45 = arith.constant dense<0.000000e+00> : vector<32x768xf32>
    %27 = tpu.matmul %25, %26, %cst_45 {dimension_numbers = #tpu.dot_dimension_numbers<[1], [0], [0], [1], [0, 0, 1, 1], [], []>} : vector<32x1344xbf16>, vector<1344x768xbf16>, vector<32x768xf32> -> vector<32x768xf32>
    %c0_46 = arith.constant 0 : index
    %c0_47 = arith.constant 0 : index
    %28 = vector.load %arg5[%c0_46, %c0_47] : memref<1x768xf32, #tpu.memory_space<vmem>>, vector<1x768xf32>
    %29 = vector.broadcast %28 : vector<1x768xf32> to vector<32x768xf32>
    %30 = arith.addf %27, %29 : vector<32x768xf32>
    %cst_48 = arith.constant 0.000000e+00 : f32
    %31 = vector.broadcast %cst_48 : f32 to vector<32x768xf32>
    %32 = arith.maximumf %30, %31 : vector<32x768xf32>
    %33 = vector.shape_cast %32 : vector<32x768xf32> to vector<2x16x768xf32>
    %34 = arith.truncf %33 : vector<2x16x768xf32> to vector<2x16x768xbf16>
    %c0_49 = arith.constant 0 : index
    %c0_50 = arith.constant 0 : index
    %c0_51 = arith.constant 0 : index
    %35 = vector.load %arg16[%c0_49, %c0_50, %c0_51] : memref<2x16x768xbf16, #tpu.memory_space<vmem>>, vector<2x16x768xbf16>
    tpu.vector_store %arg16[%c0_49, %c0_50, %c0_51], %34 {strides = array<i32>} : memref<2x16x768xbf16, #tpu.memory_space<vmem>>, vector<2x16x768xbf16>,
    %c0_52 = arith.constant 0 : index
    %c0_53 = arith.constant 0 : index
    %c0_54 = arith.constant 0 : index
    %36 = vector.load %arg16[%c0_52, %c0_53, %c0_54] : memref<2x16x768xbf16, #tpu.memory_space<vmem>>, vector<2x10x768xbf16>
    %c0_55 = arith.constant 0 : index
    %c0_56 = arith.constant 0 : index
    %c0_57 = arith.constant 0 : index
    %37 = vector.load %arg17[%c0_55, %c0_56, %c0_57] : memref<2x16x2304xbf16, #tpu.memory_space<vmem>>, vector<2x10x768xbf16>
    tpu.vector_store %arg17[%c0_55, %c0_56, %c0_57], %36 {strides = array<i32>} : memref<2x16x2304xbf16, #tpu.memory_space<vmem>>, vector<2x10x768xbf16>,
    %c0_58 = arith.constant 0 : index
    %c1_59 = arith.constant 1 : index
    %c0_60 = arith.constant 0 : index
    %38 = vector.load %arg16[%c0_58, %c1_59, %c0_60] : memref<2x16x768xbf16, #tpu.memory_space<vmem>>, vector<2x10x768xbf16>
    %c0_61 = arith.constant 0 : index
    %c0_62 = arith.constant 0 : index
    %c768 = arith.constant 768 : index
    %39 = vector.load %arg17[%c0_61, %c0_62, %c768] : memref<2x16x2304xbf16, #tpu.memory_space<vmem>>, vector<2x10x768xbf16>
    tpu.vector_store %arg17[%c0_61, %c0_62, %c768], %38 {strides = array<i32>} : memref<2x16x2304xbf16, #tpu.memory_space<vmem>>, vector<2x10x768xbf16>,
    %c0_63 = arith.constant 0 : index
    %c2_64 = arith.constant 2 : index
    %c0_65 = arith.constant 0 : index
    %40 = vector.load %arg16[%c0_63, %c2_64, %c0_65] : memref<2x16x768xbf16, #tpu.memory_space<vmem>>, vector<2x10x768xbf16>
    %c0_66 = arith.constant 0 : index
    %c0_67 = arith.constant 0 : index
    %c1536 = arith.constant 1536 : index
    %41 = vector.load %arg17[%c0_66, %c0_67, %c1536] : memref<2x16x2304xbf16, #tpu.memory_space<vmem>>, vector<2x10x768xbf16>
    tpu.vector_store %arg17[%c0_66, %c0_67, %c1536], %40 {strides = array<i32>} : memref<2x16x2304xbf16, #tpu.memory_space<vmem>>, vector<2x10x768xbf16>,
    %c0_68 = arith.constant 0 : index
    %c0_69 = arith.constant 0 : index
    %c0_70 = arith.constant 0 : index
    %42 = vector.load %arg17[%c0_68, %c0_69, %c0_70] : memref<2x16x2304xbf16, #tpu.memory_space<vmem>>, vector<2x16x2304xbf16>
    %43 = vector.shape_cast %42 : vector<2x16x2304xbf16> to vector<32x2304xbf16>
    %c0_71 = arith.constant 0 : index
    %c0_72 = arith.constant 0 : index
    %44 = vector.load %arg6[%c0_71, %c0_72] : memref<2304x320xbf16, #tpu.memory_space<vmem>>, vector<2304x320xbf16>
    %cst_73 = arith.constant dense<0.000000e+00> : vector<32x320xf32>
    %45 = tpu.matmul %43, %44, %cst_73 {dimension_numbers = #tpu.dot_dimension_numbers<[1], [0], [0], [1], [0, 0, 1, 1], [], []>} : vector<32x2304xbf16>, vector<2304x320xbf16>, vector<32x320xf32> -> vector<32x320xf32>
    %c0_74 = arith.constant 0 : index
    %c0_75 = arith.constant 0 : index
    %46 = vector.load %arg7[%c0_74, %c0_75] : memref<1x320xf32, #tpu.memory_space<vmem>>, vector<1x320xf32>
    %47 = vector.broadcast %46 : vector<1x320xf32> to vector<32x320xf32>
    %48 = arith.addf %45, %47 : vector<32x320xf32>
    %cst_76 = arith.constant 0.000000e+00 : f32
    %49 = vector.broadcast %cst_76 : f32 to vector<32x320xf32>
    %50 = arith.maximumf %48, %49 : vector<32x320xf32>
    %51 = vector.shape_cast %50 : vector<32x320xf32> to vector<2x16x320xf32>
    %52 = arith.truncf %51 : vector<2x16x320xf32> to vector<2x16x320xbf16>
    %c0_77 = arith.constant 0 : index
    %c0_78 = arith.constant 0 : index
    %c0_79 = arith.constant 0 : index
    %53 = vector.load %arg18[%c0_77, %c0_78, %c0_79] : memref<2x16x320xbf16, #tpu.memory_space<vmem>>, vector<2x16x320xbf16>
    tpu.vector_store %arg18[%c0_77, %c0_78, %c0_79], %52 {strides = array<i32>} : memref<2x16x320xbf16, #tpu.memory_space<vmem>>, vector<2x16x320xbf16>,
    %c0_80 = arith.constant 0 : index
    %c0_81 = arith.constant 0 : index
    %c0_82 = arith.constant 0 : index
    %54 = vector.load %arg18[%c0_80, %c0_81, %c0_82] : memref<2x16x320xbf16, #tpu.memory_space<vmem>>, vector<2x1x320xbf16>
    %55 = vector.shape_cast %54 : vector<2x1x320xbf16> to vector<2x320xbf16>
    %c0_83 = arith.constant 0 : index
    %c0_84 = arith.constant 0 : index
    %56 = vector.load %arg19[%c0_83, %c0_84] : memref<2x3200xbf16, #tpu.memory_space<vmem>>, vector<2x320xbf16>
    tpu.vector_store %arg19[%c0_83, %c0_84], %55 {strides = array<i32>} : memref<2x3200xbf16, #tpu.memory_space<vmem>>, vector<2x320xbf16>,
    %c0_85 = arith.constant 0 : index
    %c1_86 = arith.constant 1 : index
    %c0_87 = arith.constant 0 : index
    %57 = vector.load %arg18[%c0_85, %c1_86, %c0_87] : memref<2x16x320xbf16, #tpu.memory_space<vmem>>, vector<2x1x320xbf16>
    %58 = vector.shape_cast %57 : vector<2x1x320xbf16> to vector<2x320xbf16>
    %c0_88 = arith.constant 0 : index
    %c320 = arith.constant 320 : index
    %59 = vector.load %arg19[%c0_88, %c320] : memref<2x3200xbf16, #tpu.memory_space<vmem>>, vector<2x320xbf16>
    tpu.vector_store %arg19[%c0_88, %c320], %58 {strides = array<i32>} : memref<2x3200xbf16, #tpu.memory_space<vmem>>, vector<2x320xbf16>,
    %c0_89 = arith.constant 0 : index
    %c2_90 = arith.constant 2 : index
    %c0_91 = arith.constant 0 : index
    %60 = vector.load %arg18[%c0_89, %c2_90, %c0_91] : memref<2x16x320xbf16, #tpu.memory_space<vmem>>, vector<2x1x320xbf16>
    %61 = vector.shape_cast %60 : vector<2x1x320xbf16> to vector<2x320xbf16>
    %c0_92 = arith.constant 0 : index
    %c640 = arith.constant 640 : index
    %62 = vector.load %arg19[%c0_92, %c640] : memref<2x3200xbf16, #tpu.memory_space<vmem>>, vector<2x320xbf16>
    tpu.vector_store %arg19[%c0_92, %c640], %61 {strides = array<i32>} : memref<2x3200xbf16, #tpu.memory_space<vmem>>, vector<2x320xbf16>,
    %c0_93 = arith.constant 0 : index
    %c3 = arith.constant 3 : index
    %c0_94 = arith.constant 0 : index
    %63 = vector.load %arg18[%c0_93, %c3, %c0_94] : memref<2x16x320xbf16, #tpu.memory_space<vmem>>, vector<2x1x320xbf16>
    %64 = vector.shape_cast %63 : vector<2x1x320xbf16> to vector<2x320xbf16>
    %c0_95 = arith.constant 0 : index
    %c960 = arith.constant 960 : index
    %65 = vector.load %arg19[%c0_95, %c960] : memref<2x3200xbf16, #tpu.memory_space<vmem>>, vector<2x320xbf16>
    tpu.vector_store %arg19[%c0_95, %c960], %64 {strides = array<i32>} : memref<2x3200xbf16, #tpu.memory_space<vmem>>, vector<2x320xbf16>,
    %c0_96 = arith.constant 0 : index
    %c4 = arith.constant 4 : index
    %c0_97 = arith.constant 0 : index
    %66 = vector.load %arg18[%c0_96, %c4, %c0_97] : memref<2x16x320xbf16, #tpu.memory_space<vmem>>, vector<2x1x320xbf16>
    %67 = vector.shape_cast %66 : vector<2x1x320xbf16> to vector<2x320xbf16>
    %c0_98 = arith.constant 0 : index
    %c1280 = arith.constant 1280 : index
    %68 = vector.load %arg19[%c0_98, %c1280] : memref<2x3200xbf16, #tpu.memory_space<vmem>>, vector<2x320xbf16>
    tpu.vector_store %arg19[%c0_98, %c1280], %67 {strides = array<i32>} : memref<2x3200xbf16, #tpu.memory_space<vmem>>, vector<2x320xbf16>,
    %c0_99 = arith.constant 0 : index
    %c5 = arith.constant 5 : index
    %c0_100 = arith.constant 0 : index
    %69 = vector.load %arg18[%c0_99, %c5, %c0_100] : memref<2x16x320xbf16, #tpu.memory_space<vmem>>, vector<2x1x320xbf16>
    %70 = vector.shape_cast %69 : vector<2x1x320xbf16> to vector<2x320xbf16>
    %c0_101 = arith.constant 0 : index
    %c1600 = arith.constant 1600 : index
    %71 = vector.load %arg19[%c0_101, %c1600] : memref<2x3200xbf16, #tpu.memory_space<vmem>>, vector<2x320xbf16>
    tpu.vector_store %arg19[%c0_101, %c1600], %70 {strides = array<i32>} : memref<2x3200xbf16, #tpu.memory_space<vmem>>, vector<2x320xbf16>,
    %c0_102 = arith.constant 0 : index
    %c6 = arith.constant 6 : index
    %c0_103 = arith.constant 0 : index
    %72 = vector.load %arg18[%c0_102, %c6, %c0_103] : memref<2x16x320xbf16, #tpu.memory_space<vmem>>, vector<2x1x320xbf16>
    %73 = vector.shape_cast %72 : vector<2x1x320xbf16> to vector<2x320xbf16>
    %c0_104 = arith.constant 0 : index
    %c1920 = arith.constant 1920 : index
    %74 = vector.load %arg19[%c0_104, %c1920] : memref<2x3200xbf16, #tpu.memory_space<vmem>>, vector<2x320xbf16>
    tpu.vector_store %arg19[%c0_104, %c1920], %73 {strides = array<i32>} : memref<2x3200xbf16, #tpu.memory_space<vmem>>, vector<2x320xbf16>,
    %c0_105 = arith.constant 0 : index
    %c7 = arith.constant 7 : index
    %c0_106 = arith.constant 0 : index
    %75 = vector.load %arg18[%c0_105, %c7, %c0_106] : memref<2x16x320xbf16, #tpu.memory_space<vmem>>, vector<2x1x320xbf16>
    %76 = vector.shape_cast %75 : vector<2x1x320xbf16> to vector<2x320xbf16>
    %c0_107 = arith.constant 0 : index
    %c2240 = arith.constant 2240 : index
    %77 = vector.load %arg19[%c0_107, %c2240] : memref<2x3200xbf16, #tpu.memory_space<vmem>>, vector<2x320xbf16>
    tpu.vector_store %arg19[%c0_107, %c2240], %76 {strides = array<i32>} : memref<2x3200xbf16, #tpu.memory_space<vmem>>, vector<2x320xbf16>,
    %c0_108 = arith.constant 0 : index
    %c8 = arith.constant 8 : index
    %c0_109 = arith.constant 0 : index
    %78 = vector.load %arg18[%c0_108, %c8, %c0_109] : memref<2x16x320xbf16, #tpu.memory_space<vmem>>, vector<2x1x320xbf16>
    %79 = vector.shape_cast %78 : vector<2x1x320xbf16> to vector<2x320xbf16>
    %c0_110 = arith.constant 0 : index
    %c2560 = arith.constant 2560 : index
    %80 = vector.load %arg19[%c0_110, %c2560] : memref<2x3200xbf16, #tpu.memory_space<vmem>>, vector<2x320xbf16>
    tpu.vector_store %arg19[%c0_110, %c2560], %79 {strides = array<i32>} : memref<2x3200xbf16, #tpu.memory_space<vmem>>, vector<2x320xbf16>,
    %c0_111 = arith.constant 0 : index
    %c9 = arith.constant 9 : index
    %c0_112 = arith.constant 0 : index
    %81 = vector.load %arg18[%c0_111, %c9, %c0_112] : memref<2x16x320xbf16, #tpu.memory_space<vmem>>, vector<2x1x320xbf16>
    %82 = vector.shape_cast %81 : vector<2x1x320xbf16> to vector<2x320xbf16>
    %c0_113 = arith.constant 0 : index
    %c2880 = arith.constant 2880 : index
    %83 = vector.load %arg19[%c0_113, %c2880] : memref<2x3200xbf16, #tpu.memory_space<vmem>>, vector<2x320xbf16>
    tpu.vector_store %arg19[%c0_113, %c2880], %82 {strides = array<i32>} : memref<2x3200xbf16, #tpu.memory_space<vmem>>, vector<2x320xbf16>,
    %c0_114 = arith.constant 0 : index
    %c0_115 = arith.constant 0 : index
    %84 = vector.load %arg19[%c0_114, %c0_115] : memref<2x3200xbf16, #tpu.memory_space<vmem>>, vector<2x3200xbf16>
    %c0_116 = arith.constant 0 : index
    %c0_117 = arith.constant 0 : index
    %85 = vector.load %arg8[%c0_116, %c0_117] : memref<3200x256xbf16, #tpu.memory_space<vmem>>, vector<3200x256xbf16>
    %cst_118 = arith.constant dense<0.000000e+00> : vector<2x256xf32>
    %86 = tpu.matmul %84, %85, %cst_118 {dimension_numbers = #tpu.dot_dimension_numbers<[1], [0], [0], [1], [0, 0, 1, 1], [], []>} : vector<2x3200xbf16>, vector<3200x256xbf16>, vector<2x256xf32> -> vector<2x256xf32>
    %c0_119 = arith.constant 0 : index
    %c0_120 = arith.constant 0 : index
    %87 = vector.load %arg9[%c0_119, %c0_120] : memref<1x256xf32, #tpu.memory_space<vmem>>, vector<1x256xf32>
    %88 = vector.broadcast %87 : vector<1x256xf32> to vector<2x256xf32>
    %89 = arith.addf %86, %88 : vector<2x256xf32>
    %cst_121 = arith.constant 0.000000e+00 : f32
    %90 = vector.broadcast %cst_121 : f32 to vector<2x256xf32>
    %91 = arith.maximumf %89, %90 : vector<2x256xf32>
    %92 = arith.truncf %91 : vector<2x256xf32> to vector<2x256xbf16>
    %c0_122 = arith.constant 0 : index
    %c0_123 = arith.constant 0 : index
    %93 = vector.load %arg10[%c0_122, %c0_123] : memref<256x7xbf16, #tpu.memory_space<vmem>>, vector<256x7xbf16>
    %cst_124 = arith.constant dense<0.000000e+00> : vector<2x7xf32>
    %94 = tpu.matmul %92, %93, %cst_124 {dimension_numbers = #tpu.dot_dimension_numbers<[1], [0], [0], [1], [0, 0, 1, 1], [], []>} : vector<2x256xbf16>, vector<256x7xbf16>, vector<2x7xf32> -> vector<2x7xf32>
    %c0_125 = arith.constant 0 : index
    %c0_126 = arith.constant 0 : index
    %95 = vector.load %arg11[%c0_125, %c0_126] : memref<1x7xf32, #tpu.memory_space<vmem>>, vector<1x7xf32>
    %96 = vector.broadcast %95 : vector<1x7xf32> to vector<2x7xf32>
    %97 = arith.addf %94, %96 : vector<2x7xf32>
    %c0_127 = arith.constant 0 : index
    %c0_128 = arith.constant 0 : index
    %98 = vector.load %arg12[%c0_127, %c0_128] : memref<2x7xf32, #tpu.memory_space<vmem>>, vector<2x7xf32>
    tpu.vector_store %arg12[%c0_127, %c0_128], %97 {strides = array<i32>} : memref<2x7xf32, #tpu.memory_space<vmem>>, vector<2x7xf32>,
    return
  }
  func.func @transform_0(%arg0: i32) -> (i32, i32, i32) {
    %c0_i32 = arith.constant 0 : i32
    %c0_i32_0 = arith.constant 0 : i32
    %c0_i32_1 = arith.constant 0 : i32
    return %arg0, %c0_i32, %c0_i32_0 : i32, i32, i32
  }
  func.func @transform_1(%arg0: i32) -> (i32, i32) {
    %c0_i32 = arith.constant 0 : i32
    %c0_i32_0 = arith.constant 0 : i32
    %c0_i32_1 = arith.constant 0 : i32
    return %c0_i32, %c0_i32_0 : i32, i32
  }
  func.func @transform_2(%arg0: i32) -> (i32, i32) {
    %c0_i32 = arith.constant 0 : i32
    %c0_i32_0 = arith.constant 0 : i32
    %c0_i32_1 = arith.constant 0 : i32
    return %c0_i32, %c0_i32_0 : i32, i32
  }
  func.func @transform_3(%arg0: i32) -> (i32, i32) {
    %c0_i32 = arith.constant 0 : i32
    %c0_i32_0 = arith.constant 0 : i32
    %c0_i32_1 = arith.constant 0 : i32
    return %c0_i32, %c0_i32_0 : i32, i32
  }
  func.func @transform_4(%arg0: i32) -> (i32, i32) {
    %c0_i32 = arith.constant 0 : i32
    %c0_i32_0 = arith.constant 0 : i32
    %c0_i32_1 = arith.constant 0 : i32
    return %c0_i32, %c0_i32_0 : i32, i32
  }
  func.func @transform_5(%arg0: i32) -> (i32, i32) {
    %c0_i32 = arith.constant 0 : i32
    %c0_i32_0 = arith.constant 0 : i32
    %c0_i32_1 = arith.constant 0 : i32
    return %c0_i32, %c0_i32_0 : i32, i32
  }
  func.func @transform_6(%arg0: i32) -> (i32, i32) {
    %c0_i32 = arith.constant 0 : i32
    %c0_i32_0 = arith.constant 0 : i32
    %c0_i32_1 = arith.constant 0 : i32
    return %c0_i32, %c0_i32_0 : i32, i32
  }
  func.func @transform_7(%arg0: i32) -> (i32, i32) {
    %c0_i32 = arith.constant 0 : i32
    %c0_i32_0 = arith.constant 0 : i32
    %c0_i32_1 = arith.constant 0 : i32
    return %c0_i32, %c0_i32_0 : i32, i32
  }
  func.func @transform_8(%arg0: i32) -> (i32, i32) {
    %c0_i32 = arith.constant 0 : i32
    %c0_i32_0 = arith.constant 0 : i32
    %c0_i32_1 = arith.constant 0 : i32
    return %c0_i32, %c0_i32_0 : i32, i32
  }
  func.func @transform_9(%arg0: i32) -> (i32, i32) {
    %c0_i32 = arith.constant 0 : i32
    %c0_i32_0 = arith.constant 0 : i32
    %c0_i32_1 = arith.constant 0 : i32
    return %c0_i32, %c0_i32_0 : i32, i32
  }
  func.func @transform_10(%arg0: i32) -> (i32, i32) {
    %c0_i32 = arith.constant 0 : i32
    %c0_i32_0 = arith.constant 0 : i32
    %c0_i32_1 = arith.constant 0 : i32
    return %c0_i32, %c0_i32_0 : i32, i32
  }
  func.func @transform_11(%arg0: i32) -> (i32, i32) {
    %c0_i32 = arith.constant 0 : i32
    %c0_i32_0 = arith.constant 0 : i32
    return %arg0, %c0_i32 : i32, i32
  }
}

</mosaic_0001>

<llo_original>
// kernel: rollout_policy_forward.1
$region0: #{rollout_policy_forward.1}
  #allocation0 [shape = 'u32[]', space=smem, size = 0x4, offset = 0x4, fixed_abs, tag = 'smem constant byte address 0x4 - core index']
  #allocation1 [shape = 'u32[72,128]{1,0:T(1,128)}', space=vmem, size = 0x9000, scoped, tag = 'internal scratch']
  #allocation2 [shape = 'bf16[2,16,192]{2,1,0:T(8,128)(2,1)}', space=vmem, size = 0x4000, scoped, tag = 'scratch operand']
  #allocation3 [shape = 'bf16[2,16,448]{2,1,0:T(8,128)(2,1)}', space=vmem, size = 0x8000, scoped, tag = 'scratch operand']
  #allocation4 [shape = 'bf16[2,16,1344]{2,1,0:T(8,128)(2,1)}', space=vmem, size = 0x16000, scoped, tag = 'scratch operand']
  #allocation5 [shape = 'bf16[2,16,768]{2,1,0:T(8,128)(2,1)}', space=vmem, size = 0xc000, scoped, tag = 'scratch operand']
  #allocation6 [shape = 'bf16[2,16,2304]{2,1,0:T(8,128)(2,1)}', space=vmem, size = 0x24000, scoped, tag = 'scratch operand']
  #allocation7 [shape = 'bf16[2,16,320]{2,1,0:T(8,128)(2,1)}', space=vmem, size = 0x6000, scoped, tag = 'scratch operand']
  #allocation8 [shape = 'bf16[2,3200]{1,0:T(2,128)(2,1)}', space=vmem, size = 0x3200, scoped, tag = 'scratch operand']
  %s0 = inlined_call_operand.vmem [shape: bf16[2,16,64], index: 0, kind: input, shape index: {}]
  %s1 = inlined_call_operand.vmem [shape: bf16[192,448], index: 1, kind: input, shape index: {}]
  %s2 = inlined_call_operand.vmem [shape: f32[1,448], index: 2, kind: input, shape index: {}]
  %s3 = inlined_call_operand.vmem [shape: bf16[1344,768], index: 3, kind: input, shape index: {}]
  %s4 = inlined_call_operand.vmem [shape: f32[1,768], index: 4, kind: input, shape index: {}]
  %s5 = inlined_call_operand.vmem [shape: bf16[2304,320], index: 5, kind: input, shape index: {}]
  %s6 = inlined_call_operand.vmem [shape: f32[1,320], index: 6, kind: input, shape index: {}]
  %s7 = inlined_call_operand.hbm [shape: bf16[3200,256], index: 7, kind: input, shape index: {}]
  %s8 = inlined_call_operand.vmem [shape: f32[1,256], index: 8, kind: input, shape index: {}]
  %s9 = inlined_call_operand.vmem [shape: bf16[256,7], index: 9, kind: input, shape index: {}]
  %s10 = inlined_call_operand.vmem [shape: f32[1,7], index: 10, kind: input, shape index: {}]
  %s11 = inlined_call_operand.vmem [shape: f32[2,7], index: 11, kind: output, shape index: {}]
  %s12 = sld [smem:[#allocation0]]
  $region58: #{rollout_policy_forward.1} parent=0
    _
  %s14 = ssub.s32 1, %s12
  %s15 = scalar_select 0, %s14, %s12
  $region1: #{rollout_policy_forward.1} parent=0
    #allocation9 [shape = 'u8[1638400]{0}', space=vmem, size = 0x190000, scoped, tag = 'input window, operand 7, single buffered']
    #allocation10 [shape = 's32[1]{0}', space=sflag, size = 0x4, scoped, tag = 'scoped memory for rollout_policy_forward.1']
    %16 = vsyncpa [#allocation10], 0
    // Predicated region
    $region2: #{rollout_policy_forward.1} parent=1 // pred_check
      _
    $region3: #{rollout_policy_forward.1} parent=1 // pred_check_branch
      %18 = sbr.rel (0) target = $region5
    $region4: #{rollout_policy_forward.1} parent=1 // pred_region
      _
    $region5: #{rollout_policy_forward.1} parent=1 // pred_fallthru
      _
    // Predicated region
    $region6: #{rollout_policy_forward.1} parent=1 // pred_check
      _
    $region7: #{rollout_policy_forward.1} parent=1 // pred_check_branch
      %20 = sbr.rel (0) target = $region9
    $region8: #{rollout_policy_forward.1} parent=1 // pred_region
      _
    $region9: #{rollout_policy_forward.1} parent=1 // pred_fallthru
      _
    // Predicated region
    $region10: #{rollout_policy_forward.1} parent=1 // pred_check
      _
    $region11: #{rollout_policy_forward.1} parent=1 // pred_check_branch
      %22 = sbr.rel (0) target = $region13
    $region12: #{rollout_policy_forward.1} parent=1 // pred_region
      _
    $region13: #{rollout_policy_forward.1} parent=1 // pred_fallthru
      _
    // Predicated region
    $region14: #{rollout_policy_forward.1} parent=1 // pred_check
      _
    $region15: #{rollout_policy_forward.1} parent=1 // pred_check_branch
      %24 = sbr.rel (0) target = $region17
    $region16: #{rollout_policy_forward.1} parent=1 // pred_region
      _
    $region17: #{rollout_policy_forward.1} parent=1 // pred_fallthru
      _
    // Predicated region
    $region18: #{rollout_policy_forward.1} parent=1 // pred_check
      _
    $region19: #{rollout_policy_forward.1} parent=1 // pred_check_branch
      %26 = sbr.rel (0) target = $region21
    $region20: #{rollout_policy_forward.1} parent=1 // pred_region
      _
    $region21: #{rollout_policy_forward.1} parent=1 // pred_fallthru
      _
    // Predicated region
    $region22: #{rollout_policy_forward.1} parent=1 // pred_check
      _
    $region23: #{rollout_policy_forward.1} parent=1 // pred_check_branch
      %28 = sbr.rel (0) target = $region25
    $region24: #{rollout_policy_forward.1} parent=1 // pred_region
      _
    $region25: #{rollout_policy_forward.1} parent=1 // pred_fallthru
      _
    // Predicated region
    $region26: #{rollout_policy_forward.1} parent=1 // pred_check
      _
    $region27: #{rollout_policy_forward.1} parent=1 // pred_check_branch
      %30 = sbr.rel (0) target = $region29
    $region28: #{rollout_policy_forward.1} parent=1 // pred_region
      _
    $region29: #{rollout_policy_forward.1} parent=1 // pred_fallthru
      _
    // Predicated region
    $region30: #{rollout_policy_forward.1} parent=1 // pred_check
      _
    $region31: #{rollout_policy_forward.1} parent=1 // pred_check_branch
      %32 = sbr.rel (0) target = $region33
    $region32: #{rollout_policy_forward.1} parent=1 // pred_region
      %34 = vsyncadd [#allocation10], 0
      %s35 = sshll.u32 %s7, 4
      %s36 = int_to_ptr.hbm [resolvable:$true] %s35
      %s37 = sshll.u32 [#allocation9], 4
      %s38 = int_to_ptr.vmem [resolvable:$true] %s37
      %43 = dma.hbm_to_vmem [thread:$0]  %s36, 51200, %s38, [#allocation10], 128, 128, 8
    $region33: #{rollout_policy_forward.1} parent=1 // pred_fallthru
      _
    // Predicated region
    $region34: #{rollout_policy_forward.1} parent=1 // pred_check
      _
    $region35: #{rollout_policy_forward.1} parent=1 // pred_check_branch
      %45 = sbr.rel (0) target = $region37
    $region36: #{rollout_policy_forward.1} parent=1 // pred_region
      _
    $region37: #{rollout_policy_forward.1} parent=1 // pred_fallthru
      _
    // Predicated region
    $region38: #{rollout_policy_forward.1} parent=1 // pred_check
      _
    $region39: #{rollout_policy_forward.1} parent=1 // pred_check_branch
      %47 = sbr.rel (0) target = $region41
    $region40: #{rollout_policy_forward.1} parent=1 // pred_region
      _
    $region41: #{rollout_policy_forward.1} parent=1 // pred_fallthru
      _
    // Predicated region
    $region42: #{rollout_policy_forward.1} parent=1 // pred_check
      _
    $region43: #{rollout_policy_forward.1} parent=1 // pred_check_branch
      %49 = sbr.rel (0) target = $region45
    $region44: #{rollout_policy_forward.1} parent=1 // pred_region
      _
    $region45: #{rollout_policy_forward.1} parent=1 // pred_fallthru
      _
    // Predicated region
    $region46: #{rollout_policy_forward.1} parent=1 // pred_check
      _
    $region47: #{rollout_policy_forward.1} parent=1 // pred_check_branch
      %51 = sbr.rel (0) target = $region49
    $region48: #{rollout_policy_forward.1} parent=1 // pred_region
      %53 = dma.done [#allocation10], 51200
    $region49: #{rollout_policy_forward.1} parent=1 // pred_fallthru
      _
    %v55 = vld [vmem:[%s0] sm:$0xf]
    %v56 = vld [vmem:[%s0 + $0x4] sm:$0x7]
    %v57 = vld [vmem:[%s0 + $0x8] sm:$0xf]
    %v58 = vld [vmem:[%s0 + $0xc] sm:$0x7]
    %vm59 = vcmask 519168
    %60 = vst.msk [vmem:[#allocation2] sm:$0xf] %vm59, %v55
    %vm61 = vcmask 518144
    %62 = vst.msk [vmem:[#allocation2 + $0x8] sm:$0x7] %vm61, %v56
    %63 = vst.msk [vmem:[#allocation2 + $0x10] sm:$0xf] %vm59, %v57
    %64 = vst.msk [vmem:[#allocation2 + $0x18] sm:$0x7] %vm61, %v58
    %v65 = vld [vmem:[%s0] sm:$0xf]
    %v66 = vld [vmem:[%s0 + $0x4] sm:$0xf]
    %v67 = vld [vmem:[%s0 + $0x8] sm:$0xf]
    %v68 = vld [vmem:[%s0 + $0xc] sm:$0xf]
    %vm69 = vsmask.f32 3328
    %vm70 = vsmask.f32 7440
    %vm71 = vmor %vm69, %vm70
    %v73 = vshrl.u32 %v65, 16
    %v75 = vrot.slane %v73, 4
    %v76 = vshll.u32 %v65, 16
    %v78 = vrot.slane %v76, 5
    %v79 = vor.u32 %v75, %v78
    %v80 = vrot.slane %v79, 4
    %v82 = vshll.u32 %v66, 16
    %v84 = vrot.slane %v82, 5
    %v85 = vsel %vm71, %v80, %v84
    %v86 = vshrl.u32 %v66, 16
    %v88 = vrot.slane %v86, 4
    %v89 = vor.u32 %v88, %v84
    %v90 = vrot.slane %v89, 4
    %v92 = vshrl.u32 %v67, 16
    %v94 = vrot.slane %v92, 4
    %v95 = vshll.u32 %v67, 16
    %v97 = vrot.slane %v95, 5
    %v98 = vor.u32 %v94, %v97
    %v99 = vrot.slane %v98, 4
    %v101 = vshll.u32 %v68, 16
    %v103 = vrot.slane %v101, 5
    %v104 = vsel %vm71, %v99, %v103
    %v105 = vshrl.u32 %v68, 16
    %v107 = vrot.slane %v105, 4
    %v108 = vor.u32 %v107, %v103
    %v109 = vrot.slane %v108, 4
    %110 = vrot.lane.b32.xlu0 %v85, 64
    %v111 = vpop.permute.xlu0 %110
    %112 = vrot.lane.b32.xlu0 %v90, 64
    %v113 = vpop.permute.xlu0 %112
    %114 = vrot.lane.b32.xlu0 %v104, 64
    %v115 = vpop.permute.xlu0 %114
    %116 = vrot.lane.b32.xlu0 %v109, 64
    %v117 = vpop.permute.xlu0 %116
    %vm122 = vcmask 1043968
    %123 = vst.msk [vmem:[#allocation2] sm:$0xf] %vm122, %v111
    %vm124 = vcmask 1042944
    %125 = vst.msk [vmem:[#allocation2 + $0x8] sm:$0x7] %vm124, %v113
    %126 = vst.msk [vmem:[#allocation2 + $0x10] sm:$0xf] %vm122, %v115
    %127 = vst.msk [vmem:[#allocation2 + $0x18] sm:$0x7] %vm124, %v117
    %v128 = vld [vmem:[%s0] sm:$0xe]
    %v129 = vld [vmem:[%s0 + $0x4] sm:$0xf]
    %v130 = vld [vmem:[%s0 + $0x8] sm:$0xe]
    %v131 = vld [vmem:[%s0 + $0xc] sm:$0xf]
    %vm136 = vcmask 1042432
    %vm137 = vcmask 1046532
    %vm138 = vmor %vm136, %vm137
    %v139 = vrot.slane %v128, 5
    %v140 = vrot.slane %v139, 4
    %v141 = vrot.slane %v129, 5
    %v142 = vsel %vm138, %v140, %v141
    %v143 = vrot.slane %v141, 4
    %v144 = vrot.slane %v130, 5
    %v145 = vrot.slane %v144, 4
    %v146 = vrot.slane %v131, 5
    %v147 = vsel %vm138, %v145, %v146
    %v148 = vrot.slane %v146, 4
    %153 = vst.msk [vmem:[#allocation2 + $0x4] sm:$0xf] %vm59, %v142
    %154 = vst.msk [vmem:[#allocation2 + $0xc] sm:$0x7] %vm61, %v143
    %155 = vst.msk [vmem:[#allocation2 + $0x14] sm:$0xf] %vm59, %v147
    %156 = vst.msk [vmem:[#allocation2 + $0x1c] sm:$0x7] %vm61, %v148
    %v157 = vld [vmem:[#allocation2] sm:$0xff]
    %v158 = vld [vmem:[#allocation2 + $0x8] sm:$0xff]
    %v159 = vld [vmem:[#allocation2 + $0x10] sm:$0xff]
    %v160 = vld [vmem:[#allocation2 + $0x18] sm:$0xff]
    %v161 = vld [vmem:[%s1] sm:$0xff]
    %v162 = vld [vmem:[%s1 + $0x8] sm:$0xff]
    %v163 = vld [vmem:[%s1 + $0x10] sm:$0xff]
    %v164 = vld [vmem:[%s1 + $0x18] sm:$0xff]
    %v165 = vld [vmem:[%s1 + $0x20] sm:$0xff]
    %v166 = vld [vmem:[%s1 + $0x28] sm:$0xff]
    %v167 = vld [vmem:[%s1 + $0x30] sm:$0xff]
    %v168 = vld [vmem:[%s1 + $0x38] sm:$0xff]
    %v169 = vld [vmem:[%s1 + $0x40] sm:$0xff]
    %v170 = vld [vmem:[%s1 + $0x48] sm:$0xff]
    %v171 = vld [vmem:[%s1 + $0x50] sm:$0xff]
    %v172 = vld [vmem:[%s1 + $0x58] sm:$0xff]
    %v173 = vld [vmem:[%s1 + $0x60] sm:$0xff]
    %v174 = vld [vmem:[%s1 + $0x68] sm:$0xff]
    %v175 = vld [vmem:[%s1 + $0x70] sm:$0xff]
    %v176 = vld [vmem:[%s1 + $0x78] sm:$0xff]
    %v177 = vld [vmem:[%s1 + $0x80] sm:$0xff]
    %v178 = vld [vmem:[%s1 + $0x88] sm:$0xff]
    %v179 = vld [vmem:[%s1 + $0x90] sm:$0xff]
    %v180 = vld [vmem:[%s1 + $0x98] sm:$0xff]
    %v181 = vld [vmem:[%s1 + $0xa0] sm:$0xff]
    %v182 = vld [vmem:[%s1 + $0xa8] sm:$0xff]
    %v183 = vld [vmem:[%s1 + $0xb0] sm:$0xff]
    %v184 = vld [vmem:[%s1 + $0xb8] sm:$0xff]
    %v185 = vld [vmem:[%s1 + $0xc0] sm:$0xff]
    %v186 = vld [vmem:[%s1 + $0xc8] sm:$0xff]
    %v187 = vld [vmem:[%s1 + $0xd0] sm:$0xff]
    %v188 = vld [vmem:[%s1 + $0xd8] sm:$0xff]
    %v189 = vld [vmem:[%s1 + $0xe0] sm:$0xff]
    %v190 = vld [vmem:[%s1 + $0xe8] sm:$0xff]
    %v191 = vld [vmem:[%s1 + $0xf0] sm:$0xff]
    %v192 = vld [vmem:[%s1 + $0xf8] sm:$0xff]
    %v193 = vld [vmem:[%s1 + $0x100] sm:$0xff]
    %v194 = vld [vmem:[%s1 + $0x108] sm:$0xff]
    %v195 = vld [vmem:[%s1 + $0x110] sm:$0xff]
    %v196 = vld [vmem:[%s1 + $0x118] sm:$0xff]
    %v197 = vld [vmem:[%s1 + $0x120] sm:$0xff]
    %v198 = vld [vmem:[%s1 + $0x128] sm:$0xff]
    %v199 = vld [vmem:[%s1 + $0x130] sm:$0xff]
    %v200 = vld [vmem:[%s1 + $0x138] sm:$0xff]
    %v201 = vld [vmem:[%s1 + $0x140] sm:$0xff]
    %v202 = vld [vmem:[%s1 + $0x148] sm:$0xff]
    %v203 = vld [vmem:[%s1 + $0x150] sm:$0xff]
    %v204 = vld [vmem:[%s1 + $0x158] sm:$0xff]
    %v205 = vld [vmem:[%s1 + $0x160] sm:$0xff]
    %v206 = vld [vmem:[%s1 + $0x168] sm:$0xff]
    %v207 = vld [vmem:[%s1 + $0x170] sm:$0xff]
    %v208 = vld [vmem:[%s1 + $0x178] sm:$0xff]
    %v209 = vld [vmem:[%s2] sm:$0xf]
    %v211 = vperm.slane %v209, 0
    %v212 = vperm.slane %v209, 1
    %v213 = vperm.slane %v209, 2
    %v214 = vperm.slane %v209, 3
    %v223 = vunpack.c.l.b16 %v157
    %v224 = vunpack.c.h.b16 %v157
    %v225 = vunpack.c.l.b16 %v158
    %v226 = vunpack.c.h.b16 %v158
    %v227 = vunpack.c.l.b16 %v159
    %v228 = vunpack.c.h.b16 %v159
    %v229 = vunpack.c.l.b16 %v160
    %v230 = vunpack.c.h.b16 %v160
    %v231 = vpack.c.b16 %v225, %v223
    %v232 = vpack.c.b16 %v226, %v224
    %v233 = vpack.c.b16 %v229, %v227
    %v234 = vpack.c.b16 %v230, %v228
    %v285 = vunpack.c.l.b16 %v161
    %v286 = vunpack.c.h.b16 %v161
    %v287 = vunpack.c.l.b16 %v162
    %v288 = vunpack.c.h.b16 %v162
    %v289 = vunpack.c.l.b16 %v163
    %v290 = vunpack.c.h.b16 %v163
    %v291 = vunpack.c.l.b16 %v164
    %v292 = vunpack.c.h.b16 %v164
    %v293 = vunpack.c.l.b16 %v165
    %v294 = vunpack.c.h.b16 %v165
    %v295 = vunpack.c.l.b16 %v166
    %v296 = vunpack.c.h.b16 %v166
    %v297 = vunpack.c.l.b16 %v167
    %v298 = vunpack.c.h.b16 %v167
    %v299 = vunpack.c.l.b16 %v168
    %v300 = vunpack.c.h.b16 %v168
    %v301 = vunpack.c.l.b16 %v169
    %v302 = vunpack.c.h.b16 %v169
    %v303 = vunpack.c.l.b16 %v170
    %v304 = vunpack.c.h.b16 %v170
    %v305 = vunpack.c.l.b16 %v171
    %v306 = vunpack.c.h.b16 %v171
    %v307 = vunpack.c.l.b16 %v172
    %v308 = vunpack.c.h.b16 %v172
    %v309 = vunpack.c.l.b16 %v173
    %v310 = vunpack.c.h.b16 %v173
    %v311 = vunpack.c.l.b16 %v174
    %v312 = vunpack.c.h.b16 %v174
    %v313 = vunpack.c.l.b16 %v175
    %v314 = vunpack.c.h.b16 %v175
    %v315 = vunpack.c.l.b16 %v176
    %v316 = vunpack.c.h.b16 %v176
    %v317 = vunpack.c.l.b16 %v177
    %v318 = vunpack.c.h.b16 %v177
    %v319 = vunpack.c.l.b16 %v178
    %v320 = vunpack.c.h.b16 %v178
    %v321 = vunpack.c.l.b16 %v179
    %v322 = vunpack.c.h.b16 %v179
    %v323 = vunpack.c.l.b16 %v180
    %v324 = vunpack.c.h.b16 %v180
    %v325 = vunpack.c.l.b16 %v181
    %v326 = vunpack.c.h.b16 %v181
    %v327 = vunpack.c.l.b16 %v182
    %v328 = vunpack.c.h.b16 %v182
    %v329 = vunpack.c.l.b16 %v183
    %v330 = vunpack.c.h.b16 %v183
    %v331 = vunpack.c.l.b16 %v184
    %v332 = vunpack.c.h.b16 %v184
    %v333 = vunpack.c.l.b16 %v185
    %v334 = vunpack.c.h.b16 %v185
    %v335 = vunpack.c.l.b16 %v186
    %v336 = vunpack.c.h.b16 %v186
    %v337 = vunpack.c.l.b16 %v187
    %v338 = vunpack.c.h.b16 %v187
    %v339 = vunpack.c.l.b16 %v188
    %v340 = vunpack.c.h.b16 %v188
    %v341 = vunpack.c.l.b16 %v189
    %v342 = vunpack.c.h.b16 %v189
    %v343 = vunpack.c.l.b16 %v190
    %v344 = vunpack.c.h.b16 %v190
    %v345 = vunpack.c.l.b16 %v191
    %v346 = vunpack.c.h.b16 %v191
    %v347 = vunpack.c.l.b16 %v192
    %v348 = vunpack.c.h.b16 %v192
    %v349 = vunpack.c.l.b16 %v193
    %v350 = vunpack.c.h.b16 %v193
    %v351 = vunpack.c.l.b16 %v194
    %v352 = vunpack.c.h.b16 %v194
    %v353 = vunpack.c.l.b16 %v195
    %v354 = vunpack.c.h.b16 %v195
    %v355 = vunpack.c.l.b16 %v196
    %v356 = vunpack.c.h.b16 %v196
    %v357 = vunpack.c.l.b16 %v197
    %v358 = vunpack.c.h.b16 %v197
    %v359 = vunpack.c.l.b16 %v198
    %v360 = vunpack.c.h.b16 %v198
    %v361 = vunpack.c.l.b16 %v199
    %v362 = vunpack.c.h.b16 %v199
    %v363 = vunpack.c.l.b16 %v200
    %v364 = vunpack.c.h.b16 %v200
    %v365 = vunpack.c.l.b16 %v201
    %v366 = vunpack.c.h.b16 %v201
    %v367 = vunpack.c.l.b16 %v202
    %v368 = vunpack.c.h.b16 %v202
    %v369 = vunpack.c.l.b16 %v203
    %v370 = vunpack.c.h.b16 %v203
    %v371 = vunpack.c.l.b16 %v204
    %v372 = vunpack.c.h.b16 %v204
    %v373 = vunpack.c.l.b16 %v205
    %v374 = vunpack.c.h.b16 %v205
    %v375 = vunpack.c.l.b16 %v206
    %v376 = vunpack.c.h.b16 %v206
    %v377 = vunpack.c.l.b16 %v207
    %v378 = vunpack.c.h.b16 %v207
    %v379 = vunpack.c.l.b16 %v208
    %v380 = vunpack.c.h.b16 %v208
    %v381 = vpack.c.b16 %v289, %v285
    %v382 = vpack.c.b16 %v290, %v286
    %v383 = vpack.c.b16 %v291, %v287
    %v384 = vpack.c.b16 %v292, %v288
    %v385 = vpack.c.b16 %v297, %v293
    %v386 = vpack.c.b16 %v298, %v294
    %v387 = vpack.c.b16 %v299, %v295
    %v388 = vpack.c.b16 %v300, %v296
    %v389 = vpack.c.b16 %v305, %v301
    %v390 = vpack.c.b16 %v306, %v302
    %v391 = vpack.c.b16 %v307, %v303
    %v392 = vpack.c.b16 %v308, %v304
    %v393 = vpack.c.b16 %v313, %v309
    %v394 = vpack.c.b16 %v314, %v310
    %v395 = vpack.c.b16 %v315, %v311
    %v396 = vpack.c.b16 %v316, %v312
    %v397 = vpack.c.b16 %v321, %v317
    %v398 = vpack.c.b16 %v322, %v318
    %v399 = vpack.c.b16 %v323, %v319
    %v400 = vpack.c.b16 %v324, %v320
    %v401 = vpack.c.b16 %v329, %v325
    %v402 = vpack.c.b16 %v330, %v326
    %v403 = vpack.c.b16 %v331, %v327
    %v404 = vpack.c.b16 %v332, %v328
    %v405 = vpack.c.b16 %v337, %v333
    %v406 = vpack.c.b16 %v338, %v334
    %v407 = vpack.c.b16 %v339, %v335
    %v408 = vpack.c.b16 %v340, %v336
    %v409 = vpack.c.b16 %v345, %v341
    %v410 = vpack.c.b16 %v346, %v342
    %v411 = vpack.c.b16 %v347, %v343
    %v412 = vpack.c.b16 %v348, %v344
    %v413 = vpack.c.b16 %v353, %v349
    %v414 = vpack.c.b16 %v354, %v350
    %v415 = vpack.c.b16 %v355, %v351
    %v416 = vpack.c.b16 %v356, %v352
    %v417 = vpack.c.b16 %v361, %v357
    %v418 = vpack.c.b16 %v362, %v358
    %v419 = vpack.c.b16 %v363, %v359
    %v420 = vpack.c.b16 %v364, %v360
    %v421 = vpack.c.b16 %v369, %v365
    %v422 = vpack.c.b16 %v370, %v366
    %v423 = vpack.c.b16 %v371, %v367
    %v424 = vpack.c.b16 %v372, %v368
    %v425 = vpack.c.b16 %v377, %v373
    %v426 = vpack.c.b16 %v378, %v374
    %v427 = vpack.c.b16 %v379, %v375
    %v428 = vpack.c.b16 %v380, %v376
    %vm477 = vcmask 523264
    %v479 = vsel %vm477, %v232, 0
    %v482 = vsel %vm477, %v234, 0
    %484 = vmatpush.bf16.msra.mxu0 %v409
    %485 = vmatpush.bf16.msra.mxu0 %v405
    %486 = vmatpush.bf16.msra.mxu0 %v401
    %487 = vmatpush.bf16.msra.mxu0 %v397
    %488 = vmatpush.bf16.msra.mxu0 %v393
    %489 = vmatpush.bf16.msra.mxu0 %v389
    %490 = vmatpush.bf16.msra.mxu0 %v385
    %491 = vmatpush.bf16.msra.mxu0 %v381
    %492 = vmatmul.bf16.gmra.mxu0 %v231
    %v493 = vpop.f32.mrf.mxu0
    %v494 = vadd.f32 %v211, %v493
    %v495 = vpop.f32.mrf.mxu0
    %v496 = vadd.f32 %v211, %v495
    %497 = vmatmul.bf16.gmra.mxu0 %v233
    %v498 = vpop.f32.mrf.mxu0
    %v499 = vadd.f32 %v211, %v498
    %v500 = vpop.f32.mrf.mxu0
    %v501 = vadd.f32 %v211, %v500
    %502 = vdwg.mxu0
    %503 = vmatpush.bf16.msra.mxu0 0
    %504 = vmatpush.bf16.msra.mxu0 0
    %505 = vmatpush.bf16.msra.mxu0 0
    %506 = vmatpush.bf16.msra.mxu0 0
    %507 = vmatpush.bf16.msra.mxu0 %v425
    %508 = vmatpush.bf16.msra.mxu0 %v421
    %509 = vmatpush.bf16.msra.mxu0 %v417
    %510 = vmatpush.bf16.msra.mxu0 %v413
    %511 = vmatmul.bf16.gmra.mxu0 %v479
    %v512 = vpop.f32.mrf.mxu0
    %v513 = vadd.f32 %v494, %v512
    %v514 = vpop.f32.mrf.mxu0
    %v515 = vadd.f32 %v496, %v514
    %516 = vmatmul.bf16.gmra.mxu0 %v482
    %v517 = vpop.f32.mrf.mxu0
    %v518 = vadd.f32 %v499, %v517
    %v519 = vpop.f32.mrf.mxu0
    %v520 = vadd.f32 %v501, %v519
    %521 = vdwg.mxu0
    %522 = vmatpush.bf16.msra.mxu0 %v410
    %523 = vmatpush.bf16.msra.mxu0 %v406
    %524 = vmatpush.bf16.msra.mxu0 %v402
    %525 = vmatpush.bf16.msra.mxu0 %v398
    %526 = vmatpush.bf16.msra.mxu0 %v394
    %527 = vmatpush.bf16.msra.mxu0 %v390
    %528 = vmatpush.bf16.msra.mxu0 %v386
    %529 = vmatpush.bf16.msra.mxu0 %v382
    %530 = vmatmul.bf16.gmra.mxu0 %v231
    %v531 = vpop.f32.mrf.mxu0
    %v532 = vadd.f32 %v212, %v531
    %v533 = vpop.f32.mrf.mxu0
    %v534 = vadd.f32 %v212, %v533
    %535 = vmatmul.bf16.gmra.mxu0 %v233
    %v536 = vpop.f32.mrf.mxu0
    %v537 = vadd.f32 %v212, %v536
    %v538 = vpop.f32.mrf.mxu0
    %v539 = vadd.f32 %v212, %v538
    %540 = vdwg.mxu0
    %541 = vmatpush.bf16.msra.mxu0 0
    %542 = vmatpush.bf16.msra.mxu0 0
    %543 = vmatpush.bf16.msra.mxu0 0
    %544 = vmatpush.bf16.msra.mxu0 0
    %545 = vmatpush.bf16.msra.mxu0 %v426
    %546 = vmatpush.bf16.msra.mxu0 %v422
    %547 = vmatpush.bf16.msra.mxu0 %v418
    %548 = vmatpush.bf16.msra.mxu0 %v414
    %549 = vmatmul.bf16.gmra.mxu0 %v479
    %v550 = vpop.f32.mrf.mxu0
    %v551 = vadd.f32 %v532, %v550
    %v552 = vpop.f32.mrf.mxu0
    %v553 = vadd.f32 %v534, %v552
    %554 = vmatmul.bf16.gmra.mxu0 %v482
    %v555 = vpop.f32.mrf.mxu0
    %v556 = vadd.f32 %v537, %v555
    %v557 = vpop.f32.mrf.mxu0
    %v558 = vadd.f32 %v539, %v557
    %559 = vdwg.mxu0
    %560 = vmatpush.bf16.msra.mxu0 %v411
    %561 = vmatpush.bf16.msra.mxu0 %v407
    %562 = vmatpush.bf16.msra.mxu0 %v403
    %563 = vmatpush.bf16.msra.mxu0 %v399
    %564 = vmatpush.bf16.msra.mxu0 %v395
    %565 = vmatpush.bf16.msra.mxu0 %v391
    %566 = vmatpush.bf16.msra.mxu0 %v387
    %567 = vmatpush.bf16.msra.mxu0 %v383
    %568 = vmatmul.bf16.gmra.mxu0 %v231
    %v569 = vpop.f32.mrf.mxu0
    %v570 = vadd.f32 %v213, %v569
    %v571 = vpop.f32.mrf.mxu0
    %v572 = vadd.f32 %v213, %v571
    %573 = vmatmul.bf16.gmra.mxu0 %v233
    %v574 = vpop.f32.mrf.mxu0
    %v575 = vadd.f32 %v213, %v574
    %v576 = vpop.f32.mrf.mxu0
    %v577 = vadd.f32 %v213, %v576
    %578 = vdwg.mxu0
    %579 = vmatpush.bf16.msra.mxu0 0
    %580 = vmatpush.bf16.msra.mxu0 0
    %581 = vmatpush.bf16.msra.mxu0 0
    %582 = vmatpush.bf16.msra.mxu0 0
    %583 = vmatpush.bf16.msra.mxu0 %v427
    %584 = vmatpush.bf16.msra.mxu0 %v423
    %585 = vmatpush.bf16.msra.mxu0 %v419
    %586 = vmatpush.bf16.msra.mxu0 %v415
    %587 = vmatmul.bf16.gmra.mxu0 %v479
    %v588 = vpop.f32.mrf.mxu0
    %v589 = vadd.f32 %v570, %v588
    %v590 = vpop.f32.mrf.mxu0
    %v591 = vadd.f32 %v572, %v590
    %592 = vmatmul.bf16.gmra.mxu0 %v482
    %v593 = vpop.f32.mrf.mxu0
    %v594 = vadd.f32 %v575, %v593
    %v595 = vpop.f32.mrf.mxu0
    %v596 = vadd.f32 %v577, %v595
    %597 = vdwg.mxu0
    %598 = vmatpush.bf16.msra.mxu0 %v412
    %599 = vmatpush.bf16.msra.mxu0 %v408
    %600 = vmatpush.bf16.msra.mxu0 %v404
    %601 = vmatpush.bf16.msra.mxu0 %v400
    %602 = vmatpush.bf16.msra.mxu0 %v396
    %603 = vmatpush.bf16.msra.mxu0 %v392
    %604 = vmatpush.bf16.msra.mxu0 %v388
    %605 = vmatpush.bf16.msra.mxu0 %v384
    %606 = vmatmul.bf16.gmra.mxu0 %v231
    %v607 = vpop.f32.mrf.mxu0
    %v608 = vadd.f32 %v214, %v607
    %v609 = vpop.f32.mrf.mxu0
    %v610 = vadd.f32 %v214, %v609
    %611 = vmatmul.bf16.gmra.mxu0 %v233
    %v612 = vpop.f32.mrf.mxu0
    %v613 = vadd.f32 %v214, %v612
    %v614 = vpop.f32.mrf.mxu0
    %v615 = vadd.f32 %v214, %v614
    %616 = vdwg.mxu0
    %617 = vmatpush.bf16.msra.mxu0 0
    %618 = vmatpush.bf16.msra.mxu0 0
    %619 = vmatpush.bf16.msra.mxu0 0
    %620 = vmatpush.bf16.msra.mxu0 0
    %621 = vmatpush.bf16.msra.mxu0 %v428
    %622 = vmatpush.bf16.msra.mxu0 %v424
    %623 = vmatpush.bf16.msra.mxu0 %v420
    %624 = vmatpush.bf16.msra.mxu0 %v416
    %625 = vmatmul.bf16.gmra.mxu0 %v479
    %v626 = vpop.f32.mrf.mxu0
    %v627 = vadd.f32 %v608, %v626
    %v628 = vpop.f32.mrf.mxu0
    %v629 = vadd.f32 %v610, %v628
    %630 = vmatmul.bf16.gmra.mxu0 %v482
    %v631 = vpop.f32.mrf.mxu0
    %v632 = vadd.f32 %v613, %v631
    %v633 = vpop.f32.mrf.mxu0
    %v634 = vadd.f32 %v615, %v633
    %635 = vdwg.mxu0
    %v636 = vmax.f32 %v513, 0.0
    %v637 = vmax.f32 %v551, 0.0
    %v638 = vmax.f32 %v589, 0.0
    %v639 = vmax.f32 %v627, 0.0
    %v640 = vmax.f32 %v515, 0.0
    %v641 = vmax.f32 %v553, 0.0
    %v642 = vmax.f32 %v591, 0.0
    %v643 = vmax.f32 %v629, 0.0
    %v644 = vmax.f32 %v518, 0.0
    %v645 = vmax.f32 %v556, 0.0
    %v646 = vmax.f32 %v594, 0.0
    %v647 = vmax.f32 %v632, 0.0
    %v648 = vmax.f32 %v520, 0.0
    %v649 = vmax.f32 %v558, 0.0
    %v650 = vmax.f32 %v596, 0.0
    %v651 = vmax.f32 %v634, 0.0
    %v652 = vpack.c.bf16 %v637, %v636
    %v653 = vpack.c.bf16 %v639, %v638
    %v654 = vpack.c.bf16 %v641, %v640
    %v655 = vpack.c.bf16 %v643, %v642
    %v656 = vpack.c.bf16 %v645, %v644
    %v657 = vpack.c.bf16 %v647, %v646
    %v658 = vpack.c.bf16 %v649, %v648
    %v659 = vpack.c.bf16 %v651, %v650
    %660 = vst [vmem:[#allocation3] sm:$0xff] %v652
    %vm661 = vcmask 1043456
    %vm662 = vcmask 523268
    %vm663 = vmor %vm662, %vm661
    %664 = vst.msk [vmem:[#allocation3 + $0x8] sm:$0xff] %vm663, %v653
    %665 = vst [vmem:[#allocation3 + $0x10] sm:$0xff] %v654
    %666 = vst.msk [vmem:[#allocation3 + $0x18] sm:$0xff] %vm663, %v655
    %667 = vst [vmem:[#allocation3 + $0x20] sm:$0xff] %v656
    %668 = vst.msk [vmem:[#allocation3 + $0x28] sm:$0xff] %vm663, %v657
    %669 = vst [vmem:[#allocation3 + $0x30] sm:$0xff] %v658
    %670 = vst.msk [vmem:[#allocation3 + $0x38] sm:$0xff] %vm663, %v659
    %v671 = vld [vmem:[#allocation3] sm:$0xff]
    %v672 = vld [vmem:[#allocation3 + $0x8] sm:$0xff]
    %v673 = vld [vmem:[#allocation3 + $0x10] sm:$0x33]
    %v674 = vld [vmem:[#allocation3 + $0x18] sm:$0x33]
    %v675 = vld [vmem:[#allocation3 + $0x20] sm:$0xff]
    %v676 = vld [vmem:[#allocation3 + $0x28] sm:$0xff]
    %v677 = vld [vmem:[#allocation3 + $0x30] sm:$0x33]
    %v678 = vld [vmem:[#allocation3 + $0x38] sm:$0x33]
    %679 = vst [vmem:[#allocation4] sm:$0xff] %v671
    %680 = vst.msk [vmem:[#allocation4 + $0x8] sm:$0xff] %vm663, %v672
    %681 = vst [vmem:[#allocation4 + $0x2c] sm:$0x33] %v673
    %vm682 = vcmask 1041408
    %vm683 = vcmask 521220
    %vm684 = vmor %vm683, %vm682
    %685 = vst.msk [vmem:[#allocation4 + $0x34] sm:$0x33] %vm684, %v674
    %686 = vst [vmem:[#allocation4 + $0x58] sm:$0xff] %v675
    %687 = vst.msk [vmem:[#allocation4 + $0x60] sm:$0xff] %vm663, %v676
    %688 = vst [vmem:[#allocation4 + $0x84] sm:$0x33] %v677
    %689 = vst.msk [vmem:[#allocation4 + $0x8c] sm:$0x33] %vm684, %v678
    %v690 = vld [vmem:[#allocation3] sm:$0xff]
    %v691 = vld [vmem:[#allocation3 + $0x8] sm:$0xff]
    %v692 = vld [vmem:[#allocation3 + $0x10] sm:$0x77]
    %v693 = vld [vmem:[#allocation3 + $0x18] sm:$0x77]
    %v694 = vld [vmem:[#allocation3 + $0x20] sm:$0xff]
    %v695 = vld [vmem:[#allocation3 + $0x28] sm:$0xff]
    %v696 = vld [vmem:[#allocation3 + $0x30] sm:$0x77]
    %v697 = vld [vmem:[#allocation3 + $0x38] sm:$0x77]
    %v699 = vshrl.u32 %v690, 16
    %v701 = vrot.slane %v699, 4
    %v702 = vshll.u32 %v690, 16
    %v704 = vrot.slane %v702, 5
    %v705 = vor.u32 %v701, %v704
    %v706 = vrot.slane %v705, 4
    %v708 = vshll.u32 %v692, 16
    %v710 = vrot.slane %v708, 5
    %v711 = vsel %vm71, %v706, %v710
    %v713 = vshrl.u32 %v691, 16
    %v715 = vrot.slane %v713, 4
    %v716 = vshll.u32 %v691, 16
    %v718 = vrot.slane %v716, 5
    %v719 = vor.u32 %v715, %v718
    %v720 = vrot.slane %v719, 4
    %v722 = vshll.u32 %v693, 16
    %v724 = vrot.slane %v722, 5
    %v725 = vsel %vm71, %v720, %v724
    %v726 = vshrl.u32 %v692, 16
    %v728 = vrot.slane %v726, 4
    %v729 = vor.u32 %v728, %v710
    %v730 = vrot.slane %v729, 4
    %v731 = vshrl.u32 %v693, 16
    %v733 = vrot.slane %v731, 4
    %v734 = vor.u32 %v733, %v724
    %v735 = vrot.slane %v734, 4
    %v737 = vshrl.u32 %v694, 16
    %v739 = vrot.slane %v737, 4
    %v740 = vshll.u32 %v694, 16
    %v742 = vrot.slane %v740, 5
    %v743 = vor.u32 %v739, %v742
    %v744 = vrot.slane %v743, 4
    %v746 = vshll.u32 %v696, 16
    %v748 = vrot.slane %v746, 5
    %v749 = vsel %vm71, %v744, %v748
    %v751 = vshrl.u32 %v695, 16
    %v753 = vrot.slane %v751, 4
    %v754 = vshll.u32 %v695, 16
    %v756 = vrot.slane %v754, 5
    %v757 = vor.u32 %v753, %v756
    %v758 = vrot.slane %v757, 4
    %v760 = vshll.u32 %v697, 16
    %v762 = vrot.slane %v760, 5
    %v763 = vsel %vm71, %v758, %v762
    %v764 = vshrl.u32 %v696, 16
    %v766 = vrot.slane %v764, 4
    %v767 = vor.u32 %v766, %v748
    %v768 = vrot.slane %v767, 4
    %v769 = vshrl.u32 %v697, 16
    %v771 = vrot.slane %v769, 4
    %v772 = vor.u32 %v771, %v762
    %v773 = vrot.slane %v772, 4
    %774 = vrot.lane.b32.xlu0 %v711, 64
    %v775 = vpop.permute.xlu0 %774
    %776 = vrot.lane.b32.xlu0 %v725, 64
    %v777 = vpop.permute.xlu0 %776
    %778 = vrot.lane.b32.xlu0 %v730, 64
    %v779 = vpop.permute.xlu0 %778
    %780 = vrot.lane.b32.xlu0 %v735, 64
    %v781 = vpop.permute.xlu0 %780
    %782 = vrot.lane.b32.xlu0 %v749, 64
    %v783 = vpop.permute.xlu0 %782
    %784 = vrot.lane.b32.xlu0 %v763, 64
    %v785 = vpop.permute.xlu0 %784
    %786 = vrot.lane.b32.xlu0 %v768, 64
    %v787 = vpop.permute.xlu0 %786
    %788 = vrot.lane.b32.xlu0 %v773, 64
    %v789 = vpop.permute.xlu0 %788
    %v790 = vrot.slane %v775, 4
    %v791 = vrot.slane %v777, 4
    %v792 = vrot.slane %v779, 4
    %v793 = vrot.slane %v781, 4
    %v794 = vrot.slane %v783, 4
    %v795 = vrot.slane %v785, 4
    %v796 = vrot.slane %v787, 4
    %v797 = vrot.slane %v789, 4
    %vm798 = vcmask 523264
    %v799 = vsel %vm798, %v790, %v775
    %vm800 = vcmask 1043456
    %v801 = vsel %vm800, %v790, %v791
    %v802 = vsel %vm798, %v801, %v777
    %v803 = vsel %vm798, %v792, %v779
    %v804 = vsel %vm800, %v792, %v793
    %v805 = vsel %vm798, %v804, %v781
    %v806 = vsel %vm798, %v794, %v783
    %v807 = vsel %vm800, %v794, %v795
    %v808 = vsel %vm798, %v807, %v785
    %v809 = vsel %vm798, %v796, %v787
    %v810 = vsel %vm800, %v796, %v797
    %v811 = vsel %vm798, %v810, %v789
    %vm820 = vcmask 1047556
    %vm821 = vmor %vm820, %vm122
    %822 = vst.msk [vmem:[#allocation4 + $0xc] sm:$0xff] %vm821, %v799
    %823 = vst [vmem:[#allocation4 + $0x14] sm:$0xff] %v802
    %vm824 = vcmask 1041920
    %vm825 = vcmask 1045508
    %vm826 = vmor %vm825, %vm824
    %827 = vst.msk [vmem:[#allocation4 + $0x38] sm:$0x33] %vm826, %v803
    %828 = vst [vmem:[#allocation4 + $0x40] sm:$0x33] %v805
    %829 = vst.msk [vmem:[#allocation4 + $0x64] sm:$0xff] %vm821, %v806
    %830 = vst [vmem:[#allocation4 + $0x6c] sm:$0xff] %v808
    %831 = vst.msk [vmem:[#allocation4 + $0x90] sm:$0x33] %vm826, %v809
    %832 = vst [vmem:[#allocation4 + $0x98] sm:$0x33] %v811
    %v833 = vld [vmem:[#allocation3] sm:$0xee]
    %v834 = vld [vmem:[#allocation3 + $0x8] sm:$0xee]
    %v835 = vld [vmem:[#allocation3 + $0x10] sm:$0x77]
    %v836 = vld [vmem:[#allocation3 + $0x18] sm:$0x77]
    %v837 = vld [vmem:[#allocation3 + $0x20] sm:$0xee]
    %v838 = vld [vmem:[#allocation3 + $0x28] sm:$0xee]
    %v839 = vld [vmem:[#allocation3 + $0x30] sm:$0x77]
    %v840 = vld [vmem:[#allocation3 + $0x38] sm:$0x77]
    %v849 = vrot.slane %v833, 5
    %v850 = vrot.slane %v849, 4
    %v851 = vrot.slane %v835, 5
    %v852 = vsel %vm138, %v850, %v851
    %v853 = vrot.slane %v834, 5
    %v854 = vrot.slane %v853, 4
    %v855 = vrot.slane %v836, 5
    %v856 = vsel %vm138, %v854, %v855
    %v857 = vrot.slane %v851, 4
    %v858 = vrot.slane %v855, 4
    %v859 = vrot.slane %v837, 5
    %v860 = vrot.slane %v859, 4
    %v861 = vrot.slane %v839, 5
    %v862 = vsel %vm138, %v860, %v861
    %v863 = vrot.slane %v838, 5
    %v864 = vrot.slane %v863, 4
    %v865 = vrot.slane %v840, 5
    %v866 = vsel %vm138, %v864, %v865
    %v867 = vrot.slane %v861, 4
    %v868 = vrot.slane %v865, 4
    %877 = vst [vmem:[#allocation4 + $0x1c] sm:$0xff] %v852
    %878 = vst.msk [vmem:[#allocation4 + $0x24] sm:$0xff] %vm663, %v856
    %879 = vst [vmem:[#allocation4 + $0x48] sm:$0x33] %v857
    %880 = vst.msk [vmem:[#allocation4 + $0x50] sm:$0x33] %vm684, %v858
    %881 = vst [vmem:[#allocation4 + $0x74] sm:$0xff] %v862
    %882 = vst.msk [vmem:[#allocation4 + $0x7c] sm:$0xff] %vm663, %v866
    %883 = vst [vmem:[#allocation4 + $0xa0] sm:$0x33] %v867
    %884 = vst.msk [vmem:[#allocation4 + $0xa8] sm:$0x33] %vm684, %v868
    %v885 = vld [vmem:[#allocation4] sm:$0xff]
    %v886 = vld [vmem:[#allocation4 + $0x8] sm:$0xff]
    %v887 = vld [vmem:[#allocation4 + $0x10] sm:$0xff]
    %v888 = vld [vmem:[#allocation4 + $0x18] sm:$0xff]
    %v889 = vld [vmem:[#allocation4 + $0x20] sm:$0xff]
    %v890 = vld [vmem:[#allocation4 + $0x28] sm:$0xf]
    %v891 = vld [vmem:[#allocation4 + $0x2c] sm:$0xff]
    %v892 = vld [vmem:[#allocation4 + $0x34] sm:$0xff]
    %v893 = vld [vmem:[#allocation4 + $0x3c] sm:$0xff]
    %v894 = vld [vmem:[#allocation4 + $0x44] sm:$0xff]
    %v895 = vld [vmem:[#allocation4 + $0x4c] sm:$0xff]
    %v896 = vld [vmem:[#allocation4 + $0x54] sm:$0xf]
    %v897 = vld [vmem:[#allocation4 + $0x58] sm:$0xff]
    %v898 = vld [vmem:[#allocation4 + $0x60] sm:$0xff]
    %v899 = vld [vmem:[#allocation4 + $0x68] sm:$0xff]
    %v900 = vld [vmem:[#allocation4 + $0x70] sm:$0xff]
    %v901 = vld [vmem:[#allocation4 + $0x78] sm:$0xff]
    %v902 = vld [vmem:[#allocation4 + $0x80] sm:$0xf]
    %v903 = vld [vmem:[#allocation4 + $0x84] sm:$0xff]
    %v904 = vld [vmem:[#allocation4 + $0x8c] sm:$0xff]
    %v905 = vld [vmem:[#allocation4 + $0x94] sm:$0xff]
    %v906 = vld [vmem:[#allocation4 + $0x9c] sm:$0xff]
    %v907 = vld [vmem:[#allocation4 + $0xa4] sm:$0xff]
    %v908 = vld [vmem:[#allocation4 + $0xac] sm:$0xf]
    %v909 = vld [vmem:[%s3] sm:$0xff]
    %v910 = vld [vmem:[%s3 + $0x8] sm:$0xff]
    %v911 = vld [vmem:[%s3 + $0x10] sm:$0xff]
    %v912 = vld [vmem:[%s3 + $0x18] sm:$0xff]
    %v913 = vld [vmem:[%s3 + $0x20] sm:$0xff]
    %v914 = vld [vmem:[%s3 + $0x28] sm:$0xff]
    %v915 = vld [vmem:[%s3 + $0x30] sm:$0xff]
    %v916 = vld [vmem:[%s3 + $0x38] sm:$0xff]
    %v917 = vld [vmem:[%s3 + $0x40] sm:$0xff]
    %v918 = vld [vmem:[%s3 + $0x48] sm:$0xff]
    %v919 = vld [vmem:[%s3 + $0x50] sm:$0xff]
    %v920 = vld [vmem:[%s3 + $0x58] sm:$0xff]
    %v921 = vld [vmem:[%s3 + $0x60] sm:$0xff]
    %v922 = vld [vmem:[%s3 + $0x68] sm:$0xff]
    %v923 = vld [vmem:[%s3 + $0x70] sm:$0xff]
    %v924 = vld [vmem:[%s3 + $0x78] sm:$0xff]
    %v925 = vld [vmem:[%s3 + $0x80] sm:$0xff]
    %v926 = vld [vmem:[%s3 + $0x88] sm:$0xff]
    %v927 = vld [vmem:[%s3 + $0x90] sm:$0xff]
    %v928 = vld [vmem:[%s3 + $0x98] sm:$0xff]
    %v929 = vld [vmem:[%s3 + $0xa0] sm:$0xff]
    %v930 = vld [vmem:[%s3 + $0xa8] sm:$0xff]
    %v931 = vld [vmem:[%s3 + $0xb0] sm:$0xff]
    %v932 = vld [vmem:[%s3 + $0xb8] sm:$0xff]
    %v933 = vld [vmem:[%s3 + $0xc0] sm:$0xff]
    %v934 = vld [vmem:[%s3 + $0xc8] sm:$0xff]
    %v935 = vld [vmem:[%s3 + $0xd0] sm:$0xff]
    %v936 = vld [vmem:[%s3 + $0xd8] sm:$0xff]
    %v937 = vld [vmem:[%s3 + $0xe0] sm:$0xff]
    %v938 = vld [vmem:[%s3 + $0xe8] sm:$0xff]
    %v939 = vld [vmem:[%s3 + $0xf0] sm:$0xff]
    %v940 = vld [vmem:[%s3 + $0xf8] sm:$0xff]
    %v941 = vld [vmem:[%s3 + $0x100] sm:$0xff]
    %v942 = vld [vmem:[%s3 + $0x108] sm:$0xff]
    %v943 = vld [vmem:[%s3 + $0x110] sm:$0xff]
    %v944 = vld [vmem:[%s3 + $0x118] sm:$0xff]
    %v945 = vld [vmem:[%s3 + $0x120] sm:$0xff]
    %v946 = vld [vmem:[%s3 + $0x128] sm:$0xff]
    %v947 = vld [vmem:[%s3 + $0x130] sm:$0xff]
    %v948 = vld [vmem:[%s3 + $0x138] sm:$0xff]
    %v949 = vld [vmem:[%s3 + $0x140] sm:$0xff]
    %v950 = vld [vmem:[%s3 + $0x148] sm:$0xff]
    %v951 = vld [vmem:[%s3 + $0x150] sm:$0xff]
    %v952 = vld [vmem:[%s3 + $0x158] sm:$0xff]
    %v953 = vld [vmem:[%s3 + $0x160] sm:$0xff]
    %v954 = vld [vmem:[%s3 + $0x168] sm:$0xff]
    %v955 = vld [vmem:[%s3 + $0x170] sm:$0xff]
    %v956 = vld [vmem:[%s3 + $0x178] sm:$0xff]
    %v957 = vld [vmem:[%s3 + $0x180] sm:$0xff]
    %v958 = vld [vmem:[%s3 + $0x188] sm:$0xff]
    %v959 = vld [vmem:[%s3 + $0x190] sm:$0xff]
    %v960 = vld [vmem:[%s3 + $0x198] sm:$0xff]
    %v961 = vld [vmem:[%s3 + $0x1a0] sm:$0xff]
    %v962 = vld [vmem:[%s3 + $0x1a8] sm:$0xff]
    %v963 = vld [vmem:[%s3 + $0x1b0] sm:$0xff]
    %v964 = vld [vmem:[%s3 + $0x1b8] sm:$0xff]
    %v965 = vld [vmem:[%s3 + $0x1c0] sm:$0xff]
    %v966 = vld [vmem:[%s3 + $0x1c8] sm:$0xff]
    %v967 = vld [vmem:[%s3 + $0x1d0] sm:$0xff]
    %v968 = vld [vmem:[%s3 + $0x1d8] sm:$0xff]
    %v969 = vld [vmem:[%s3 + $0x1e0] sm:$0xff]
    %v970 = vld [vmem:[%s3 + $0x1e8] sm:$0xff]
    %v971 = vld [vmem:[%s3 + $0x1f0] sm:$0xff]
    %v972 = vld [vmem:[%s3 + $0x1f8] sm:$0xff]
    %v973 = vld [vmem:[%s3 + $0x200] sm:$0xff]
    %v974 = vld [vmem:[%s3 + $0x208] sm:$0xff]
    %v975 = vld [vmem:[%s3 + $0x210] sm:$0xff]
    %v976 = vld [vmem:[%s3 + $0x218] sm:$0xff]
    %v977 = vld [vmem:[%s3 + $0x220] sm:$0xff]
    %v978 = vld [vmem:[%s3 + $0x228] sm:$0xff]
    %v979 = vld [vmem:[%s3 + $0x230] sm:$0xff]
    %v980 = vld [vmem:[%s3 + $0x238] sm:$0xff]
    %v981 = vld [vmem:[%s3 + $0x240] sm:$0xff]
    %v982 = vld [vmem:[%s3 + $0x248] sm:$0xff]
    %v983 = vld [vmem:[%s3 + $0x250] sm:$0xff]
    %v984 = vld [vmem:[%s3 + $0x258] sm:$0xff]
    %v985 = vld [vmem:[%s3 + $0x260] sm:$0xff]
    %v986 = vld [vmem:[%s3 + $0x268] sm:$0xff]
    %v987 = vld [vmem:[%s3 + $0x270] sm:$0xff]
    %v988 = vld [vmem:[%s3 + $0x278] sm:$0xff]
    %v989 = vld [vmem:[%s3 + $0x280] sm:$0xff]
    %v990 = vld [vmem:[%s3 + $0x288] sm:$0xff]
    %v991 = vld [vmem:[%s3 + $0x290] sm:$0xff]
    %v992 = vld [vmem:[%s3 + $0x298] sm:$0xff]
    %v993 = vld [vmem:[%s3 + $0x2a0] sm:$0xff]
    %v994 = vld [vmem:[%s3 + $0x2a8] sm:$0xff]
    %v995 = vld [vmem:[%s3 + $0x2b0] sm:$0xff]
    %v996 = vld [vmem:[%s3 + $0x2b8] sm:$0xff]
    %v997 = vld [vmem:[%s3 + $0x2c0] sm:$0xff]
    %v998 = vld [vmem:[%s3 + $0x2c8] sm:$0xff]
    %v999 = vld [vmem:[%s3 + $0x2d0] sm:$0xff]
    %v1000 = vld [vmem:[%s3 + $0x2d8] sm:$0xff]
    %v1001 = vld [vmem:[%s3 + $0x2e0] sm:$0xff]
    %v1002 = vld [vmem:[%s3 + $0x2e8] sm:$0xff]
    %v1003 = vld [vmem:[%s3 + $0x2f0] sm:$0xff]
    %v1004 = vld [vmem:[%s3 + $0x2f8] sm:$0xff]
    %v1005 = vld [vmem:[%s3 + $0x300] sm:$0xff]
    %v1006 = vld [vmem:[%s3 + $0x308] sm:$0xff]
    %v1007 = vld [vmem:[%s3 + $0x310] sm:$0xff]
    %v1008 = vld [vmem:[%s3 + $0x318] sm:$0xff]
    %v1009 = vld [vmem:[%s3 + $0x320] sm:$0xff]
    %v1010 = vld [vmem:[%s3 + $0x328] sm:$0xff]
    %v1011 = vld [vmem:[%s3 + $0x330] sm:$0xff]
    %v1012 = vld [vmem:[%s3 + $0x338] sm:$0xff]
    %v1013 = vld [vmem:[%s3 + $0x340] sm:$0xff]
    %v1014 = vld [vmem:[%s3 + $0x348] sm:$0xff]
    %v1015 = vld [vmem:[%s3 + $0x350] sm:$0xff]
    %v1016 = vld [vmem:[%s3 + $0x358] sm:$0xff]
    %v1017 = vld [vmem:[%s3 + $0x360] sm:$0xff]
    %v1018 = vld [vmem:[%s3 + $0x368] sm:$0xff]
    %v1019 = vld [vmem:[%s3 + $0x370] sm:$0xff]
    %v1020 = vld [vmem:[%s3 + $0x378] sm:$0xff]
    %v1021 = vld [vmem:[%s3 + $0x380] sm:$0xff]
    %v1022 = vld [vmem:[%s3 + $0x388] sm:$0xff]
    %v1023 = vld [vmem:[%s3 + $0x390] sm:$0xff]
    %v1024 = vld [vmem:[%s3 + $0x398] sm:$0xff]
    %v1025 = vld [vmem:[%s3 + $0x3a0] sm:$0xff]
    %v1026 = vld [vmem:[%s3 + $0x3a8] sm:$0xff]
    %v1027 = vld [vmem:[%s3 + $0x3b0] sm:$0xff]
    %v1028 = vld [vmem:[%s3 + $0x3b8] sm:$0xff]
    %v1029 = vld [vmem:[%s3 + $0x3c0] sm:$0xff]
    %v1030 = vld [vmem:[%s3 + $0x3c8] sm:$0xff]
    %v1031 = vld [vmem:[%s3 + $0x3d0] sm:$0xff]
    %v1032 = vld [vmem:[%s3 + $0x3d8] sm:$0xff]
    %v1033 = vld [vmem:[%s3 + $0x3e0] sm:$0xff]
    %v1034 = vld [vmem:[%s3 + $0x3e8] sm:$0xff]
    %v1035 = vld [vmem:[%s3 + $0x3f0] sm:$0xff]
    %v1036 = vld [vmem:[%s3 + $0x3f8] sm:$0xff]
    %v1037 = vld [vmem:[%s3 + $0x400] sm:$0xff]
    %v1038 = vld [vmem:[%s3 + $0x408] sm:$0xff]
    %v1039 = vld [vmem:[%s3 + $0x410] sm:$0xff]
    %v1040 = vld [vmem:[%s3 + $0x418] sm:$0xff]
    %v1041 = vld [vmem:[%s3 + $0x420] sm:$0xff]
    %v1042 = vld [vmem:[%s3 + $0x428] sm:$0xff]
    %v1043 = vld [vmem:[%s3 + $0x430] sm:$0xff]
    %v1044 = vld [vmem:[%s3 + $0x438] sm:$0xff]
    %v1045 = vld [vmem:[%s3 + $0x440] sm:$0xff]
    %v1046 = vld [vmem:[%s3 + $0x448] sm:$0xff]
    %v1047 = vld [vmem:[%s3 + $0x450] sm:$0xff]
    %v1048 = vld [vmem:[%s3 + $0x458] sm:$0xff]
    %v1049 = vld [vmem:[%s3 + $0x460] sm:$0xff]
    %v1050 = vld [vmem:[%s3 + $0x468] sm:$0xff]
    %v1051 = vld [vmem:[%s3 + $0x470] sm:$0xff]
    %v1052 = vld [vmem:[%s3 + $0x478] sm:$0xff]
    %v1053 = vld [vmem:[%s3 + $0x480] sm:$0xff]
    %v1054 = vld [vmem:[%s3 + $0x488] sm:$0xff]
    %v1055 = vld [vmem:[%s3 + $0x490] sm:$0xff]
    %v1056 = vld [vmem:[%s3 + $0x498] sm:$0xff]
    %v1057 = vld [vmem:[%s3 + $0x4a0] sm:$0xff]
    %v1058 = vld [vmem:[%s3 + $0x4a8] sm:$0xff]
    %v1059 = vld [vmem:[%s3 + $0x4b0] sm:$0xff]
    %v1060 = vld [vmem:[%s3 + $0x4b8] sm:$0xff]
    %v1061 = vld [vmem:[%s3 + $0x4c0] sm:$0xff]
    %v1062 = vld [vmem:[%s3 + $0x4c8] sm:$0xff]
    %v1063 = vld [vmem:[%s3 + $0x4d0] sm:$0xff]
    %v1064 = vld [vmem:[%s3 + $0x4d8] sm:$0xff]
    %v1065 = vld [vmem:[%s3 + $0x4e0] sm:$0xff]
    %v1066 = vld [vmem:[%s3 + $0x4e8] sm:$0xff]
    %v1067 = vld [vmem:[%s3 + $0x4f0] sm:$0xff]
    %v1068 = vld [vmem:[%s3 + $0x4f8] sm:$0xff]
    %v1069 = vld [vmem:[%s3 + $0x500] sm:$0xff]
    %v1070 = vld [vmem:[%s3 + $0x508] sm:$0xff]
    %v1071 = vld [vmem:[%s3 + $0x510] sm:$0xff]
    %v1072 = vld [vmem:[%s3 + $0x518] sm:$0xff]
    %v1073 = vld [vmem:[%s3 + $0x520] sm:$0xff]
    %v1074 = vld [vmem:[%s3 + $0x528] sm:$0xff]
    %v1075 = vld [vmem:[%s3 + $0x530] sm:$0xff]
    %v1076 = vld [vmem:[%s3 + $0x538] sm:$0xff]
    %v1077 = vld [vmem:[%s3 + $0x540] sm:$0xff]
    %v1078 = vld [vmem:[%s3 + $0x548] sm:$0xff]
    %v1079 = vld [vmem:[%s3 + $0x550] sm:$0xff]
    %v1080 = vld [vmem:[%s3 + $0x558] sm:$0xff]
    %v1081 = vld [vmem:[%s3 + $0x560] sm:$0xff]
    %v1082 = vld [vmem:[%s3 + $0x568] sm:$0xff]
    %v1083 = vld [vmem:[%s3 + $0x570] sm:$0xff]
    %v1084 = vld [vmem:[%s3 + $0x578] sm:$0xff]
    %v1085 = vld [vmem:[%s3 + $0x580] sm:$0xff]
    %v1086 = vld [vmem:[%s3 + $0x588] sm:$0xff]
    %v1087 = vld [vmem:[%s3 + $0x590] sm:$0xff]
    %v1088 = vld [vmem:[%s3 + $0x598] sm:$0xff]
    %v1089 = vld [vmem:[%s3 + $0x5a0] sm:$0xff]
    %v1090 = vld [vmem:[%s3 + $0x5a8] sm:$0xff]
    %v1091 = vld [vmem:[%s3 + $0x5b0] sm:$0xff]
    %v1092 = vld [vmem:[%s3 + $0x5b8] sm:$0xff]
    %v1093 = vld [vmem:[%s3 + $0x5c0] sm:$0xff]
    %v1094 = vld [vmem:[%s3 + $0x5c8] sm:$0xff]
    %v1095 = vld [vmem:[%s3 + $0x5d0] sm:$0xff]
    %v1096 = vld [vmem:[%s3 + $0x5d8] sm:$0xff]
    %v1097 = vld [vmem:[%s3 + $0x5e0] sm:$0xff]
    %v1098 = vld [vmem:[%s3 + $0x5e8] sm:$0xff]
    %v1099 = vld [vmem:[%s3 + $0x5f0] sm:$0xff]
    %v1100 = vld [vmem:[%s3 + $0x5f8] sm:$0xff]
    %v1101 = vld [vmem:[%s3 + $0x600] sm:$0xff]
    %v1102 = vld [vmem:[%s3 + $0x608] sm:$0xff]
    %v1103 = vld [vmem:[%s3 + $0x610] sm:$0xff]
    %v1104 = vld [vmem:[%s3 + $0x618] sm:$0xff]
    %v1105 = vld [vmem:[%s3 + $0x620] sm:$0xff]
    %v1106 = vld [vmem:[%s3 + $0x628] sm:$0xff]
    %v1107 = vld [vmem:[%s3 + $0x630] sm:$0xff]
    %v1108 = vld [vmem:[%s3 + $0x638] sm:$0xff]
    %v1109 = vld [vmem:[%s3 + $0x640] sm:$0xff]
    %v1110 = vld [vmem:[%s3 + $0x648] sm:$0xff]
    %v1111 = vld [vmem:[%s3 + $0x650] sm:$0xff]
    %v1112 = vld [vmem:[%s3 + $0x658] sm:$0xff]
    %v1113 = vld [vmem:[%s3 + $0x660] sm:$0xff]
    %v1114 = vld [vmem:[%s3 + $0x668] sm:$0xff]
    %v1115 = vld [vmem:[%s3 + $0x670] sm:$0xff]
    %v1116 = vld [vmem:[%s3 + $0x678] sm:$0xff]
    %v1117 = vld [vmem:[%s3 + $0x680] sm:$0xff]
    %v1118 = vld [vmem:[%s3 + $0x688] sm:$0xff]
    %v1119 = vld [vmem:[%s3 + $0x690] sm:$0xff]
    %v1120 = vld [vmem:[%s3 + $0x698] sm:$0xff]
    %v1121 = vld [vmem:[%s3 + $0x6a0] sm:$0xff]
    %v1122 = vld [vmem:[%s3 + $0x6a8] sm:$0xff]
    %v1123 = vld [vmem:[%s3 + $0x6b0] sm:$0xff]
    %v1124 = vld [vmem:[%s3 + $0x6b8] sm:$0xff]
    %v1125 = vld [vmem:[%s3 + $0x6c0] sm:$0xff]
    %v1126 = vld [vmem:[%s3 + $0x6c8] sm:$0xff]
    %v1127 = vld [vmem:[%s3 + $0x6d0] sm:$0xff]
    %v1128 = vld [vmem:[%s3 + $0x6d8] sm:$0xff]
    %v1129 = vld [vmem:[%s3 + $0x6e0] sm:$0xff]
    %v1130 = vld [vmem:[%s3 + $0x6e8] sm:$0xff]
    %v1131 = vld [vmem:[%s3 + $0x6f0] sm:$0xff]
    %v1132 = vld [vmem:[%s3 + $0x6f8] sm:$0xff]
    %v1133 = vld [vmem:[%s3 + $0x700] sm:$0xff]
    %v1134 = vld [vmem:[%s3 + $0x708] sm:$0xff]
    %v1135 = vld [vmem:[%s3 + $0x710] sm:$0xff]
    %v1136 = vld [vmem:[%s3 + $0x718] sm:$0xff]
    %v1137 = vld [vmem:[%s3 + $0x720] sm:$0xff]
    %v1138 = vld [vmem:[%s3 + $0x728] sm:$0xff]
    %v1139 = vld [vmem:[%s3 + $0x730] sm:$0xff]
    %v1140 = vld [vmem:[%s3 + $0x738] sm:$0xff]
    %v1141 = vld [vmem:[%s3 + $0x740] sm:$0xff]
    %v1142 = vld [vmem:[%s3 + $0x748] sm:$0xff]
    %v1143 = vld [vmem:[%s3 + $0x750] sm:$0xff]
    %v1144 = vld [vmem:[%s3 + $0x758] sm:$0xff]
    %v1145 = vld [vmem:[%s3 + $0x760] sm:$0xff]
    %v1146 = vld [vmem:[%s3 + $0x768] sm:$0xff]
    %v1147 = vld [vmem:[%s3 + $0x770] sm:$0xff]
    %v1148 = vld [vmem:[%s3 + $0x778] sm:$0xff]
    %v1149 = vld [vmem:[%s3 + $0x780] sm:$0xff]
    %v1150 = vld [vmem:[%s3 + $0x788] sm:$0xff]
    %v1151 = vld [vmem:[%s3 + $0x790] sm:$0xff]
    %v1152 = vld [vmem:[%s3 + $0x798] sm:$0xff]
    %v1153 = vld [vmem:[%s3 + $0x7a0] sm:$0xff]
    %v1154 = vld [vmem:[%s3 + $0x7a8] sm:$0xff]
    %v1155 = vld [vmem:[%s3 + $0x7b0] sm:$0xff]
    %v1156 = vld [vmem:[%s3 + $0x7b8] sm:$0xff]
    %v1157 = vld [vmem:[%s3 + $0x7c0] sm:$0xff]
    %v1158 = vld [vmem:[%s3 + $0x7c8] sm:$0xff]
    %v1159 = vld [vmem:[%s3 + $0x7d0] sm:$0xff]
    %v1160 = vld [vmem:[%s3 + $0x7d8] sm:$0xff]
    %v1161 = vld [vmem:[%s3 + $0x7e0] sm:$0xff]
    %v1162 = vld [vmem:[%s3 + $0x7e8] sm:$0xff]
    %v1163 = vld [vmem:[%s3 + $0x7f0] sm:$0xff]
    %v1164 = vld [vmem:[%s3 + $0x7f8] sm:$0xff]
    %v1165 = vld [vmem:[%s3 + $0x800] sm:$0xff]
    %v1166 = vld [vmem:[%s3 + $0x808] sm:$0xff]
    %v1167 = vld [vmem:[%s3 + $0x810] sm:$0xff]
    %v1168 = vld [vmem:[%s3 + $0x818] sm:$0xff]
    %v1169 = vld [vmem:[%s3 + $0x820] sm:$0xff]
    %v1170 = vld [vmem:[%s3 + $0x828] sm:$0xff]
    %v1171 = vld [vmem:[%s3 + $0x830] sm:$0xff]
    %v1172 = vld [vmem:[%s3 + $0x838] sm:$0xff]
    %v1173 = vld [vmem:[%s3 + $0x840] sm:$0xff]
    %v1174 = vld [vmem:[%s3 + $0x848] sm:$0xff]
    %v1175 = vld [vmem:[%s3 + $0x850] sm:$0xff]
    %v1176 = vld [vmem:[%s3 + $0x858] sm:$0xff]
    %v1177 = vld [vmem:[%s3 + $0x860] sm:$0xff]
    %v1178 = vld [vmem:[%s3 + $0x868] sm:$0xff]
    %v1179 = vld [vmem:[%s3 + $0x870] sm:$0xff]
    %v1180 = vld [vmem:[%s3 + $0x878] sm:$0xff]
    %v1181 = vld [vmem:[%s3 + $0x880] sm:$0xff]
    %v1182 = vld [vmem:[%s3 + $0x888] sm:$0xff]
    %v1183 = vld [vmem:[%s3 + $0x890] sm:$0xff]
    %v1184 = vld [vmem:[%s3 + $0x898] sm:$0xff]
    %v1185 = vld [vmem:[%s3 + $0x8a0] sm:$0xff]
    %v1186 = vld [vmem:[%s3 + $0x8a8] sm:$0xff]
    %v1187 = vld [vmem:[%s3 + $0x8b0] sm:$0xff]
    %v1188 = vld [vmem:[%s3 + $0x8b8] sm:$0xff]
    %v1189 = vld [vmem:[%s3 + $0x8c0] sm:$0xff]
    %v1190 = vld [vmem:[%s3 + $0x8c8] sm:$0xff]
    %v1191 = vld [vmem:[%s3 + $0x8d0] sm:$0xff]
    %v1192 = vld [vmem:[%s3 + $0x8d8] sm:$0xff]
    %v1193 = vld [vmem:[%s3 + $0x8e0] sm:$0xff]
    %v1194 = vld [vmem:[%s3 + $0x8e8] sm:$0xff]
    %v1195 = vld [vmem:[%s3 + $0x8f0] sm:$0xff]
    %v1196 = vld [vmem:[%s3 + $0x8f8] sm:$0xff]
    %v1197 = vld [vmem:[%s3 + $0x900] sm:$0xff]
    %v1198 = vld [vmem:[%s3 + $0x908] sm:$0xff]
    %v1199 = vld [vmem:[%s3 + $0x910] sm:$0xff]
    %v1200 = vld [vmem:[%s3 + $0x918] sm:$0xff]
    %v1201 = vld [vmem:[%s3 + $0x920] sm:$0xff]
    %v1202 = vld [vmem:[%s3 + $0x928] sm:$0xff]
    %v1203 = vld [vmem:[%s3 + $0x930] sm:$0xff]
    %v1204 = vld [vmem:[%s3 + $0x938] sm:$0xff]
    %v1205 = vld [vmem:[%s3 + $0x940] sm:$0xff]
    %v1206 = vld [vmem:[%s3 + $0x948] sm:$0xff]
    %v1207 = vld [vmem:[%s3 + $0x950] sm:$0xff]
    %v1208 = vld [vmem:[%s3 + $0x958] sm:$0xff]
    %v1209 = vld [vmem:[%s3 + $0x960] sm:$0xff]
    %v1210 = vld [vmem:[%s3 + $0x968] sm:$0xff]
    %v1211 = vld [vmem:[%s3 + $0x970] sm:$0xff]
    %v1212 = vld [vmem:[%s3 + $0x978] sm:$0xff]
    %v1213 = vld [vmem:[%s3 + $0x980] sm:$0xff]
    %v1214 = vld [vmem:[%s3 + $0x988] sm:$0xff]
    %v1215 = vld [vmem:[%s3 + $0x990] sm:$0xff]
    %v1216 = vld [vmem:[%s3 + $0x998] sm:$0xff]
    %v1217 = vld [vmem:[%s3 + $0x9a0] sm:$0xff]
    %v1218 = vld [vmem:[%s3 + $0x9a8] sm:$0xff]
    %v1219 = vld [vmem:[%s3 + $0x9b0] sm:$0xff]
    %v1220 = vld [vmem:[%s3 + $0x9b8] sm:$0xff]
    %v1221 = vld [vmem:[%s3 + $0x9c0] sm:$0xff]
    %v1222 = vld [vmem:[%s3 + $0x9c8] sm:$0xff]
    %v1223 = vld [vmem:[%s3 + $0x9d0] sm:$0xff]
    %v1224 = vld [vmem:[%s3 + $0x9d8] sm:$0xff]
    %v1225 = vld [vmem:[%s3 + $0x9e0] sm:$0xff]
    %v1226 = vld [vmem:[%s3 + $0x9e8] sm:$0xff]
    %v1227 = vld [vmem:[%s3 + $0x9f0] sm:$0xff]
    %v1228 = vld [vmem:[%s3 + $0x9f8] sm:$0xff]
    %v1229 = vld [vmem:[%s3 + $0xa00] sm:$0xff]
    %v1230 = vld [vmem:[%s3 + $0xa08] sm:$0xff]
    %v1231 = vld [vmem:[%s3 + $0xa10] sm:$0xff]
    %v1232 = vld [vmem:[%s3 + $0xa18] sm:$0xff]
    %v1233 = vld [vmem:[%s3 + $0xa20] sm:$0xff]
    %v1234 = vld [vmem:[%s3 + $0xa28] sm:$0xff]
    %v1235 = vld [vmem:[%s3 + $0xa30] sm:$0xff]
    %v1236 = vld [vmem:[%s3 + $0xa38] sm:$0xff]
    %v1237 = vld [vmem:[%s3 + $0xa40] sm:$0xff]
    %v1238 = vld [vmem:[%s3 + $0xa48] sm:$0xff]
    %v1239 = vld [vmem:[%s3 + $0xa50] sm:$0xff]
    %v1240 = vld [vmem:[%s3 + $0xa58] sm:$0xff]
    %v1241 = vld [vmem:[%s3 + $0xa60] sm:$0xff]
    %v1242 = vld [vmem:[%s3 + $0xa68] sm:$0xff]
    %v1243 = vld [vmem:[%s3 + $0xa70] sm:$0xff]
    %v1244 = vld [vmem:[%s3 + $0xa78] sm:$0xff]
    %v1245 = vld [vmem:[%s3 + $0xa80] sm:$0xff]
    %v1246 = vld [vmem:[%s3 + $0xa88] sm:$0xff]
    %v1247 = vld [vmem:[%s3 + $0xa90] sm:$0xff]
    %v1248 = vld [vmem:[%s3 + $0xa98] sm:$0xff]
    %v1249 = vld [vmem:[%s3 + $0xaa0] sm:$0xff]
    %v1250 = vld [vmem:[%s3 + $0xaa8] sm:$0xff]
    %v1251 = vld [vmem:[%s3 + $0xab0] sm:$0xff]
    %v1252 = vld [vmem:[%s3 + $0xab8] sm:$0xff]
    %v1253 = vld [vmem:[%s3 + $0xac0] sm:$0xff]
    %v1254 = vld [vmem:[%s3 + $0xac8] sm:$0xff]
    %v1255 = vld [vmem:[%s3 + $0xad0] sm:$0xff]
    %v1256 = vld [vmem:[%s3 + $0xad8] sm:$0xff]
    %v1257 = vld [vmem:[%s3 + $0xae0] sm:$0xff]
    %v1258 = vld [vmem:[%s3 + $0xae8] sm:$0xff]
    %v1259 = vld [vmem:[%s3 + $0xaf0] sm:$0xff]
    %v1260 = vld [vmem:[%s3 + $0xaf8] sm:$0xff]
    %v1261 = vld [vmem:[%s3 + $0xb00] sm:$0xff]
    %v1262 = vld [vmem:[%s3 + $0xb08] sm:$0xff]
    %v1263 = vld [vmem:[%s3 + $0xb10] sm:$0xff]
    %v1264 = vld [vmem:[%s3 + $0xb18] sm:$0xff]
    %v1265 = vld [vmem:[%s3 + $0xb20] sm:$0xff]
    %v1266 = vld [vmem:[%s3 + $0xb28] sm:$0xff]
    %v1267 = vld [vmem:[%s3 + $0xb30] sm:$0xff]
    %v1268 = vld [vmem:[%s3 + $0xb38] sm:$0xff]
    %v1269 = vld [vmem:[%s3 + $0xb40] sm:$0xff]
    %v1270 = vld [vmem:[%s3 + $0xb48] sm:$0xff]
    %v1271 = vld [vmem:[%s3 + $0xb50] sm:$0xff]
    %v1272 = vld [vmem:[%s3 + $0xb58] sm:$0xff]
    %v1273 = vld [vmem:[%s3 + $0xb60] sm:$0xff]
    %v1274 = vld [vmem:[%s3 + $0xb68] sm:$0xff]
    %v1275 = vld [vmem:[%s3 + $0xb70] sm:$0xff]
    %v1276 = vld [vmem:[%s3 + $0xb78] sm:$0xff]
    %v1277 = vld [vmem:[%s3 + $0xb80] sm:$0xff]
    %v1278 = vld [vmem:[%s3 + $0xb88] sm:$0xff]
    %v1279 = vld [vmem:[%s3 + $0xb90] sm:$0xff]
    %v1280 = vld [vmem:[%s3 + $0xb98] sm:$0xff]
    %v1281 = vld [vmem:[%s3 + $0xba0] sm:$0xff]
    %v1282 = vld [vmem:[%s3 + $0xba8] sm:$0xff]
    %v1283 = vld [vmem:[%s3 + $0xbb0] sm:$0xff]
    %v1284 = vld [vmem:[%s3 + $0xbb8] sm:$0xff]
    %v1285 = vld [vmem:[%s3 + $0xbc0] sm:$0xff]
    %v1286 = vld [vmem:[%s3 + $0xbc8] sm:$0xff]
    %v1287 = vld [vmem:[%s3 + $0xbd0] sm:$0xff]
    %v1288 = vld [vmem:[%s3 + $0xbd8] sm:$0xff]
    %v1289 = vld [vmem:[%s3 + $0xbe0] sm:$0xff]
    %v1290 = vld [vmem:[%s3 + $0xbe8] sm:$0xff]
    %v1291 = vld [vmem:[%s3 + $0xbf0] sm:$0xff]
    %v1292 = vld [vmem:[%s3 + $0xbf8] sm:$0xff]
    %v1293 = vld [vmem:[%s3 + $0xc00] sm:$0xff]
    %v1294 = vld [vmem:[%s3 + $0xc08] sm:$0xff]
    %v1295 = vld [vmem:[%s3 + $0xc10] sm:$0xff]
    %v1296 = vld [vmem:[%s3 + $0xc18] sm:$0xff]
    %v1297 = vld [vmem:[%s3 + $0xc20] sm:$0xff]
    %v1298 = vld [vmem:[%s3 + $0xc28] sm:$0xff]
    %v1299 = vld [vmem:[%s3 + $0xc30] sm:$0xff]
    %v1300 = vld [vmem:[%s3 + $0xc38] sm:$0xff]
    %v1301 = vld [vmem:[%s3 + $0xc40] sm:$0xff]
    %v1302 = vld [vmem:[%s3 + $0xc48] sm:$0xff]
    %v1303 = vld [vmem:[%s3 + $0xc50] sm:$0xff]
    %v1304 = vld [vmem:[%s3 + $0xc58] sm:$0xff]
    %v1305 = vld [vmem:[%s3 + $0xc60] sm:$0xff]
    %v1306 = vld [vmem:[%s3 + $0xc68] sm:$0xff]
    %v1307 = vld [vmem:[%s3 + $0xc70] sm:$0xff]
    %v1308 = vld [vmem:[%s3 + $0xc78] sm:$0xff]
    %v1309 = vld [vmem:[%s3 + $0xc80] sm:$0xff]
    %v1310 = vld [vmem:[%s3 + $0xc88] sm:$0xff]
    %v1311 = vld [vmem:[%s3 + $0xc90] sm:$0xff]
    %v1312 = vld [vmem:[%s3 + $0xc98] sm:$0xff]
    %v1313 = vld [vmem:[%s3 + $0xca0] sm:$0xff]
    %v1314 = vld [vmem:[%s3 + $0xca8] sm:$0xff]
    %v1315 = vld [vmem:[%s3 + $0xcb0] sm:$0xff]
    %v1316 = vld [vmem:[%s3 + $0xcb8] sm:$0xff]
    %v1317 = vld [vmem:[%s3 + $0xcc0] sm:$0xff]
    %v1318 = vld [vmem:[%s3 + $0xcc8] sm:$0xff]
    %v1319 = vld [vmem:[%s3 + $0xcd0] sm:$0xff]
    %v1320 = vld [vmem:[%s3 + $0xcd8] sm:$0xff]
    %v1321 = vld [vmem:[%s3 + $0xce0] sm:$0xff]
    %v1322 = vld [vmem:[%s3 + $0xce8] sm:$0xff]
    %v1323 = vld [vmem:[%s3 + $0xcf0] sm:$0xff]
    %v1324 = vld [vmem:[%s3 + $0xcf8] sm:$0xff]
    %v1325 = vld [vmem:[%s3 + $0xd00] sm:$0xff]
    %v1326 = vld [vmem:[%s3 + $0xd08] sm:$0xff]
    %v1327 = vld [vmem:[%s3 + $0xd10] sm:$0xff]
    %v1328 = vld [vmem:[%s3 + $0xd18] sm:$0xff]
    %v1329 = vld [vmem:[%s3 + $0xd20] sm:$0xff]
    %v1330 = vld [vmem:[%s3 + $0xd28] sm:$0xff]
    %v1331 = vld [vmem:[%s3 + $0xd30] sm:$0xff]
    %v1332 = vld [vmem:[%s3 + $0xd38] sm:$0xff]
    %v1333 = vld [vmem:[%s3 + $0xd40] sm:$0xff]
    %v1334 = vld [vmem:[%s3 + $0xd48] sm:$0xff]
    %v1335 = vld [vmem:[%s3 + $0xd50] sm:$0xff]
    %v1336 = vld [vmem:[%s3 + $0xd58] sm:$0xff]
    %v1337 = vld [vmem:[%s3 + $0xd60] sm:$0xff]
    %v1338 = vld [vmem:[%s3 + $0xd68] sm:$0xff]
    %v1339 = vld [vmem:[%s3 + $0xd70] sm:$0xff]
    %v1340 = vld [vmem:[%s3 + $0xd78] sm:$0xff]
    %v1341 = vld [vmem:[%s3 + $0xd80] sm:$0xff]
    %v1342 = vld [vmem:[%s3 + $0xd88] sm:$0xff]
    %v1343 = vld [vmem:[%s3 + $0xd90] sm:$0xff]
    %v1344 = vld [vmem:[%s3 + $0xd98] sm:$0xff]
    %v1345 = vld [vmem:[%s3 + $0xda0] sm:$0xff]
    %v1346 = vld [vmem:[%s3 + $0xda8] sm:$0xff]
    %v1347 = vld [vmem:[%s3 + $0xdb0] sm:$0xff]
    %v1348 = vld [vmem:[%s3 + $0xdb8] sm:$0xff]
    %v1349 = vld [vmem:[%s3 + $0xdc0] sm:$0xff]
    %v1350 = vld [vmem:[%s3 + $0xdc8] sm:$0xff]
    %v1351 = vld [vmem:[%s3 + $0xdd0] sm:$0xff]
    %v1352 = vld [vmem:[%s3 + $0xdd8] sm:$0xff]
    %v1353 = vld [vmem:[%s3 + $0xde0] sm:$0xff]
    %v1354 = vld [vmem:[%s3 + $0xde8] sm:$0xff]
    %v1355 = vld [vmem:[%s3 + $0xdf0] sm:$0xff]
    %v1356 = vld [vmem:[%s3 + $0xdf8] sm:$0xff]
    %v1357 = vld [vmem:[%s3 + $0xe00] sm:$0xff]
    %v1358 = vld [vmem:[%s3 + $0xe08] sm:$0xff]
    %v1359 = vld [vmem:[%s3 + $0xe10] sm:$0xff]
    %v1360 = vld [vmem:[%s3 + $0xe18] sm:$0xff]
    %v1361 = vld [vmem:[%s3 + $0xe20] sm:$0xff]
    %v1362 = vld [vmem:[%s3 + $0xe28] sm:$0xff]
    %v1363 = vld [vmem:[%s3 + $0xe30] sm:$0xff]
    %v1364 = vld [vmem:[%s3 + $0xe38] sm:$0xff]
    %v1365 = vld [vmem:[%s3 + $0xe40] sm:$0xff]
    %v1366 = vld [vmem:[%s3 + $0xe48] sm:$0xff]
    %v1367 = vld [vmem:[%s3 + $0xe50] sm:$0xff]
    %v1368 = vld [vmem:[%s3 + $0xe58] sm:$0xff]
    %v1369 = vld [vmem:[%s3 + $0xe60] sm:$0xff]
    %v1370 = vld [vmem:[%s3 + $0xe68] sm:$0xff]
    %v1371 = vld [vmem:[%s3 + $0xe70] sm:$0xff]
    %v1372 = vld [vmem:[%s3 + $0xe78] sm:$0xff]
    %v1373 = vld [vmem:[%s3 + $0xe80] sm:$0xff]
    %v1374 = vld [vmem:[%s3 + $0xe88] sm:$0xff]
    %v1375 = vld [vmem:[%s3 + $0xe90] sm:$0xff]
    %v1376 = vld [vmem:[%s3 + $0xe98] sm:$0xff]
    %v1377 = vld [vmem:[%s3 + $0xea0] sm:$0xff]
    %v1378 = vld [vmem:[%s3 + $0xea8] sm:$0xff]
    %v1379 = vld [vmem:[%s3 + $0xeb0] sm:$0xff]
    %v1380 = vld [vmem:[%s3 + $0xeb8] sm:$0xff]
    %v1381 = vld [vmem:[%s3 + $0xec0] sm:$0xff]
    %v1382 = vld [vmem:[%s3 + $0xec8] sm:$0xff]
    %v1383 = vld [vmem:[%s3 + $0xed0] sm:$0xff]
    %v1384 = vld [vmem:[%s3 + $0xed8] sm:$0xff]
    %v1385 = vld [vmem:[%s3 + $0xee0] sm:$0xff]
    %v1386 = vld [vmem:[%s3 + $0xee8] sm:$0xff]
    %v1387 = vld [vmem:[%s3 + $0xef0] sm:$0xff]
    %v1388 = vld [vmem:[%s3 + $0xef8] sm:$0xff]
    %v1389 = vld [vmem:[%s3 + $0xf00] sm:$0xff]
    %v1390 = vld [vmem:[%s3 + $0xf08] sm:$0xff]
    %v1391 = vld [vmem:[%s3 + $0xf10] sm:$0xff]
    %v1392 = vld [vmem:[%s3 + $0xf18] sm:$0xff]
    %v1393 = vld [vmem:[%s3 + $0xf20] sm:$0xff]
    %v1394 = vld [vmem:[%s3 + $0xf28] sm:$0xff]
    %v1395 = vld [vmem:[%s3 + $0xf30] sm:$0xff]
    %v1396 = vld [vmem:[%s3 + $0xf38] sm:$0xff]
    %v1397 = vld [vmem:[%s3 + $0xf40] sm:$0xff]
    %v1398 = vld [vmem:[%s3 + $0xf48] sm:$0xff]
    %v1399 = vld [vmem:[%s3 + $0xf50] sm:$0xff]
    %v1400 = vld [vmem:[%s3 + $0xf58] sm:$0xff]
    %v1401 = vld [vmem:[%s3 + $0xf60] sm:$0xff]
    %v1402 = vld [vmem:[%s3 + $0xf68] sm:$0xff]
    %v1403 = vld [vmem:[%s3 + $0xf70] sm:$0xff]
    %v1404 = vld [vmem:[%s3 + $0xf78] sm:$0xff]
    %v1405 = vld [vmem:[%s3 + $0xf80] sm:$0xff]
    %v1406 = vld [vmem:[%s3 + $0xf88] sm:$0xff]
    %v1407 = vld [vmem:[%s3 + $0xf90] sm:$0xff]
    %v1408 = vld [vmem:[%s3 + $0xf98] sm:$0xff]
    %v1409 = vld [vmem:[%s3 + $0xfa0] sm:$0xff]
    %v1410 = vld [vmem:[%s3 + $0xfa8] sm:$0xff]
    %v1411 = vld [vmem:[%s3 + $0xfb0] sm:$0xff]
    %v1412 = vld [vmem:[%s3 + $0xfb8] sm:$0xff]
    %v1413 = vld [vmem:[%s4] sm:$0x3f]
    %v1415 = vperm.slane %v1413, 0
    %v1416 = vperm.slane %v1413, 1
    %v1417 = vperm.slane %v1413, 2
    %v1418 = vperm.slane %v1413, 3
    %v1419 = vperm.slane %v1413, 4
    %v1420 = vperm.slane %v1413, 5
    %v1451 = vunpack.c.l.b16 %v885
    %v1452 = vunpack.c.h.b16 %v885
    %v1453 = vunpack.c.l.b16 %v886
    %v1454 = vunpack.c.h.b16 %v886
    %v1455 = vunpack.c.l.b16 %v887
    %v1456 = vunpack.c.h.b16 %v887
    %v1457 = vunpack.c.l.b16 %v888
    %v1458 = vunpack.c.h.b16 %v888
    %v1459 = vunpack.c.l.b16 %v889
    %v1460 = vunpack.c.h.b16 %v889
    %v1461 = vunpack.c.l.b16 %v890
    %v1462 = vunpack.c.l.b16 %v891
    %v1463 = vunpack.c.h.b16 %v891
    %v1464 = vunpack.c.l.b16 %v892
    %v1465 = vunpack.c.h.b16 %v892
    %v1466 = vunpack.c.l.b16 %v893
    %v1467 = vunpack.c.h.b16 %v893
    %v1468 = vunpack.c.l.b16 %v894
    %v1469 = vunpack.c.h.b16 %v894
    %v1470 = vunpack.c.l.b16 %v895
    %v1471 = vunpack.c.h.b16 %v895
    %v1472 = vunpack.c.l.b16 %v896
    %v1473 = vunpack.c.l.b16 %v897
    %v1474 = vunpack.c.h.b16 %v897
    %v1475 = vunpack.c.l.b16 %v898
    %v1476 = vunpack.c.h.b16 %v898
    %v1477 = vunpack.c.l.b16 %v899
    %v1478 = vunpack.c.h.b16 %v899
    %v1479 = vunpack.c.l.b16 %v900
    %v1480 = vunpack.c.h.b16 %v900
    %v1481 = vunpack.c.l.b16 %v901
    %v1482 = vunpack.c.h.b16 %v901
    %v1483 = vunpack.c.l.b16 %v902
    %v1484 = vunpack.c.l.b16 %v903
    %v1485 = vunpack.c.h.b16 %v903
    %v1486 = vunpack.c.l.b16 %v904
    %v1487 = vunpack.c.h.b16 %v904
    %v1488 = vunpack.c.l.b16 %v905
    %v1489 = vunpack.c.h.b16 %v905
    %v1490 = vunpack.c.l.b16 %v906
    %v1491 = vunpack.c.h.b16 %v906
    %v1492 = vunpack.c.l.b16 %v907
    %v1493 = vunpack.c.h.b16 %v907
    %v1494 = vunpack.c.l.b16 %v908
    %v1495 = vpack.c.b16 %v1462, %v1451
    %v1496 = vpack.c.b16 %v1463, %v1452
    %v1497 = vpack.c.b16 %v1464, %v1453
    %v1498 = vpack.c.b16 %v1465, %v1454
    %v1499 = vpack.c.b16 %v1466, %v1455
    %v1500 = vpack.c.b16 %v1467, %v1456
    %v1501 = vpack.c.b16 %v1468, %v1457
    %v1502 = vpack.c.b16 %v1469, %v1458
    %v1503 = vpack.c.b16 %v1470, %v1459
    %v1504 = vpack.c.b16 %v1471, %v1460
    %v1505 = vpack.c.b16 %v1472, %v1461
    %v1506 = vpack.c.b16 %v1484, %v1473
    %v1507 = vpack.c.b16 %v1485, %v1474
    %v1508 = vpack.c.b16 %v1486, %v1475
    %v1509 = vpack.c.b16 %v1487, %v1476
    %v1510 = vpack.c.b16 %v1488, %v1477
    %v1511 = vpack.c.b16 %v1489, %v1478
    %v1512 = vpack.c.b16 %v1490, %v1479
    %v1513 = vpack.c.b16 %v1491, %v1480
    %v1514 = vpack.c.b16 %v1492, %v1481
    %v1515 = vpack.c.b16 %v1493, %v1482
    %v1516 = vpack.c.b16 %v1494, %v1483
    %v2041 = vunpack.c.l.b16 %v909
    %v2042 = vunpack.c.h.b16 %v909
    %v2043 = vunpack.c.l.b16 %v910
    %v2044 = vunpack.c.h.b16 %v910
    %v2045 = vunpack.c.l.b16 %v911
    %v2046 = vunpack.c.h.b16 %v911
    %v2047 = vunpack.c.l.b16 %v912
    %v2048 = vunpack.c.h.b16 %v912
    %v2049 = vunpack.c.l.b16 %v913
    %v2050 = vunpack.c.h.b16 %v913
    %v2051 = vunpack.c.l.b16 %v914
    %v2052 = vunpack.c.h.b16 %v914
    %v2053 = vunpack.c.l.b16 %v915
    %v2054 = vunpack.c.h.b16 %v915
    %v2055 = vunpack.c.l.b16 %v916
    %v2056 = vunpack.c.h.b16 %v916
    %v2057 = vunpack.c.l.b16 %v917
    %v2058 = vunpack.c.h.b16 %v917
    %v2059 = vunpack.c.l.b16 %v918
    %v2060 = vunpack.c.h.b16 %v918
    %v2061 = vunpack.c.l.b16 %v919
    %v2062 = vunpack.c.h.b16 %v919
    %v2063 = vunpack.c.l.b16 %v920
    %v2064 = vunpack.c.h.b16 %v920
    %v2065 = vunpack.c.l.b16 %v921
    %v2066 = vunpack.c.h.b16 %v921
    %v2067 = vunpack.c.l.b16 %v922
    %v2068 = vunpack.c.h.b16 %v922
    %v2069 = vunpack.c.l.b16 %v923
    %v2070 = vunpack.c.h.b16 %v923
    %v2071 = vunpack.c.l.b16 %v924
    %v2072 = vunpack.c.h.b16 %v924
    %v2073 = vunpack.c.l.b16 %v925
    %v2074 = vunpack.c.h.b16 %v925
    %v2075 = vunpack.c.l.b16 %v926
    %v2076 = vunpack.c.h.b16 %v926
    %v2077 = vunpack.c.l.b16 %v927
    %v2078 = vunpack.c.h.b16 %v927
    %v2079 = vunpack.c.l.b16 %v928
    %v2080 = vunpack.c.h.b16 %v928
    %v2081 = vunpack.c.l.b16 %v929
    %v2082 = vunpack.c.h.b16 %v929
    %v2083 = vunpack.c.l.b16 %v930
    %v2084 = vunpack.c.h.b16 %v930
    %v2085 = vunpack.c.l.b16 %v931
    %v2086 = vunpack.c.h.b16 %v931
    %v2087 = vunpack.c.l.b16 %v932
    %v2088 = vunpack.c.h.b16 %v932
    %v2089 = vunpack.c.l.b16 %v933
    %v2090 = vunpack.c.h.b16 %v933
    %v2091 = vunpack.c.l.b16 %v934
    %v2092 = vunpack.c.h.b16 %v934
    %v2093 = vunpack.c.l.b16 %v935
    %v2094 = vunpack.c.h.b16 %v935
    %v2095 = vunpack.c.l.b16 %v936
    %v2096 = vunpack.c.h.b16 %v936
    %v2097 = vunpack.c.l.b16 %v937
    %v2098 = vunpack.c.h.b16 %v937
    %v2099 = vunpack.c.l.b16 %v938
    %v2100 = vunpack.c.h.b16 %v938
    %v2101 = vunpack.c.l.b16 %v939
    %v2102 = vunpack.c.h.b16 %v939
    %v2103 = vunpack.c.l.b16 %v940
    %v2104 = vunpack.c.h.b16 %v940
    %v2105 = vunpack.c.l.b16 %v941
    %v2106 = vunpack.c.h.b16 %v941
    %v2107 = vunpack.c.l.b16 %v942
    %v2108 = vunpack.c.h.b16 %v942
    %v2109 = vunpack.c.l.b16 %v943
    %v2110 = vunpack.c.h.b16 %v943
    %v2111 = vunpack.c.l.b16 %v944
    %v2112 = vunpack.c.h.b16 %v944
    %v2113 = vunpack.c.l.b16 %v945
    %v2114 = vunpack.c.h.b16 %v945
    %v2115 = vunpack.c.l.b16 %v946
    %v2116 = vunpack.c.h.b16 %v946
    %v2117 = vunpack.c.l.b16 %v947
    %v2118 = vunpack.c.h.b16 %v947
    %v2119 = vunpack.c.l.b16 %v948
    %v2120 = vunpack.c.h.b16 %v948
    %v2121 = vunpack.c.l.b16 %v949
    %v2122 = vunpack.c.h.b16 %v949
    %v2123 = vunpack.c.l.b16 %v950
    %v2124 = vunpack.c.h.b16 %v950
    %v2125 = vunpack.c.l.b16 %v951
    %v2126 = vunpack.c.h.b16 %v951
    %v2127 = vunpack.c.l.b16 %v952
    %v2128 = vunpack.c.h.b16 %v952
    %v2129 = vunpack.c.l.b16 %v953
    %v2130 = vunpack.c.h.b16 %v953
    %v2131 = vunpack.c.l.b16 %v954
    %v2132 = vunpack.c.h.b16 %v954
    %v2133 = vunpack.c.l.b16 %v955
    %v2134 = vunpack.c.h.b16 %v955
    %v2135 = vunpack.c.l.b16 %v956
    %v2136 = vunpack.c.h.b16 %v956
    %v2137 = vunpack.c.l.b16 %v957
    %v2138 = vunpack.c.h.b16 %v957
    %v2139 = vunpack.c.l.b16 %v958
    %v2140 = vunpack.c.h.b16 %v958
    %v2141 = vunpack.c.l.b16 %v959
    %v2142 = vunpack.c.h.b16 %v959
    %v2143 = vunpack.c.l.b16 %v960
    %v2144 = vunpack.c.h.b16 %v960
    %v2145 = vunpack.c.l.b16 %v961
    %v2146 = vunpack.c.h.b16 %v961
    %v2147 = vunpack.c.l.b16 %v962
    %v2148 = vunpack.c.h.b16 %v962
    %v2149 = vunpack.c.l.b16 %v963
    %v2150 = vunpack.c.h.b16 %v963
    %v2151 = vunpack.c.l.b16 %v964
    %v2152 = vunpack.c.h.b16 %v964
    %v2153 = vunpack.c.l.b16 %v965
    %v2154 = vunpack.c.h.b16 %v965
    %v2155 = vunpack.c.l.b16 %v966
    %v2156 = vunpack.c.h.b16 %v966
    %v2157 = vunpack.c.l.b16 %v967
    %v2158 = vunpack.c.h.b16 %v967
    %v2159 = vunpack.c.l.b16 %v968
    %v2160 = vunpack.c.h.b16 %v968
    %v2161 = vunpack.c.l.b16 %v969
    %v2162 = vunpack.c.h.b16 %v969
    %v2163 = vunpack.c.l.b16 %v970
    %v2164 = vunpack.c.h.b16 %v970
    %v2165 = vunpack.c.l.b16 %v971
    %v2166 = vunpack.c.h.b16 %v971
    %v2167 = vunpack.c.l.b16 %v972
    %v2168 = vunpack.c.h.b16 %v972
    %v2169 = vunpack.c.l.b16 %v973
    %v2170 = vunpack.c.h.b16 %v973
    %v2171 = vunpack.c.l.b16 %v974
    %v2172 = vunpack.c.h.b16 %v974
    %v2173 = vunpack.c.l.b16 %v975
    %v2174 = vunpack.c.h.b16 %v975
    %v2175 = vunpack.c.l.b16 %v976
    %v2176 = vunpack.c.h.b16 %v976
    %v2177 = vunpack.c.l.b16 %v977
    %v2178 = vunpack.c.h.b16 %v977
    %v2179 = vunpack.c.l.b16 %v978
    %v2180 = vunpack.c.h.b16 %v978
    %v2181 = vunpack.c.l.b16 %v979
    %v2182 = vunpack.c.h.b16 %v979
    %v2183 = vunpack.c.l.b16 %v980
    %v2184 = vunpack.c.h.b16 %v980
    %v2185 = vunpack.c.l.b16 %v981
    %v2186 = vunpack.c.h.b16 %v981
    %v2187 = vunpack.c.l.b16 %v982
    %v2188 = vunpack.c.h.b16 %v982
    %v2189 = vunpack.c.l.b16 %v983
    %v2190 = vunpack.c.h.b16 %v983
    %v2191 = vunpack.c.l.b16 %v984
    %v2192 = vunpack.c.h.b16 %v984
    %v2193 = vunpack.c.l.b16 %v985
    %v2194 = vunpack.c.h.b16 %v985
    %v2195 = vunpack.c.l.b16 %v986
    %v2196 = vunpack.c.h.b16 %v986
    %v2197 = vunpack.c.l.b16 %v987
    %v2198 = vunpack.c.h.b16 %v987
    %v2199 = vunpack.c.l.b16 %v988
    %v2200 = vunpack.c.h.b16 %v988
    %v2201 = vunpack.c.l.b16 %v989
    %v2202 = vunpack.c.h.b16 %v989
    %v2203 = vunpack.c.l.b16 %v990
    %v2204 = vunpack.c.h.b16 %v990
    %v2205 = vunpack.c.l.b16 %v991
    %v2206 = vunpack.c.h.b16 %v991
    %v2207 = vunpack.c.l.b16 %v992
    %v2208 = vunpack.c.h.b16 %v992
    %v2209 = vunpack.c.l.b16 %v993
    %v2210 = vunpack.c.h.b16 %v993
    %v2211 = vunpack.c.l.b16 %v994
    %v2212 = vunpack.c.h.b16 %v994
    %v2213 = vunpack.c.l.b16 %v995
    %v2214 = vunpack.c.h.b16 %v995
    %v2215 = vunpack.c.l.b16 %v996
    %v2216 = vunpack.c.h.b16 %v996
    %v2217 = vunpack.c.l.b16 %v997
    %v2218 = vunpack.c.h.b16 %v997
    %v2219 = vunpack.c.l.b16 %v998
    %v2220 = vunpack.c.h.b16 %v998
    %v2221 = vunpack.c.l.b16 %v999
    %v2222 = vunpack.c.h.b16 %v999
    %v2223 = vunpack.c.l.b16 %v1000
    %v2224 = vunpack.c.h.b16 %v1000
    %v2225 = vunpack.c.l.b16 %v1001
    %v2226 = vunpack.c.h.b16 %v1001
    %v2227 = vunpack.c.l.b16 %v1002
    %v2228 = vunpack.c.h.b16 %v1002
    %v2229 = vunpack.c.l.b16 %v1003
    %v2230 = vunpack.c.h.b16 %v1003
    %v2231 = vunpack.c.l.b16 %v1004
    %v2232 = vunpack.c.h.b16 %v1004
    %v2233 = vunpack.c.l.b16 %v1005
    %v2234 = vunpack.c.h.b16 %v1005
    %v2235 = vunpack.c.l.b16 %v1006
    %v2236 = vunpack.c.h.b16 %v1006
    %v2237 = vunpack.c.l.b16 %v1007
    %v2238 = vunpack.c.h.b16 %v1007
    %v2239 = vunpack.c.l.b16 %v1008
    %v2240 = vunpack.c.h.b16 %v1008
    %v2241 = vunpack.c.l.b16 %v1009
    %v2242 = vunpack.c.h.b16 %v1009
    %v2243 = vunpack.c.l.b16 %v1010
    %v2244 = vunpack.c.h.b16 %v1010
    %v2245 = vunpack.c.l.b16 %v1011
    %v2246 = vunpack.c.h.b16 %v1011
    %v2247 = vunpack.c.l.b16 %v1012
    %v2248 = vunpack.c.h.b16 %v1012
    %v2249 = vunpack.c.l.b16 %v1013
    %v2250 = vunpack.c.h.b16 %v1013
    %v2251 = vunpack.c.l.b16 %v1014
    %v2252 = vunpack.c.h.b16 %v1014
    %v2253 = vunpack.c.l.b16 %v1015
    %v2254 = vunpack.c.h.b16 %v1015
    %v2255 = vunpack.c.l.b16 %v1016
    %v2256 = vunpack.c.h.b16 %v1016
    %v2257 = vunpack.c.l.b16 %v1017
    %v2258 = vunpack.c.h.b16 %v1017
    %v2259 = vunpack.c.l.b16 %v1018
    %v2260 = vunpack.c.h.b16 %v1018
    %v2261 = vunpack.c.l.b16 %v1019
    %v2262 = vunpack.c.h.b16 %v1019
    %v2263 = vunpack.c.l.b16 %v1020
    %v2264 = vunpack.c.h.b16 %v1020
    %v2265 = vunpack.c.l.b16 %v1021
    %v2266 = vunpack.c.h.b16 %v1021
    %v2267 = vunpack.c.l.b16 %v1022
    %v2268 = vunpack.c.h.b16 %v1022
    %v2269 = vunpack.c.l.b16 %v1023
    %v2270 = vunpack.c.h.b16 %v1023
    %v2271 = vunpack.c.l.b16 %v1024
    %v2272 = vunpack.c.h.b16 %v1024
    %v2273 = vunpack.c.l.b16 %v1025
    %v2274 = vunpack.c.h.b16 %v1025
    %v2275 = vunpack.c.l.b16 %v1026
    %v2276 = vunpack.c.h.b16 %v1026
    %v2277 = vunpack.c.l.b16 %v1027
    %v2278 = vunpack.c.h.b16 %v1027
    %v2279 = vunpack.c.l.b16 %v1028
    %v2280 = vunpack.c.h.b16 %v1028
    %v2281 = vunpack.c.l.b16 %v1029
    %v2282 = vunpack.c.h.b16 %v1029
    %v2283 = vunpack.c.l.b16 %v1030
    %v2284 = vunpack.c.h.b16 %v1030
    %v2285 = vunpack.c.l.b16 %v1031
    %v2286 = vunpack.c.h.b16 %v1031
    %v2287 = vunpack.c.l.b16 %v1032
    %v2288 = vunpack.c.h.b16 %v1032
    %v2289 = vunpack.c.l.b16 %v1033
    %v2290 = vunpack.c.h.b16 %v1033
    %v2291 = vunpack.c.l.b16 %v1034
    %v2292 = vunpack.c.h.b16 %v1034
    %v2293 = vunpack.c.l.b16 %v1035
    %v2294 = vunpack.c.h.b16 %v1035
    %v2295 = vunpack.c.l.b16 %v1036
    %v2296 = vunpack.c.h.b16 %v1036
    %v2297 = vunpack.c.l.b16 %v1037
    %v2298 = vunpack.c.h.b16 %v1037
    %v2299 = vunpack.c.l.b16 %v1038
    %v2300 = vunpack.c.h.b16 %v1038
    %v2301 = vunpack.c.l.b16 %v1039
    %v2302 = vunpack.c.h.b16 %v1039
    %v2303 = vunpack.c.l.b16 %v1040
    %v2304 = vunpack.c.h.b16 %v1040
    %v2305 = vunpack.c.l.b16 %v1041
    %v2306 = vunpack.c.h.b16 %v1041
    %v2307 = vunpack.c.l.b16 %v1042
    %v2308 = vunpack.c.h.b16 %v1042
    %v2309 = vunpack.c.l.b16 %v1043
    %v2310 = vunpack.c.h.b16 %v1043
    %v2311 = vunpack.c.l.b16 %v1044
    %v2312 = vunpack.c.h.b16 %v1044
    %v2313 = vunpack.c.l.b16 %v1045
    %v2314 = vunpack.c.h.b16 %v1045
    %v2315 = vunpack.c.l.b16 %v1046
    %v2316 = vunpack.c.h.b16 %v1046
    %v2317 = vunpack.c.l.b16 %v1047
    %v2318 = vunpack.c.h.b16 %v1047
    %v2319 = vunpack.c.l.b16 %v1048
    %v2320 = vunpack.c.h.b16 %v1048
    %v2321 = vunpack.c.l.b16 %v1049
    %v2322 = vunpack.c.h.b16 %v1049
    %v2323 = vunpack.c.l.b16 %v1050
    %v2324 = vunpack.c.h.b16 %v1050
    %v2325 = vunpack.c.l.b16 %v1051
    %v2326 = vunpack.c.h.b16 %v1051
    %v2327 = vunpack.c.l.b16 %v1052
    %v2328 = vunpack.c.h.b16 %v1052
    %v2329 = vunpack.c.l.b16 %v1053
    %v2330 = vunpack.c.h.b16 %v1053
    %v2331 = vunpack.c.l.b16 %v1054
    %v2332 = vunpack.c.h.b16 %v1054
    %v2333 = vunpack.c.l.b16 %v1055
    %v2334 = vunpack.c.h.b16 %v1055
    %v2335 = vunpack.c.l.b16 %v1056
    %v2336 = vunpack.c.h.b16 %v1056
    %v2337 = vunpack.c.l.b16 %v1057
    %v2338 = vunpack.c.h.b16 %v1057
    %v2339 = vunpack.c.l.b16 %v1058
    %v2340 = vunpack.c.h.b16 %v1058
    %v2341 = vunpack.c.l.b16 %v1059
    %v2342 = vunpack.c.h.b16 %v1059
    %v2343 = vunpack.c.l.b16 %v1060
    %v2344 = vunpack.c.h.b16 %v1060
    %v2345 = vunpack.c.l.b16 %v1061
    %v2346 = vunpack.c.h.b16 %v1061
    %v2347 = vunpack.c.l.b16 %v1062
    %v2348 = vunpack.c.h.b16 %v1062
    %v2349 = vunpack.c.l.b16 %v1063
    %v2350 = vunpack.c.h.b16 %v1063
    %v2351 = vunpack.c.l.b16 %v1064
    %v2352 = vunpack.c.h.b16 %v1064
    %v2353 = vunpack.c.l.b16 %v1065
    %v2354 = vunpack.c.h.b16 %v1065
    %v2355 = vunpack.c.l.b16 %v1066
    %v2356 = vunpack.c.h.b16 %v1066
    %v2357 = vunpack.c.l.b16 %v1067
    %v2358 = vunpack.c.h.b16 %v1067
    %v2359 = vunpack.c.l.b16 %v1068
    %v2360 = vunpack.c.h.b16 %v1068
    %v2361 = vunpack.c.l.b16 %v1069
    %v2362 = vunpack.c.h.b16 %v1069
    %v2363 = vunpack.c.l.b16 %v1070
    %v2364 = vunpack.c.h.b16 %v1070
    %v2365 = vunpack.c.l.b16 %v1071
    %v2366 = vunpack.c.h.b16 %v1071
    %v2367 = vunpack.c.l.b16 %v1072
    %v2368 = vunpack.c.h.b16 %v1072
    %v2369 = vunpack.c.l.b16 %v1073
    %v2370 = vunpack.c.h.b16 %v1073
    %v2371 = vunpack.c.l.b16 %v1074
    %v2372 = vunpack.c.h.b16 %v1074
    %v2373 = vunpack.c.l.b16 %v1075
    %v2374 = vunpack.c.h.b16 %v1075
    %v2375 = vunpack.c.l.b16 %v1076
    %v2376 = vunpack.c.h.b16 %v1076
    %v2377 = vunpack.c.l.b16 %v1077
    %v2378 = vunpack.c.h.b16 %v1077
    %v2379 = vunpack.c.l.b16 %v1078
    %v2380 = vunpack.c.h.b16 %v1078
    %v2381 = vunpack.c.l.b16 %v1079
    %v2382 = vunpack.c.h.b16 %v1079
    %v2383 = vunpack.c.l.b16 %v1080
    %v2384 = vunpack.c.h.b16 %v1080
    %v2385 = vunpack.c.l.b16 %v1081
    %v2386 = vunpack.c.h.b16 %v1081
    %v2387 = vunpack.c.l.b16 %v1082
    %v2388 = vunpack.c.h.b16 %v1082
    %v2389 = vunpack.c.l.b16 %v1083
    %v2390 = vunpack.c.h.b16 %v1083
    %v2391 = vunpack.c.l.b16 %v1084
    %v2392 = vunpack.c.h.b16 %v1084
    %v2393 = vunpack.c.l.b16 %v1085
    %v2394 = vunpack.c.h.b16 %v1085
    %v2395 = vunpack.c.l.b16 %v1086
    %v2396 = vunpack.c.h.b16 %v1086
    %v2397 = vunpack.c.l.b16 %v1087
    %v2398 = vunpack.c.h.b16 %v1087
    %v2399 = vunpack.c.l.b16 %v1088
    %v2400 = vunpack.c.h.b16 %v1088
    %v2401 = vunpack.c.l.b16 %v1089
    %v2402 = vunpack.c.h.b16 %v1089
    %v2403 = vunpack.c.l.b16 %v1090
    %v2404 = vunpack.c.h.b16 %v1090
    %v2405 = vunpack.c.l.b16 %v1091
    %v2406 = vunpack.c.h.b16 %v1091
    %v2407 = vunpack.c.l.b16 %v1092
    %v2408 = vunpack.c.h.b16 %v1092
    %v2409 = vunpack.c.l.b16 %v1093
    %v2410 = vunpack.c.h.b16 %v1093
    %v2411 = vunpack.c.l.b16 %v1094
    %v2412 = vunpack.c.h.b16 %v1094
    %v2413 = vunpack.c.l.b16 %v1095
    %v2414 = vunpack.c.h.b16 %v1095
    %v2415 = vunpack.c.l.b16 %v1096
    %v2416 = vunpack.c.h.b16 %v1096
    %v2417 = vunpack.c.l.b16 %v1097
    %v2418 = vunpack.c.h.b16 %v1097
    %v2419 = vunpack.c.l.b16 %v1098
    %v2420 = vunpack.c.h.b16 %v1098
    %v2421 = vunpack.c.l.b16 %v1099
    %v2422 = vunpack.c.h.b16 %v1099
    %v2423 = vunpack.c.l.b16 %v1100
    %v2424 = vunpack.c.h.b16 %v1100
    %v2425 = vunpack.c.l.b16 %v1101
    %v2426 = vunpack.c.h.b16 %v1101
    %v2427 = vunpack.c.l.b16 %v1102
    %v2428 = vunpack.c.h.b16 %v1102
    %v2429 = vunpack.c.l.b16 %v1103
    %v2430 = vunpack.c.h.b16 %v1103
    %v2431 = vunpack.c.l.b16 %v1104
    %v2432 = vunpack.c.h.b16 %v1104
    %v2433 = vunpack.c.l.b16 %v1105
    %v2434 = vunpack.c.h.b16 %v1105
    %v2435 = vunpack.c.l.b16 %v1106
    %v2436 = vunpack.c.h.b16 %v1106
    %v2437 = vunpack.c.l.b16 %v1107
    %v2438 = vunpack.c.h.b16 %v1107
    %v2439 = vunpack.c.l.b16 %v1108
    %v2440 = vunpack.c.h.b16 %v1108
    %v2441 = vunpack.c.l.b16 %v1109
    %v2442 = vunpack.c.h.b16 %v1109
    %v2443 = vunpack.c.l.b16 %v1110
    %v2444 = vunpack.c.h.b16 %v1110
    %v2445 = vunpack.c.l.b16 %v1111
    %v2446 = vunpack.c.h.b16 %v1111
    %v2447 = vunpack.c.l.b16 %v1112
    %v2448 = vunpack.c.h.b16 %v1112
    %v2449 = vunpack.c.l.b16 %v1113
    %v2450 = vunpack.c.h.b16 %v1113
    %v2451 = vunpack.c.l.b16 %v1114
    %v2452 = vunpack.c.h.b16 %v1114
    %v2453 = vunpack.c.l.b16 %v1115
    %v2454 = vunpack.c.h.b16 %v1115
    %v2455 = vunpack.c.l.b16 %v1116
    %v2456 = vunpack.c.h.b16 %v1116
    %v2457 = vunpack.c.l.b16 %v1117
    %v2458 = vunpack.c.h.b16 %v1117
    %v2459 = vunpack.c.l.b16 %v1118
    %v2460 = vunpack.c.h.b16 %v1118
    %v2461 = vunpack.c.l.b16 %v1119
    %v2462 = vunpack.c.h.b16 %v1119
    %v2463 = vunpack.c.l.b16 %v1120
    %v2464 = vunpack.c.h.b16 %v1120
    %v2465 = vunpack.c.l.b16 %v1121
    %v2466 = vunpack.c.h.b16 %v1121
    %v2467 = vunpack.c.l.b16 %v1122
    %v2468 = vunpack.c.h.b16 %v1122
    %v2469 = vunpack.c.l.b16 %v1123
    %v2470 = vunpack.c.h.b16 %v1123
    %v2471 = vunpack.c.l.b16 %v1124
    %v2472 = vunpack.c.h.b16 %v1124
    %v2473 = vunpack.c.l.b16 %v1125
    %v2474 = vunpack.c.h.b16 %v1125
    %v2475 = vunpack.c.l.b16 %v1126
    %v2476 = vunpack.c.h.b16 %v1126
    %v2477 = vunpack.c.l.b16 %v1127
    %v2478 = vunpack.c.h.b16 %v1127
    %v2479 = vunpack.c.l.b16 %v1128
    %v2480 = vunpack.c.h.b16 %v1128
    %v2481 = vunpack.c.l.b16 %v1129
    %v2482 = vunpack.c.h.b16 %v1129
    %v2483 = vunpack.c.l.b16 %v1130
    %v2484 = vunpack.c.h.b16 %v1130
    %v2485 = vunpack.c.l.b16 %v1131
    %v2486 = vunpack.c.h.b16 %v1131
    %v2487 = vunpack.c.l.b16 %v1132
    %v2488 = vunpack.c.h.b16 %v1132
    %v2489 = vunpack.c.l.b16 %v1133
    %v2490 = vunpack.c.h.b16 %v1133
    %v2491 = vunpack.c.l.b16 %v1134
    %v2492 = vunpack.c.h.b16 %v1134
    %v2493 = vunpack.c.l.b16 %v1135
    %v2494 = vunpack.c.h.b16 %v1135
    %v2495 = vunpack.c.l.b16 %v1136
    %v2496 = vunpack.c.h.b16 %v1136
    %v2497 = vunpack.c.l.b16 %v1137
    %v2498 = vunpack.c.h.b16 %v1137
    %v2499 = vunpack.c.l.b16 %v1138
    %v2500 = vunpack.c.h.b16 %v1138
    %v2501 = vunpack.c.l.b16 %v1139
    %v2502 = vunpack.c.h.b16 %v1139
    %v2503 = vunpack.c.l.b16 %v1140
    %v2504 = vunpack.c.h.b16 %v1140
    %v2505 = vunpack.c.l.b16 %v1141
    %v2506 = vunpack.c.h.b16 %v1141
    %v2507 = vunpack.c.l.b16 %v1142
    %v2508 = vunpack.c.h.b16 %v1142
    %v2509 = vunpack.c.l.b16 %v1143
    %v2510 = vunpack.c.h.b16 %v1143
    %v2511 = vunpack.c.l.b16 %v1144
    %v2512 = vunpack.c.h.b16 %v1144
    %v2513 = vunpack.c.l.b16 %v1145
    %v2514 = vunpack.c.h.b16 %v1145
    %v2515 = vunpack.c.l.b16 %v1146
    %v2516 = vunpack.c.h.b16 %v1146
    %v2517 = vunpack.c.l.b16 %v1147
    %v2518 = vunpack.c.h.b16 %v1147
    %v2519 = vunpack.c.l.b16 %v1148
    %v2520 = vunpack.c.h.b16 %v1148
    %v2521 = vunpack.c.l.b16 %v1149
    %v2522 = vunpack.c.h.b16 %v1149
    %v2523 = vunpack.c.l.b16 %v1150
    %v2524 = vunpack.c.h.b16 %v1150
    %v2525 = vunpack.c.l.b16 %v1151
    %v2526 = vunpack.c.h.b16 %v1151
    %v2527 = vunpack.c.l.b16 %v1152
    %v2528 = vunpack.c.h.b16 %v1152
    %v2529 = vunpack.c.l.b16 %v1153
    %v2530 = vunpack.c.h.b16 %v1153
    %v2531 = vunpack.c.l.b16 %v1154
    %v2532 = vunpack.c.h.b16 %v1154
    %v2533 = vunpack.c.l.b16 %v1155
    %v2534 = vunpack.c.h.b16 %v1155
    %v2535 = vunpack.c.l.b16 %v1156
    %v2536 = vunpack.c.h.b16 %v1156
    %v2537 = vunpack.c.l.b16 %v1157
    %v2538 = vunpack.c.h.b16 %v1157
    %v2539 = vunpack.c.l.b16 %v1158
    %v2540 = vunpack.c.h.b16 %v1158
    %v2541 = vunpack.c.l.b16 %v1159
    %v2542 = vunpack.c.h.b16 %v1159
    %v2543 = vunpack.c.l.b16 %v1160
    %v2544 = vunpack.c.h.b16 %v1160
    %v2545 = vunpack.c.l.b16 %v1161
    %v2546 = vunpack.c.h.b16 %v1161
    %v2547 = vunpack.c.l.b16 %v1162
    %v2548 = vunpack.c.h.b16 %v1162
    %v2549 = vunpack.c.l.b16 %v1163
    %v2550 = vunpack.c.h.b16 %v1163
    %v2551 = vunpack.c.l.b16 %v1164
    %v2552 = vunpack.c.h.b16 %v1164
    %v2553 = vunpack.c.l.b16 %v1165
    %v2554 = vunpack.c.h.b16 %v1165
    %v2555 = vunpack.c.l.b16 %v1166
    %v2556 = vunpack.c.h.b16 %v1166
    %v2557 = vunpack.c.l.b16 %v1167
    %v2558 = vunpack.c.h.b16 %v1167
    %v2559 = vunpack.c.l.b16 %v1168
    %v2560 = vunpack.c.h.b16 %v1168
    %v2561 = vunpack.c.l.b16 %v1169
    %v2562 = vunpack.c.h.b16 %v1169
    %v2563 = vunpack.c.l.b16 %v1170
    %v2564 = vunpack.c.h.b16 %v1170
    %v2565 = vunpack.c.l.b16 %v1171
    %v2566 = vunpack.c.h.b16 %v1171
    %v2567 = vunpack.c.l.b16 %v1172
    %v2568 = vunpack.c.h.b16 %v1172
    %v2569 = vunpack.c.l.b16 %v1173
    %v2570 = vunpack.c.h.b16 %v1173
    %v2571 = vunpack.c.l.b16 %v1174
    %v2572 = vunpack.c.h.b16 %v1174
    %v2573 = vunpack.c.l.b16 %v1175
    %v2574 = vunpack.c.h.b16 %v1175
    %v2575 = vunpack.c.l.b16 %v1176
    %v2576 = vunpack.c.h.b16 %v1176
    %v2577 = vunpack.c.l.b16 %v1177
    %v2578 = vunpack.c.h.b16 %v1177
    %v2579 = vunpack.c.l.b16 %v1178
    %v2580 = vunpack.c.h.b16 %v1178
    %v2581 = vunpack.c.l.b16 %v1179
    %v2582 = vunpack.c.h.b16 %v1179
    %v2583 = vunpack.c.l.b16 %v1180
    %v2584 = vunpack.c.h.b16 %v1180
    %v2585 = vunpack.c.l.b16 %v1181
    %v2586 = vunpack.c.h.b16 %v1181
    %v2587 = vunpack.c.l.b16 %v1182
    %v2588 = vunpack.c.h.b16 %v1182
    %v2589 = vunpack.c.l.b16 %v1183
    %v2590 = vunpack.c.h.b16 %v1183
    %v2591 = vunpack.c.l.b16 %v1184
    %v2592 = vunpack.c.h.b16 %v1184
    %v2593 = vunpack.c.l.b16 %v1185
    %v2594 = vunpack.c.h.b16 %v1185
    %v2595 = vunpack.c.l.b16 %v1186
    %v2596 = vunpack.c.h.b16 %v1186
    %v2597 = vunpack.c.l.b16 %v1187
    %v2598 = vunpack.c.h.b16 %v1187
    %v2599 = vunpack.c.l.b16 %v1188
    %v2600 = vunpack.c.h.b16 %v1188
    %v2601 = vunpack.c.l.b16 %v1189
    %v2602 = vunpack.c.h.b16 %v1189
    %v2603 = vunpack.c.l.b16 %v1190
    %v2604 = vunpack.c.h.b16 %v1190
    %v2605 = vunpack.c.l.b16 %v1191
    %v2606 = vunpack.c.h.b16 %v1191
    %v2607 = vunpack.c.l.b16 %v1192
    %v2608 = vunpack.c.h.b16 %v1192
    %v2609 = vunpack.c.l.b16 %v1193
    %v2610 = vunpack.c.h.b16 %v1193
    %v2611 = vunpack.c.l.b16 %v1194
    %v2612 = vunpack.c.h.b16 %v1194
    %v2613 = vunpack.c.l.b16 %v1195
    %v2614 = vunpack.c.h.b16 %v1195
    %v2615 = vunpack.c.l.b16 %v1196
    %v2616 = vunpack.c.h.b16 %v1196
    %v2617 = vunpack.c.l.b16 %v1197
    %v2618 = vunpack.c.h.b16 %v1197
    %v2619 = vunpack.c.l.b16 %v1198
    %v2620 = vunpack.c.h.b16 %v1198
    %v2621 = vunpack.c.l.b16 %v1199
    %v2622 = vunpack.c.h.b16 %v1199
    %v2623 = vunpack.c.l.b16 %v1200
    %v2624 = vunpack.c.h.b16 %v1200
    %v2625 = vunpack.c.l.b16 %v1201
    %v2626 = vunpack.c.h.b16 %v1201
    %v2627 = vunpack.c.l.b16 %v1202
    %v2628 = vunpack.c.h.b16 %v1202
    %v2629 = vunpack.c.l.b16 %v1203
    %v2630 = vunpack.c.h.b16 %v1203
    %v2631 = vunpack.c.l.b16 %v1204
    %v2632 = vunpack.c.h.b16 %v1204
    %v2633 = vunpack.c.l.b16 %v1205
    %v2634 = vunpack.c.h.b16 %v1205
    %v2635 = vunpack.c.l.b16 %v1206
    %v2636 = vunpack.c.h.b16 %v1206
    %v2637 = vunpack.c.l.b16 %v1207
    %v2638 = vunpack.c.h.b16 %v1207
    %v2639 = vunpack.c.l.b16 %v1208
    %v2640 = vunpack.c.h.b16 %v1208
    %v2641 = vunpack.c.l.b16 %v1209
    %v2642 = vunpack.c.h.b16 %v1209
    %v2643 = vunpack.c.l.b16 %v1210
    %v2644 = vunpack.c.h.b16 %v1210
    %v2645 = vunpack.c.l.b16 %v1211
    %v2646 = vunpack.c.h.b16 %v1211
    %v2647 = vunpack.c.l.b16 %v1212
    %v2648 = vunpack.c.h.b16 %v1212
    %v2649 = vunpack.c.l.b16 %v1213
    %v2650 = vunpack.c.h.b16 %v1213
    %v2651 = vunpack.c.l.b16 %v1214
    %v2652 = vunpack.c.h.b16 %v1214
    %v2653 = vunpack.c.l.b16 %v1215
    %v2654 = vunpack.c.h.b16 %v1215
    %v2655 = vunpack.c.l.b16 %v1216
    %v2656 = vunpack.c.h.b16 %v1216
    %v2657 = vunpack.c.l.b16 %v1217
    %v2658 = vunpack.c.h.b16 %v1217
    %v2659 = vunpack.c.l.b16 %v1218
    %v2660 = vunpack.c.h.b16 %v1218
    %v2661 = vunpack.c.l.b16 %v1219
    %v2662 = vunpack.c.h.b16 %v1219
    %v2663 = vunpack.c.l.b16 %v1220
    %v2664 = vunpack.c.h.b16 %v1220
    %v2665 = vunpack.c.l.b16 %v1221
    %v2666 = vunpack.c.h.b16 %v1221
    %v2667 = vunpack.c.l.b16 %v1222
    %v2668 = vunpack.c.h.b16 %v1222
    %v2669 = vunpack.c.l.b16 %v1223
    %v2670 = vunpack.c.h.b16 %v1223
    %v2671 = vunpack.c.l.b16 %v1224
    %v2672 = vunpack.c.h.b16 %v1224
    %v2673 = vunpack.c.l.b16 %v1225
    %v2674 = vunpack.c.h.b16 %v1225
    %v2675 = vunpack.c.l.b16 %v1226
    %v2676 = vunpack.c.h.b16 %v1226
    %v2677 = vunpack.c.l.b16 %v1227
    %v2678 = vunpack.c.h.b16 %v1227
    %v2679 = vunpack.c.l.b16 %v1228
    %v2680 = vunpack.c.h.b16 %v1228
    %v2681 = vunpack.c.l.b16 %v1229
    %v2682 = vunpack.c.h.b16 %v1229
    %v2683 = vunpack.c.l.b16 %v1230
    %v2684 = vunpack.c.h.b16 %v1230
    %v2685 = vunpack.c.l.b16 %v1231
    %v2686 = vunpack.c.h.b16 %v1231
    %v2687 = vunpack.c.l.b16 %v1232
    %v2688 = vunpack.c.h.b16 %v1232
    %v2689 = vunpack.c.l.b16 %v1233
    %v2690 = vunpack.c.h.b16 %v1233
    %v2691 = vunpack.c.l.b16 %v1234
    %v2692 = vunpack.c.h.b16 %v1234
    %v2693 = vunpack.c.l.b16 %v1235
    %v2694 = vunpack.c.h.b16 %v1235
    %v2695 = vunpack.c.l.b16 %v1236
    %v2696 = vunpack.c.h.b16 %v1236
    %v2697 = vunpack.c.l.b16 %v1237
    %v2698 = vunpack.c.h.b16 %v1237
    %v2699 = vunpack.c.l.b16 %v1238
    %v2700 = vunpack.c.h.b16 %v1238
    %v2701 = vunpack.c.l.b16 %v1239
    %v2702 = vunpack.c.h.b16 %v1239
    %v2703 = vunpack.c.l.b16 %v1240
    %v2704 = vunpack.c.h.b16 %v1240
    %v2705 = vunpack.c.l.b16 %v1241
    %v2706 = vunpack.c.h.b16 %v1241
    %v2707 = vunpack.c.l.b16 %v1242
    %v2708 = vunpack.c.h.b16 %v1242
    %v2709 = vunpack.c.l.b16 %v1243
    %v2710 = vunpack.c.h.b16 %v1243
    %v2711 = vunpack.c.l.b16 %v1244
    %v2712 = vunpack.c.h.b16 %v1244
    %v2713 = vunpack.c.l.b16 %v1245
    %v2714 = vunpack.c.h.b16 %v1245
    %v2715 = vunpack.c.l.b16 %v1246
    %v2716 = vunpack.c.h.b16 %v1246
    %v2717 = vunpack.c.l.b16 %v1247
    %v2718 = vunpack.c.h.b16 %v1247
    %v2719 = vunpack.c.l.b16 %v1248
    %v2720 = vunpack.c.h.b16 %v1248
    %v2721 = vunpack.c.l.b16 %v1249
    %v2722 = vunpack.c.h.b16 %v1249
    %v2723 = vunpack.c.l.b16 %v1250
    %v2724 = vunpack.c.h.b16 %v1250
    %v2725 = vunpack.c.l.b16 %v1251
    %v2726 = vunpack.c.h.b16 %v1251
    %v2727 = vunpack.c.l.b16 %v1252
    %v2728 = vunpack.c.h.b16 %v1252
    %v2729 = vunpack.c.l.b16 %v1253
    %v2730 = vunpack.c.h.b16 %v1253
    %v2731 = vunpack.c.l.b16 %v1254
    %v2732 = vunpack.c.h.b16 %v1254
    %v2733 = vunpack.c.l.b16 %v1255
    %v2734 = vunpack.c.h.b16 %v1255
    %v2735 = vunpack.c.l.b16 %v1256
    %v2736 = vunpack.c.h.b16 %v1256
    %v2737 = vunpack.c.l.b16 %v1257
    %v2738 = vunpack.c.h.b16 %v1257
    %v2739 = vunpack.c.l.b16 %v1258
    %v2740 = vunpack.c.h.b16 %v1258
    %v2741 = vunpack.c.l.b16 %v1259
    %v2742 = vunpack.c.h.b16 %v1259
    %v2743 = vunpack.c.l.b16 %v1260
    %v2744 = vunpack.c.h.b16 %v1260
    %v2745 = vunpack.c.l.b16 %v1261
    %v2746 = vunpack.c.h.b16 %v1261
    %v2747 = vunpack.c.l.b16 %v1262
    %v2748 = vunpack.c.h.b16 %v1262
    %v2749 = vunpack.c.l.b16 %v1263
    %v2750 = vunpack.c.h.b16 %v1263
    %v2751 = vunpack.c.l.b16 %v1264
    %v2752 = vunpack.c.h.b16 %v1264
    %v2753 = vunpack.c.l.b16 %v1265
    %v2754 = vunpack.c.h.b16 %v1265
    %v2755 = vunpack.c.l.b16 %v1266
    %v2756 = vunpack.c.h.b16 %v1266
    %v2757 = vunpack.c.l.b16 %v1267
    %v2758 = vunpack.c.h.b16 %v1267
    %v2759 = vunpack.c.l.b16 %v1268
    %v2760 = vunpack.c.h.b16 %v1268
    %v2761 = vunpack.c.l.b16 %v1269
    %v2762 = vunpack.c.h.b16 %v1269
    %v2763 = vunpack.c.l.b16 %v1270
    %v2764 = vunpack.c.h.b16 %v1270
    %v2765 = vunpack.c.l.b16 %v1271
    %v2766 = vunpack.c.h.b16 %v1271
    %v2767 = vunpack.c.l.b16 %v1272
    %v2768 = vunpack.c.h.b16 %v1272
    %v2769 = vunpack.c.l.b16 %v1273
    %v2770 = vunpack.c.h.b16 %v1273
    %v2771 = vunpack.c.l.b16 %v1274
    %v2772 = vunpack.c.h.b16 %v1274
    %v2773 = vunpack.c.l.b16 %v1275
    %v2774 = vunpack.c.h.b16 %v1275
    %v2775 = vunpack.c.l.b16 %v1276
    %v2776 = vunpack.c.h.b16 %v1276
    %v2777 = vunpack.c.l.b16 %v1277
    %v2778 = vunpack.c.h.b16 %v1277
    %v2779 = vunpack.c.l.b16 %v1278
    %v2780 = vunpack.c.h.b16 %v1278
    %v2781 = vunpack.c.l.b16 %v1279
    %v2782 = vunpack.c.h.b16 %v1279
    %v2783 = vunpack.c.l.b16 %v1280
    %v2784 = vunpack.c.h.b16 %v1280
    %v2785 = vunpack.c.l.b16 %v1281
    %v2786 = vunpack.c.h.b16 %v1281
    %v2787 = vunpack.c.l.b16 %v1282
    %v2788 = vunpack.c.h.b16 %v1282
    %v2789 = vunpack.c.l.b16 %v1283
    %v2790 = vunpack.c.h.b16 %v1283
    %v2791 = vunpack.c.l.b16 %v1284
    %v2792 = vunpack.c.h.b16 %v1284
    %v2793 = vunpack.c.l.b16 %v1285
    %v2794 = vunpack.c.h.b16 %v1285
    %v2795 = vunpack.c.l.b16 %v1286
    %v2796 = vunpack.c.h.b16 %v1286
    %v2797 = vunpack.c.l.b16 %v1287
    %v2798 = vunpack.c.h.b16 %v1287
    %v2799 = vunpack.c.l.b16 %v1288
    %v2800 = vunpack.c.h.b16 %v1288
    %v2801 = vunpack.c.l.b16 %v1289
    %v2802 = vunpack.c.h.b16 %v1289
    %v2803 = vunpack.c.l.b16 %v1290
    %v2804 = vunpack.c.h.b16 %v1290
    %v2805 = vunpack.c.l.b16 %v1291
    %v2806 = vunpack.c.h.b16 %v1291
    %v2807 = vunpack.c.l.b16 %v1292
    %v2808 = vunpack.c.h.b16 %v1292
    %v2809 = vunpack.c.l.b16 %v1293
    %v2810 = vunpack.c.h.b16 %v1293
    %v2811 = vunpack.c.l.b16 %v1294
    %v2812 = vunpack.c.h.b16 %v1294
    %v2813 = vunpack.c.l.b16 %v1295
    %v2814 = vunpack.c.h.b16 %v1295
    %v2815 = vunpack.c.l.b16 %v1296
    %v2816 = vunpack.c.h.b16 %v1296
    %v2817 = vunpack.c.l.b16 %v1297
    %v2818 = vunpack.c.h.b16 %v1297
    %v2819 = vunpack.c.l.b16 %v1298
    %v2820 = vunpack.c.h.b16 %v1298
    %v2821 = vunpack.c.l.b16 %v1299
    %v2822 = vunpack.c.h.b16 %v1299
    %v2823 = vunpack.c.l.b16 %v1300
    %v2824 = vunpack.c.h.b16 %v1300
    %v2825 = vunpack.c.l.b16 %v1301
    %v2826 = vunpack.c.h.b16 %v1301
    %v2827 = vunpack.c.l.b16 %v1302
    %v2828 = vunpack.c.h.b16 %v1302
    %v2829 = vunpack.c.l.b16 %v1303
    %v2830 = vunpack.c.h.b16 %v1303
    %v2831 = vunpack.c.l.b16 %v1304
    %v2832 = vunpack.c.h.b16 %v1304
    %v2833 = vunpack.c.l.b16 %v1305
    %v2834 = vunpack.c.h.b16 %v1305
    %v2835 = vunpack.c.l.b16 %v1306
    %v2836 = vunpack.c.h.b16 %v1306
    %v2837 = vunpack.c.l.b16 %v1307
    %v2838 = vunpack.c.h.b16 %v1307
    %v2839 = vunpack.c.l.b16 %v1308
    %v2840 = vunpack.c.h.b16 %v1308
    %v2841 = vunpack.c.l.b16 %v1309
    %v2842 = vunpack.c.h.b16 %v1309
    %v2843 = vunpack.c.l.b16 %v1310
    %v2844 = vunpack.c.h.b16 %v1310
    %v2845 = vunpack.c.l.b16 %v1311
    %v2846 = vunpack.c.h.b16 %v1311
    %v2847 = vunpack.c.l.b16 %v1312
    %v2848 = vunpack.c.h.b16 %v1312
    %v2849 = vunpack.c.l.b16 %v1313
    %v2850 = vunpack.c.h.b16 %v1313
    %v2851 = vunpack.c.l.b16 %v1314
    %v2852 = vunpack.c.h.b16 %v1314
    %v2853 = vunpack.c.l.b16 %v1315
    %v2854 = vunpack.c.h.b16 %v1315
    %v2855 = vunpack.c.l.b16 %v1316
    %v2856 = vunpack.c.h.b16 %v1316
    %v2857 = vunpack.c.l.b16 %v1317
    %v2858 = vunpack.c.h.b16 %v1317
    %v2859 = vunpack.c.l.b16 %v1318
    %v2860 = vunpack.c.h.b16 %v1318
    %v2861 = vunpack.c.l.b16 %v1319
    %v2862 = vunpack.c.h.b16 %v1319
    %v2863 = vunpack.c.l.b16 %v1320
    %v2864 = vunpack.c.h.b16 %v1320
    %v2865 = vunpack.c.l.b16 %v1321
    %v2866 = vunpack.c.h.b16 %v1321
    %v2867 = vunpack.c.l.b16 %v1322
    %v2868 = vunpack.c.h.b16 %v1322
    %v2869 = vunpack.c.l.b16 %v1323
    %v2870 = vunpack.c.h.b16 %v1323
    %v2871 = vunpack.c.l.b16 %v1324
    %v2872 = vunpack.c.h.b16 %v1324
    %v2873 = vunpack.c.l.b16 %v1325
    %v2874 = vunpack.c.h.b16 %v1325
    %v2875 = vunpack.c.l.b16 %v1326
    %v2876 = vunpack.c.h.b16 %v1326
    %v2877 = vunpack.c.l.b16 %v1327
    %v2878 = vunpack.c.h.b16 %v1327
    %v2879 = vunpack.c.l.b16 %v1328
    %v2880 = vunpack.c.h.b16 %v1328
    %v2881 = vunpack.c.l.b16 %v1329
    %v2882 = vunpack.c.h.b16 %v1329
    %v2883 = vunpack.c.l.b16 %v1330
    %v2884 = vunpack.c.h.b16 %v1330
    %v2885 = vunpack.c.l.b16 %v1331
    %v2886 = vunpack.c.h.b16 %v1331
    %v2887 = vunpack.c.l.b16 %v1332
    %v2888 = vunpack.c.h.b16 %v1332
    %v2889 = vunpack.c.l.b16 %v1333
    %v2890 = vunpack.c.h.b16 %v1333
    %v2891 = vunpack.c.l.b16 %v1334
    %v2892 = vunpack.c.h.b16 %v1334
    %v2893 = vunpack.c.l.b16 %v1335
    %v2894 = vunpack.c.h.b16 %v1335
    %v2895 = vunpack.c.l.b16 %v1336
    %v2896 = vunpack.c.h.b16 %v1336
    %v2897 = vunpack.c.l.b16 %v1337
    %v2898 = vunpack.c.h.b16 %v1337
    %v2899 = vunpack.c.l.b16 %v1338
    %v2900 = vunpack.c.h.b16 %v1338
    %v2901 = vunpack.c.l.b16 %v1339
    %v2902 = vunpack.c.h.b16 %v1339
    %v2903 = vunpack.c.l.b16 %v1340
    %v2904 = vunpack.c.h.b16 %v1340
    %v2905 = vunpack.c.l.b16 %v1341
    %v2906 = vunpack.c.h.b16 %v1341
    %v2907 = vunpack.c.l.b16 %v1342
    %v2908 = vunpack.c.h.b16 %v1342
    %v2909 = vunpack.c.l.b16 %v1343
    %v2910 = vunpack.c.h.b16 %v1343
    %v2911 = vunpack.c.l.b16 %v1344
    %v2912 = vunpack.c.h.b16 %v1344
    %v2913 = vunpack.c.l.b16 %v1345
    %v2914 = vunpack.c.h.b16 %v1345
    %v2915 = vunpack.c.l.b16 %v1346
    %v2916 = vunpack.c.h.b16 %v1346
    %v2917 = vunpack.c.l.b16 %v1347
    %v2918 = vunpack.c.h.b16 %v1347
    %v2919 = vunpack.c.l.b16 %v1348
    %v2920 = vunpack.c.h.b16 %v1348
    %v2921 = vunpack.c.l.b16 %v1349
    %v2922 = vunpack.c.h.b16 %v1349
    %v2923 = vunpack.c.l.b16 %v1350
    %v2924 = vunpack.c.h.b16 %v1350
    %v2925 = vunpack.c.l.b16 %v1351
    %v2926 = vunpack.c.h.b16 %v1351
    %v2927 = vunpack.c.l.b16 %v1352
    %v2928 = vunpack.c.h.b16 %v1352
    %v2929 = vunpack.c.l.b16 %v1353
    %v2930 = vunpack.c.h.b16 %v1353
    %v2931 = vunpack.c.l.b16 %v1354
    %v2932 = vunpack.c.h.b16 %v1354
    %v2933 = vunpack.c.l.b16 %v1355
    %v2934 = vunpack.c.h.b16 %v1355
    %v2935 = vunpack.c.l.b16 %v1356
    %v2936 = vunpack.c.h.b16 %v1356
    %v2937 = vunpack.c.l.b16 %v1357
    %v2938 = vunpack.c.h.b16 %v1357
    %v2939 = vunpack.c.l.b16 %v1358
    %v2940 = vunpack.c.h.b16 %v1358
    %v2941 = vunpack.c.l.b16 %v1359
    %v2942 = vunpack.c.h.b16 %v1359
    %v2943 = vunpack.c.l.b16 %v1360
    %v2944 = vunpack.c.h.b16 %v1360
    %v2945 = vunpack.c.l.b16 %v1361
    %v2946 = vunpack.c.h.b16 %v1361
    %v2947 = vunpack.c.l.b16 %v1362
    %v2948 = vunpack.c.h.b16 %v1362
    %v2949 = vunpack.c.l.b16 %v1363
    %v2950 = vunpack.c.h.b16 %v1363
    %v2951 = vunpack.c.l.b16 %v1364
    %v2952 = vunpack.c.h.b16 %v1364
    %v2953 = vunpack.c.l.b16 %v1365
    %v2954 = vunpack.c.h.b16 %v1365
    %v2955 = vunpack.c.l.b16 %v1366
    %v2956 = vunpack.c.h.b16 %v1366
    %v2957 = vunpack.c.l.b16 %v1367
    %v2958 = vunpack.c.h.b16 %v1367
    %v2959 = vunpack.c.l.b16 %v1368
    %v2960 = vunpack.c.h.b16 %v1368
    %v2961 = vunpack.c.l.b16 %v1369
    %v2962 = vunpack.c.h.b16 %v1369
    %v2963 = vunpack.c.l.b16 %v1370
    %v2964 = vunpack.c.h.b16 %v1370
    %v2965 = vunpack.c.l.b16 %v1371
    %v2966 = vunpack.c.h.b16 %v1371
    %v2967 = vunpack.c.l.b16 %v1372
    %v2968 = vunpack.c.h.b16 %v1372
    %v2969 = vunpack.c.l.b16 %v1373
    %v2970 = vunpack.c.h.b16 %v1373
    %v2971 = vunpack.c.l.b16 %v1374
    %v2972 = vunpack.c.h.b16 %v1374
    %v2973 = vunpack.c.l.b16 %v1375
    %v2974 = vunpack.c.h.b16 %v1375
    %v2975 = vunpack.c.l.b16 %v1376
    %v2976 = vunpack.c.h.b16 %v1376
    %v2977 = vunpack.c.l.b16 %v1377
    %v2978 = vunpack.c.h.b16 %v1377
    %v2979 = vunpack.c.l.b16 %v1378
    %v2980 = vunpack.c.h.b16 %v1378
    %v2981 = vunpack.c.l.b16 %v1379
    %v2982 = vunpack.c.h.b16 %v1379
    %v2983 = vunpack.c.l.b16 %v1380
    %v2984 = vunpack.c.h.b16 %v1380
    %v2985 = vunpack.c.l.b16 %v1381
    %v2986 = vunpack.c.h.b16 %v1381
    %v2987 = vunpack.c.l.b16 %v1382
    %v2988 = vunpack.c.h.b16 %v1382
    %v2989 = vunpack.c.l.b16 %v1383
    %v2990 = vunpack.c.h.b16 %v1383
    %v2991 = vunpack.c.l.b16 %v1384
    %v2992 = vunpack.c.h.b16 %v1384
    %v2993 = vunpack.c.l.b16 %v1385
    %v2994 = vunpack.c.h.b16 %v1385
    %v2995 = vunpack.c.l.b16 %v1386
    %v2996 = vunpack.c.h.b16 %v1386
    %v2997 = vunpack.c.l.b16 %v1387
    %v2998 = vunpack.c.h.b16 %v1387
    %v2999 = vunpack.c.l.b16 %v1388
    %v3000 = vunpack.c.h.b16 %v1388
    %v3001 = vunpack.c.l.b16 %v1389
    %v3002 = vunpack.c.h.b16 %v1389
    %v3003 = vunpack.c.l.b16 %v1390
    %v3004 = vunpack.c.h.b16 %v1390
    %v3005 = vunpack.c.l.b16 %v1391
    %v3006 = vunpack.c.h.b16 %v1391
    %v3007 = vunpack.c.l.b16 %v1392
    %v3008 = vunpack.c.h.b16 %v1392
    %v3009 = vunpack.c.l.b16 %v1393
    %v3010 = vunpack.c.h.b16 %v1393
    %v3011 = vunpack.c.l.b16 %v1394
    %v3012 = vunpack.c.h.b16 %v1394
    %v3013 = vunpack.c.l.b16 %v1395
    %v3014 = vunpack.c.h.b16 %v1395
    %v3015 = vunpack.c.l.b16 %v1396
    %v3016 = vunpack.c.h.b16 %v1396
    %v3017 = vunpack.c.l.b16 %v1397
    %v3018 = vunpack.c.h.b16 %v1397
    %v3019 = vunpack.c.l.b16 %v1398
    %v3020 = vunpack.c.h.b16 %v1398
    %v3021 = vunpack.c.l.b16 %v1399
    %v3022 = vunpack.c.h.b16 %v1399
    %v3023 = vunpack.c.l.b16 %v1400
    %v3024 = vunpack.c.h.b16 %v1400
    %v3025 = vunpack.c.l.b16 %v1401
    %v3026 = vunpack.c.h.b16 %v1401
    %v3027 = vunpack.c.l.b16 %v1402
    %v3028 = vunpack.c.h.b16 %v1402
    %v3029 = vunpack.c.l.b16 %v1403
    %v3030 = vunpack.c.h.b16 %v1403
    %v3031 = vunpack.c.l.b16 %v1404
    %v3032 = vunpack.c.h.b16 %v1404
    %v3033 = vunpack.c.l.b16 %v1405
    %v3034 = vunpack.c.h.b16 %v1405
    %v3035 = vunpack.c.l.b16 %v1406
    %v3036 = vunpack.c.h.b16 %v1406
    %v3037 = vunpack.c.l.b16 %v1407
    %v3038 = vunpack.c.h.b16 %v1407
    %v3039 = vunpack.c.l.b16 %v1408
    %v3040 = vunpack.c.h.b16 %v1408
    %v3041 = vunpack.c.l.b16 %v1409
    %v3042 = vunpack.c.h.b16 %v1409
    %v3043 = vunpack.c.l.b16 %v1410
    %v3044 = vunpack.c.h.b16 %v1410
    %v3045 = vunpack.c.l.b16 %v1411
    %v3046 = vunpack.c.h.b16 %v1411
    %v3047 = vunpack.c.l.b16 %v1412
    %v3048 = vunpack.c.h.b16 %v1412
    %v3049 = vpack.c.b16 %v2047, %v2041
    %v3050 = vpack.c.b16 %v2048, %v2042
    %v3051 = vpack.c.b16 %v2049, %v2043
    %v3052 = vpack.c.b16 %v2050, %v2044
    %v3053 = vpack.c.b16 %v2051, %v2045
    %v3054 = vpack.c.b16 %v2052, %v2046
    %v3055 = vpack.c.b16 %v2059, %v2053
    %v3056 = vpack.c.b16 %v2060, %v2054
    %v3057 = vpack.c.b16 %v2061, %v2055
    %v3058 = vpack.c.b16 %v2062, %v2056
    %v3059 = vpack.c.b16 %v2063, %v2057
    %v3060 = vpack.c.b16 %v2064, %v2058
    %v3061 = vpack.c.b16 %v2071, %v2065
    %v3062 = vpack.c.b16 %v2072, %v2066
    %v3063 = vpack.c.b16 %v2073, %v2067
    %v3064 = vpack.c.b16 %v2074, %v2068
    %v3065 = vpack.c.b16 %v2075, %v2069
    %v3066 = vpack.c.b16 %v2076, %v2070
    %v3067 = vpack.c.b16 %v2083, %v2077
    %v3068 = vpack.c.b16 %v2084, %v2078
    %v3069 = vpack.c.b16 %v2085, %v2079
    %v3070 = vpack.c.b16 %v2086, %v2080
    %v3071 = vpack.c.b16 %v2087, %v2081
    %v3072 = vpack.c.b16 %v2088, %v2082
    %v3073 = vpack.c.b16 %v2095, %v2089
    %v3074 = vpack.c.b16 %v2096, %v2090
    %v3075 = vpack.c.b16 %v2097, %v2091
    %v3076 = vpack.c.b16 %v2098, %v2092
    %v3077 = vpack.c.b16 %v2099, %v2093
    %v3078 = vpack.c.b16 %v2100, %v2094
    %v3079 = vpack.c.b16 %v2107, %v2101
    %v3080 = vpack.c.b16 %v2108, %v2102
    %v3081 = vpack.c.b16 %v2109, %v2103
    %v3082 = vpack.c.b16 %v2110, %v2104
    %v3083 = vpack.c.b16 %v2111, %v2105
    %v3084 = vpack.c.b16 %v2112, %v2106
    %v3085 = vpack.c.b16 %v2119, %v2113
    %v3086 = vpack.c.b16 %v2120, %v2114
    %v3087 = vpack.c.b16 %v2121, %v2115
    %v3088 = vpack.c.b16 %v2122, %v2116
    %v3089 = vpack.c.b16 %v2123, %v2117
    %v3090 = vpack.c.b16 %v2124, %v2118
    %v3091 = vpack.c.b16 %v2131, %v2125
    %v3092 = vpack.c.b16 %v2132, %v2126
    %v3093 = vpack.c.b16 %v2133, %v2127
    %v3094 = vpack.c.b16 %v2134, %v2128
    %v3095 = vpack.c.b16 %v2135, %v2129
    %v3096 = vpack.c.b16 %v2136, %v2130
    %v3097 = vpack.c.b16 %v2143, %v2137
    %v3098 = vpack.c.b16 %v2144, %v2138
    %v3099 = vpack.c.b16 %v2145, %v2139
    %v3100 = vpack.c.b16 %v2146, %v2140
    %v3101 = vpack.c.b16 %v2147, %v2141
    %v3102 = vpack.c.b16 %v2148, %v2142
    %v3103 = vpack.c.b16 %v2155, %v2149
    %v3104 = vpack.c.b16 %v2156, %v2150
    %v3105 = vpack.c.b16 %v2157, %v2151
    %v3106 = vpack.c.b16 %v2158, %v2152
    %v3107 = vpack.c.b16 %v2159, %v2153
    %v3108 = vpack.c.b16 %v2160, %v2154
    %v3109 = vpack.c.b16 %v2167, %v2161
    %v3110 = vpack.c.b16 %v2168, %v2162
    %v3111 = vpack.c.b16 %v2169, %v2163
    %v3112 = vpack.c.b16 %v2170, %v2164
    %v3113 = vpack.c.b16 %v2171, %v2165
    %v3114 = vpack.c.b16 %v2172, %v2166
    %v3115 = vpack.c.b16 %v2179, %v2173
    %v3116 = vpack.c.b16 %v2180, %v2174
    %v3117 = vpack.c.b16 %v2181, %v2175
    %v3118 = vpack.c.b16 %v2182, %v2176
    %v3119 = vpack.c.b16 %v2183, %v2177
    %v3120 = vpack.c.b16 %v2184, %v2178
    %v3121 = vpack.c.b16 %v2191, %v2185
    %v3122 = vpack.c.b16 %v2192, %v2186
    %v3123 = vpack.c.b16 %v2193, %v2187
    %v3124 = vpack.c.b16 %v2194, %v2188
    %v3125 = vpack.c.b16 %v2195, %v2189
    %v3126 = vpack.c.b16 %v2196, %v2190
    %v3127 = vpack.c.b16 %v2203, %v2197
    %v3128 = vpack.c.b16 %v2204, %v2198
    %v3129 = vpack.c.b16 %v2205, %v2199
    %v3130 = vpack.c.b16 %v2206, %v2200
    %v3131 = vpack.c.b16 %v2207, %v2201
    %v3132 = vpack.c.b16 %v2208, %v2202
    %v3133 = vpack.c.b16 %v2215, %v2209
    %v3134 = vpack.c.b16 %v2216, %v2210
    %v3135 = vpack.c.b16 %v2217, %v2211
    %v3136 = vpack.c.b16 %v2218, %v2212
    %v3137 = vpack.c.b16 %v2219, %v2213
    %v3138 = vpack.c.b16 %v2220, %v2214
    %v3139 = vpack.c.b16 %v2227, %v2221
    %v3140 = vpack.c.b16 %v2228, %v2222
    %v3141 = vpack.c.b16 %v2229, %v2223
    %v3142 = vpack.c.b16 %v2230, %v2224
    %v3143 = vpack.c.b16 %v2231, %v2225
    %v3144 = vpack.c.b16 %v2232, %v2226
    %v3145 = vpack.c.b16 %v2239, %v2233
    %v3146 = vpack.c.b16 %v2240, %v2234
    %v3147 = vpack.c.b16 %v2241, %v2235
    %v3148 = vpack.c.b16 %v2242, %v2236
    %v3149 = vpack.c.b16 %v2243, %v2237
    %v3150 = vpack.c.b16 %v2244, %v2238
    %v3151 = vpack.c.b16 %v2251, %v2245
    %v3152 = vpack.c.b16 %v2252, %v2246
    %v3153 = vpack.c.b16 %v2253, %v2247
    %v3154 = vpack.c.b16 %v2254, %v2248
    %v3155 = vpack.c.b16 %v2255, %v2249
    %v3156 = vpack.c.b16 %v2256, %v2250
    %v3157 = vpack.c.b16 %v2263, %v2257
    %v3158 = vpack.c.b16 %v2264, %v2258
    %v3159 = vpack.c.b16 %v2265, %v2259
    %v3160 = vpack.c.b16 %v2266, %v2260
    %v3161 = vpack.c.b16 %v2267, %v2261
    %v3162 = vpack.c.b16 %v2268, %v2262
    %v3163 = vpack.c.b16 %v2275, %v2269
    %v3164 = vpack.c.b16 %v2276, %v2270
    %v3165 = vpack.c.b16 %v2277, %v2271
    %v3166 = vpack.c.b16 %v2278, %v2272
    %v3167 = vpack.c.b16 %v2279, %v2273
    %v3168 = vpack.c.b16 %v2280, %v2274
    %v3169 = vpack.c.b16 %v2287, %v2281
    %v3170 = vpack.c.b16 %v2288, %v2282
    %v3171 = vpack.c.b16 %v2289, %v2283
    %v3172 = vpack.c.b16 %v2290, %v2284
    %v3173 = vpack.c.b16 %v2291, %v2285
    %v3174 = vpack.c.b16 %v2292, %v2286
    %v3175 = vpack.c.b16 %v2299, %v2293
    %v3176 = vpack.c.b16 %v2300, %v2294
    %v3177 = vpack.c.b16 %v2301, %v2295
    %v3178 = vpack.c.b16 %v2302, %v2296
    %v3179 = vpack.c.b16 %v2303, %v2297
    %v3180 = vpack.c.b16 %v2304, %v2298
    %v3181 = vpack.c.b16 %v2311, %v2305
    %v3182 = vpack.c.b16 %v2312, %v2306
    %v3183 = vpack.c.b16 %v2313, %v2307
    %v3184 = vpack.c.b16 %v2314, %v2308
    %v3185 = vpack.c.b16 %v2315, %v2309
    %v3186 = vpack.c.b16 %v2316, %v2310
    %v3187 = vpack.c.b16 %v2323, %v2317
    %v3188 = vpack.c.b16 %v2324, %v2318
    %v3189 = vpack.c.b16 %v2325, %v2319
    %v3190 = vpack.c.b16 %v2326, %v2320
    %v3191 = vpack.c.b16 %v2327, %v2321
    %v3192 = vpack.c.b16 %v2328, %v2322
    %v3193 = vpack.c.b16 %v2335, %v2329
    %v3194 = vpack.c.b16 %v2336, %v2330
    %v3195 = vpack.c.b16 %v2337, %v2331
    %v3196 = vpack.c.b16 %v2338, %v2332
    %v3197 = vpack.c.b16 %v2339, %v2333
    %v3198 = vpack.c.b16 %v2340, %v2334
    %v3199 = vpack.c.b16 %v2347, %v2341
    %v3200 = vpack.c.b16 %v2348, %v2342
    %v3201 = vpack.c.b16 %v2349, %v2343
    %v3202 = vpack.c.b16 %v2350, %v2344
    %v3203 = vpack.c.b16 %v2351, %v2345
    %v3204 = vpack.c.b16 %v2352, %v2346
    %v3205 = vpack.c.b16 %v2359, %v2353
    %v3206 = vpack.c.b16 %v2360, %v2354
    %v3207 = vpack.c.b16 %v2361, %v2355
    %v3208 = vpack.c.b16 %v2362, %v2356
    %v3209 = vpack.c.b16 %v2363, %v2357
    %v3210 = vpack.c.b16 %v2364, %v2358
    %v3211 = vpack.c.b16 %v2371, %v2365
    %v3212 = vpack.c.b16 %v2372, %v2366
    %v3213 = vpack.c.b16 %v2373, %v2367
    %v3214 = vpack.c.b16 %v2374, %v2368
    %v3215 = vpack.c.b16 %v2375, %v2369
    %v3216 = vpack.c.b16 %v2376, %v2370
    %v3217 = vpack.c.b16 %v2383, %v2377
    %v3218 = vpack.c.b16 %v2384, %v2378
    %v3219 = vpack.c.b16 %v2385, %v2379
    %v3220 = vpack.c.b16 %v2386, %v2380
    %v3221 = vpack.c.b16 %v2387, %v2381
    %v3222 = vpack.c.b16 %v2388, %v2382
    %v3223 = vpack.c.b16 %v2395, %v2389
    %v3224 = vpack.c.b16 %v2396, %v2390
    %v3225 = vpack.c.b16 %v2397, %v2391
    %v3226 = vpack.c.b16 %v2398, %v2392
    %v3227 = vpack.c.b16 %v2399, %v2393
    %v3228 = vpack.c.b16 %v2400, %v2394
    %v3229 = vpack.c.b16 %v2407, %v2401
    %v3230 = vpack.c.b16 %v2408, %v2402
    %v3231 = vpack.c.b16 %v2409, %v2403
    %v3232 = vpack.c.b16 %v2410, %v2404
    %v3233 = vpack.c.b16 %v2411, %v2405
    %v3234 = vpack.c.b16 %v2412, %v2406
    %v3235 = vpack.c.b16 %v2419, %v2413
    %v3236 = vpack.c.b16 %v2420, %v2414
    %v3237 = vpack.c.b16 %v2421, %v2415
    %v3238 = vpack.c.b16 %v2422, %v2416
    %v3239 = vpack.c.b16 %v2423, %v2417
    %v3240 = vpack.c.b16 %v2424, %v2418
    %v3241 = vpack.c.b16 %v2431, %v2425
    %v3242 = vpack.c.b16 %v2432, %v2426
    %v3243 = vpack.c.b16 %v2433, %v2427
    %v3244 = vpack.c.b16 %v2434, %v2428
    %v3245 = vpack.c.b16 %v2435, %v2429
    %v3246 = vpack.c.b16 %v2436, %v2430
    %v3247 = vpack.c.b16 %v2443, %v2437
    %v3248 = vpack.c.b16 %v2444, %v2438
    %v3249 = vpack.c.b16 %v2445, %v2439
    %v3250 = vpack.c.b16 %v2446, %v2440
    %v3251 = vpack.c.b16 %v2447, %v2441
    %v3252 = vpack.c.b16 %v2448, %v2442
    %v3253 = vpack.c.b16 %v2455, %v2449
    %v3254 = vpack.c.b16 %v2456, %v2450
    %v3255 = vpack.c.b16 %v2457, %v2451
    %v3256 = vpack.c.b16 %v2458, %v2452
    %v3257 = vpack.c.b16 %v2459, %v2453
    %v3258 = vpack.c.b16 %v2460, %v2454
    %v3259 = vpack.c.b16 %v2467, %v2461
    %v3260 = vpack.c.b16 %v2468, %v2462
    %v3261 = vpack.c.b16 %v2469, %v2463
    %v3262 = vpack.c.b16 %v2470, %v2464
    %v3263 = vpack.c.b16 %v2471, %v2465
    %v3264 = vpack.c.b16 %v2472, %v2466
    %v3265 = vpack.c.b16 %v2479, %v2473
    %v3266 = vpack.c.b16 %v2480, %v2474
    %v3267 = vpack.c.b16 %v2481, %v2475
    %v3268 = vpack.c.b16 %v2482, %v2476
    %v3269 = vpack.c.b16 %v2483, %v2477
    %v3270 = vpack.c.b16 %v2484, %v2478
    %v3271 = vpack.c.b16 %v2491, %v2485
    %v3272 = vpack.c.b16 %v2492, %v2486
    %v3273 = vpack.c.b16 %v2493, %v2487
    %v3274 = vpack.c.b16 %v2494, %v2488
    %v3275 = vpack.c.b16 %v2495, %v2489
    %v3276 = vpack.c.b16 %v2496, %v2490
    %v3277 = vpack.c.b16 %v2503, %v2497
    %v3278 = vpack.c.b16 %v2504, %v2498
    %v3279 = vpack.c.b16 %v2505, %v2499
    %v3280 = vpack.c.b16 %v2506, %v2500
    %v3281 = vpack.c.b16 %v2507, %v2501
    %v3282 = vpack.c.b16 %v2508, %v2502
    %v3283 = vpack.c.b16 %v2515, %v2509
    %v3284 = vpack.c.b16 %v2516, %v2510
    %v3285 = vpack.c.b16 %v2517, %v2511
    %v3286 = vpack.c.b16 %v2518, %v2512
    %v3287 = vpack.c.b16 %v2519, %v2513
    %v3288 = vpack.c.b16 %v2520, %v2514
    %v3289 = vpack.c.b16 %v2527, %v2521
    %v3290 = vpack.c.b16 %v2528, %v2522
    %v3291 = vpack.c.b16 %v2529, %v2523
    %v3292 = vpack.c.b16 %v2530, %v2524
    %v3293 = vpack.c.b16 %v2531, %v2525
    %v3294 = vpack.c.b16 %v2532, %v2526
    %v3295 = vpack.c.b16 %v2539, %v2533
    %v3296 = vpack.c.b16 %v2540, %v2534
    %v3297 = vpack.c.b16 %v2541, %v2535
    %v3298 = vpack.c.b16 %v2542, %v2536
    %v3299 = vpack.c.b16 %v2543, %v2537
    %v3300 = vpack.c.b16 %v2544, %v2538
    %v3301 = vpack.c.b16 %v2551, %v2545
    %v3302 = vpack.c.b16 %v2552, %v2546
    %v3303 = vpack.c.b16 %v2553, %v2547
    %v3304 = vpack.c.b16 %v2554, %v2548
    %v3305 = vpack.c.b16 %v2555, %v2549
    %v3306 = vpack.c.b16 %v2556, %v2550
    %v3307 = vpack.c.b16 %v2563, %v2557
    %v3308 = vpack.c.b16 %v2564, %v2558
    %v3309 = vpack.c.b16 %v2565, %v2559
    %v3310 = vpack.c.b16 %v2566, %v2560
    %v3311 = vpack.c.b16 %v2567, %v2561
    %v3312 = vpack.c.b16 %v2568, %v2562
    %v3313 = vpack.c.b16 %v2575, %v2569
    %v3314 = vpack.c.b16 %v2576, %v2570
    %v3315 = vpack.c.b16 %v2577, %v2571
    %v3316 = vpack.c.b16 %v2578, %v2572
    %v3317 = vpack.c.b16 %v2579, %v2573
    %v3318 = vpack.c.b16 %v2580, %v2574
    %v3319 = vpack.c.b16 %v2587, %v2581
    %v3320 = vpack.c.b16 %v2588, %v2582
    %v3321 = vpack.c.b16 %v2589, %v2583
    %v3322 = vpack.c.b16 %v2590, %v2584
    %v3323 = vpack.c.b16 %v2591, %v2585
    %v3324 = vpack.c.b16 %v2592, %v2586
    %v3325 = vpack.c.b16 %v2599, %v2593
    %v3326 = vpack.c.b16 %v2600, %v2594
    %v3327 = vpack.c.b16 %v2601, %v2595
    %v3328 = vpack.c.b16 %v2602, %v2596
    %v3329 = vpack.c.b16 %v2603, %v2597
    %v3330 = vpack.c.b16 %v2604, %v2598
    %v3331 = vpack.c.b16 %v2611, %v2605
    %v3332 = vpack.c.b16 %v2612, %v2606
    %v3333 = vpack.c.b16 %v2613, %v2607
    %v3334 = vpack.c.b16 %v2614, %v2608
    %v3335 = vpack.c.b16 %v2615, %v2609
    %v3336 = vpack.c.b16 %v2616, %v2610
    %v3337 = vpack.c.b16 %v2623, %v2617
    %v3338 = vpack.c.b16 %v2624, %v2618
    %v3339 = vpack.c.b16 %v2625, %v2619
    %v3340 = vpack.c.b16 %v2626, %v2620
    %v3341 = vpack.c.b16 %v2627, %v2621
    %v3342 = vpack.c.b16 %v2628, %v2622
    %v3343 = vpack.c.b16 %v2635, %v2629
    %v3344 = vpack.c.b16 %v2636, %v2630
    %v3345 = vpack.c.b16 %v2637, %v2631
    %v3346 = vpack.c.b16 %v2638, %v2632
    %v3347 = vpack.c.b16 %v2639, %v2633
    %v3348 = vpack.c.b16 %v2640, %v2634
    %v3349 = vpack.c.b16 %v2647, %v2641
    %v3350 = vpack.c.b16 %v2648, %v2642
    %v3351 = vpack.c.b16 %v2649, %v2643
    %v3352 = vpack.c.b16 %v2650, %v2644
    %v3353 = vpack.c.b16 %v2651, %v2645
    %v3354 = vpack.c.b16 %v2652, %v2646
    %v3355 = vpack.c.b16 %v2659, %v2653
    %v3356 = vpack.c.b16 %v2660, %v2654
    %v3357 = vpack.c.b16 %v2661, %v2655
    %v3358 = vpack.c.b16 %v2662, %v2656
    %v3359 = vpack.c.b16 %v2663, %v2657
    %v3360 = vpack.c.b16 %v2664, %v2658
    %v3361 = vpack.c.b16 %v2671, %v2665
    %v3362 = vpack.c.b16 %v2672, %v2666
    %v3363 = vpack.c.b16 %v2673, %v2667
    %v3364 = vpack.c.b16 %v2674, %v2668
    %v3365 = vpack.c.b16 %v2675, %v2669
    %v3366 = vpack.c.b16 %v2676, %v2670
    %v3367 = vpack.c.b16 %v2683, %v2677
    %v3368 = vpack.c.b16 %v2684, %v2678
    %v3369 = vpack.c.b16 %v2685, %v2679
    %v3370 = vpack.c.b16 %v2686, %v2680
    %v3371 = vpack.c.b16 %v2687, %v2681
    %v3372 = vpack.c.b16 %v2688, %v2682
    %v3373 = vpack.c.b16 %v2695, %v2689
    %v3374 = vpack.c.b16 %v2696, %v2690
    %v3375 = vpack.c.b16 %v2697, %v2691
    %v3376 = vpack.c.b16 %v2698, %v2692
    %v3377 = vpack.c.b16 %v2699, %v2693
    %v3378 = vpack.c.b16 %v2700, %v2694
    %v3379 = vpack.c.b16 %v2707, %v2701
    %v3380 = vpack.c.b16 %v2708, %v2702
    %v3381 = vpack.c.b16 %v2709, %v2703
    %v3382 = vpack.c.b16 %v2710, %v2704
    %v3383 = vpack.c.b16 %v2711, %v2705
    %v3384 = vpack.c.b16 %v2712, %v2706
    %v3385 = vpack.c.b16 %v2719, %v2713
    %v3386 = vpack.c.b16 %v2720, %v2714
    %v3387 = vpack.c.b16 %v2721, %v2715
    %v3388 = vpack.c.b16 %v2722, %v2716
    %v3389 = vpack.c.b16 %v2723, %v2717
    %v3390 = vpack.c.b16 %v2724, %v2718
    %v3391 = vpack.c.b16 %v2731, %v2725
    %v3392 = vpack.c.b16 %v2732, %v2726
    %v3393 = vpack.c.b16 %v2733, %v2727
    %v3394 = vpack.c.b16 %v2734, %v2728
    %v3395 = vpack.c.b16 %v2735, %v2729
    %v3396 = vpack.c.b16 %v2736, %v2730
    %v3397 = vpack.c.b16 %v2743, %v2737
    %v3398 = vpack.c.b16 %v2744, %v2738
    %v3399 = vpack.c.b16 %v2745, %v2739
    %v3400 = vpack.c.b16 %v2746, %v2740
    %v3401 = vpack.c.b16 %v2747, %v2741
    %v3402 = vpack.c.b16 %v2748, %v2742
    %v3403 = vpack.c.b16 %v2755, %v2749
    %v3404 = vpack.c.b16 %v2756, %v2750
    %v3405 = vpack.c.b16 %v2757, %v2751
    %v3406 = vpack.c.b16 %v2758, %v2752
    %v3407 = vpack.c.b16 %v2759, %v2753
    %v3408 = vpack.c.b16 %v2760, %v2754
    %v3409 = vpack.c.b16 %v2767, %v2761
    %v3410 = vpack.c.b16 %v2768, %v2762
    %v3411 = vpack.c.b16 %v2769, %v2763
    %v3412 = vpack.c.b16 %v2770, %v2764
    %v3413 = vpack.c.b16 %v2771, %v2765
    %v3414 = vpack.c.b16 %v2772, %v2766
    %v3415 = vpack.c.b16 %v2779, %v2773
    %v3416 = vpack.c.b16 %v2780, %v2774
    %v3417 = vpack.c.b16 %v2781, %v2775
    %v3418 = vpack.c.b16 %v2782, %v2776
    %v3419 = vpack.c.b16 %v2783, %v2777
    %v3420 = vpack.c.b16 %v2784, %v2778
    %v3421 = vpack.c.b16 %v2791, %v2785
    %v3422 = vpack.c.b16 %v2792, %v2786
    %v3423 = vpack.c.b16 %v2793, %v2787
    %v3424 = vpack.c.b16 %v2794, %v2788
    %v3425 = vpack.c.b16 %v2795, %v2789
    %v3426 = vpack.c.b16 %v2796, %v2790
    %v3427 = vpack.c.b16 %v2803, %v2797
    %v3428 = vpack.c.b16 %v2804, %v2798
    %v3429 = vpack.c.b16 %v2805, %v2799
    %v3430 = vpack.c.b16 %v2806, %v2800
    %v3431 = vpack.c.b16 %v2807, %v2801
    %v3432 = vpack.c.b16 %v2808, %v2802
    %v3433 = vpack.c.b16 %v2815, %v2809
    %v3434 = vpack.c.b16 %v2816, %v2810
    %v3435 = vpack.c.b16 %v2817, %v2811
    %v3436 = vpack.c.b16 %v2818, %v2812
    %v3437 = vpack.c.b16 %v2819, %v2813
    %v3438 = vpack.c.b16 %v2820, %v2814
    %v3439 = vpack.c.b16 %v2827, %v2821
    %v3440 = vpack.c.b16 %v2828, %v2822
    %v3441 = vpack.c.b16 %v2829, %v2823
    %v3442 = vpack.c.b16 %v2830, %v2824
    %v3443 = vpack.c.b16 %v2831, %v2825
    %v3444 = vpack.c.b16 %v2832, %v2826
    %v3445 = vpack.c.b16 %v2839, %v2833
    %v3446 = vpack.c.b16 %v2840, %v2834
    %v3447 = vpack.c.b16 %v2841, %v2835
    %v3448 = vpack.c.b16 %v2842, %v2836
    %v3449 = vpack.c.b16 %v2843, %v2837
    %v3450 = vpack.c.b16 %v2844, %v2838
    %v3451 = vpack.c.b16 %v2851, %v2845
    %v3452 = vpack.c.b16 %v2852, %v2846
    %v3453 = vpack.c.b16 %v2853, %v2847
    %v3454 = vpack.c.b16 %v2854, %v2848
    %v3455 = vpack.c.b16 %v2855, %v2849
    %v3456 = vpack.c.b16 %v2856, %v2850
    %v3457 = vpack.c.b16 %v2863, %v2857
    %v3458 = vpack.c.b16 %v2864, %v2858
    %v3459 = vpack.c.b16 %v2865, %v2859
    %v3460 = vpack.c.b16 %v2866, %v2860
    %v3461 = vpack.c.b16 %v2867, %v2861
    %v3462 = vpack.c.b16 %v2868, %v2862
    %v3463 = vpack.c.b16 %v2875, %v2869
    %v3464 = vpack.c.b16 %v2876, %v2870
    %v3465 = vpack.c.b16 %v2877, %v2871
    %v3466 = vpack.c.b16 %v2878, %v2872
    %v3467 = vpack.c.b16 %v2879, %v2873
    %v3468 = vpack.c.b16 %v2880, %v2874
    %v3469 = vpack.c.b16 %v2887, %v2881
    %v3470 = vpack.c.b16 %v2888, %v2882
    %v3471 = vpack.c.b16 %v2889, %v2883
    %v3472 = vpack.c.b16 %v2890, %v2884
    %v3473 = vpack.c.b16 %v2891, %v2885
    %v3474 = vpack.c.b16 %v2892, %v2886
    %v3475 = vpack.c.b16 %v2899, %v2893
    %v3476 = vpack.c.b16 %v2900, %v2894
    %v3477 = vpack.c.b16 %v2901, %v2895
    %v3478 = vpack.c.b16 %v2902, %v2896
    %v3479 = vpack.c.b16 %v2903, %v2897
    %v3480 = vpack.c.b16 %v2904, %v2898
    %v3481 = vpack.c.b16 %v2911, %v2905
    %v3482 = vpack.c.b16 %v2912, %v2906
    %v3483 = vpack.c.b16 %v2913, %v2907
    %v3484 = vpack.c.b16 %v2914, %v2908
    %v3485 = vpack.c.b16 %v2915, %v2909
    %v3486 = vpack.c.b16 %v2916, %v2910
    %v3487 = vpack.c.b16 %v2923, %v2917
    %v3488 = vpack.c.b16 %v2924, %v2918
    %v3489 = vpack.c.b16 %v2925, %v2919
    %v3490 = vpack.c.b16 %v2926, %v2920
    %v3491 = vpack.c.b16 %v2927, %v2921
    %v3492 = vpack.c.b16 %v2928, %v2922
    %v3493 = vpack.c.b16 %v2935, %v2929
    %v3494 = vpack.c.b16 %v2936, %v2930
    %v3495 = vpack.c.b16 %v2937, %v2931
    %v3496 = vpack.c.b16 %v2938, %v2932
    %v3497 = vpack.c.b16 %v2939, %v2933
    %v3498 = vpack.c.b16 %v2940, %v2934
    %v3499 = vpack.c.b16 %v2947, %v2941
    %v3500 = vpack.c.b16 %v2948, %v2942
    %v3501 = vpack.c.b16 %v2949, %v2943
    %v3502 = vpack.c.b16 %v2950, %v2944
    %v3503 = vpack.c.b16 %v2951, %v2945
    %v3504 = vpack.c.b16 %v2952, %v2946
    %v3505 = vpack.c.b16 %v2959, %v2953
    %v3506 = vpack.c.b16 %v2960, %v2954
    %v3507 = vpack.c.b16 %v2961, %v2955
    %v3508 = vpack.c.b16 %v2962, %v2956
    %v3509 = vpack.c.b16 %v2963, %v2957
    %v3510 = vpack.c.b16 %v2964, %v2958
    %v3511 = vpack.c.b16 %v2971, %v2965
    %v3512 = vpack.c.b16 %v2972, %v2966
    %v3513 = vpack.c.b16 %v2973, %v2967
    %v3514 = vpack.c.b16 %v2974, %v2968
    %v3515 = vpack.c.b16 %v2975, %v2969
    %v3516 = vpack.c.b16 %v2976, %v2970
    %v3517 = vpack.c.b16 %v2983, %v2977
    %v3518 = vpack.c.b16 %v2984, %v2978
    %v3519 = vpack.c.b16 %v2985, %v2979
    %v3520 = vpack.c.b16 %v2986, %v2980
    %v3521 = vpack.c.b16 %v2987, %v2981
    %v3522 = vpack.c.b16 %v2988, %v2982
    %v3523 = vpack.c.b16 %v2995, %v2989
    %v3524 = vpack.c.b16 %v2996, %v2990
    %v3525 = vpack.c.b16 %v2997, %v2991
    %v3526 = vpack.c.b16 %v2998, %v2992
    %v3527 = vpack.c.b16 %v2999, %v2993
    %v3528 = vpack.c.b16 %v3000, %v2994
    %v3529 = vpack.c.b16 %v3007, %v3001
    %v3530 = vpack.c.b16 %v3008, %v3002
    %v3531 = vpack.c.b16 %v3009, %v3003
    %v3532 = vpack.c.b16 %v3010, %v3004
    %v3533 = vpack.c.b16 %v3011, %v3005
    %v3534 = vpack.c.b16 %v3012, %v3006
    %v3535 = vpack.c.b16 %v3019, %v3013
    %v3536 = vpack.c.b16 %v3020, %v3014
    %v3537 = vpack.c.b16 %v3021, %v3015
    %v3538 = vpack.c.b16 %v3022, %v3016
    %v3539 = vpack.c.b16 %v3023, %v3017
    %v3540 = vpack.c.b16 %v3024, %v3018
    %v3541 = vpack.c.b16 %v3031, %v3025
    %v3542 = vpack.c.b16 %v3032, %v3026
    %v3543 = vpack.c.b16 %v3033, %v3027
    %v3544 = vpack.c.b16 %v3034, %v3028
    %v3545 = vpack.c.b16 %v3035, %v3029
    %v3546 = vpack.c.b16 %v3036, %v3030
    %v3547 = vpack.c.b16 %v3043, %v3037
    %v3548 = vpack.c.b16 %v3044, %v3038
    %v3549 = vpack.c.b16 %v3045, %v3039
    %v3550 = vpack.c.b16 %v3046, %v3040
    %v3551 = vpack.c.b16 %v3047, %v3041
    %v3552 = vpack.c.b16 %v3048, %v3042
    %v4058 = vsel %vm477, %v1505, 0
    %v4061 = vsel %vm477, %v1516, 0
    %4063 = vmatpush.bf16.msra.mxu0 %v3091
    %4064 = vmatpush.bf16.msra.mxu0 %v3085
    %4065 = vmatpush.bf16.msra.mxu0 %v3079
    %4066 = vmatpush.bf16.msra.mxu0 %v3073
    %4067 = vmatpush.bf16.msra.mxu0 %v3067
    %4068 = vmatpush.bf16.msra.mxu0 %v3061
    %4069 = vmatpush.bf16.msra.mxu0 %v3055
    %4070 = vmatpush.bf16.msra.mxu0 %v3049
    %4071 = vmatmul.bf16.gmra.mxu0 %v1495
    %v4072 = vpop.f32.mrf.mxu0
    %v4073 = vadd.f32 %v1415, %v4072
    %v4074 = vpop.f32.mrf.mxu0
    %v4075 = vadd.f32 %v1415, %v4074
    %4076 = vmatmul.bf16.gmra.mxu0 %v1506
    %v4077 = vpop.f32.mrf.mxu0
    %v4078 = vadd.f32 %v1415, %v4077
    %v4079 = vpop.f32.mrf.mxu0
    %v4080 = vadd.f32 %v1415, %v4079
    %4081 = vdwg.mxu0
    %4082 = vmatpush.bf16.msra.mxu0 %v3139
    %4083 = vmatpush.bf16.msra.mxu0 %v3133
    %4084 = vmatpush.bf16.msra.mxu0 %v3127
    %4085 = vmatpush.bf16.msra.mxu0 %v3121
    %4086 = vmatpush.bf16.msra.mxu0 %v3115
    %4087 = vmatpush.bf16.msra.mxu0 %v3109
    %4088 = vmatpush.bf16.msra.mxu0 %v3103
    %4089 = vmatpush.bf16.msra.mxu0 %v3097
    %4090 = vmatmul.bf16.gmra.mxu0 %v1496
    %v4091 = vpop.f32.mrf.mxu0
    %v4092 = vadd.f32 %v4073, %v4091
    %v4093 = vpop.f32.mrf.mxu0
    %v4094 = vadd.f32 %v4075, %v4093
    %4095 = vmatmul.bf16.gmra.mxu0 %v1507
    %v4096 = vpop.f32.mrf.mxu0
    %v4097 = vadd.f32 %v4078, %v4096
    %v4098 = vpop.f32.mrf.mxu0
    %v4099 = vadd.f32 %v4080, %v4098
    %4100 = vdwg.mxu0
    %4101 = vmatpush.bf16.msra.mxu0 %v3187
    %4102 = vmatpush.bf16.msra.mxu0 %v3181
    %4103 = vmatpush.bf16.msra.mxu0 %v3175
    %4104 = vmatpush.bf16.msra.mxu0 %v3169
    %4105 = vmatpush.bf16.msra.mxu0 %v3163
    %4106 = vmatpush.bf16.msra.mxu0 %v3157
    %4107 = vmatpush.bf16.msra.mxu0 %v3151
    %4108 = vmatpush.bf16.msra.mxu0 %v3145
    %4109 = vmatmul.bf16.gmra.mxu0 %v1497
    %v4110 = vpop.f32.mrf.mxu0
    %v4111 = vadd.f32 %v4092, %v4110
    %v4112 = vpop.f32.mrf.mxu0
    %v4113 = vadd.f32 %v4094, %v4112
    %4114 = vmatmul.bf16.gmra.mxu0 %v1508
    %v4115 = vpop.f32.mrf.mxu0
    %v4116 = vadd.f32 %v4097, %v4115
    %v4117 = vpop.f32.mrf.mxu0
    %v4118 = vadd.f32 %v4099, %v4117
    %4119 = vdwg.mxu0
    %4120 = vmatpush.bf16.msra.mxu0 %v3235
    %4121 = vmatpush.bf16.msra.mxu0 %v3229
    %4122 = vmatpush.bf16.msra.mxu0 %v3223
    %4123 = vmatpush.bf16.msra.mxu0 %v3217
    %4124 = vmatpush.bf16.msra.mxu0 %v3211
    %4125 = vmatpush.bf16.msra.mxu0 %v3205
    %4126 = vmatpush.bf16.msra.mxu0 %v3199
    %4127 = vmatpush.bf16.msra.mxu0 %v3193
    %4128 = vmatmul.bf16.gmra.mxu0 %v1498
    %v4129 = vpop.f32.mrf.mxu0
    %v4130 = vadd.f32 %v4111, %v4129
    %v4131 = vpop.f32.mrf.mxu0
    %v4132 = vadd.f32 %v4113, %v4131
    %4133 = vmatmul.bf16.gmra.mxu0 %v1509
    %v4134 = vpop.f32.mrf.mxu0
    %v4135 = vadd.f32 %v4116, %v4134
    %v4136 = vpop.f32.mrf.mxu0
    %v4137 = vadd.f32 %v4118, %v4136
    %4138 = vdwg.mxu0
    %4139 = vmatpush.bf16.msra.mxu0 %v3283
    %4140 = vmatpush.bf16.msra.mxu0 %v3277
    %4141 = vmatpush.bf16.msra.mxu0 %v3271
    %4142 = vmatpush.bf16.msra.mxu0 %v3265
    %4143 = vmatpush.bf16.msra.mxu0 %v3259
    %4144 = vmatpush.bf16.msra.mxu0 %v3253
    %4145 = vmatpush.bf16.msra.mxu0 %v3247
    %4146 = vmatpush.bf16.msra.mxu0 %v3241
    %4147 = vmatmul.bf16.gmra.mxu0 %v1499
    %v4148 = vpop.f32.mrf.mxu0
    %v4149 = vadd.f32 %v4130, %v4148
    %v4150 = vpop.f32.mrf.mxu0
    %v4151 = vadd.f32 %v4132, %v4150
    %4152 = vmatmul.bf16.gmra.mxu0 %v1510
    %v4153 = vpop.f32.mrf.mxu0
    %v4154 = vadd.f32 %v4135, %v4153
    %v4155 = vpop.f32.mrf.mxu0
    %v4156 = vadd.f32 %v4137, %v4155
    %4157 = vdwg.mxu0
    %4158 = vmatpush.bf16.msra.mxu0 %v3331
    %4159 = vmatpush.bf16.msra.mxu0 %v3325
    %4160 = vmatpush.bf16.msra.mxu0 %v3319
    %4161 = vmatpush.bf16.msra.mxu0 %v3313
    %4162 = vmatpush.bf16.msra.mxu0 %v3307
    %4163 = vmatpush.bf16.msra.mxu0 %v3301
    %4164 = vmatpush.bf16.msra.mxu0 %v3295
    %4165 = vmatpush.bf16.msra.mxu0 %v3289
    %4166 = vmatmul.bf16.gmra.mxu0 %v1500
    %v4167 = vpop.f32.mrf.mxu0
    %v4168 = vadd.f32 %v4149, %v4167
    %v4169 = vpop.f32.mrf.mxu0
    %v4170 = vadd.f32 %v4151, %v4169
    %4171 = vmatmul.bf16.gmra.mxu0 %v1511
    %v4172 = vpop.f32.mrf.mxu0
    %v4173 = vadd.f32 %v4154, %v4172
    %v4174 = vpop.f32.mrf.mxu0
    %v4175 = vadd.f32 %v4156, %v4174
    %4176 = vdwg.mxu0
    %4177 = vmatpush.bf16.msra.mxu0 %v3379
    %4178 = vmatpush.bf16.msra.mxu0 %v3373
    %4179 = vmatpush.bf16.msra.mxu0 %v3367
    %4180 = vmatpush.bf16.msra.mxu0 %v3361
    %4181 = vmatpush.bf16.msra.mxu0 %v3355
    %4182 = vmatpush.bf16.msra.mxu0 %v3349
    %4183 = vmatpush.bf16.msra.mxu0 %v3343
    %4184 = vmatpush.bf16.msra.mxu0 %v3337
    %4185 = vmatmul.bf16.gmra.mxu0 %v1501
    %v4186 = vpop.f32.mrf.mxu0
    %v4187 = vadd.f32 %v4168, %v4186
    %v4188 = vpop.f32.mrf.mxu0
    %v4189 = vadd.f32 %v4170, %v4188
    %4190 = vmatmul.bf16.gmra.mxu0 %v1512
    %v4191 = vpop.f32.mrf.mxu0
    %v4192 = vadd.f32 %v4173, %v4191
    %v4193 = vpop.f32.mrf.mxu0
    %v4194 = vadd.f32 %v4175, %v4193
    %4195 = vdwg.mxu0
    %4196 = vmatpush.bf16.msra.mxu0 %v3427
    %4197 = vmatpush.bf16.msra.mxu0 %v3421
    %4198 = vmatpush.bf16.msra.mxu0 %v3415
    %4199 = vmatpush.bf16.msra.mxu0 %v3409
    %4200 = vmatpush.bf16.msra.mxu0 %v3403
    %4201 = vmatpush.bf16.msra.mxu0 %v3397
    %4202 = vmatpush.bf16.msra.mxu0 %v3391
    %4203 = vmatpush.bf16.msra.mxu0 %v3385
    %4204 = vmatmul.bf16.gmra.mxu0 %v1502
    %v4205 = vpop.f32.mrf.mxu0
    %v4206 = vadd.f32 %v4187, %v4205
    %v4207 = vpop.f32.mrf.mxu0
    %v4208 = vadd.f32 %v4189, %v4207
    %4209 = vmatmul.bf16.gmra.mxu0 %v1513
    %v4210 = vpop.f32.mrf.mxu0
    %v4211 = vadd.f32 %v4192, %v4210
    %v4212 = vpop.f32.mrf.mxu0
    %v4213 = vadd.f32 %v4194, %v4212
    %4214 = vdwg.mxu0
    %4215 = vmatpush.bf16.msra.mxu0 %v3475
    %4216 = vmatpush.bf16.msra.mxu0 %v3469
    %4217 = vmatpush.bf16.msra.mxu0 %v3463
    %4218 = vmatpush.bf16.msra.mxu0 %v3457
    %4219 = vmatpush.bf16.msra.mxu0 %v3451
    %4220 = vmatpush.bf16.msra.mxu0 %v3445
    %4221 = vmatpush.bf16.msra.mxu0 %v3439
    %4222 = vmatpush.bf16.msra.mxu0 %v3433
    %4223 = vmatmul.bf16.gmra.mxu0 %v1503
    %v4224 = vpop.f32.mrf.mxu0
    %v4225 = vadd.f32 %v4206, %v4224
    %v4226 = vpop.f32.mrf.mxu0
    %v4227 = vadd.f32 %v4208, %v4226
    %4228 = vmatmul.bf16.gmra.mxu0 %v1514
    %v4229 = vpop.f32.mrf.mxu0
    %v4230 = vadd.f32 %v4211, %v4229
    %v4231 = vpop.f32.mrf.mxu0
    %v4232 = vadd.f32 %v4213, %v4231
    %4233 = vdwg.mxu0
    %4234 = vmatpush.bf16.msra.mxu0 %v3523
    %4235 = vmatpush.bf16.msra.mxu0 %v3517
    %4236 = vmatpush.bf16.msra.mxu0 %v3511
    %4237 = vmatpush.bf16.msra.mxu0 %v3505
    %4238 = vmatpush.bf16.msra.mxu0 %v3499
    %4239 = vmatpush.bf16.msra.mxu0 %v3493
    %4240 = vmatpush.bf16.msra.mxu0 %v3487
    %4241 = vmatpush.bf16.msra.mxu0 %v3481
    %4242 = vmatmul.bf16.gmra.mxu0 %v1504
    %v4243 = vpop.f32.mrf.mxu0
    %v4244 = vadd.f32 %v4225, %v4243
    %v4245 = vpop.f32.mrf.mxu0
    %v4246 = vadd.f32 %v4227, %v4245
    %4247 = vmatmul.bf16.gmra.mxu0 %v1515
    %v4248 = vpop.f32.mrf.mxu0
    %v4249 = vadd.f32 %v4230, %v4248
    %v4250 = vpop.f32.mrf.mxu0
    %v4251 = vadd.f32 %v4232, %v4250
    %4252 = vdwg.mxu0
    %4253 = vmatpush.bf16.msra.mxu0 0
    %4254 = vmatpush.bf16.msra.mxu0 0
    %4255 = vmatpush.bf16.msra.mxu0 0
    %4256 = vmatpush.bf16.msra.mxu0 0
    %4257 = vmatpush.bf16.msra.mxu0 %v3547
    %4258 = vmatpush.bf16.msra.mxu0 %v3541
    %4259 = vmatpush.bf16.msra.mxu0 %v3535
    %4260 = vmatpush.bf16.msra.mxu0 %v3529
    %4261 = vmatmul.bf16.gmra.mxu0 %v4058
    %v4262 = vpop.f32.mrf.mxu0
    %v4263 = vadd.f32 %v4244, %v4262
    %v4264 = vpop.f32.mrf.mxu0
    %v4265 = vadd.f32 %v4246, %v4264
    %4266 = vmatmul.bf16.gmra.mxu0 %v4061
    %v4267 = vpop.f32.mrf.mxu0
    %v4268 = vadd.f32 %v4249, %v4267
    %v4269 = vpop.f32.mrf.mxu0
    %v4270 = vadd.f32 %v4251, %v4269
    %4271 = vdwg.mxu0
    %4272 = vmatpush.bf16.msra.mxu0 %v3092
    %4273 = vmatpush.bf16.msra.mxu0 %v3086
    %4274 = vmatpush.bf16.msra.mxu0 %v3080
    %4275 = vmatpush.bf16.msra.mxu0 %v3074
    %4276 = vmatpush.bf16.msra.mxu0 %v3068
    %4277 = vmatpush.bf16.msra.mxu0 %v3062
    %4278 = vmatpush.bf16.msra.mxu0 %v3056
    %4279 = vmatpush.bf16.msra.mxu0 %v3050
    %4280 = vmatmul.bf16.gmra.mxu0 %v1495
    %v4281 = vpop.f32.mrf.mxu0
    %v4282 = vadd.f32 %v1416, %v4281
    %v4283 = vpop.f32.mrf.mxu0
    %v4284 = vadd.f32 %v1416, %v4283
    %4285 = vmatmul.bf16.gmra.mxu0 %v1506
    %v4286 = vpop.f32.mrf.mxu0
    %v4287 = vadd.f32 %v1416, %v4286
    %v4288 = vpop.f32.mrf.mxu0
    %v4289 = vadd.f32 %v1416, %v4288
    %4290 = vdwg.mxu0
    %4291 = vmatpush.bf16.msra.mxu0 %v3140
    %4292 = vmatpush.bf16.msra.mxu0 %v3134
    %4293 = vmatpush.bf16.msra.mxu0 %v3128
    %4294 = vmatpush.bf16.msra.mxu0 %v3122
    %4295 = vmatpush.bf16.msra.mxu0 %v3116
    %4296 = vmatpush.bf16.msra.mxu0 %v3110
    %4297 = vmatpush.bf16.msra.mxu0 %v3104
    %4298 = vmatpush.bf16.msra.mxu0 %v3098
    %4299 = vmatmul.bf16.gmra.mxu0 %v1496
    %v4300 = vpop.f32.mrf.mxu0
    %v4301 = vadd.f32 %v4282, %v4300
    %v4302 = vpop.f32.mrf.mxu0
    %v4303 = vadd.f32 %v4284, %v4302
    %4304 = vmatmul.bf16.gmra.mxu0 %v1507
    %v4305 = vpop.f32.mrf.mxu0
    %v4306 = vadd.f32 %v4287, %v4305
    %v4307 = vpop.f32.mrf.mxu0
    %v4308 = vadd.f32 %v4289, %v4307
    %4309 = vdwg.mxu0
    %4310 = vmatpush.bf16.msra.mxu0 %v3188
    %4311 = vmatpush.bf16.msra.mxu0 %v3182
    %4312 = vmatpush.bf16.msra.mxu0 %v3176
    %4313 = vmatpush.bf16.msra.mxu0 %v3170
    %4314 = vmatpush.bf16.msra.mxu0 %v3164
    %4315 = vmatpush.bf16.msra.mxu0 %v3158
    %4316 = vmatpush.bf16.msra.mxu0 %v3152
    %4317 = vmatpush.bf16.msra.mxu0 %v3146
    %4318 = vmatmul.bf16.gmra.mxu0 %v1497
    %v4319 = vpop.f32.mrf.mxu0
    %v4320 = vadd.f32 %v4301, %v4319
    %v4321 = vpop.f32.mrf.mxu0
    %v4322 = vadd.f32 %v4303, %v4321
    %4323 = vmatmul.bf16.gmra.mxu0 %v1508
    %v4324 = vpop.f32.mrf.mxu0
    %v4325 = vadd.f32 %v4306, %v4324
    %v4326 = vpop.f32.mrf.mxu0
    %v4327 = vadd.f32 %v4308, %v4326
    %4328 = vdwg.mxu0
    %4329 = vmatpush.bf16.msra.mxu0 %v3236
    %4330 = vmatpush.bf16.msra.mxu0 %v3230
    %4331 = vmatpush.bf16.msra.mxu0 %v3224
    %4332 = vmatpush.bf16.msra.mxu0 %v3218
    %4333 = vmatpush.bf16.msra.mxu0 %v3212
    %4334 = vmatpush.bf16.msra.mxu0 %v3206
    %4335 = vmatpush.bf16.msra.mxu0 %v3200
    %4336 = vmatpush.bf16.msra.mxu0 %v3194
    %4337 = vmatmul.bf16.gmra.mxu0 %v1498
    %v4338 = vpop.f32.mrf.mxu0
    %v4339 = vadd.f32 %v4320, %v4338
    %v4340 = vpop.f32.mrf.mxu0
    %v4341 = vadd.f32 %v4322, %v4340
    %4342 = vmatmul.bf16.gmra.mxu0 %v1509
    %v4343 = vpop.f32.mrf.mxu0
    %v4344 = vadd.f32 %v4325, %v4343
    %v4345 = vpop.f32.mrf.mxu0
    %v4346 = vadd.f32 %v4327, %v4345
    %4347 = vdwg.mxu0
    %4348 = vmatpush.bf16.msra.mxu0 %v3284
    %4349 = vmatpush.bf16.msra.mxu0 %v3278
    %4350 = vmatpush.bf16.msra.mxu0 %v3272
    %4351 = vmatpush.bf16.msra.mxu0 %v3266
    %4352 = vmatpush.bf16.msra.mxu0 %v3260
    %4353 = vmatpush.bf16.msra.mxu0 %v3254
    %4354 = vmatpush.bf16.msra.mxu0 %v3248
    %4355 = vmatpush.bf16.msra.mxu0 %v3242
    %4356 = vmatmul.bf16.gmra.mxu0 %v1499
    %v4357 = vpop.f32.mrf.mxu0
    %v4358 = vadd.f32 %v4339, %v4357
    %v4359 = vpop.f32.mrf.mxu0
    %v4360 = vadd.f32 %v4341, %v4359
    %4361 = vmatmul.bf16.gmra.mxu0 %v1510
    %v4362 = vpop.f32.mrf.mxu0
    %v4363 = vadd.f32 %v4344, %v4362
    %v4364 = vpop.f32.mrf.mxu0
    %v4365 = vadd.f32 %v4346, %v4364
    %4366 = vdwg.mxu0
    %4367 = vmatpush.bf16.msra.mxu0 %v3332
    %4368 = vmatpush.bf16.msra.mxu0 %v3326
    %4369 = vmatpush.bf16.msra.mxu0 %v3320
    %4370 = vmatpush.bf16.msra.mxu0 %v3314
    %4371 = vmatpush.bf16.msra.mxu0 %v3308
    %4372 = vmatpush.bf16.msra.mxu0 %v3302
    %4373 = vmatpush.bf16.msra.mxu0 %v3296
    %4374 = vmatpush.bf16.msra.mxu0 %v3290
    %4375 = vmatmul.bf16.gmra.mxu0 %v1500
    %v4376 = vpop.f32.mrf.mxu0
    %v4377 = vadd.f32 %v4358, %v4376
    %v4378 = vpop.f32.mrf.mxu0
    %v4379 = vadd.f32 %v4360, %v4378
    %4380 = vmatmul.bf16.gmra.mxu0 %v1511
    %v4381 = vpop.f32.mrf.mxu0
    %v4382 = vadd.f32 %v4363, %v4381
    %v4383 = vpop.f32.mrf.mxu0
    %v4384 = vadd.f32 %v4365, %v4383
    %4385 = vdwg.mxu0
    %4386 = vmatpush.bf16.msra.mxu0 %v3380
    %4387 = vmatpush.bf16.msra.mxu0 %v3374
    %4388 = vmatpush.bf16.msra.mxu0 %v3368
    %4389 = vmatpush.bf16.msra.mxu0 %v3362
    %4390 = vmatpush.bf16.msra.mxu0 %v3356
    %4391 = vmatpush.bf16.msra.mxu0 %v3350
    %4392 = vmatpush.bf16.msra.mxu0 %v3344
    %4393 = vmatpush.bf16.msra.mxu0 %v3338
    %4394 = vmatmul.bf16.gmra.mxu0 %v1501
    %v4395 = vpop.f32.mrf.mxu0
    %v4396 = vadd.f32 %v4377, %v4395
    %v4397 = vpop.f32.mrf.mxu0
    %v4398 = vadd.f32 %v4379, %v4397
    %4399 = vmatmul.bf16.gmra.mxu0 %v1512
    %v4400 = vpop.f32.mrf.mxu0
    %v4401 = vadd.f32 %v4382, %v4400
    %v4402 = vpop.f32.mrf.mxu0
    %v4403 = vadd.f32 %v4384, %v4402
    %4404 = vdwg.mxu0
    %4405 = vmatpush.bf16.msra.mxu0 %v3428
    %4406 = vmatpush.bf16.msra.mxu0 %v3422
    %4407 = vmatpush.bf16.msra.mxu0 %v3416
    %4408 = vmatpush.bf16.msra.mxu0 %v3410
    %4409 = vmatpush.bf16.msra.mxu0 %v3404
    %4410 = vmatpush.bf16.msra.mxu0 %v3398
    %4411 = vmatpush.bf16.msra.mxu0 %v3392
    %4412 = vmatpush.bf16.msra.mxu0 %v3386
    %4413 = vmatmul.bf16.gmra.mxu0 %v1502
    %v4414 = vpop.f32.mrf.mxu0
    %v4415 = vadd.f32 %v4396, %v4414
    %v4416 = vpop.f32.mrf.mxu0
    %v4417 = vadd.f32 %v4398, %v4416
    %4418 = vmatmul.bf16.gmra.mxu0 %v1513
    %v4419 = vpop.f32.mrf.mxu0
    %v4420 = vadd.f32 %v4401, %v4419
    %v4421 = vpop.f32.mrf.mxu0
    %v4422 = vadd.f32 %v4403, %v4421
    %4423 = vdwg.mxu0
    %4424 = vmatpush.bf16.msra.mxu0 %v3476
    %4425 = vmatpush.bf16.msra.mxu0 %v3470
    %4426 = vmatpush.bf16.msra.mxu0 %v3464
    %4427 = vmatpush.bf16.msra.mxu0 %v3458
    %4428 = vmatpush.bf16.msra.mxu0 %v3452
    %4429 = vmatpush.bf16.msra.mxu0 %v3446
    %4430 = vmatpush.bf16.msra.mxu0 %v3440
    %4431 = vmatpush.bf16.msra.mxu0 %v3434
    %4432 = vmatmul.bf16.gmra.mxu0 %v1503
    %v4433 = vpop.f32.mrf.mxu0
    %v4434 = vadd.f32 %v4415, %v4433
    %v4435 = vpop.f32.mrf.mxu0
    %v4436 = vadd.f32 %v4417, %v4435
    %4437 = vmatmul.bf16.gmra.mxu0 %v1514
    %v4438 = vpop.f32.mrf.mxu0
    %v4439 = vadd.f32 %v4420, %v4438
    %v4440 = vpop.f32.mrf.mxu0
    %v4441 = vadd.f32 %v4422, %v4440
    %4442 = vdwg.mxu0
    %4443 = vmatpush.bf16.msra.mxu0 %v3524
    %4444 = vmatpush.bf16.msra.mxu0 %v3518
    %4445 = vmatpush.bf16.msra.mxu0 %v3512
    %4446 = vmatpush.bf16.msra.mxu0 %v3506
    %4447 = vmatpush.bf16.msra.mxu0 %v3500
    %4448 = vmatpush.bf16.msra.mxu0 %v3494
    %4449 = vmatpush.bf16.msra.mxu0 %v3488
    %4450 = vmatpush.bf16.msra.mxu0 %v3482
    %4451 = vmatmul.bf16.gmra.mxu0 %v1504
    %v4452 = vpop.f32.mrf.mxu0
    %v4453 = vadd.f32 %v4434, %v4452
    %v4454 = vpop.f32.mrf.mxu0
    %v4455 = vadd.f32 %v4436, %v4454
    %4456 = vmatmul.bf16.gmra.mxu0 %v1515
    %v4457 = vpop.f32.mrf.mxu0
    %v4458 = vadd.f32 %v4439, %v4457
    %v4459 = vpop.f32.mrf.mxu0
    %v4460 = vadd.f32 %v4441, %v4459
    %4461 = vdwg.mxu0
    %4462 = vmatpush.bf16.msra.mxu0 0
    %4463 = vmatpush.bf16.msra.mxu0 0
    %4464 = vmatpush.bf16.msra.mxu0 0
    %4465 = vmatpush.bf16.msra.mxu0 0
    %4466 = vmatpush.bf16.msra.mxu0 %v3548
    %4467 = vmatpush.bf16.msra.mxu0 %v3542
    %4468 = vmatpush.bf16.msra.mxu0 %v3536
    %4469 = vmatpush.bf16.msra.mxu0 %v3530
    %4470 = vmatmul.bf16.gmra.mxu0 %v4058
    %v4471 = vpop.f32.mrf.mxu0
    %v4472 = vadd.f32 %v4453, %v4471
    %v4473 = vpop.f32.mrf.mxu0
    %v4474 = vadd.f32 %v4455, %v4473
    %4475 = vmatmul.bf16.gmra.mxu0 %v4061
    %v4476 = vpop.f32.mrf.mxu0
    %v4477 = vadd.f32 %v4458, %v4476
    %v4478 = vpop.f32.mrf.mxu0
    %v4479 = vadd.f32 %v4460, %v4478
    %4480 = vdwg.mxu0
    %4481 = vmatpush.bf16.msra.mxu0 %v3093
    %4482 = vmatpush.bf16.msra.mxu0 %v3087
    %4483 = vmatpush.bf16.msra.mxu0 %v3081
    %4484 = vmatpush.bf16.msra.mxu0 %v3075
    %4485 = vmatpush.bf16.msra.mxu0 %v3069
    %4486 = vmatpush.bf16.msra.mxu0 %v3063
    %4487 = vmatpush.bf16.msra.mxu0 %v3057
    %4488 = vmatpush.bf16.msra.mxu0 %v3051
    %4489 = vmatmul.bf16.gmra.mxu0 %v1495
    %v4490 = vpop.f32.mrf.mxu0
    %v4491 = vadd.f32 %v1417, %v4490
    %v4492 = vpop.f32.mrf.mxu0
    %v4493 = vadd.f32 %v1417, %v4492
    %4494 = vmatmul.bf16.gmra.mxu0 %v1506
    %v4495 = vpop.f32.mrf.mxu0
    %v4496 = vadd.f32 %v1417, %v4495
    %v4497 = vpop.f32.mrf.mxu0
    %v4498 = vadd.f32 %v1417, %v4497
    %4499 = vdwg.mxu0
    %4500 = vmatpush.bf16.msra.mxu0 %v3141
    %4501 = vmatpush.bf16.msra.mxu0 %v3135
    %4502 = vmatpush.bf16.msra.mxu0 %v3129
    %4503 = vmatpush.bf16.msra.mxu0 %v3123
    %4504 = vmatpush.bf16.msra.mxu0 %v3117
    %4505 = vmatpush.bf16.msra.mxu0 %v3111
    %4506 = vmatpush.bf16.msra.mxu0 %v3105
    %4507 = vmatpush.bf16.msra.mxu0 %v3099
    %4508 = vmatmul.bf16.gmra.mxu0 %v1496
    %v4509 = vpop.f32.mrf.mxu0
    %v4510 = vadd.f32 %v4491, %v4509
    %v4511 = vpop.f32.mrf.mxu0
    %v4512 = vadd.f32 %v4493, %v4511
    %4513 = vmatmul.bf16.gmra.mxu0 %v1507
    %v4514 = vpop.f32.mrf.mxu0
    %v4515 = vadd.f32 %v4496, %v4514
    %v4516 = vpop.f32.mrf.mxu0
    %v4517 = vadd.f32 %v4498, %v4516
    %4518 = vdwg.mxu0
    %4519 = vmatpush.bf16.msra.mxu0 %v3189
    %4520 = vmatpush.bf16.msra.mxu0 %v3183
    %4521 = vmatpush.bf16.msra.mxu0 %v3177
    %4522 = vmatpush.bf16.msra.mxu0 %v3171
    %4523 = vmatpush.bf16.msra.mxu0 %v3165
    %4524 = vmatpush.bf16.msra.mxu0 %v3159
    %4525 = vmatpush.bf16.msra.mxu0 %v3153
    %4526 = vmatpush.bf16.msra.mxu0 %v3147
    %4527 = vmatmul.bf16.gmra.mxu0 %v1497
    %v4528 = vpop.f32.mrf.mxu0
    %v4529 = vadd.f32 %v4510, %v4528
    %v4530 = vpop.f32.mrf.mxu0
    %v4531 = vadd.f32 %v4512, %v4530
    %4532 = vmatmul.bf16.gmra.mxu0 %v1508
    %v4533 = vpop.f32.mrf.mxu0
    %v4534 = vadd.f32 %v4515, %v4533
    %v4535 = vpop.f32.mrf.mxu0
    %v4536 = vadd.f32 %v4517, %v4535
    %4537 = vdwg.mxu0
    %4538 = vmatpush.bf16.msra.mxu0 %v3237
    %4539 = vmatpush.bf16.msra.mxu0 %v3231
    %4540 = vmatpush.bf16.msra.mxu0 %v3225
    %4541 = vmatpush.bf16.msra.mxu0 %v3219
    %4542 = vmatpush.bf16.msra.mxu0 %v3213
    %4543 = vmatpush.bf16.msra.mxu0 %v3207
    %4544 = vmatpush.bf16.msra.mxu0 %v3201
    %4545 = vmatpush.bf16.msra.mxu0 %v3195
    %4546 = vmatmul.bf16.gmra.mxu0 %v1498
    %v4547 = vpop.f32.mrf.mxu0
    %v4548 = vadd.f32 %v4529, %v4547
    %v4549 = vpop.f32.mrf.mxu0
    %v4550 = vadd.f32 %v4531, %v4549
    %4551 = vmatmul.bf16.gmra.mxu0 %v1509
    %v4552 = vpop.f32.mrf.mxu0
    %v4553 = vadd.f32 %v4534, %v4552
    %v4554 = vpop.f32.mrf.mxu0
    %v4555 = vadd.f32 %v4536, %v4554
    %4556 = vdwg.mxu0
    %4557 = vmatpush.bf16.msra.mxu0 %v3285
    %4558 = vmatpush.bf16.msra.mxu0 %v3279
    %4559 = vmatpush.bf16.msra.mxu0 %v3273
    %4560 = vmatpush.bf16.msra.mxu0 %v3267
    %4561 = vmatpush.bf16.msra.mxu0 %v3261
    %4562 = vmatpush.bf16.msra.mxu0 %v3255
    %4563 = vmatpush.bf16.msra.mxu0 %v3249
    %4564 = vmatpush.bf16.msra.mxu0 %v3243
    %4565 = vmatmul.bf16.gmra.mxu0 %v1499
    %v4566 = vpop.f32.mrf.mxu0
    %v4567 = vadd.f32 %v4548, %v4566
    %v4568 = vpop.f32.mrf.mxu0
    %v4569 = vadd.f32 %v4550, %v4568
    %4570 = vmatmul.bf16.gmra.mxu0 %v1510
    %v4571 = vpop.f32.mrf.mxu0
    %v4572 = vadd.f32 %v4553, %v4571
    %v4573 = vpop.f32.mrf.mxu0
    %v4574 = vadd.f32 %v4555, %v4573
    %4575 = vdwg.mxu0
    %4576 = vmatpush.bf16.msra.mxu0 %v3333
    %4577 = vmatpush.bf16.msra.mxu0 %v3327
    %4578 = vmatpush.bf16.msra.mxu0 %v3321
    %4579 = vmatpush.bf16.msra.mxu0 %v3315
    %4580 = vmatpush.bf16.msra.mxu0 %v3309
    %4581 = vmatpush.bf16.msra.mxu0 %v3303
    %4582 = vmatpush.bf16.msra.mxu0 %v3297
    %4583 = vmatpush.bf16.msra.mxu0 %v3291
    %4584 = vmatmul.bf16.gmra.mxu0 %v1500
    %v4585 = vpop.f32.mrf.mxu0
    %v4586 = vadd.f32 %v4567, %v4585
    %v4587 = vpop.f32.mrf.mxu0
    %v4588 = vadd.f32 %v4569, %v4587
    %4589 = vmatmul.bf16.gmra.mxu0 %v1511
    %v4590 = vpop.f32.mrf.mxu0
    %v4591 = vadd.f32 %v4572, %v4590
    %v4592 = vpop.f32.mrf.mxu0
    %v4593 = vadd.f32 %v4574, %v4592
    %4594 = vdwg.mxu0
    %4595 = vmatpush.bf16.msra.mxu0 %v3381
    %4596 = vmatpush.bf16.msra.mxu0 %v3375
    %4597 = vmatpush.bf16.msra.mxu0 %v3369
    %4598 = vmatpush.bf16.msra.mxu0 %v3363
    %4599 = vmatpush.bf16.msra.mxu0 %v3357
    %4600 = vmatpush.bf16.msra.mxu0 %v3351
    %4601 = vmatpush.bf16.msra.mxu0 %v3345
    %4602 = vmatpush.bf16.msra.mxu0 %v3339
    %4603 = vmatmul.bf16.gmra.mxu0 %v1501
    %v4604 = vpop.f32.mrf.mxu0
    %v4605 = vadd.f32 %v4586, %v4604
    %v4606 = vpop.f32.mrf.mxu0
    %v4607 = vadd.f32 %v4588, %v4606
    %4608 = vmatmul.bf16.gmra.mxu0 %v1512
    %v4609 = vpop.f32.mrf.mxu0
    %v4610 = vadd.f32 %v4591, %v4609
    %v4611 = vpop.f32.mrf.mxu0
    %v4612 = vadd.f32 %v4593, %v4611
    %4613 = vdwg.mxu0
    %4614 = vmatpush.bf16.msra.mxu0 %v3429
    %4615 = vmatpush.bf16.msra.mxu0 %v3423
    %4616 = vmatpush.bf16.msra.mxu0 %v3417
    %4617 = vmatpush.bf16.msra.mxu0 %v3411
    %4618 = vmatpush.bf16.msra.mxu0 %v3405
    %4619 = vmatpush.bf16.msra.mxu0 %v3399
    %4620 = vmatpush.bf16.msra.mxu0 %v3393
    %4621 = vmatpush.bf16.msra.mxu0 %v3387
    %4622 = vmatmul.bf16.gmra.mxu0 %v1502
    %v4623 = vpop.f32.mrf.mxu0
    %v4624 = vadd.f32 %v4605, %v4623
    %v4625 = vpop.f32.mrf.mxu0
    %v4626 = vadd.f32 %v4607, %v4625
    %4627 = vmatmul.bf16.gmra.mxu0 %v1513
    %v4628 = vpop.f32.mrf.mxu0
    %v4629 = vadd.f32 %v4610, %v4628
    %v4630 = vpop.f32.mrf.mxu0
    %v4631 = vadd.f32 %v4612, %v4630
    %4632 = vdwg.mxu0
    %4633 = vmatpush.bf16.msra.mxu0 %v3477
    %4634 = vmatpush.bf16.msra.mxu0 %v3471
    %4635 = vmatpush.bf16.msra.mxu0 %v3465
    %4636 = vmatpush.bf16.msra.mxu0 %v3459
    %4637 = vmatpush.bf16.msra.mxu0 %v3453
    %4638 = vmatpush.bf16.msra.mxu0 %v3447
    %4639 = vmatpush.bf16.msra.mxu0 %v3441
    %4640 = vmatpush.bf16.msra.mxu0 %v3435
    %4641 = vmatmul.bf16.gmra.mxu0 %v1503
    %v4642 = vpop.f32.mrf.mxu0
    %v4643 = vadd.f32 %v4624, %v4642
    %v4644 = vpop.f32.mrf.mxu0
    %v4645 = vadd.f32 %v4626, %v4644
    %4646 = vmatmul.bf16.gmra.mxu0 %v1514
    %v4647 = vpop.f32.mrf.mxu0
    %v4648 = vadd.f32 %v4629, %v4647
    %v4649 = vpop.f32.mrf.mxu0
    %v4650 = vadd.f32 %v4631, %v4649
    %4651 = vdwg.mxu0
    %4652 = vmatpush.bf16.msra.mxu0 %v3525
    %4653 = vmatpush.bf16.msra.mxu0 %v3519
    %4654 = vmatpush.bf16.msra.mxu0 %v3513
    %4655 = vmatpush.bf16.msra.mxu0 %v3507
    %4656 = vmatpush.bf16.msra.mxu0 %v3501
    %4657 = vmatpush.bf16.msra.mxu0 %v3495
    %4658 = vmatpush.bf16.msra.mxu0 %v3489
    %4659 = vmatpush.bf16.msra.mxu0 %v3483
    %4660 = vmatmul.bf16.gmra.mxu0 %v1504
    %v4661 = vpop.f32.mrf.mxu0
    %v4662 = vadd.f32 %v4643, %v4661
    %v4663 = vpop.f32.mrf.mxu0
    %v4664 = vadd.f32 %v4645, %v4663
    %4665 = vmatmul.bf16.gmra.mxu0 %v1515
    %v4666 = vpop.f32.mrf.mxu0
    %v4667 = vadd.f32 %v4648, %v4666
    %v4668 = vpop.f32.mrf.mxu0
    %v4669 = vadd.f32 %v4650, %v4668
    %4670 = vdwg.mxu0
    %4671 = vmatpush.bf16.msra.mxu0 0
    %4672 = vmatpush.bf16.msra.mxu0 0
    %4673 = vmatpush.bf16.msra.mxu0 0
    %4674 = vmatpush.bf16.msra.mxu0 0
    %4675 = vmatpush.bf16.msra.mxu0 %v3549
    %4676 = vmatpush.bf16.msra.mxu0 %v3543
    %4677 = vmatpush.bf16.msra.mxu0 %v3537
    %4678 = vmatpush.bf16.msra.mxu0 %v3531
    %4679 = vmatmul.bf16.gmra.mxu0 %v4058
    %v4680 = vpop.f32.mrf.mxu0
    %v4681 = vadd.f32 %v4662, %v4680
    %v4682 = vpop.f32.mrf.mxu0
    %v4683 = vadd.f32 %v4664, %v4682
    %4684 = vmatmul.bf16.gmra.mxu0 %v4061
    %v4685 = vpop.f32.mrf.mxu0
    %v4686 = vadd.f32 %v4667, %v4685
    %v4687 = vpop.f32.mrf.mxu0
    %v4688 = vadd.f32 %v4669, %v4687
    %4689 = vdwg.mxu0
    %4690 = vmatpush.bf16.msra.mxu0 %v3094
    %4691 = vmatpush.bf16.msra.mxu0 %v3088
    %4692 = vmatpush.bf16.msra.mxu0 %v3082
    %4693 = vmatpush.bf16.msra.mxu0 %v3076
    %4694 = vmatpush.bf16.msra.mxu0 %v3070
    %4695 = vmatpush.bf16.msra.mxu0 %v3064
    %4696 = vmatpush.bf16.msra.mxu0 %v3058
    %4697 = vmatpush.bf16.msra.mxu0 %v3052
    %4698 = vmatmul.bf16.gmra.mxu0 %v1495
    %v4699 = vpop.f32.mrf.mxu0
    %v4700 = vadd.f32 %v1418, %v4699
    %v4701 = vpop.f32.mrf.mxu0
    %v4702 = vadd.f32 %v1418, %v4701
    %4703 = vmatmul.bf16.gmra.mxu0 %v1506
    %v4704 = vpop.f32.mrf.mxu0
    %v4705 = vadd.f32 %v1418, %v4704
    %v4706 = vpop.f32.mrf.mxu0
    %v4707 = vadd.f32 %v1418, %v4706
    %4708 = vdwg.mxu0
    %4709 = vmatpush.bf16.msra.mxu0 %v3142
    %4710 = vmatpush.bf16.msra.mxu0 %v3136
    %4711 = vmatpush.bf16.msra.mxu0 %v3130
    %4712 = vmatpush.bf16.msra.mxu0 %v3124
    %4713 = vmatpush.bf16.msra.mxu0 %v3118
    %4714 = vmatpush.bf16.msra.mxu0 %v3112
    %4715 = vmatpush.bf16.msra.mxu0 %v3106
    %4716 = vmatpush.bf16.msra.mxu0 %v3100
    %4717 = vmatmul.bf16.gmra.mxu0 %v1496
    %v4718 = vpop.f32.mrf.mxu0
    %v4719 = vadd.f32 %v4700, %v4718
    %v4720 = vpop.f32.mrf.mxu0
    %v4721 = vadd.f32 %v4702, %v4720
    %4722 = vmatmul.bf16.gmra.mxu0 %v1507
    %v4723 = vpop.f32.mrf.mxu0
    %v4724 = vadd.f32 %v4705, %v4723
    %v4725 = vpop.f32.mrf.mxu0
    %v4726 = vadd.f32 %v4707, %v4725
    %4727 = vdwg.mxu0
    %4728 = vmatpush.bf16.msra.mxu0 %v3190
    %4729 = vmatpush.bf16.msra.mxu0 %v3184
    %4730 = vmatpush.bf16.msra.mxu0 %v3178
    %4731 = vmatpush.bf16.msra.mxu0 %v3172
    %4732 = vmatpush.bf16.msra.mxu0 %v3166
    %4733 = vmatpush.bf16.msra.mxu0 %v3160
    %4734 = vmatpush.bf16.msra.mxu0 %v3154
    %4735 = vmatpush.bf16.msra.mxu0 %v3148
    %4736 = vmatmul.bf16.gmra.mxu0 %v1497
    %v4737 = vpop.f32.mrf.mxu0
    %v4738 = vadd.f32 %v4719, %v4737
    %v4739 = vpop.f32.mrf.mxu0
    %v4740 = vadd.f32 %v4721, %v4739
    %4741 = vmatmul.bf16.gmra.mxu0 %v1508
    %v4742 = vpop.f32.mrf.mxu0
    %v4743 = vadd.f32 %v4724, %v4742
    %v4744 = vpop.f32.mrf.mxu0
    %v4745 = vadd.f32 %v4726, %v4744
    %4746 = vdwg.mxu0
    %4747 = vmatpush.bf16.msra.mxu0 %v3238
    %4748 = vmatpush.bf16.msra.mxu0 %v3232
    %4749 = vmatpush.bf16.msra.mxu0 %v3226
    %4750 = vmatpush.bf16.msra.mxu0 %v3220
    %4751 = vmatpush.bf16.msra.mxu0 %v3214
    %4752 = vmatpush.bf16.msra.mxu0 %v3208
    %4753 = vmatpush.bf16.msra.mxu0 %v3202
    %4754 = vmatpush.bf16.msra.mxu0 %v3196
    %4755 = vmatmul.bf16.gmra.mxu0 %v1498
    %v4756 = vpop.f32.mrf.mxu0
    %v4757 = vadd.f32 %v4738, %v4756
    %v4758 = vpop.f32.mrf.mxu0
    %v4759 = vadd.f32 %v4740, %v4758
    %4760 = vmatmul.bf16.gmra.mxu0 %v1509
    %v4761 = vpop.f32.mrf.mxu0
    %v4762 = vadd.f32 %v4743, %v4761
    %v4763 = vpop.f32.mrf.mxu0
    %v4764 = vadd.f32 %v4745, %v4763
    %4765 = vdwg.mxu0
    %4766 = vmatpush.bf16.msra.mxu0 %v3286
    %4767 = vmatpush.bf16.msra.mxu0 %v3280
    %4768 = vmatpush.bf16.msra.mxu0 %v3274
    %4769 = vmatpush.bf16.msra.mxu0 %v3268
    %4770 = vmatpush.bf16.msra.mxu0 %v3262
    %4771 = vmatpush.bf16.msra.mxu0 %v3256
    %4772 = vmatpush.bf16.msra.mxu0 %v3250
    %4773 = vmatpush.bf16.msra.mxu0 %v3244
    %4774 = vmatmul.bf16.gmra.mxu0 %v1499
    %v4775 = vpop.f32.mrf.mxu0
    %v4776 = vadd.f32 %v4757, %v4775
    %v4777 = vpop.f32.mrf.mxu0
    %v4778 = vadd.f32 %v4759, %v4777
    %4779 = vmatmul.bf16.gmra.mxu0 %v1510
    %v4780 = vpop.f32.mrf.mxu0
    %v4781 = vadd.f32 %v4762, %v4780
    %v4782 = vpop.f32.mrf.mxu0
    %v4783 = vadd.f32 %v4764, %v4782
    %4784 = vdwg.mxu0
    %4785 = vmatpush.bf16.msra.mxu0 %v3334
    %4786 = vmatpush.bf16.msra.mxu0 %v3328
    %4787 = vmatpush.bf16.msra.mxu0 %v3322
    %4788 = vmatpush.bf16.msra.mxu0 %v3316
    %4789 = vmatpush.bf16.msra.mxu0 %v3310
    %4790 = vmatpush.bf16.msra.mxu0 %v3304
    %4791 = vmatpush.bf16.msra.mxu0 %v3298
    %4792 = vmatpush.bf16.msra.mxu0 %v3292
    %4793 = vmatmul.bf16.gmra.mxu0 %v1500
    %v4794 = vpop.f32.mrf.mxu0
    %v4795 = vadd.f32 %v4776, %v4794
    %v4796 = vpop.f32.mrf.mxu0
    %v4797 = vadd.f32 %v4778, %v4796
    %4798 = vmatmul.bf16.gmra.mxu0 %v1511
    %v4799 = vpop.f32.mrf.mxu0
    %v4800 = vadd.f32 %v4781, %v4799
    %v4801 = vpop.f32.mrf.mxu0
    %v4802 = vadd.f32 %v4783, %v4801
    %4803 = vdwg.mxu0
    %4804 = vmatpush.bf16.msra.mxu0 %v3382
    %4805 = vmatpush.bf16.msra.mxu0 %v3376
    %4806 = vmatpush.bf16.msra.mxu0 %v3370
    %4807 = vmatpush.bf16.msra.mxu0 %v3364
    %4808 = vmatpush.bf16.msra.mxu0 %v3358
    %4809 = vmatpush.bf16.msra.mxu0 %v3352
    %4810 = vmatpush.bf16.msra.mxu0 %v3346
    %4811 = vmatpush.bf16.msra.mxu0 %v3340
    %4812 = vmatmul.bf16.gmra.mxu0 %v1501
    %v4813 = vpop.f32.mrf.mxu0
    %v4814 = vadd.f32 %v4795, %v4813
    %v4815 = vpop.f32.mrf.mxu0
    %v4816 = vadd.f32 %v4797, %v4815
    %4817 = vmatmul.bf16.gmra.mxu0 %v1512
    %v4818 = vpop.f32.mrf.mxu0
    %v4819 = vadd.f32 %v4800, %v4818
    %v4820 = vpop.f32.mrf.mxu0
    %v4821 = vadd.f32 %v4802, %v4820
    %4822 = vdwg.mxu0
    %4823 = vmatpush.bf16.msra.mxu0 %v3430
    %4824 = vmatpush.bf16.msra.mxu0 %v3424
    %4825 = vmatpush.bf16.msra.mxu0 %v3418
    %4826 = vmatpush.bf16.msra.mxu0 %v3412
    %4827 = vmatpush.bf16.msra.mxu0 %v3406
    %4828 = vmatpush.bf16.msra.mxu0 %v3400
    %4829 = vmatpush.bf16.msra.mxu0 %v3394
    %4830 = vmatpush.bf16.msra.mxu0 %v3388
    %4831 = vmatmul.bf16.gmra.mxu0 %v1502
    %v4832 = vpop.f32.mrf.mxu0
    %v4833 = vadd.f32 %v4814, %v4832
    %v4834 = vpop.f32.mrf.mxu0
    %v4835 = vadd.f32 %v4816, %v4834
    %4836 = vmatmul.bf16.gmra.mxu0 %v1513
    %v4837 = vpop.f32.mrf.mxu0
    %v4838 = vadd.f32 %v4819, %v4837
    %v4839 = vpop.f32.mrf.mxu0
    %v4840 = vadd.f32 %v4821, %v4839
    %4841 = vdwg.mxu0
    %4842 = vmatpush.bf16.msra.mxu0 %v3478
    %4843 = vmatpush.bf16.msra.mxu0 %v3472
    %4844 = vmatpush.bf16.msra.mxu0 %v3466
    %4845 = vmatpush.bf16.msra.mxu0 %v3460
    %4846 = vmatpush.bf16.msra.mxu0 %v3454
    %4847 = vmatpush.bf16.msra.mxu0 %v3448
    %4848 = vmatpush.bf16.msra.mxu0 %v3442
    %4849 = vmatpush.bf16.msra.mxu0 %v3436
    %4850 = vmatmul.bf16.gmra.mxu0 %v1503
    %v4851 = vpop.f32.mrf.mxu0
    %v4852 = vadd.f32 %v4833, %v4851
    %v4853 = vpop.f32.mrf.mxu0
    %v4854 = vadd.f32 %v4835, %v4853
    %4855 = vmatmul.bf16.gmra.mxu0 %v1514
    %v4856 = vpop.f32.mrf.mxu0
    %v4857 = vadd.f32 %v4838, %v4856
    %v4858 = vpop.f32.mrf.mxu0
    %v4859 = vadd.f32 %v4840, %v4858
    %4860 = vdwg.mxu0
    %4861 = vmatpush.bf16.msra.mxu0 %v3526
    %4862 = vmatpush.bf16.msra.mxu0 %v3520
    %4863 = vmatpush.bf16.msra.mxu0 %v3514
    %4864 = vmatpush.bf16.msra.mxu0 %v3508
    %4865 = vmatpush.bf16.msra.mxu0 %v3502
    %4866 = vmatpush.bf16.msra.mxu0 %v3496
    %4867 = vmatpush.bf16.msra.mxu0 %v3490
    %4868 = vmatpush.bf16.msra.mxu0 %v3484
    %4869 = vmatmul.bf16.gmra.mxu0 %v1504
    %v4870 = vpop.f32.mrf.mxu0
    %v4871 = vadd.f32 %v4852, %v4870
    %v4872 = vpop.f32.mrf.mxu0
    %v4873 = vadd.f32 %v4854, %v4872
    %4874 = vmatmul.bf16.gmra.mxu0 %v1515
    %v4875 = vpop.f32.mrf.mxu0
    %v4876 = vadd.f32 %v4857, %v4875
    %v4877 = vpop.f32.mrf.mxu0
    %v4878 = vadd.f32 %v4859, %v4877
    %4879 = vdwg.mxu0
    %4880 = vmatpush.bf16.msra.mxu0 0
    %4881 = vmatpush.bf16.msra.mxu0 0
    %4882 = vmatpush.bf16.msra.mxu0 0
    %4883 = vmatpush.bf16.msra.mxu0 0
    %4884 = vmatpush.bf16.msra.mxu0 %v3550
    %4885 = vmatpush.bf16.msra.mxu0 %v3544
    %4886 = vmatpush.bf16.msra.mxu0 %v3538
    %4887 = vmatpush.bf16.msra.mxu0 %v3532
    %4888 = vmatmul.bf16.gmra.mxu0 %v4058
    %v4889 = vpop.f32.mrf.mxu0
    %v4890 = vadd.f32 %v4871, %v4889
    %v4891 = vpop.f32.mrf.mxu0
    %v4892 = vadd.f32 %v4873, %v4891
    %4893 = vmatmul.bf16.gmra.mxu0 %v4061
    %v4894 = vpop.f32.mrf.mxu0
    %v4895 = vadd.f32 %v4876, %v4894
    %v4896 = vpop.f32.mrf.mxu0
    %v4897 = vadd.f32 %v4878, %v4896
    %4898 = vdwg.mxu0
    %4899 = vmatpush.bf16.msra.mxu0 %v3095
    %4900 = vmatpush.bf16.msra.mxu0 %v3089
    %4901 = vmatpush.bf16.msra.mxu0 %v3083
    %4902 = vmatpush.bf16.msra.mxu0 %v3077
    %4903 = vmatpush.bf16.msra.mxu0 %v3071
    %4904 = vmatpush.bf16.msra.mxu0 %v3065
    %4905 = vmatpush.bf16.msra.mxu0 %v3059
    %4906 = vmatpush.bf16.msra.mxu0 %v3053
    %4907 = vmatmul.bf16.gmra.mxu0 %v1495
    %v4908 = vpop.f32.mrf.mxu0
    %v4909 = vadd.f32 %v1419, %v4908
    %v4910 = vpop.f32.mrf.mxu0
    %v4911 = vadd.f32 %v1419, %v4910
    %4912 = vmatmul.bf16.gmra.mxu0 %v1506
    %v4913 = vpop.f32.mrf.mxu0
    %v4914 = vadd.f32 %v1419, %v4913
    %v4915 = vpop.f32.mrf.mxu0
    %v4916 = vadd.f32 %v1419, %v4915
    %4917 = vdwg.mxu0
    %4918 = vmatpush.bf16.msra.mxu0 %v3143
    %4919 = vmatpush.bf16.msra.mxu0 %v3137
    %4920 = vmatpush.bf16.msra.mxu0 %v3131
    %4921 = vmatpush.bf16.msra.mxu0 %v3125
    %4922 = vmatpush.bf16.msra.mxu0 %v3119
    %4923 = vmatpush.bf16.msra.mxu0 %v3113
    %4924 = vmatpush.bf16.msra.mxu0 %v3107
    %4925 = vmatpush.bf16.msra.mxu0 %v3101
    %4926 = vmatmul.bf16.gmra.mxu0 %v1496
    %v4927 = vpop.f32.mrf.mxu0
    %v4928 = vadd.f32 %v4909, %v4927
    %v4929 = vpop.f32.mrf.mxu0
    %v4930 = vadd.f32 %v4911, %v4929
    %4931 = vmatmul.bf16.gmra.mxu0 %v1507
    %v4932 = vpop.f32.mrf.mxu0
    %v4933 = vadd.f32 %v4914, %v4932
    %v4934 = vpop.f32.mrf.mxu0
    %v4935 = vadd.f32 %v4916, %v4934
    %4936 = vdwg.mxu0
    %4937 = vmatpush.bf16.msra.mxu0 %v3191
    %4938 = vmatpush.bf16.msra.mxu0 %v3185
    %4939 = vmatpush.bf16.msra.mxu0 %v3179
    %4940 = vmatpush.bf16.msra.mxu0 %v3173
    %4941 = vmatpush.bf16.msra.mxu0 %v3167
    %4942 = vmatpush.bf16.msra.mxu0 %v3161
    %4943 = vmatpush.bf16.msra.mxu0 %v3155
    %4944 = vmatpush.bf16.msra.mxu0 %v3149
    %4945 = vmatmul.bf16.gmra.mxu0 %v1497
    %v4946 = vpop.f32.mrf.mxu0
    %v4947 = vadd.f32 %v4928, %v4946
    %v4948 = vpop.f32.mrf.mxu0
    %v4949 = vadd.f32 %v4930, %v4948
    %4950 = vmatmul.bf16.gmra.mxu0 %v1508
    %v4951 = vpop.f32.mrf.mxu0
    %v4952 = vadd.f32 %v4933, %v4951
    %v4953 = vpop.f32.mrf.mxu0
    %v4954 = vadd.f32 %v4935, %v4953
    %4955 = vdwg.mxu0
    %4956 = vmatpush.bf16.msra.mxu0 %v3239
    %4957 = vmatpush.bf16.msra.mxu0 %v3233
    %4958 = vmatpush.bf16.msra.mxu0 %v3227
    %4959 = vmatpush.bf16.msra.mxu0 %v3221
    %4960 = vmatpush.bf16.msra.mxu0 %v3215
    %4961 = vmatpush.bf16.msra.mxu0 %v3209
    %4962 = vmatpush.bf16.msra.mxu0 %v3203
    %4963 = vmatpush.bf16.msra.mxu0 %v3197
    %4964 = vmatmul.bf16.gmra.mxu0 %v1498
    %v4965 = vpop.f32.mrf.mxu0
    %v4966 = vadd.f32 %v4947, %v4965
    %v4967 = vpop.f32.mrf.mxu0
    %v4968 = vadd.f32 %v4949, %v4967
    %4969 = vmatmul.bf16.gmra.mxu0 %v1509
    %v4970 = vpop.f32.mrf.mxu0
    %v4971 = vadd.f32 %v4952, %v4970
    %v4972 = vpop.f32.mrf.mxu0
    %v4973 = vadd.f32 %v4954, %v4972
    %4974 = vdwg.mxu0
    %4975 = vmatpush.bf16.msra.mxu0 %v3287
    %4976 = vmatpush.bf16.msra.mxu0 %v3281
    %4977 = vmatpush.bf16.msra.mxu0 %v3275
    %4978 = vmatpush.bf16.msra.mxu0 %v3269
    %4979 = vmatpush.bf16.msra.mxu0 %v3263
    %4980 = vmatpush.bf16.msra.mxu0 %v3257
    %4981 = vmatpush.bf16.msra.mxu0 %v3251
    %4982 = vmatpush.bf16.msra.mxu0 %v3245
    %4983 = vmatmul.bf16.gmra.mxu0 %v1499
    %v4984 = vpop.f32.mrf.mxu0
    %v4985 = vadd.f32 %v4966, %v4984
    %v4986 = vpop.f32.mrf.mxu0
    %v4987 = vadd.f32 %v4968, %v4986
    %4988 = vmatmul.bf16.gmra.mxu0 %v1510
    %v4989 = vpop.f32.mrf.mxu0
    %v4990 = vadd.f32 %v4971, %v4989
    %v4991 = vpop.f32.mrf.mxu0
    %v4992 = vadd.f32 %v4973, %v4991
    %4993 = vdwg.mxu0
    %4994 = vmatpush.bf16.msra.mxu0 %v3335
    %4995 = vmatpush.bf16.msra.mxu0 %v3329
    %4996 = vmatpush.bf16.msra.mxu0 %v3323
    %4997 = vmatpush.bf16.msra.mxu0 %v3317
    %4998 = vmatpush.bf16.msra.mxu0 %v3311
    %4999 = vmatpush.bf16.msra.mxu0 %v3305
    %5000 = vmatpush.bf16.msra.mxu0 %v3299
    %5001 = vmatpush.bf16.msra.mxu0 %v3293
    %5002 = vmatmul.bf16.gmra.mxu0 %v1500
    %v5003 = vpop.f32.mrf.mxu0
    %v5004 = vadd.f32 %v4985, %v5003
    %v5005 = vpop.f32.mrf.mxu0
    %v5006 = vadd.f32 %v4987, %v5005
    %5007 = vmatmul.bf16.gmra.mxu0 %v1511
    %v5008 = vpop.f32.mrf.mxu0
    %v5009 = vadd.f32 %v4990, %v5008
    %v5010 = vpop.f32.mrf.mxu0
    %v5011 = vadd.f32 %v4992, %v5010
    %5012 = vdwg.mxu0
    %5013 = vmatpush.bf16.msra.mxu0 %v3383
    %5014 = vmatpush.bf16.msra.mxu0 %v3377
    %5015 = vmatpush.bf16.msra.mxu0 %v3371
    %5016 = vmatpush.bf16.msra.mxu0 %v3365
    %5017 = vmatpush.bf16.msra.mxu0 %v3359
    %5018 = vmatpush.bf16.msra.mxu0 %v3353
    %5019 = vmatpush.bf16.msra.mxu0 %v3347
    %5020 = vmatpush.bf16.msra.mxu0 %v3341
    %5021 = vmatmul.bf16.gmra.mxu0 %v1501
    %v5022 = vpop.f32.mrf.mxu0
    %v5023 = vadd.f32 %v5004, %v5022
    %v5024 = vpop.f32.mrf.mxu0
    %v5025 = vadd.f32 %v5006, %v5024
    %5026 = vmatmul.bf16.gmra.mxu0 %v1512
    %v5027 = vpop.f32.mrf.mxu0
    %v5028 = vadd.f32 %v5009, %v5027
    %v5029 = vpop.f32.mrf.mxu0
    %v5030 = vadd.f32 %v5011, %v5029
    %5031 = vdwg.mxu0
    %5032 = vmatpush.bf16.msra.mxu0 %v3431
    %5033 = vmatpush.bf16.msra.mxu0 %v3425
    %5034 = vmatpush.bf16.msra.mxu0 %v3419
    %5035 = vmatpush.bf16.msra.mxu0 %v3413
    %5036 = vmatpush.bf16.msra.mxu0 %v3407
    %5037 = vmatpush.bf16.msra.mxu0 %v3401
    %5038 = vmatpush.bf16.msra.mxu0 %v3395
    %5039 = vmatpush.bf16.msra.mxu0 %v3389
    %5040 = vmatmul.bf16.gmra.mxu0 %v1502
    %v5041 = vpop.f32.mrf.mxu0
    %v5042 = vadd.f32 %v5023, %v5041
    %v5043 = vpop.f32.mrf.mxu0
    %v5044 = vadd.f32 %v5025, %v5043
    %5045 = vmatmul.bf16.gmra.mxu0 %v1513
    %v5046 = vpop.f32.mrf.mxu0
    %v5047 = vadd.f32 %v5028, %v5046
    %v5048 = vpop.f32.mrf.mxu0
    %v5049 = vadd.f32 %v5030, %v5048
    %5050 = vdwg.mxu0
    %5051 = vmatpush.bf16.msra.mxu0 %v3479
    %5052 = vmatpush.bf16.msra.mxu0 %v3473
    %5053 = vmatpush.bf16.msra.mxu0 %v3467
    %5054 = vmatpush.bf16.msra.mxu0 %v3461
    %5055 = vmatpush.bf16.msra.mxu0 %v3455
    %5056 = vmatpush.bf16.msra.mxu0 %v3449
    %5057 = vmatpush.bf16.msra.mxu0 %v3443
    %5058 = vmatpush.bf16.msra.mxu0 %v3437
    %5059 = vmatmul.bf16.gmra.mxu0 %v1503
    %v5060 = vpop.f32.mrf.mxu0
    %v5061 = vadd.f32 %v5042, %v5060
    %v5062 = vpop.f32.mrf.mxu0
    %v5063 = vadd.f32 %v5044, %v5062
    %5064 = vmatmul.bf16.gmra.mxu0 %v1514
    %v5065 = vpop.f32.mrf.mxu0
    %v5066 = vadd.f32 %v5047, %v5065
    %v5067 = vpop.f32.mrf.mxu0
    %v5068 = vadd.f32 %v5049, %v5067
    %5069 = vdwg.mxu0
    %5070 = vmatpush.bf16.msra.mxu0 %v3527
    %5071 = vmatpush.bf16.msra.mxu0 %v3521
    %5072 = vmatpush.bf16.msra.mxu0 %v3515
    %5073 = vmatpush.bf16.msra.mxu0 %v3509
    %5074 = vmatpush.bf16.msra.mxu0 %v3503
    %5075 = vmatpush.bf16.msra.mxu0 %v3497
    %5076 = vmatpush.bf16.msra.mxu0 %v3491
    %5077 = vmatpush.bf16.msra.mxu0 %v3485
    %5078 = vmatmul.bf16.gmra.mxu0 %v1504
    %v5079 = vpop.f32.mrf.mxu0
    %v5080 = vadd.f32 %v5061, %v5079
    %v5081 = vpop.f32.mrf.mxu0
    %v5082 = vadd.f32 %v5063, %v5081
    %5083 = vmatmul.bf16.gmra.mxu0 %v1515
    %v5084 = vpop.f32.mrf.mxu0
    %v5085 = vadd.f32 %v5066, %v5084
    %v5086 = vpop.f32.mrf.mxu0
    %v5087 = vadd.f32 %v5068, %v5086
    %5088 = vdwg.mxu0
    %5089 = vmatpush.bf16.msra.mxu0 0
    %5090 = vmatpush.bf16.msra.mxu0 0
    %5091 = vmatpush.bf16.msra.mxu0 0
    %5092 = vmatpush.bf16.msra.mxu0 0
    %5093 = vmatpush.bf16.msra.mxu0 %v3551
    %5094 = vmatpush.bf16.msra.mxu0 %v3545
    %5095 = vmatpush.bf16.msra.mxu0 %v3539
    %5096 = vmatpush.bf16.msra.mxu0 %v3533
    %5097 = vmatmul.bf16.gmra.mxu0 %v4058
    %v5098 = vpop.f32.mrf.mxu0
    %v5099 = vadd.f32 %v5080, %v5098
    %v5100 = vpop.f32.mrf.mxu0
    %v5101 = vadd.f32 %v5082, %v5100
    %5102 = vmatmul.bf16.gmra.mxu0 %v4061
    %v5103 = vpop.f32.mrf.mxu0
    %v5104 = vadd.f32 %v5085, %v5103
    %v5105 = vpop.f32.mrf.mxu0
    %v5106 = vadd.f32 %v5087, %v5105
    %5107 = vdwg.mxu0
    %5108 = vmatpush.bf16.msra.mxu0 %v3096
    %5109 = vmatpush.bf16.msra.mxu0 %v3090
    %5110 = vmatpush.bf16.msra.mxu0 %v3084
    %5111 = vmatpush.bf16.msra.mxu0 %v3078
    %5112 = vmatpush.bf16.msra.mxu0 %v3072
    %5113 = vmatpush.bf16.msra.mxu0 %v3066
    %5114 = vmatpush.bf16.msra.mxu0 %v3060
    %5115 = vmatpush.bf16.msra.mxu0 %v3054
    %5116 = vmatmul.bf16.gmra.mxu0 %v1495
    %v5117 = vpop.f32.mrf.mxu0
    %v5118 = vadd.f32 %v1420, %v5117
    %v5119 = vpop.f32.mrf.mxu0
    %v5120 = vadd.f32 %v1420, %v5119
    %5121 = vmatmul.bf16.gmra.mxu0 %v1506
    %v5122 = vpop.f32.mrf.mxu0
    %v5123 = vadd.f32 %v1420, %v5122
    %v5124 = vpop.f32.mrf.mxu0
    %v5125 = vadd.f32 %v1420, %v5124
    %5126 = vdwg.mxu0
    %5127 = vmatpush.bf16.msra.mxu0 %v3144
    %5128 = vmatpush.bf16.msra.mxu0 %v3138
    %5129 = vmatpush.bf16.msra.mxu0 %v3132
    %5130 = vmatpush.bf16.msra.mxu0 %v3126
    %5131 = vmatpush.bf16.msra.mxu0 %v3120
    %5132 = vmatpush.bf16.msra.mxu0 %v3114
    %5133 = vmatpush.bf16.msra.mxu0 %v3108
    %5134 = vmatpush.bf16.msra.mxu0 %v3102
    %5135 = vmatmul.bf16.gmra.mxu0 %v1496
    %v5136 = vpop.f32.mrf.mxu0
    %v5137 = vadd.f32 %v5118, %v5136
    %v5138 = vpop.f32.mrf.mxu0
    %v5139 = vadd.f32 %v5120, %v5138
    %5140 = vmatmul.bf16.gmra.mxu0 %v1507
    %v5141 = vpop.f32.mrf.mxu0
    %v5142 = vadd.f32 %v5123, %v5141
    %v5143 = vpop.f32.mrf.mxu0
    %v5144 = vadd.f32 %v5125, %v5143
    %5145 = vdwg.mxu0
    %5146 = vmatpush.bf16.msra.mxu0 %v3192
    %5147 = vmatpush.bf16.msra.mxu0 %v3186
    %5148 = vmatpush.bf16.msra.mxu0 %v3180
    %5149 = vmatpush.bf16.msra.mxu0 %v3174
    %5150 = vmatpush.bf16.msra.mxu0 %v3168
    %5151 = vmatpush.bf16.msra.mxu0 %v3162
    %5152 = vmatpush.bf16.msra.mxu0 %v3156
    %5153 = vmatpush.bf16.msra.mxu0 %v3150
    %5154 = vmatmul.bf16.gmra.mxu0 %v1497
    %v5155 = vpop.f32.mrf.mxu0
    %v5156 = vadd.f32 %v5137, %v5155
    %v5157 = vpop.f32.mrf.mxu0
    %v5158 = vadd.f32 %v5139, %v5157
    %5159 = vmatmul.bf16.gmra.mxu0 %v1508
    %v5160 = vpop.f32.mrf.mxu0
    %v5161 = vadd.f32 %v5142, %v5160
    %v5162 = vpop.f32.mrf.mxu0
    %v5163 = vadd.f32 %v5144, %v5162
    %5164 = vdwg.mxu0
    %5165 = vmatpush.bf16.msra.mxu0 %v3240
    %5166 = vmatpush.bf16.msra.mxu0 %v3234
    %5167 = vmatpush.bf16.msra.mxu0 %v3228
    %5168 = vmatpush.bf16.msra.mxu0 %v3222
    %5169 = vmatpush.bf16.msra.mxu0 %v3216
    %5170 = vmatpush.bf16.msra.mxu0 %v3210
    %5171 = vmatpush.bf16.msra.mxu0 %v3204
    %5172 = vmatpush.bf16.msra.mxu0 %v3198
    %5173 = vmatmul.bf16.gmra.mxu0 %v1498
    %v5174 = vpop.f32.mrf.mxu0
    %v5175 = vadd.f32 %v5156, %v5174
    %v5176 = vpop.f32.mrf.mxu0
    %v5177 = vadd.f32 %v5158, %v5176
    %5178 = vmatmul.bf16.gmra.mxu0 %v1509
    %v5179 = vpop.f32.mrf.mxu0
    %v5180 = vadd.f32 %v5161, %v5179
    %v5181 = vpop.f32.mrf.mxu0
    %v5182 = vadd.f32 %v5163, %v5181
    %5183 = vdwg.mxu0
    %5184 = vmatpush.bf16.msra.mxu0 %v3288
    %5185 = vmatpush.bf16.msra.mxu0 %v3282
    %5186 = vmatpush.bf16.msra.mxu0 %v3276
    %5187 = vmatpush.bf16.msra.mxu0 %v3270
    %5188 = vmatpush.bf16.msra.mxu0 %v3264
    %5189 = vmatpush.bf16.msra.mxu0 %v3258
    %5190 = vmatpush.bf16.msra.mxu0 %v3252
    %5191 = vmatpush.bf16.msra.mxu0 %v3246
    %5192 = vmatmul.bf16.gmra.mxu0 %v1499
    %v5193 = vpop.f32.mrf.mxu0
    %v5194 = vadd.f32 %v5175, %v5193
    %v5195 = vpop.f32.mrf.mxu0
    %v5196 = vadd.f32 %v5177, %v5195
    %5197 = vmatmul.bf16.gmra.mxu0 %v1510
    %v5198 = vpop.f32.mrf.mxu0
    %v5199 = vadd.f32 %v5180, %v5198
    %v5200 = vpop.f32.mrf.mxu0
    %v5201 = vadd.f32 %v5182, %v5200
    %5202 = vdwg.mxu0
    %5203 = vmatpush.bf16.msra.mxu0 %v3336
    %5204 = vmatpush.bf16.msra.mxu0 %v3330
    %5205 = vmatpush.bf16.msra.mxu0 %v3324
    %5206 = vmatpush.bf16.msra.mxu0 %v3318
    %5207 = vmatpush.bf16.msra.mxu0 %v3312
    %5208 = vmatpush.bf16.msra.mxu0 %v3306
    %5209 = vmatpush.bf16.msra.mxu0 %v3300
    %5210 = vmatpush.bf16.msra.mxu0 %v3294
    %5211 = vmatmul.bf16.gmra.mxu0 %v1500
    %v5212 = vpop.f32.mrf.mxu0
    %v5213 = vadd.f32 %v5194, %v5212
    %v5214 = vpop.f32.mrf.mxu0
    %v5215 = vadd.f32 %v5196, %v5214
    %5216 = vmatmul.bf16.gmra.mxu0 %v1511
    %v5217 = vpop.f32.mrf.mxu0
    %v5218 = vadd.f32 %v5199, %v5217
    %v5219 = vpop.f32.mrf.mxu0
    %v5220 = vadd.f32 %v5201, %v5219
    %5221 = vdwg.mxu0
    %5222 = vmatpush.bf16.msra.mxu0 %v3384
    %5223 = vmatpush.bf16.msra.mxu0 %v3378
    %5224 = vmatpush.bf16.msra.mxu0 %v3372
    %5225 = vmatpush.bf16.msra.mxu0 %v3366
    %5226 = vmatpush.bf16.msra.mxu0 %v3360
    %5227 = vmatpush.bf16.msra.mxu0 %v3354
    %5228 = vmatpush.bf16.msra.mxu0 %v3348
    %5229 = vmatpush.bf16.msra.mxu0 %v3342
    %5230 = vmatmul.bf16.gmra.mxu0 %v1501
    %v5231 = vpop.f32.mrf.mxu0
    %v5232 = vadd.f32 %v5213, %v5231
    %v5233 = vpop.f32.mrf.mxu0
    %v5234 = vadd.f32 %v5215, %v5233
    %5235 = vmatmul.bf16.gmra.mxu0 %v1512
    %v5236 = vpop.f32.mrf.mxu0
    %v5237 = vadd.f32 %v5218, %v5236
    %v5238 = vpop.f32.mrf.mxu0
    %v5239 = vadd.f32 %v5220, %v5238
    %5240 = vdwg.mxu0
    %5241 = vmatpush.bf16.msra.mxu0 %v3432
    %5242 = vmatpush.bf16.msra.mxu0 %v3426
    %5243 = vmatpush.bf16.msra.mxu0 %v3420
    %5244 = vmatpush.bf16.msra.mxu0 %v3414
    %5245 = vmatpush.bf16.msra.mxu0 %v3408
    %5246 = vmatpush.bf16.msra.mxu0 %v3402
    %5247 = vmatpush.bf16.msra.mxu0 %v3396
    %5248 = vmatpush.bf16.msra.mxu0 %v3390
    %5249 = vmatmul.bf16.gmra.mxu0 %v1502
    %v5250 = vpop.f32.mrf.mxu0
    %v5251 = vadd.f32 %v5232, %v5250
    %v5252 = vpop.f32.mrf.mxu0
    %v5253 = vadd.f32 %v5234, %v5252
    %5254 = vmatmul.bf16.gmra.mxu0 %v1513
    %v5255 = vpop.f32.mrf.mxu0
    %v5256 = vadd.f32 %v5237, %v5255
    %v5257 = vpop.f32.mrf.mxu0
    %v5258 = vadd.f32 %v5239, %v5257
    %5259 = vdwg.mxu0
    %5260 = vmatpush.bf16.msra.mxu0 %v3480
    %5261 = vmatpush.bf16.msra.mxu0 %v3474
    %5262 = vmatpush.bf16.msra.mxu0 %v3468
    %5263 = vmatpush.bf16.msra.mxu0 %v3462
    %5264 = vmatpush.bf16.msra.mxu0 %v3456
    %5265 = vmatpush.bf16.msra.mxu0 %v3450
    %5266 = vmatpush.bf16.msra.mxu0 %v3444
    %5267 = vmatpush.bf16.msra.mxu0 %v3438
    %5268 = vmatmul.bf16.gmra.mxu0 %v1503
    %v5269 = vpop.f32.mrf.mxu0
    %v5270 = vadd.f32 %v5251, %v5269
    %v5271 = vpop.f32.mrf.mxu0
    %v5272 = vadd.f32 %v5253, %v5271
    %5273 = vmatmul.bf16.gmra.mxu0 %v1514
    %v5274 = vpop.f32.mrf.mxu0
    %v5275 = vadd.f32 %v5256, %v5274
    %v5276 = vpop.f32.mrf.mxu0
    %v5277 = vadd.f32 %v5258, %v5276
    %5278 = vdwg.mxu0
    %5279 = vmatpush.bf16.msra.mxu0 %v3528
    %5280 = vmatpush.bf16.msra.mxu0 %v3522
    %5281 = vmatpush.bf16.msra.mxu0 %v3516
    %5282 = vmatpush.bf16.msra.mxu0 %v3510
    %5283 = vmatpush.bf16.msra.mxu0 %v3504
    %5284 = vmatpush.bf16.msra.mxu0 %v3498
    %5285 = vmatpush.bf16.msra.mxu0 %v3492
    %5286 = vmatpush.bf16.msra.mxu0 %v3486
    %5287 = vmatmul.bf16.gmra.mxu0 %v1504
    %v5288 = vpop.f32.mrf.mxu0
    %v5289 = vadd.f32 %v5270, %v5288
    %v5290 = vpop.f32.mrf.mxu0
    %v5291 = vadd.f32 %v5272, %v5290
    %5292 = vmatmul.bf16.gmra.mxu0 %v1515
    %v5293 = vpop.f32.mrf.mxu0
    %v5294 = vadd.f32 %v5275, %v5293
    %v5295 = vpop.f32.mrf.mxu0
    %v5296 = vadd.f32 %v5277, %v5295
    %5297 = vdwg.mxu0
    %5298 = vmatpush.bf16.msra.mxu0 0
    %5299 = vmatpush.bf16.msra.mxu0 0
    %5300 = vmatpush.bf16.msra.mxu0 0
    %5301 = vmatpush.bf16.msra.mxu0 0
    %5302 = vmatpush.bf16.msra.mxu0 %v3552
    %5303 = vmatpush.bf16.msra.mxu0 %v3546
    %5304 = vmatpush.bf16.msra.mxu0 %v3540
    %5305 = vmatpush.bf16.msra.mxu0 %v3534
    %5306 = vmatmul.bf16.gmra.mxu0 %v4058
    %v5307 = vpop.f32.mrf.mxu0
    %v5308 = vadd.f32 %v5289, %v5307
    %v5309 = vpop.f32.mrf.mxu0
    %v5310 = vadd.f32 %v5291, %v5309
    %5311 = vmatmul.bf16.gmra.mxu0 %v4061
    %v5312 = vpop.f32.mrf.mxu0
    %v5313 = vadd.f32 %v5294, %v5312
    %v5314 = vpop.f32.mrf.mxu0
    %v5315 = vadd.f32 %v5296, %v5314
    %5316 = vdwg.mxu0
    %v5317 = vmax.f32 %v4263, 0.0
    %v5318 = vmax.f32 %v4472, 0.0
    %v5319 = vmax.f32 %v4681, 0.0
    %v5320 = vmax.f32 %v4890, 0.0
    %v5321 = vmax.f32 %v5099, 0.0
    %v5322 = vmax.f32 %v5308, 0.0
    %v5323 = vmax.f32 %v4265, 0.0
    %v5324 = vmax.f32 %v4474, 0.0
    %v5325 = vmax.f32 %v4683, 0.0
    %v5326 = vmax.f32 %v4892, 0.0
    %v5327 = vmax.f32 %v5101, 0.0
    %v5328 = vmax.f32 %v5310, 0.0
    %v5329 = vmax.f32 %v4268, 0.0
    %v5330 = vmax.f32 %v4477, 0.0
    %v5331 = vmax.f32 %v4686, 0.0
    %v5332 = vmax.f32 %v4895, 0.0
    %v5333 = vmax.f32 %v5104, 0.0
    %v5334 = vmax.f32 %v5313, 0.0
    %v5335 = vmax.f32 %v4270, 0.0
    %v5336 = vmax.f32 %v4479, 0.0
    %v5337 = vmax.f32 %v4688, 0.0
    %v5338 = vmax.f32 %v4897, 0.0
    %v5339 = vmax.f32 %v5106, 0.0
    %v5340 = vmax.f32 %v5315, 0.0
    %v5341 = vpack.c.bf16 %v5318, %v5317
    %v5342 = vpack.c.bf16 %v5320, %v5319
    %v5343 = vpack.c.bf16 %v5322, %v5321
    %v5344 = vpack.c.bf16 %v5324, %v5323
    %v5345 = vpack.c.bf16 %v5326, %v5325
    %v5346 = vpack.c.bf16 %v5328, %v5327
    %v5347 = vpack.c.bf16 %v5330, %v5329
    %v5348 = vpack.c.bf16 %v5332, %v5331
    %v5349 = vpack.c.bf16 %v5334, %v5333
    %v5350 = vpack.c.bf16 %v5336, %v5335
    %v5351 = vpack.c.bf16 %v5338, %v5337
    %v5352 = vpack.c.bf16 %v5340, %v5339
    %5353 = vst [vmem:[#allocation5] sm:$0xff] %v5341
    %5354 = vst [vmem:[#allocation5 + $0x8] sm:$0xff] %v5342
    %5355 = vst [vmem:[#allocation5 + $0x10] sm:$0xff] %v5343
    %5356 = vst [vmem:[#allocation5 + $0x18] sm:$0xff] %v5344
    %5357 = vst [vmem:[#allocation5 + $0x20] sm:$0xff] %v5345
    %5358 = vst [vmem:[#allocation5 + $0x28] sm:$0xff] %v5346
    %5359 = vst [vmem:[#allocation5 + $0x30] sm:$0xff] %v5347
    %5360 = vst [vmem:[#allocation5 + $0x38] sm:$0xff] %v5348
    %5361 = vst [vmem:[#allocation5 + $0x40] sm:$0xff] %v5349
    %5362 = vst [vmem:[#allocation5 + $0x48] sm:$0xff] %v5350
    %5363 = vst [vmem:[#allocation5 + $0x50] sm:$0xff] %v5351
    %5364 = vst [vmem:[#allocation5 + $0x58] sm:$0xff] %v5352
    %v5365 = vld [vmem:[#allocation5] sm:$0xff]
    %v5366 = vld [vmem:[#allocation5 + $0x8] sm:$0xff]
    %v5367 = vld [vmem:[#allocation5 + $0x10] sm:$0xff]
    %v5368 = vld [vmem:[#allocation5 + $0x18] sm:$0x11]
    %v5369 = vld [vmem:[#allocation5 + $0x20] sm:$0x11]
    %v5370 = vld [vmem:[#allocation5 + $0x28] sm:$0x11]
    %v5371 = vld [vmem:[#allocation5 + $0x30] sm:$0xff]
    %v5372 = vld [vmem:[#allocation5 + $0x38] sm:$0xff]
    %v5373 = vld [vmem:[#allocation5 + $0x40] sm:$0xff]
    %v5374 = vld [vmem:[#allocation5 + $0x48] sm:$0x11]
    %v5375 = vld [vmem:[#allocation5 + $0x50] sm:$0x11]
    %v5376 = vld [vmem:[#allocation5 + $0x58] sm:$0x11]
    %5377 = vst [vmem:[#allocation6] sm:$0xff] %v5365
    %5378 = vst [vmem:[#allocation6 + $0x8] sm:$0xff] %v5366
    %5379 = vst [vmem:[#allocation6 + $0x10] sm:$0xff] %v5367
    %5380 = vst [vmem:[#allocation6 + $0x48] sm:$0x11] %v5368
    %5381 = vst [vmem:[#allocation6 + $0x50] sm:$0x11] %v5369
    %5382 = vst [vmem:[#allocation6 + $0x58] sm:$0x11] %v5370
    %5383 = vst [vmem:[#allocation6 + $0x90] sm:$0xff] %v5371
    %5384 = vst [vmem:[#allocation6 + $0x98] sm:$0xff] %v5372
    %5385 = vst [vmem:[#allocation6 + $0xa0] sm:$0xff] %v5373
    %5386 = vst [vmem:[#allocation6 + $0xd8] sm:$0x11] %v5374
    %5387 = vst [vmem:[#allocation6 + $0xe0] sm:$0x11] %v5375
    %5388 = vst [vmem:[#allocation6 + $0xe8] sm:$0x11] %v5376
    %v5389 = vld [vmem:[#allocation5] sm:$0xff]
    %v5390 = vld [vmem:[#allocation5 + $0x8] sm:$0xff]
    %v5391 = vld [vmem:[#allocation5 + $0x10] sm:$0xff]
    %v5392 = vld [vmem:[#allocation5 + $0x18] sm:$0x33]
    %v5393 = vld [vmem:[#allocation5 + $0x20] sm:$0x33]
    %v5394 = vld [vmem:[#allocation5 + $0x28] sm:$0x33]
    %v5395 = vld [vmem:[#allocation5 + $0x30] sm:$0xff]
    %v5396 = vld [vmem:[#allocation5 + $0x38] sm:$0xff]
    %v5397 = vld [vmem:[#allocation5 + $0x40] sm:$0xff]
    %v5398 = vld [vmem:[#allocation5 + $0x48] sm:$0x33]
    %v5399 = vld [vmem:[#allocation5 + $0x50] sm:$0x33]
    %v5400 = vld [vmem:[#allocation5 + $0x58] sm:$0x33]
    %v5402 = vshrl.u32 %v5389, 16
    %v5404 = vrot.slane %v5402, 4
    %v5405 = vshll.u32 %v5389, 16
    %v5407 = vrot.slane %v5405, 5
    %v5408 = vor.u32 %v5404, %v5407
    %v5409 = vrot.slane %v5408, 4
    %v5411 = vshll.u32 %v5392, 16
    %v5413 = vrot.slane %v5411, 5
    %v5414 = vsel %vm71, %v5409, %v5413
    %v5416 = vshrl.u32 %v5390, 16
    %v5418 = vrot.slane %v5416, 4
    %v5419 = vshll.u32 %v5390, 16
    %v5421 = vrot.slane %v5419, 5
    %v5422 = vor.u32 %v5418, %v5421
    %v5423 = vrot.slane %v5422, 4
    %v5425 = vshll.u32 %v5393, 16
    %v5427 = vrot.slane %v5425, 5
    %v5428 = vsel %vm71, %v5423, %v5427
    %v5430 = vshrl.u32 %v5391, 16
    %v5432 = vrot.slane %v5430, 4
    %v5433 = vshll.u32 %v5391, 16
    %v5435 = vrot.slane %v5433, 5
    %v5436 = vor.u32 %v5432, %v5435
    %v5437 = vrot.slane %v5436, 4
    %v5439 = vshll.u32 %v5394, 16
    %v5441 = vrot.slane %v5439, 5
    %v5442 = vsel %vm71, %v5437, %v5441
    %v5443 = vshrl.u32 %v5392, 16
    %v5445 = vrot.slane %v5443, 4
    %v5446 = vor.u32 %v5445, %v5413
    %v5447 = vrot.slane %v5446, 4
    %v5448 = vshrl.u32 %v5393, 16
    %v5450 = vrot.slane %v5448, 4
    %v5451 = vor.u32 %v5450, %v5427
    %v5452 = vrot.slane %v5451, 4
    %v5453 = vshrl.u32 %v5394, 16
    %v5455 = vrot.slane %v5453, 4
    %v5456 = vor.u32 %v5455, %v5441
    %v5457 = vrot.slane %v5456, 4
    %v5459 = vshrl.u32 %v5395, 16
    %v5461 = vrot.slane %v5459, 4
    %v5462 = vshll.u32 %v5395, 16
    %v5464 = vrot.slane %v5462, 5
    %v5465 = vor.u32 %v5461, %v5464
    %v5466 = vrot.slane %v5465, 4
    %v5468 = vshll.u32 %v5398, 16
    %v5470 = vrot.slane %v5468, 5
    %v5471 = vsel %vm71, %v5466, %v5470
    %v5473 = vshrl.u32 %v5396, 16
    %v5475 = vrot.slane %v5473, 4
    %v5476 = vshll.u32 %v5396, 16
    %v5478 = vrot.slane %v5476, 5
    %v5479 = vor.u32 %v5475, %v5478
    %v5480 = vrot.slane %v5479, 4
    %v5482 = vshll.u32 %v5399, 16
    %v5484 = vrot.slane %v5482, 5
    %v5485 = vsel %vm71, %v5480, %v5484
    %v5487 = vshrl.u32 %v5397, 16
    %v5489 = vrot.slane %v5487, 4
    %v5490 = vshll.u32 %v5397, 16
    %v5492 = vrot.slane %v5490, 5
    %v5493 = vor.u32 %v5489, %v5492
    %v5494 = vrot.slane %v5493, 4
    %v5496 = vshll.u32 %v5400, 16
    %v5498 = vrot.slane %v5496, 5
    %v5499 = vsel %vm71, %v5494, %v5498
    %v5500 = vshrl.u32 %v5398, 16
    %v5502 = vrot.slane %v5500, 4
    %v5503 = vor.u32 %v5502, %v5470
    %v5504 = vrot.slane %v5503, 4
    %v5505 = vshrl.u32 %v5399, 16
    %v5507 = vrot.slane %v5505, 4
    %v5508 = vor.u32 %v5507, %v5484
    %v5509 = vrot.slane %v5508, 4
    %v5510 = vshrl.u32 %v5400, 16
    %v5512 = vrot.slane %v5510, 4
    %v5513 = vor.u32 %v5512, %v5498
    %v5514 = vrot.slane %v5513, 4
    %5527 = vst [vmem:[#allocation6 + $0x18] sm:$0xff] %v5414
    %5528 = vst [vmem:[#allocation6 + $0x20] sm:$0xff] %v5428
    %5529 = vst [vmem:[#allocation6 + $0x28] sm:$0xff] %v5442
    %5530 = vst [vmem:[#allocation6 + $0x60] sm:$0x11] %v5447
    %5531 = vst [vmem:[#allocation6 + $0x68] sm:$0x11] %v5452
    %5532 = vst [vmem:[#allocation6 + $0x70] sm:$0x11] %v5457
    %5533 = vst [vmem:[#allocation6 + $0xa8] sm:$0xff] %v5471
    %5534 = vst [vmem:[#allocation6 + $0xb0] sm:$0xff] %v5485
    %5535 = vst [vmem:[#allocation6 + $0xb8] sm:$0xff] %v5499
    %5536 = vst [vmem:[#allocation6 + $0xf0] sm:$0x11] %v5504
    %5537 = vst [vmem:[#allocation6 + $0xf8] sm:$0x11] %v5509
    %5538 = vst [vmem:[#allocation6 + $0x100] sm:$0x11] %v5514
    %v5539 = vld [vmem:[#allocation5] sm:$0xee]
    %v5540 = vld [vmem:[#allocation5 + $0x8] sm:$0xee]
    %v5541 = vld [vmem:[#allocation5 + $0x10] sm:$0xee]
    %v5542 = vld [vmem:[#allocation5 + $0x18] sm:$0x33]
    %v5543 = vld [vmem:[#allocation5 + $0x20] sm:$0x33]
    %v5544 = vld [vmem:[#allocation5 + $0x28] sm:$0x33]
    %v5545 = vld [vmem:[#allocation5 + $0x30] sm:$0xee]
    %v5546 = vld [vmem:[#allocation5 + $0x38] sm:$0xee]
    %v5547 = vld [vmem:[#allocation5 + $0x40] sm:$0xee]
    %v5548 = vld [vmem:[#allocation5 + $0x48] sm:$0x33]
    %v5549 = vld [vmem:[#allocation5 + $0x50] sm:$0x33]
    %v5550 = vld [vmem:[#allocation5 + $0x58] sm:$0x33]
    %v5563 = vrot.slane %v5539, 5
    %v5564 = vrot.slane %v5563, 4
    %v5565 = vrot.slane %v5542, 5
    %v5566 = vsel %vm138, %v5564, %v5565
    %v5567 = vrot.slane %v5540, 5
    %v5568 = vrot.slane %v5567, 4
    %v5569 = vrot.slane %v5543, 5
    %v5570 = vsel %vm138, %v5568, %v5569
    %v5571 = vrot.slane %v5541, 5
    %v5572 = vrot.slane %v5571, 4
    %v5573 = vrot.slane %v5544, 5
    %v5574 = vsel %vm138, %v5572, %v5573
    %v5575 = vrot.slane %v5565, 4
    %v5576 = vrot.slane %v5569, 4
    %v5577 = vrot.slane %v5573, 4
    %v5578 = vrot.slane %v5545, 5
    %v5579 = vrot.slane %v5578, 4
    %v5580 = vrot.slane %v5548, 5
    %v5581 = vsel %vm138, %v5579, %v5580
    %v5582 = vrot.slane %v5546, 5
    %v5583 = vrot.slane %v5582, 4
    %v5584 = vrot.slane %v5549, 5
    %v5585 = vsel %vm138, %v5583, %v5584
    %v5586 = vrot.slane %v5547, 5
    %v5587 = vrot.slane %v5586, 4
    %v5588 = vrot.slane %v5550, 5
    %v5589 = vsel %vm138, %v5587, %v5588
    %v5590 = vrot.slane %v5580, 4
    %v5591 = vrot.slane %v5584, 4
    %v5592 = vrot.slane %v5588, 4
    %5605 = vst [vmem:[#allocation6 + $0x30] sm:$0xff] %v5566
    %5606 = vst [vmem:[#allocation6 + $0x38] sm:$0xff] %v5570
    %5607 = vst [vmem:[#allocation6 + $0x40] sm:$0xff] %v5574
    %5608 = vst [vmem:[#allocation6 + $0x78] sm:$0x11] %v5575
    %5609 = vst [vmem:[#allocation6 + $0x80] sm:$0x11] %v5576
    %5610 = vst [vmem:[#allocation6 + $0x88] sm:$0x11] %v5577
    %5611 = vst [vmem:[#allocation6 + $0xc0] sm:$0xff] %v5581
    %5612 = vst [vmem:[#allocation6 + $0xc8] sm:$0xff] %v5585
    %5613 = vst [vmem:[#allocation6 + $0xd0] sm:$0xff] %v5589
    %5614 = vst [vmem:[#allocation6 + $0x108] sm:$0x11] %v5590
    %5615 = vst [vmem:[#allocation6 + $0x110] sm:$0x11] %v5591
    %5616 = vst [vmem:[#allocation6 + $0x118] sm:$0x11] %v5592
    %v5617 = vld [vmem:[#allocation6] sm:$0xff]
    %v5618 = vld [vmem:[#allocation6 + $0x8] sm:$0xff]
    %v5619 = vld [vmem:[#allocation6 + $0x10] sm:$0xff]
    %v5620 = vld [vmem:[#allocation6 + $0x18] sm:$0xff]
    %v5621 = vld [vmem:[#allocation6 + $0x20] sm:$0xff]
    %v5622 = vld [vmem:[#allocation6 + $0x28] sm:$0xff]
    %v5623 = vld [vmem:[#allocation6 + $0x30] sm:$0xff]
    %v5624 = vld [vmem:[#allocation6 + $0x38] sm:$0xff]
    %v5625 = vld [vmem:[#allocation6 + $0x40] sm:$0xff]
    %v5626 = vld [vmem:[#allocation6 + $0x48] sm:$0xff]
    %v5627 = vld [vmem:[#allocation6 + $0x50] sm:$0xff]
    %v5628 = vld [vmem:[#allocation6 + $0x58] sm:$0xff]
    %v5629 = vld [vmem:[#allocation6 + $0x60] sm:$0xff]
    %v5630 = vld [vmem:[#allocation6 + $0x68] sm:$0xff]
    %v5631 = vld [vmem:[#allocation6 + $0x70] sm:$0xff]
    %v5632 = vld [vmem:[#allocation6 + $0x78] sm:$0xff]
    %v5633 = vld [vmem:[#allocation6 + $0x80] sm:$0xff]
    %v5634 = vld [vmem:[#allocation6 + $0x88] sm:$0xff]
    %v5635 = vld [vmem:[#allocation6 + $0x90] sm:$0xff]
    %v5636 = vld [vmem:[#allocation6 + $0x98] sm:$0xff]
    %v5637 = vld [vmem:[#allocation6 + $0xa0] sm:$0xff]
    %v5638 = vld [vmem:[#allocation6 + $0xa8] sm:$0xff]
    %v5639 = vld [vmem:[#allocation6 + $0xb0] sm:$0xff]
    %v5640 = vld [vmem:[#allocation6 + $0xb8] sm:$0xff]
    %v5641 = vld [vmem:[#allocation6 + $0xc0] sm:$0xff]
    %v5642 = vld [vmem:[#allocation6 + $0xc8] sm:$0xff]
    %v5643 = vld [vmem:[#allocation6 + $0xd0] sm:$0xff]
    %v5644 = vld [vmem:[#allocation6 + $0xd8] sm:$0xff]
    %v5645 = vld [vmem:[#allocation6 + $0xe0] sm:$0xff]
    %v5646 = vld [vmem:[#allocation6 + $0xe8] sm:$0xff]
    %v5647 = vld [vmem:[#allocation6 + $0xf0] sm:$0xff]
    %v5648 = vld [vmem:[#allocation6 + $0xf8] sm:$0xff]
    %v5649 = vld [vmem:[#allocation6 + $0x100] sm:$0xff]
    %v5650 = vld [vmem:[#allocation6 + $0x108] sm:$0xff]
    %v5651 = vld [vmem:[#allocation6 + $0x110] sm:$0xff]
    %v5652 = vld [vmem:[#allocation6 + $0x118] sm:$0xff]
    %v5653 = vld [vmem:[%s5] sm:$0xff]
    %v5654 = vld [vmem:[%s5 + $0x8] sm:$0xf]
    %v5655 = vld [vmem:[%s5 + $0xc] sm:$0xff]
    %v5656 = vld [vmem:[%s5 + $0x14] sm:$0xf]
    %v5657 = vld [vmem:[%s5 + $0x18] sm:$0xff]
    %v5658 = vld [vmem:[%s5 + $0x20] sm:$0xf]
    %v5659 = vld [vmem:[%s5 + $0x24] sm:$0xff]
    %v5660 = vld [vmem:[%s5 + $0x2c] sm:$0xf]
    %v5661 = vld [vmem:[%s5 + $0x30] sm:$0xff]
    %v5662 = vld [vmem:[%s5 + $0x38] sm:$0xf]
    %v5663 = vld [vmem:[%s5 + $0x3c] sm:$0xff]
    %v5664 = vld [vmem:[%s5 + $0x44] sm:$0xf]
    %v5665 = vld [vmem:[%s5 + $0x48] sm:$0xff]
    %v5666 = vld [vmem:[%s5 + $0x50] sm:$0xf]
    %v5667 = vld [vmem:[%s5 + $0x54] sm:$0xff]
    %v5668 = vld [vmem:[%s5 + $0x5c] sm:$0xf]
    %v5669 = vld [vmem:[%s5 + $0x60] sm:$0xff]
    %v5670 = vld [vmem:[%s5 + $0x68] sm:$0xf]
    %v5671 = vld [vmem:[%s5 + $0x6c] sm:$0xff]
    %v5672 = vld [vmem:[%s5 + $0x74] sm:$0xf]
    %v5673 = vld [vmem:[%s5 + $0x78] sm:$0xff]
    %v5674 = vld [vmem:[%s5 + $0x80] sm:$0xf]
    %v5675 = vld [vmem:[%s5 + $0x84] sm:$0xff]
    %v5676 = vld [vmem:[%s5 + $0x8c] sm:$0xf]
    %v5677 = vld [vmem:[%s5 + $0x90] sm:$0xff]
    %v5678 = vld [vmem:[%s5 + $0x98] sm:$0xf]
    %v5679 = vld [vmem:[%s5 + $0x9c] sm:$0xff]
    %v5680 = vld [vmem:[%s5 + $0xa4] sm:$0xf]
    %v5681 = vld [vmem:[%s5 + $0xa8] sm:$0xff]
    %v5682 = vld [vmem:[%s5 + $0xb0] sm:$0xf]
    %v5683 = vld [vmem:[%s5 + $0xb4] sm:$0xff]
    %v5684 = vld [vmem:[%s5 + $0xbc] sm:$0xf]
    %v5685 = vld [vmem:[%s5 + $0xc0] sm:$0xff]
    %v5686 = vld [vmem:[%s5 + $0xc8] sm:$0xf]
    %v5687 = vld [vmem:[%s5 + $0xcc] sm:$0xff]
    %v5688 = vld [vmem:[%s5 + $0xd4] sm:$0xf]
    %v5689 = vld [vmem:[%s5 + $0xd8] sm:$0xff]
    %v5690 = vld [vmem:[%s5 + $0xe0] sm:$0xf]
    %v5691 = vld [vmem:[%s5 + $0xe4] sm:$0xff]
    %v5692 = vld [vmem:[%s5 + $0xec] sm:$0xf]
    %v5693 = vld [vmem:[%s5 + $0xf0] sm:$0xff]
    %v5694 = vld [vmem:[%s5 + $0xf8] sm:$0xf]
    %v5695 = vld [vmem:[%s5 + $0xfc] sm:$0xff]
    %v5696 = vld [vmem:[%s5 + $0x104] sm:$0xf]
    %v5697 = vld [vmem:[%s5 + $0x108] sm:$0xff]
    %v5698 = vld [vmem:[%s5 + $0x110] sm:$0xf]
    %v5699 = vld [vmem:[%s5 + $0x114] sm:$0xff]
    %v5700 = vld [vmem:[%s5 + $0x11c] sm:$0xf]
    %v5701 = vld [vmem:[%s5 + $0x120] sm:$0xff]
    %v5702 = vld [vmem:[%s5 + $0x128] sm:$0xf]
    %v5703 = vld [vmem:[%s5 + $0x12c] sm:$0xff]
    %v5704 = vld [vmem:[%s5 + $0x134] sm:$0xf]
    %v5705 = vld [vmem:[%s5 + $0x138] sm:$0xff]
    %v5706 = vld [vmem:[%s5 + $0x140] sm:$0xf]
    %v5707 = vld [vmem:[%s5 + $0x144] sm:$0xff]
    %v5708 = vld [vmem:[%s5 + $0x14c] sm:$0xf]
    %v5709 = vld [vmem:[%s5 + $0x150] sm:$0xff]
    %v5710 = vld [vmem:[%s5 + $0x158] sm:$0xf]
    %v5711 = vld [vmem:[%s5 + $0x15c] sm:$0xff]
    %v5712 = vld [vmem:[%s5 + $0x164] sm:$0xf]
    %v5713 = vld [vmem:[%s5 + $0x168] sm:$0xff]
    %v5714 = vld [vmem:[%s5 + $0x170] sm:$0xf]
    %v5715 = vld [vmem:[%s5 + $0x174] sm:$0xff]
    %v5716 = vld [vmem:[%s5 + $0x17c] sm:$0xf]
    %v5717 = vld [vmem:[%s5 + $0x180] sm:$0xff]
    %v5718 = vld [vmem:[%s5 + $0x188] sm:$0xf]
    %v5719 = vld [vmem:[%s5 + $0x18c] sm:$0xff]
    %v5720 = vld [vmem:[%s5 + $0x194] sm:$0xf]
    %v5721 = vld [vmem:[%s5 + $0x198] sm:$0xff]
    %v5722 = vld [vmem:[%s5 + $0x1a0] sm:$0xf]
    %v5723 = vld [vmem:[%s5 + $0x1a4] sm:$0xff]
    %v5724 = vld [vmem:[%s5 + $0x1ac] sm:$0xf]
    %v5725 = vld [vmem:[%s5 + $0x1b0] sm:$0xff]
    %v5726 = vld [vmem:[%s5 + $0x1b8] sm:$0xf]
    %v5727 = vld [vmem:[%s5 + $0x1bc] sm:$0xff]
    %v5728 = vld [vmem:[%s5 + $0x1c4] sm:$0xf]
    %v5729 = vld [vmem:[%s5 + $0x1c8] sm:$0xff]
    %v5730 = vld [vmem:[%s5 + $0x1d0] sm:$0xf]
    %v5731 = vld [vmem:[%s5 + $0x1d4] sm:$0xff]
    %v5732 = vld [vmem:[%s5 + $0x1dc] sm:$0xf]
    %v5733 = vld [vmem:[%s5 + $0x1e0] sm:$0xff]
    %v5734 = vld [vmem:[%s5 + $0x1e8] sm:$0xf]
    %v5735 = vld [vmem:[%s5 + $0x1ec] sm:$0xff]
    %v5736 = vld [vmem:[%s5 + $0x1f4] sm:$0xf]
    %v5737 = vld [vmem:[%s5 + $0x1f8] sm:$0xff]
    %v5738 = vld [vmem:[%s5 + $0x200] sm:$0xf]
    %v5739 = vld [vmem:[%s5 + $0x204] sm:$0xff]
    %v5740 = vld [vmem:[%s5 + $0x20c] sm:$0xf]
    %v5741 = vld [vmem:[%s5 + $0x210] sm:$0xff]
    %v5742 = vld [vmem:[%s5 + $0x218] sm:$0xf]
    %v5743 = vld [vmem:[%s5 + $0x21c] sm:$0xff]
    %v5744 = vld [vmem:[%s5 + $0x224] sm:$0xf]
    %v5745 = vld [vmem:[%s5 + $0x228] sm:$0xff]
    %v5746 = vld [vmem:[%s5 + $0x230] sm:$0xf]
    %v5747 = vld [vmem:[%s5 + $0x234] sm:$0xff]
    %v5748 = vld [vmem:[%s5 + $0x23c] sm:$0xf]
    %v5749 = vld [vmem:[%s5 + $0x240] sm:$0xff]
    %v5750 = vld [vmem:[%s5 + $0x248] sm:$0xf]
    %v5751 = vld [vmem:[%s5 + $0x24c] sm:$0xff]
    %v5752 = vld [vmem:[%s5 + $0x254] sm:$0xf]
    %v5753 = vld [vmem:[%s5 + $0x258] sm:$0xff]
    %v5754 = vld [vmem:[%s5 + $0x260] sm:$0xf]
    %v5755 = vld [vmem:[%s5 + $0x264] sm:$0xff]
    %v5756 = vld [vmem:[%s5 + $0x26c] sm:$0xf]
    %v5757 = vld [vmem:[%s5 + $0x270] sm:$0xff]
    %v5758 = vld [vmem:[%s5 + $0x278] sm:$0xf]
    %v5759 = vld [vmem:[%s5 + $0x27c] sm:$0xff]
    %v5760 = vld [vmem:[%s5 + $0x284] sm:$0xf]
    %v5761 = vld [vmem:[%s5 + $0x288] sm:$0xff]
    %v5762 = vld [vmem:[%s5 + $0x290] sm:$0xf]
    %v5763 = vld [vmem:[%s5 + $0x294] sm:$0xff]
    %v5764 = vld [vmem:[%s5 + $0x29c] sm:$0xf]
    %v5765 = vld [vmem:[%s5 + $0x2a0] sm:$0xff]
    %v5766 = vld [vmem:[%s5 + $0x2a8] sm:$0xf]
    %v5767 = vld [vmem:[%s5 + $0x2ac] sm:$0xff]
    %v5768 = vld [vmem:[%s5 + $0x2b4] sm:$0xf]
    %v5769 = vld [vmem:[%s5 + $0x2b8] sm:$0xff]
    %v5770 = vld [vmem:[%s5 + $0x2c0] sm:$0xf]
    %v5771 = vld [vmem:[%s5 + $0x2c4] sm:$0xff]
    %v5772 = vld [vmem:[%s5 + $0x2cc] sm:$0xf]
    %v5773 = vld [vmem:[%s5 + $0x2d0] sm:$0xff]
    %v5774 = vld [vmem:[%s5 + $0x2d8] sm:$0xf]
    %v5775 = vld [vmem:[%s5 + $0x2dc] sm:$0xff]
    %v5776 = vld [vmem:[%s5 + $0x2e4] sm:$0xf]
    %v5777 = vld [vmem:[%s5 + $0x2e8] sm:$0xff]
    %v5778 = vld [vmem:[%s5 + $0x2f0] sm:$0xf]
    %v5779 = vld [vmem:[%s5 + $0x2f4] sm:$0xff]
    %v5780 = vld [vmem:[%s5 + $0x2fc] sm:$0xf]
    %v5781 = vld [vmem:[%s5 + $0x300] sm:$0xff]
    %v5782 = vld [vmem:[%s5 + $0x308] sm:$0xf]
    %v5783 = vld [vmem:[%s5 + $0x30c] sm:$0xff]
    %v5784 = vld [vmem:[%s5 + $0x314] sm:$0xf]
    %v5785 = vld [vmem:[%s5 + $0x318] sm:$0xff]
    %v5786 = vld [vmem:[%s5 + $0x320] sm:$0xf]
    %v5787 = vld [vmem:[%s5 + $0x324] sm:$0xff]
    %v5788 = vld [vmem:[%s5 + $0x32c] sm:$0xf]
    %v5789 = vld [vmem:[%s5 + $0x330] sm:$0xff]
    %v5790 = vld [vmem:[%s5 + $0x338] sm:$0xf]
    %v5791 = vld [vmem:[%s5 + $0x33c] sm:$0xff]
    %v5792 = vld [vmem:[%s5 + $0x344] sm:$0xf]
    %v5793 = vld [vmem:[%s5 + $0x348] sm:$0xff]
    %v5794 = vld [vmem:[%s5 + $0x350] sm:$0xf]
    %v5795 = vld [vmem:[%s5 + $0x354] sm:$0xff]
    %v5796 = vld [vmem:[%s5 + $0x35c] sm:$0xf]
    %v5797 = vld [vmem:[%s5 + $0x360] sm:$0xff]
    %v5798 = vld [vmem:[%s5 + $0x368] sm:$0xf]
    %v5799 = vld [vmem:[%s5 + $0x36c] sm:$0xff]
    %v5800 = vld [vmem:[%s5 + $0x374] sm:$0xf]
    %v5801 = vld [vmem:[%s5 + $0x378] sm:$0xff]
    %v5802 = vld [vmem:[%s5 + $0x380] sm:$0xf]
    %v5803 = vld [vmem:[%s5 + $0x384] sm:$0xff]
    %v5804 = vld [vmem:[%s5 + $0x38c] sm:$0xf]
    %v5805 = vld [vmem:[%s5 + $0x390] sm:$0xff]
    %v5806 = vld [vmem:[%s5 + $0x398] sm:$0xf]
    %v5807 = vld [vmem:[%s5 + $0x39c] sm:$0xff]
    %v5808 = vld [vmem:[%s5 + $0x3a4] sm:$0xf]
    %v5809 = vld [vmem:[%s5 + $0x3a8] sm:$0xff]
    %v5810 = vld [vmem:[%s5 + $0x3b0] sm:$0xf]
    %v5811 = vld [vmem:[%s5 + $0x3b4] sm:$0xff]
    %v5812 = vld [vmem:[%s5 + $0x3bc] sm:$0xf]
    %v5813 = vld [vmem:[%s5 + $0x3c0] sm:$0xff]
    %v5814 = vld [vmem:[%s5 + $0x3c8] sm:$0xf]
    %v5815 = vld [vmem:[%s5 + $0x3cc] sm:$0xff]
    %v5816 = vld [vmem:[%s5 + $0x3d4] sm:$0xf]
    %v5817 = vld [vmem:[%s5 + $0x3d8] sm:$0xff]
    %v5818 = vld [vmem:[%s5 + $0x3e0] sm:$0xf]
    %v5819 = vld [vmem:[%s5 + $0x3e4] sm:$0xff]
    %v5820 = vld [vmem:[%s5 + $0x3ec] sm:$0xf]
    %v5821 = vld [vmem:[%s5 + $0x3f0] sm:$0xff]
    %v5822 = vld [vmem:[%s5 + $0x3f8] sm:$0xf]
    %v5823 = vld [vmem:[%s5 + $0x3fc] sm:$0xff]
    %v5824 = vld [vmem:[%s5 + $0x404] sm:$0xf]
    %v5825 = vld [vmem:[%s5 + $0x408] sm:$0xff]
    %v5826 = vld [vmem:[%s5 + $0x410] sm:$0xf]
    %v5827 = vld [vmem:[%s5 + $0x414] sm:$0xff]
    %v5828 = vld [vmem:[%s5 + $0x41c] sm:$0xf]
    %v5829 = vld [vmem:[%s5 + $0x420] sm:$0xff]
    %v5830 = vld [vmem:[%s5 + $0x428] sm:$0xf]
    %v5831 = vld [vmem:[%s5 + $0x42c] sm:$0xff]
    %v5832 = vld [vmem:[%s5 + $0x434] sm:$0xf]
    %v5833 = vld [vmem:[%s5 + $0x438] sm:$0xff]
    %v5834 = vld [vmem:[%s5 + $0x440] sm:$0xf]
    %v5835 = vld [vmem:[%s5 + $0x444] sm:$0xff]
    %v5836 = vld [vmem:[%s5 + $0x44c] sm:$0xf]
    %v5837 = vld [vmem:[%s5 + $0x450] sm:$0xff]
    %v5838 = vld [vmem:[%s5 + $0x458] sm:$0xf]
    %v5839 = vld [vmem:[%s5 + $0x45c] sm:$0xff]
    %v5840 = vld [vmem:[%s5 + $0x464] sm:$0xf]
    %v5841 = vld [vmem:[%s5 + $0x468] sm:$0xff]
    %v5842 = vld [vmem:[%s5 + $0x470] sm:$0xf]
    %v5843 = vld [vmem:[%s5 + $0x474] sm:$0xff]
    %v5844 = vld [vmem:[%s5 + $0x47c] sm:$0xf]
    %v5845 = vld [vmem:[%s5 + $0x480] sm:$0xff]
    %v5846 = vld [vmem:[%s5 + $0x488] sm:$0xf]
    %v5847 = vld [vmem:[%s5 + $0x48c] sm:$0xff]
    %v5848 = vld [vmem:[%s5 + $0x494] sm:$0xf]
    %v5849 = vld [vmem:[%s5 + $0x498] sm:$0xff]
    %v5850 = vld [vmem:[%s5 + $0x4a0] sm:$0xf]
    %v5851 = vld [vmem:[%s5 + $0x4a4] sm:$0xff]
    %v5852 = vld [vmem:[%s5 + $0x4ac] sm:$0xf]
    %v5853 = vld [vmem:[%s5 + $0x4b0] sm:$0xff]
    %v5854 = vld [vmem:[%s5 + $0x4b8] sm:$0xf]
    %v5855 = vld [vmem:[%s5 + $0x4bc] sm:$0xff]
    %v5856 = vld [vmem:[%s5 + $0x4c4] sm:$0xf]
    %v5857 = vld [vmem:[%s5 + $0x4c8] sm:$0xff]
    %v5858 = vld [vmem:[%s5 + $0x4d0] sm:$0xf]
    %v5859 = vld [vmem:[%s5 + $0x4d4] sm:$0xff]
    %v5860 = vld [vmem:[%s5 + $0x4dc] sm:$0xf]
    %v5861 = vld [vmem:[%s5 + $0x4e0] sm:$0xff]
    %v5862 = vld [vmem:[%s5 + $0x4e8] sm:$0xf]
    %v5863 = vld [vmem:[%s5 + $0x4ec] sm:$0xff]
    %v5864 = vld [vmem:[%s5 + $0x4f4] sm:$0xf]
    %v5865 = vld [vmem:[%s5 + $0x4f8] sm:$0xff]
    %v5866 = vld [vmem:[%s5 + $0x500] sm:$0xf]
    %v5867 = vld [vmem:[%s5 + $0x504] sm:$0xff]
    %v5868 = vld [vmem:[%s5 + $0x50c] sm:$0xf]
    %v5869 = vld [vmem:[%s5 + $0x510] sm:$0xff]
    %v5870 = vld [vmem:[%s5 + $0x518] sm:$0xf]
    %v5871 = vld [vmem:[%s5 + $0x51c] sm:$0xff]
    %v5872 = vld [vmem:[%s5 + $0x524] sm:$0xf]
    %v5873 = vld [vmem:[%s5 + $0x528] sm:$0xff]
    %v5874 = vld [vmem:[%s5 + $0x530] sm:$0xf]
    %v5875 = vld [vmem:[%s5 + $0x534] sm:$0xff]
    %v5876 = vld [vmem:[%s5 + $0x53c] sm:$0xf]
    %v5877 = vld [vmem:[%s5 + $0x540] sm:$0xff]
    %v5878 = vld [vmem:[%s5 + $0x548] sm:$0xf]
    %v5879 = vld [vmem:[%s5 + $0x54c] sm:$0xff]
    %v5880 = vld [vmem:[%s5 + $0x554] sm:$0xf]
    %v5881 = vld [vmem:[%s5 + $0x558] sm:$0xff]
    %v5882 = vld [vmem:[%s5 + $0x560] sm:$0xf]
    %v5883 = vld [vmem:[%s5 + $0x564] sm:$0xff]
    %v5884 = vld [vmem:[%s5 + $0x56c] sm:$0xf]
    %v5885 = vld [vmem:[%s5 + $0x570] sm:$0xff]
    %v5886 = vld [vmem:[%s5 + $0x578] sm:$0xf]
    %v5887 = vld [vmem:[%s5 + $0x57c] sm:$0xff]
    %v5888 = vld [vmem:[%s5 + $0x584] sm:$0xf]
    %v5889 = vld [vmem:[%s5 + $0x588] sm:$0xff]
    %v5890 = vld [vmem:[%s5 + $0x590] sm:$0xf]
    %v5891 = vld [vmem:[%s5 + $0x594] sm:$0xff]
    %v5892 = vld [vmem:[%s5 + $0x59c] sm:$0xf]
    %v5893 = vld [vmem:[%s5 + $0x5a0] sm:$0xff]
    %v5894 = vld [vmem:[%s5 + $0x5a8] sm:$0xf]
    %v5895 = vld [vmem:[%s5 + $0x5ac] sm:$0xff]
    %v5896 = vld [vmem:[%s5 + $0x5b4] sm:$0xf]
    %v5897 = vld [vmem:[%s5 + $0x5b8] sm:$0xff]
    %v5898 = vld [vmem:[%s5 + $0x5c0] sm:$0xf]
    %v5899 = vld [vmem:[%s5 + $0x5c4] sm:$0xff]
    %v5900 = vld [vmem:[%s5 + $0x5cc] sm:$0xf]
    %v5901 = vld [vmem:[%s5 + $0x5d0] sm:$0xff]
    %v5902 = vld [vmem:[%s5 + $0x5d8] sm:$0xf]
    %v5903 = vld [vmem:[%s5 + $0x5dc] sm:$0xff]
    %v5904 = vld [vmem:[%s5 + $0x5e4] sm:$0xf]
    %v5905 = vld [vmem:[%s5 + $0x5e8] sm:$0xff]
    %v5906 = vld [vmem:[%s5 + $0x5f0] sm:$0xf]
    %v5907 = vld [vmem:[%s5 + $0x5f4] sm:$0xff]
    %v5908 = vld [vmem:[%s5 + $0x5fc] sm:$0xf]
    %v5909 = vld [vmem:[%s5 + $0x600] sm:$0xff]
    %v5910 = vld [vmem:[%s5 + $0x608] sm:$0xf]
    %v5911 = vld [vmem:[%s5 + $0x60c] sm:$0xff]
    %v5912 = vld [vmem:[%s5 + $0x614] sm:$0xf]
    %v5913 = vld [vmem:[%s5 + $0x618] sm:$0xff]
    %v5914 = vld [vmem:[%s5 + $0x620] sm:$0xf]
    %v5915 = vld [vmem:[%s5 + $0x624] sm:$0xff]
    %v5916 = vld [vmem:[%s5 + $0x62c] sm:$0xf]
    %v5917 = vld [vmem:[%s5 + $0x630] sm:$0xff]
    %v5918 = vld [vmem:[%s5 + $0x638] sm:$0xf]
    %v5919 = vld [vmem:[%s5 + $0x63c] sm:$0xff]
    %v5920 = vld [vmem:[%s5 + $0x644] sm:$0xf]
    %v5921 = vld [vmem:[%s5 + $0x648] sm:$0xff]
    %v5922 = vld [vmem:[%s5 + $0x650] sm:$0xf]
    %v5923 = vld [vmem:[%s5 + $0x654] sm:$0xff]
    %v5924 = vld [vmem:[%s5 + $0x65c] sm:$0xf]
    %v5925 = vld [vmem:[%s5 + $0x660] sm:$0xff]
    %v5926 = vld [vmem:[%s5 + $0x668] sm:$0xf]
    %v5927 = vld [vmem:[%s5 + $0x66c] sm:$0xff]
    %v5928 = vld [vmem:[%s5 + $0x674] sm:$0xf]
    %v5929 = vld [vmem:[%s5 + $0x678] sm:$0xff]
    %v5930 = vld [vmem:[%s5 + $0x680] sm:$0xf]
    %v5931 = vld [vmem:[%s5 + $0x684] sm:$0xff]
    %v5932 = vld [vmem:[%s5 + $0x68c] sm:$0xf]
    %v5933 = vld [vmem:[%s5 + $0x690] sm:$0xff]
    %v5934 = vld [vmem:[%s5 + $0x698] sm:$0xf]
    %v5935 = vld [vmem:[%s5 + $0x69c] sm:$0xff]
    %v5936 = vld [vmem:[%s5 + $0x6a4] sm:$0xf]
    %v5937 = vld [vmem:[%s5 + $0x6a8] sm:$0xff]
    %v5938 = vld [vmem:[%s5 + $0x6b0] sm:$0xf]
    %v5939 = vld [vmem:[%s5 + $0x6b4] sm:$0xff]
    %v5940 = vld [vmem:[%s5 + $0x6bc] sm:$0xf]
    %v5941 = vld [vmem:[%s5 + $0x6c0] sm:$0xff]
    %v5942 = vld [vmem:[%s5 + $0x6c8] sm:$0xf]
    %v5943 = vld [vmem:[%s5 + $0x6cc] sm:$0xff]
    %v5944 = vld [vmem:[%s5 + $0x6d4] sm:$0xf]
    %v5945 = vld [vmem:[%s5 + $0x6d8] sm:$0xff]
    %v5946 = vld [vmem:[%s5 + $0x6e0] sm:$0xf]
    %v5947 = vld [vmem:[%s5 + $0x6e4] sm:$0xff]
    %v5948 = vld [vmem:[%s5 + $0x6ec] sm:$0xf]
    %v5949 = vld [vmem:[%s5 + $0x6f0] sm:$0xff]
    %v5950 = vld [vmem:[%s5 + $0x6f8] sm:$0xf]
    %v5951 = vld [vmem:[%s5 + $0x6fc] sm:$0xff]
    %v5952 = vld [vmem:[%s5 + $0x704] sm:$0xf]
    %v5953 = vld [vmem:[%s5 + $0x708] sm:$0xff]
    %v5954 = vld [vmem:[%s5 + $0x710] sm:$0xf]
    %v5955 = vld [vmem:[%s5 + $0x714] sm:$0xff]
    %v5956 = vld [vmem:[%s5 + $0x71c] sm:$0xf]
    %v5957 = vld [vmem:[%s5 + $0x720] sm:$0xff]
    %v5958 = vld [vmem:[%s5 + $0x728] sm:$0xf]
    %v5959 = vld [vmem:[%s5 + $0x72c] sm:$0xff]
    %v5960 = vld [vmem:[%s5 + $0x734] sm:$0xf]
    %v5961 = vld [vmem:[%s5 + $0x738] sm:$0xff]
    %v5962 = vld [vmem:[%s5 + $0x740] sm:$0xf]
    %v5963 = vld [vmem:[%s5 + $0x744] sm:$0xff]
    %v5964 = vld [vmem:[%s5 + $0x74c] sm:$0xf]
    %v5965 = vld [vmem:[%s5 + $0x750] sm:$0xff]
    %v5966 = vld [vmem:[%s5 + $0x758] sm:$0xf]
    %v5967 = vld [vmem:[%s5 + $0x75c] sm:$0xff]
    %v5968 = vld [vmem:[%s5 + $0x764] sm:$0xf]
    %v5969 = vld [vmem:[%s5 + $0x768] sm:$0xff]
    %v5970 = vld [vmem:[%s5 + $0x770] sm:$0xf]
    %v5971 = vld [vmem:[%s5 + $0x774] sm:$0xff]
    %v5972 = vld [vmem:[%s5 + $0x77c] sm:$0xf]
    %v5973 = vld [vmem:[%s5 + $0x780] sm:$0xff]
    %v5974 = vld [vmem:[%s5 + $0x788] sm:$0xf]
    %v5975 = vld [vmem:[%s5 + $0x78c] sm:$0xff]
    %v5976 = vld [vmem:[%s5 + $0x794] sm:$0xf]
    %v5977 = vld [vmem:[%s5 + $0x798] sm:$0xff]
    %v5978 = vld [vmem:[%s5 + $0x7a0] sm:$0xf]
    %v5979 = vld [vmem:[%s5 + $0x7a4] sm:$0xff]
    %v5980 = vld [vmem:[%s5 + $0x7ac] sm:$0xf]
    %v5981 = vld [vmem:[%s5 + $0x7b0] sm:$0xff]
    %v5982 = vld [vmem:[%s5 + $0x7b8] sm:$0xf]
    %v5983 = vld [vmem:[%s5 + $0x7bc] sm:$0xff]
    %v5984 = vld [vmem:[%s5 + $0x7c4] sm:$0xf]
    %v5985 = vld [vmem:[%s5 + $0x7c8] sm:$0xff]
    %v5986 = vld [vmem:[%s5 + $0x7d0] sm:$0xf]
    %v5987 = vld [vmem:[%s5 + $0x7d4] sm:$0xff]
    %v5988 = vld [vmem:[%s5 + $0x7dc] sm:$0xf]
    %v5989 = vld [vmem:[%s5 + $0x7e0] sm:$0xff]
    %v5990 = vld [vmem:[%s5 + $0x7e8] sm:$0xf]
    %v5991 = vld [vmem:[%s5 + $0x7ec] sm:$0xff]
    %v5992 = vld [vmem:[%s5 + $0x7f4] sm:$0xf]
    %v5993 = vld [vmem:[%s5 + $0x7f8] sm:$0xff]
    %v5994 = vld [vmem:[%s5 + $0x800] sm:$0xf]
    %v5995 = vld [vmem:[%s5 + $0x804] sm:$0xff]
    %v5996 = vld [vmem:[%s5 + $0x80c] sm:$0xf]
    %v5997 = vld [vmem:[%s5 + $0x810] sm:$0xff]
    %v5998 = vld [vmem:[%s5 + $0x818] sm:$0xf]
    %v5999 = vld [vmem:[%s5 + $0x81c] sm:$0xff]
    %v6000 = vld [vmem:[%s5 + $0x824] sm:$0xf]
    %v6001 = vld [vmem:[%s5 + $0x828] sm:$0xff]
    %v6002 = vld [vmem:[%s5 + $0x830] sm:$0xf]
    %v6003 = vld [vmem:[%s5 + $0x834] sm:$0xff]
    %v6004 = vld [vmem:[%s5 + $0x83c] sm:$0xf]
    %v6005 = vld [vmem:[%s5 + $0x840] sm:$0xff]
    %v6006 = vld [vmem:[%s5 + $0x848] sm:$0xf]
    %v6007 = vld [vmem:[%s5 + $0x84c] sm:$0xff]
    %v6008 = vld [vmem:[%s5 + $0x854] sm:$0xf]
    %v6009 = vld [vmem:[%s5 + $0x858] sm:$0xff]
    %v6010 = vld [vmem:[%s5 + $0x860] sm:$0xf]
    %v6011 = vld [vmem:[%s5 + $0x864] sm:$0xff]
    %v6012 = vld [vmem:[%s5 + $0x86c] sm:$0xf]
    %v6013 = vld [vmem:[%s5 + $0x870] sm:$0xff]
    %v6014 = vld [vmem:[%s5 + $0x878] sm:$0xf]
    %v6015 = vld [vmem:[%s5 + $0x87c] sm:$0xff]
    %v6016 = vld [vmem:[%s5 + $0x884] sm:$0xf]
    %v6017 = vld [vmem:[%s5 + $0x888] sm:$0xff]
    %v6018 = vld [vmem:[%s5 + $0x890] sm:$0xf]
    %v6019 = vld [vmem:[%s5 + $0x894] sm:$0xff]
    %v6020 = vld [vmem:[%s5 + $0x89c] sm:$0xf]
    %v6021 = vld [vmem:[%s5 + $0x8a0] sm:$0xff]
    %v6022 = vld [vmem:[%s5 + $0x8a8] sm:$0xf]
    %v6023 = vld [vmem:[%s5 + $0x8ac] sm:$0xff]
    %v6024 = vld [vmem:[%s5 + $0x8b4] sm:$0xf]
    %v6025 = vld [vmem:[%s5 + $0x8b8] sm:$0xff]
    %v6026 = vld [vmem:[%s5 + $0x8c0] sm:$0xf]
    %v6027 = vld [vmem:[%s5 + $0x8c4] sm:$0xff]
    %v6028 = vld [vmem:[%s5 + $0x8cc] sm:$0xf]
    %v6029 = vld [vmem:[%s5 + $0x8d0] sm:$0xff]
    %v6030 = vld [vmem:[%s5 + $0x8d8] sm:$0xf]
    %v6031 = vld [vmem:[%s5 + $0x8dc] sm:$0xff]
    %v6032 = vld [vmem:[%s5 + $0x8e4] sm:$0xf]
    %v6033 = vld [vmem:[%s5 + $0x8e8] sm:$0xff]
    %v6034 = vld [vmem:[%s5 + $0x8f0] sm:$0xf]
    %v6035 = vld [vmem:[%s5 + $0x8f4] sm:$0xff]
    %v6036 = vld [vmem:[%s5 + $0x8fc] sm:$0xf]
    %v6037 = vld [vmem:[%s5 + $0x900] sm:$0xff]
    %v6038 = vld [vmem:[%s5 + $0x908] sm:$0xf]
    %v6039 = vld [vmem:[%s5 + $0x90c] sm:$0xff]
    %v6040 = vld [vmem:[%s5 + $0x914] sm:$0xf]
    %v6041 = vld [vmem:[%s5 + $0x918] sm:$0xff]
    %v6042 = vld [vmem:[%s5 + $0x920] sm:$0xf]
    %v6043 = vld [vmem:[%s5 + $0x924] sm:$0xff]
    %v6044 = vld [vmem:[%s5 + $0x92c] sm:$0xf]
    %v6045 = vld [vmem:[%s5 + $0x930] sm:$0xff]
    %v6046 = vld [vmem:[%s5 + $0x938] sm:$0xf]
    %v6047 = vld [vmem:[%s5 + $0x93c] sm:$0xff]
    %v6048 = vld [vmem:[%s5 + $0x944] sm:$0xf]
    %v6049 = vld [vmem:[%s5 + $0x948] sm:$0xff]
    %v6050 = vld [vmem:[%s5 + $0x950] sm:$0xf]
    %v6051 = vld [vmem:[%s5 + $0x954] sm:$0xff]
    %v6052 = vld [vmem:[%s5 + $0x95c] sm:$0xf]
    %v6053 = vld [vmem:[%s5 + $0x960] sm:$0xff]
    %v6054 = vld [vmem:[%s5 + $0x968] sm:$0xf]
    %v6055 = vld [vmem:[%s5 + $0x96c] sm:$0xff]
    %v6056 = vld [vmem:[%s5 + $0x974] sm:$0xf]
    %v6057 = vld [vmem:[%s5 + $0x978] sm:$0xff]
    %v6058 = vld [vmem:[%s5 + $0x980] sm:$0xf]
    %v6059 = vld [vmem:[%s5 + $0x984] sm:$0xff]
    %v6060 = vld [vmem:[%s5 + $0x98c] sm:$0xf]
    %v6061 = vld [vmem:[%s5 + $0x990] sm:$0xff]
    %v6062 = vld [vmem:[%s5 + $0x998] sm:$0xf]
    %v6063 = vld [vmem:[%s5 + $0x99c] sm:$0xff]
    %v6064 = vld [vmem:[%s5 + $0x9a4] sm:$0xf]
    %v6065 = vld [vmem:[%s5 + $0x9a8] sm:$0xff]
    %v6066 = vld [vmem:[%s5 + $0x9b0] sm:$0xf]
    %v6067 = vld [vmem:[%s5 + $0x9b4] sm:$0xff]
    %v6068 = vld [vmem:[%s5 + $0x9bc] sm:$0xf]
    %v6069 = vld [vmem:[%s5 + $0x9c0] sm:$0xff]
    %v6070 = vld [vmem:[%s5 + $0x9c8] sm:$0xf]
    %v6071 = vld [vmem:[%s5 + $0x9cc] sm:$0xff]
    %v6072 = vld [vmem:[%s5 + $0x9d4] sm:$0xf]
    %v6073 = vld [vmem:[%s5 + $0x9d8] sm:$0xff]
    %v6074 = vld [vmem:[%s5 + $0x9e0] sm:$0xf]
    %v6075 = vld [vmem:[%s5 + $0x9e4] sm:$0xff]
    %v6076 = vld [vmem:[%s5 + $0x9ec] sm:$0xf]
    %v6077 = vld [vmem:[%s5 + $0x9f0] sm:$0xff]
    %v6078 = vld [vmem:[%s5 + $0x9f8] sm:$0xf]
    %v6079 = vld [vmem:[%s5 + $0x9fc] sm:$0xff]
    %v6080 = vld [vmem:[%s5 + $0xa04] sm:$0xf]
    %v6081 = vld [vmem:[%s5 + $0xa08] sm:$0xff]
    %v6082 = vld [vmem:[%s5 + $0xa10] sm:$0xf]
    %v6083 = vld [vmem:[%s5 + $0xa14] sm:$0xff]
    %v6084 = vld [vmem:[%s5 + $0xa1c] sm:$0xf]
    %v6085 = vld [vmem:[%s5 + $0xa20] sm:$0xff]
    %v6086 = vld [vmem:[%s5 + $0xa28] sm:$0xf]
    %v6087 = vld [vmem:[%s5 + $0xa2c] sm:$0xff]
    %v6088 = vld [vmem:[%s5 + $0xa34] sm:$0xf]
    %v6089 = vld [vmem:[%s5 + $0xa38] sm:$0xff]
    %v6090 = vld [vmem:[%s5 + $0xa40] sm:$0xf]
    %v6091 = vld [vmem:[%s5 + $0xa44] sm:$0xff]
    %v6092 = vld [vmem:[%s5 + $0xa4c] sm:$0xf]
    %v6093 = vld [vmem:[%s5 + $0xa50] sm:$0xff]
    %v6094 = vld [vmem:[%s5 + $0xa58] sm:$0xf]
    %v6095 = vld [vmem:[%s5 + $0xa5c] sm:$0xff]
    %v6096 = vld [vmem:[%s5 + $0xa64] sm:$0xf]
    %v6097 = vld [vmem:[%s5 + $0xa68] sm:$0xff]
    %v6098 = vld [vmem:[%s5 + $0xa70] sm:$0xf]
    %v6099 = vld [vmem:[%s5 + $0xa74] sm:$0xff]
    %v6100 = vld [vmem:[%s5 + $0xa7c] sm:$0xf]
    %v6101 = vld [vmem:[%s5 + $0xa80] sm:$0xff]
    %v6102 = vld [vmem:[%s5 + $0xa88] sm:$0xf]
    %v6103 = vld [vmem:[%s5 + $0xa8c] sm:$0xff]
    %v6104 = vld [vmem:[%s5 + $0xa94] sm:$0xf]
    %v6105 = vld [vmem:[%s5 + $0xa98] sm:$0xff]
    %v6106 = vld [vmem:[%s5 + $0xaa0] sm:$0xf]
    %v6107 = vld [vmem:[%s5 + $0xaa4] sm:$0xff]
    %v6108 = vld [vmem:[%s5 + $0xaac] sm:$0xf]
    %v6109 = vld [vmem:[%s5 + $0xab0] sm:$0xff]
    %v6110 = vld [vmem:[%s5 + $0xab8] sm:$0xf]
    %v6111 = vld [vmem:[%s5 + $0xabc] sm:$0xff]
    %v6112 = vld [vmem:[%s5 + $0xac4] sm:$0xf]
    %v6113 = vld [vmem:[%s5 + $0xac8] sm:$0xff]
    %v6114 = vld [vmem:[%s5 + $0xad0] sm:$0xf]
    %v6115 = vld [vmem:[%s5 + $0xad4] sm:$0xff]
    %v6116 = vld [vmem:[%s5 + $0xadc] sm:$0xf]
    %v6117 = vld [vmem:[%s5 + $0xae0] sm:$0xff]
    %v6118 = vld [vmem:[%s5 + $0xae8] sm:$0xf]
    %v6119 = vld [vmem:[%s5 + $0xaec] sm:$0xff]
    %v6120 = vld [vmem:[%s5 + $0xaf4] sm:$0xf]
    %v6121 = vld [vmem:[%s5 + $0xaf8] sm:$0xff]
    %v6122 = vld [vmem:[%s5 + $0xb00] sm:$0xf]
    %v6123 = vld [vmem:[%s5 + $0xb04] sm:$0xff]
    %v6124 = vld [vmem:[%s5 + $0xb0c] sm:$0xf]
    %v6125 = vld [vmem:[%s5 + $0xb10] sm:$0xff]
    %v6126 = vld [vmem:[%s5 + $0xb18] sm:$0xf]
    %v6127 = vld [vmem:[%s5 + $0xb1c] sm:$0xff]
    %v6128 = vld [vmem:[%s5 + $0xb24] sm:$0xf]
    %v6129 = vld [vmem:[%s5 + $0xb28] sm:$0xff]
    %v6130 = vld [vmem:[%s5 + $0xb30] sm:$0xf]
    %v6131 = vld [vmem:[%s5 + $0xb34] sm:$0xff]
    %v6132 = vld [vmem:[%s5 + $0xb3c] sm:$0xf]
    %v6133 = vld [vmem:[%s5 + $0xb40] sm:$0xff]
    %v6134 = vld [vmem:[%s5 + $0xb48] sm:$0xf]
    %v6135 = vld [vmem:[%s5 + $0xb4c] sm:$0xff]
    %v6136 = vld [vmem:[%s5 + $0xb54] sm:$0xf]
    %v6137 = vld [vmem:[%s5 + $0xb58] sm:$0xff]
    %v6138 = vld [vmem:[%s5 + $0xb60] sm:$0xf]
    %v6139 = vld [vmem:[%s5 + $0xb64] sm:$0xff]
    %v6140 = vld [vmem:[%s5 + $0xb6c] sm:$0xf]
    %v6141 = vld [vmem:[%s5 + $0xb70] sm:$0xff]
    %v6142 = vld [vmem:[%s5 + $0xb78] sm:$0xf]
    %v6143 = vld [vmem:[%s5 + $0xb7c] sm:$0xff]
    %v6144 = vld [vmem:[%s5 + $0xb84] sm:$0xf]
    %v6145 = vld [vmem:[%s5 + $0xb88] sm:$0xff]
    %v6146 = vld [vmem:[%s5 + $0xb90] sm:$0xf]
    %v6147 = vld [vmem:[%s5 + $0xb94] sm:$0xff]
    %v6148 = vld [vmem:[%s5 + $0xb9c] sm:$0xf]
    %v6149 = vld [vmem:[%s5 + $0xba0] sm:$0xff]
    %v6150 = vld [vmem:[%s5 + $0xba8] sm:$0xf]
    %v6151 = vld [vmem:[%s5 + $0xbac] sm:$0xff]
    %v6152 = vld [vmem:[%s5 + $0xbb4] sm:$0xf]
    %v6153 = vld [vmem:[%s5 + $0xbb8] sm:$0xff]
    %v6154 = vld [vmem:[%s5 + $0xbc0] sm:$0xf]
    %v6155 = vld [vmem:[%s5 + $0xbc4] sm:$0xff]
    %v6156 = vld [vmem:[%s5 + $0xbcc] sm:$0xf]
    %v6157 = vld [vmem:[%s5 + $0xbd0] sm:$0xff]
    %v6158 = vld [vmem:[%s5 + $0xbd8] sm:$0xf]
    %v6159 = vld [vmem:[%s5 + $0xbdc] sm:$0xff]
    %v6160 = vld [vmem:[%s5 + $0xbe4] sm:$0xf]
    %v6161 = vld [vmem:[%s5 + $0xbe8] sm:$0xff]
    %v6162 = vld [vmem:[%s5 + $0xbf0] sm:$0xf]
    %v6163 = vld [vmem:[%s5 + $0xbf4] sm:$0xff]
    %v6164 = vld [vmem:[%s5 + $0xbfc] sm:$0xf]
    %v6165 = vld [vmem:[%s5 + $0xc00] sm:$0xff]
    %v6166 = vld [vmem:[%s5 + $0xc08] sm:$0xf]
    %v6167 = vld [vmem:[%s5 + $0xc0c] sm:$0xff]
    %v6168 = vld [vmem:[%s5 + $0xc14] sm:$0xf]
    %v6169 = vld [vmem:[%s5 + $0xc18] sm:$0xff]
    %v6170 = vld [vmem:[%s5 + $0xc20] sm:$0xf]
    %v6171 = vld [vmem:[%s5 + $0xc24] sm:$0xff]
    %v6172 = vld [vmem:[%s5 + $0xc2c] sm:$0xf]
    %v6173 = vld [vmem:[%s5 + $0xc30] sm:$0xff]
    %v6174 = vld [vmem:[%s5 + $0xc38] sm:$0xf]
    %v6175 = vld [vmem:[%s5 + $0xc3c] sm:$0xff]
    %v6176 = vld [vmem:[%s5 + $0xc44] sm:$0xf]
    %v6177 = vld [vmem:[%s5 + $0xc48] sm:$0xff]
    %v6178 = vld [vmem:[%s5 + $0xc50] sm:$0xf]
    %v6179 = vld [vmem:[%s5 + $0xc54] sm:$0xff]
    %v6180 = vld [vmem:[%s5 + $0xc5c] sm:$0xf]
    %v6181 = vld [vmem:[%s5 + $0xc60] sm:$0xff]
    %v6182 = vld [vmem:[%s5 + $0xc68] sm:$0xf]
    %v6183 = vld [vmem:[%s5 + $0xc6c] sm:$0xff]
    %v6184 = vld [vmem:[%s5 + $0xc74] sm:$0xf]
    %v6185 = vld [vmem:[%s5 + $0xc78] sm:$0xff]
    %v6186 = vld [vmem:[%s5 + $0xc80] sm:$0xf]
    %v6187 = vld [vmem:[%s5 + $0xc84] sm:$0xff]
    %v6188 = vld [vmem:[%s5 + $0xc8c] sm:$0xf]
    %v6189 = vld [vmem:[%s5 + $0xc90] sm:$0xff]
    %v6190 = vld [vmem:[%s5 + $0xc98] sm:$0xf]
    %v6191 = vld [vmem:[%s5 + $0xc9c] sm:$0xff]
    %v6192 = vld [vmem:[%s5 + $0xca4] sm:$0xf]
    %v6193 = vld [vmem:[%s5 + $0xca8] sm:$0xff]
    %v6194 = vld [vmem:[%s5 + $0xcb0] sm:$0xf]
    %v6195 = vld [vmem:[%s5 + $0xcb4] sm:$0xff]
    %v6196 = vld [vmem:[%s5 + $0xcbc] sm:$0xf]
    %v6197 = vld [vmem:[%s5 + $0xcc0] sm:$0xff]
    %v6198 = vld [vmem:[%s5 + $0xcc8] sm:$0xf]
    %v6199 = vld [vmem:[%s5 + $0xccc] sm:$0xff]
    %v6200 = vld [vmem:[%s5 + $0xcd4] sm:$0xf]
    %v6201 = vld [vmem:[%s5 + $0xcd8] sm:$0xff]
    %v6202 = vld [vmem:[%s5 + $0xce0] sm:$0xf]
    %v6203 = vld [vmem:[%s5 + $0xce4] sm:$0xff]
    %v6204 = vld [vmem:[%s5 + $0xcec] sm:$0xf]
    %v6205 = vld [vmem:[%s5 + $0xcf0] sm:$0xff]
    %v6206 = vld [vmem:[%s5 + $0xcf8] sm:$0xf]
    %v6207 = vld [vmem:[%s5 + $0xcfc] sm:$0xff]
    %v6208 = vld [vmem:[%s5 + $0xd04] sm:$0xf]
    %v6209 = vld [vmem:[%s5 + $0xd08] sm:$0xff]
    %v6210 = vld [vmem:[%s5 + $0xd10] sm:$0xf]
    %v6211 = vld [vmem:[%s5 + $0xd14] sm:$0xff]
    %v6212 = vld [vmem:[%s5 + $0xd1c] sm:$0xf]
    %v6213 = vld [vmem:[%s5 + $0xd20] sm:$0xff]
    %v6214 = vld [vmem:[%s5 + $0xd28] sm:$0xf]
    %v6215 = vld [vmem:[%s5 + $0xd2c] sm:$0xff]
    %v6216 = vld [vmem:[%s5 + $0xd34] sm:$0xf]
    %v6217 = vld [vmem:[%s5 + $0xd38] sm:$0xff]
    %v6218 = vld [vmem:[%s5 + $0xd40] sm:$0xf]
    %v6219 = vld [vmem:[%s5 + $0xd44] sm:$0xff]
    %v6220 = vld [vmem:[%s5 + $0xd4c] sm:$0xf]
    %v6221 = vld [vmem:[%s5 + $0xd50] sm:$0xff]
    %v6222 = vld [vmem:[%s5 + $0xd58] sm:$0xf]
    %v6223 = vld [vmem:[%s5 + $0xd5c] sm:$0xff]
    %v6224 = vld [vmem:[%s5 + $0xd64] sm:$0xf]
    %v6225 = vld [vmem:[%s5 + $0xd68] sm:$0xff]
    %v6226 = vld [vmem:[%s5 + $0xd70] sm:$0xf]
    %v6227 = vld [vmem:[%s5 + $0xd74] sm:$0xff]
    %v6228 = vld [vmem:[%s5 + $0xd7c] sm:$0xf]
    %v6229 = vld [vmem:[%s6] sm:$0x7]
    %v6231 = vperm.slane %v6229, 0
    %v6232 = vperm.slane %v6229, 1
    %v6233 = vperm.slane %v6229, 2
    %v6273 = vunpack.c.l.b16 %v5617
    %v6274 = vunpack.c.h.b16 %v5617
    %v6275 = vunpack.c.l.b16 %v5618
    %v6276 = vunpack.c.h.b16 %v5618
    %v6277 = vunpack.c.l.b16 %v5619
    %v6278 = vunpack.c.h.b16 %v5619
    %v6279 = vunpack.c.l.b16 %v5620
    %v6280 = vunpack.c.h.b16 %v5620
    %v6281 = vunpack.c.l.b16 %v5621
    %v6282 = vunpack.c.h.b16 %v5621
    %v6283 = vunpack.c.l.b16 %v5622
    %v6284 = vunpack.c.h.b16 %v5622
    %v6285 = vunpack.c.l.b16 %v5623
    %v6286 = vunpack.c.h.b16 %v5623
    %v6287 = vunpack.c.l.b16 %v5624
    %v6288 = vunpack.c.h.b16 %v5624
    %v6289 = vunpack.c.l.b16 %v5625
    %v6290 = vunpack.c.h.b16 %v5625
    %v6291 = vunpack.c.l.b16 %v5626
    %v6292 = vunpack.c.h.b16 %v5626
    %v6293 = vunpack.c.l.b16 %v5627
    %v6294 = vunpack.c.h.b16 %v5627
    %v6295 = vunpack.c.l.b16 %v5628
    %v6296 = vunpack.c.h.b16 %v5628
    %v6297 = vunpack.c.l.b16 %v5629
    %v6298 = vunpack.c.h.b16 %v5629
    %v6299 = vunpack.c.l.b16 %v5630
    %v6300 = vunpack.c.h.b16 %v5630
    %v6301 = vunpack.c.l.b16 %v5631
    %v6302 = vunpack.c.h.b16 %v5631
    %v6303 = vunpack.c.l.b16 %v5632
    %v6304 = vunpack.c.h.b16 %v5632
    %v6305 = vunpack.c.l.b16 %v5633
    %v6306 = vunpack.c.h.b16 %v5633
    %v6307 = vunpack.c.l.b16 %v5634
    %v6308 = vunpack.c.h.b16 %v5634
    %v6309 = vunpack.c.l.b16 %v5635
    %v6310 = vunpack.c.h.b16 %v5635
    %v6311 = vunpack.c.l.b16 %v5636
    %v6312 = vunpack.c.h.b16 %v5636
    %v6313 = vunpack.c.l.b16 %v5637
    %v6314 = vunpack.c.h.b16 %v5637
    %v6315 = vunpack.c.l.b16 %v5638
    %v6316 = vunpack.c.h.b16 %v5638
    %v6317 = vunpack.c.l.b16 %v5639
    %v6318 = vunpack.c.h.b16 %v5639
    %v6319 = vunpack.c.l.b16 %v5640
    %v6320 = vunpack.c.h.b16 %v5640
    %v6321 = vunpack.c.l.b16 %v5641
    %v6322 = vunpack.c.h.b16 %v5641
    %v6323 = vunpack.c.l.b16 %v5642
    %v6324 = vunpack.c.h.b16 %v5642
    %v6325 = vunpack.c.l.b16 %v5643
    %v6326 = vunpack.c.h.b16 %v5643
    %v6327 = vunpack.c.l.b16 %v5644
    %v6328 = vunpack.c.h.b16 %v5644
    %v6329 = vunpack.c.l.b16 %v5645
    %v6330 = vunpack.c.h.b16 %v5645
    %v6331 = vunpack.c.l.b16 %v5646
    %v6332 = vunpack.c.h.b16 %v5646
    %v6333 = vunpack.c.l.b16 %v5647
    %v6334 = vunpack.c.h.b16 %v5647
    %v6335 = vunpack.c.l.b16 %v5648
    %v6336 = vunpack.c.h.b16 %v5648
    %v6337 = vunpack.c.l.b16 %v5649
    %v6338 = vunpack.c.h.b16 %v5649
    %v6339 = vunpack.c.l.b16 %v5650
    %v6340 = vunpack.c.h.b16 %v5650
    %v6341 = vunpack.c.l.b16 %v5651
    %v6342 = vunpack.c.h.b16 %v5651
    %v6343 = vunpack.c.l.b16 %v5652
    %v6344 = vunpack.c.h.b16 %v5652
    %v6345 = vpack.c.b16 %v6291, %v6273
    %v6346 = vpack.c.b16 %v6292, %v6274
    %v6347 = vpack.c.b16 %v6293, %v6275
    %v6348 = vpack.c.b16 %v6294, %v6276
    %v6349 = vpack.c.b16 %v6295, %v6277
    %v6350 = vpack.c.b16 %v6296, %v6278
    %v6351 = vpack.c.b16 %v6297, %v6279
    %v6352 = vpack.c.b16 %v6298, %v6280
    %v6353 = vpack.c.b16 %v6299, %v6281
    %v6354 = vpack.c.b16 %v6300, %v6282
    %v6355 = vpack.c.b16 %v6301, %v6283
    %v6356 = vpack.c.b16 %v6302, %v6284
    %v6357 = vpack.c.b16 %v6303, %v6285
    %v6358 = vpack.c.b16 %v6304, %v6286
    %v6359 = vpack.c.b16 %v6305, %v6287
    %v6360 = vpack.c.b16 %v6306, %v6288
    %v6361 = vpack.c.b16 %v6307, %v6289
    %v6362 = vpack.c.b16 %v6308, %v6290
    %v6363 = vpack.c.b16 %v6327, %v6309
    %v6364 = vpack.c.b16 %v6328, %v6310
    %v6365 = vpack.c.b16 %v6329, %v6311
    %v6366 = vpack.c.b16 %v6330, %v6312
    %v6367 = vpack.c.b16 %v6331, %v6313
    %v6368 = vpack.c.b16 %v6332, %v6314
    %v6369 = vpack.c.b16 %v6333, %v6315
    %v6370 = vpack.c.b16 %v6334, %v6316
    %v6371 = vpack.c.b16 %v6335, %v6317
    %v6372 = vpack.c.b16 %v6336, %v6318
    %v6373 = vpack.c.b16 %v6337, %v6319
    %v6374 = vpack.c.b16 %v6338, %v6320
    %v6375 = vpack.c.b16 %v6339, %v6321
    %v6376 = vpack.c.b16 %v6340, %v6322
    %v6377 = vpack.c.b16 %v6341, %v6323
    %v6378 = vpack.c.b16 %v6342, %v6324
    %v6379 = vpack.c.b16 %v6343, %v6325
    %v6380 = vpack.c.b16 %v6344, %v6326
    %v6993 = vunpack.c.l.b16 %v5653
    %v6994 = vunpack.c.h.b16 %v5653
    %v6995 = vunpack.c.l.b16 %v5654
    %v6996 = vunpack.c.l.b16 %v5655
    %v6997 = vunpack.c.h.b16 %v5655
    %v6998 = vunpack.c.l.b16 %v5656
    %v6999 = vunpack.c.l.b16 %v5657
    %v7000 = vunpack.c.h.b16 %v5657
    %v7001 = vunpack.c.l.b16 %v5658
    %v7002 = vunpack.c.l.b16 %v5659
    %v7003 = vunpack.c.h.b16 %v5659
    %v7004 = vunpack.c.l.b16 %v5660
    %v7005 = vunpack.c.l.b16 %v5661
    %v7006 = vunpack.c.h.b16 %v5661
    %v7007 = vunpack.c.l.b16 %v5662
    %v7008 = vunpack.c.l.b16 %v5663
    %v7009 = vunpack.c.h.b16 %v5663
    %v7010 = vunpack.c.l.b16 %v5664
    %v7011 = vunpack.c.l.b16 %v5665
    %v7012 = vunpack.c.h.b16 %v5665
    %v7013 = vunpack.c.l.b16 %v5666
    %v7014 = vunpack.c.l.b16 %v5667
    %v7015 = vunpack.c.h.b16 %v5667
    %v7016 = vunpack.c.l.b16 %v5668
    %v7017 = vunpack.c.l.b16 %v5669
    %v7018 = vunpack.c.h.b16 %v5669
    %v7019 = vunpack.c.l.b16 %v5670
    %v7020 = vunpack.c.l.b16 %v5671
    %v7021 = vunpack.c.h.b16 %v5671
    %v7022 = vunpack.c.l.b16 %v5672
    %v7023 = vunpack.c.l.b16 %v5673
    %v7024 = vunpack.c.h.b16 %v5673
    %v7025 = vunpack.c.l.b16 %v5674
    %v7026 = vunpack.c.l.b16 %v5675
    %v7027 = vunpack.c.h.b16 %v5675
    %v7028 = vunpack.c.l.b16 %v5676
    %v7029 = vunpack.c.l.b16 %v5677
    %v7030 = vunpack.c.h.b16 %v5677
    %v7031 = vunpack.c.l.b16 %v5678
    %v7032 = vunpack.c.l.b16 %v5679
    %v7033 = vunpack.c.h.b16 %v5679
    %v7034 = vunpack.c.l.b16 %v5680
    %v7035 = vunpack.c.l.b16 %v5681
    %v7036 = vunpack.c.h.b16 %v5681
    %v7037 = vunpack.c.l.b16 %v5682
    %v7038 = vunpack.c.l.b16 %v5683
    %v7039 = vunpack.c.h.b16 %v5683
    %v7040 = vunpack.c.l.b16 %v5684
    %v7041 = vunpack.c.l.b16 %v5685
    %v7042 = vunpack.c.h.b16 %v5685
    %v7043 = vunpack.c.l.b16 %v5686
    %v7044 = vunpack.c.l.b16 %v5687
    %v7045 = vunpack.c.h.b16 %v5687
    %v7046 = vunpack.c.l.b16 %v5688
    %v7047 = vunpack.c.l.b16 %v5689
    %v7048 = vunpack.c.h.b16 %v5689
    %v7049 = vunpack.c.l.b16 %v5690
    %v7050 = vunpack.c.l.b16 %v5691
    %v7051 = vunpack.c.h.b16 %v5691
    %v7052 = vunpack.c.l.b16 %v5692
    %v7053 = vunpack.c.l.b16 %v5693
    %v7054 = vunpack.c.h.b16 %v5693
    %v7055 = vunpack.c.l.b16 %v5694
    %v7056 = vunpack.c.l.b16 %v5695
    %v7057 = vunpack.c.h.b16 %v5695
    %v7058 = vunpack.c.l.b16 %v5696
    %v7059 = vunpack.c.l.b16 %v5697
    %v7060 = vunpack.c.h.b16 %v5697
    %v7061 = vunpack.c.l.b16 %v5698
    %v7062 = vunpack.c.l.b16 %v5699
    %v7063 = vunpack.c.h.b16 %v5699
    %v7064 = vunpack.c.l.b16 %v5700
    %v7065 = vunpack.c.l.b16 %v5701
    %v7066 = vunpack.c.h.b16 %v5701
    %v7067 = vunpack.c.l.b16 %v5702
    %v7068 = vunpack.c.l.b16 %v5703
    %v7069 = vunpack.c.h.b16 %v5703
    %v7070 = vunpack.c.l.b16 %v5704
    %v7071 = vunpack.c.l.b16 %v5705
    %v7072 = vunpack.c.h.b16 %v5705
    %v7073 = vunpack.c.l.b16 %v5706
    %v7074 = vunpack.c.l.b16 %v5707
    %v7075 = vunpack.c.h.b16 %v5707
    %v7076 = vunpack.c.l.b16 %v5708
    %v7077 = vunpack.c.l.b16 %v5709
    %v7078 = vunpack.c.h.b16 %v5709
    %v7079 = vunpack.c.l.b16 %v5710
    %v7080 = vunpack.c.l.b16 %v5711
    %v7081 = vunpack.c.h.b16 %v5711
    %v7082 = vunpack.c.l.b16 %v5712
    %v7083 = vunpack.c.l.b16 %v5713
    %v7084 = vunpack.c.h.b16 %v5713
    %v7085 = vunpack.c.l.b16 %v5714
    %v7086 = vunpack.c.l.b16 %v5715
    %v7087 = vunpack.c.h.b16 %v5715
    %v7088 = vunpack.c.l.b16 %v5716
    %v7089 = vunpack.c.l.b16 %v5717
    %v7090 = vunpack.c.h.b16 %v5717
    %v7091 = vunpack.c.l.b16 %v5718
    %v7092 = vunpack.c.l.b16 %v5719
    %v7093 = vunpack.c.h.b16 %v5719
    %v7094 = vunpack.c.l.b16 %v5720
    %v7095 = vunpack.c.l.b16 %v5721
    %v7096 = vunpack.c.h.b16 %v5721
    %v7097 = vunpack.c.l.b16 %v5722
    %v7098 = vunpack.c.l.b16 %v5723
    %v7099 = vunpack.c.h.b16 %v5723
    %v7100 = vunpack.c.l.b16 %v5724
    %v7101 = vunpack.c.l.b16 %v5725
    %v7102 = vunpack.c.h.b16 %v5725
    %v7103 = vunpack.c.l.b16 %v5726
    %v7104 = vunpack.c.l.b16 %v5727
    %v7105 = vunpack.c.h.b16 %v5727
    %v7106 = vunpack.c.l.b16 %v5728
    %v7107 = vunpack.c.l.b16 %v5729
    %v7108 = vunpack.c.h.b16 %v5729
    %v7109 = vunpack.c.l.b16 %v5730
    %v7110 = vunpack.c.l.b16 %v5731
    %v7111 = vunpack.c.h.b16 %v5731
    %v7112 = vunpack.c.l.b16 %v5732
    %v7113 = vunpack.c.l.b16 %v5733
    %v7114 = vunpack.c.h.b16 %v5733
    %v7115 = vunpack.c.l.b16 %v5734
    %v7116 = vunpack.c.l.b16 %v5735
    %v7117 = vunpack.c.h.b16 %v5735
    %v7118 = vunpack.c.l.b16 %v5736
    %v7119 = vunpack.c.l.b16 %v5737
    %v7120 = vunpack.c.h.b16 %v5737
    %v7121 = vunpack.c.l.b16 %v5738
    %v7122 = vunpack.c.l.b16 %v5739
    %v7123 = vunpack.c.h.b16 %v5739
    %v7124 = vunpack.c.l.b16 %v5740
    %v7125 = vunpack.c.l.b16 %v5741
    %v7126 = vunpack.c.h.b16 %v5741
    %v7127 = vunpack.c.l.b16 %v5742
    %v7128 = vunpack.c.l.b16 %v5743
    %v7129 = vunpack.c.h.b16 %v5743
    %v7130 = vunpack.c.l.b16 %v5744
    %v7131 = vunpack.c.l.b16 %v5745
    %v7132 = vunpack.c.h.b16 %v5745
    %v7133 = vunpack.c.l.b16 %v5746
    %v7134 = vunpack.c.l.b16 %v5747
    %v7135 = vunpack.c.h.b16 %v5747
    %v7136 = vunpack.c.l.b16 %v5748
    %v7137 = vunpack.c.l.b16 %v5749
    %v7138 = vunpack.c.h.b16 %v5749
    %v7139 = vunpack.c.l.b16 %v5750
    %v7140 = vunpack.c.l.b16 %v5751
    %v7141 = vunpack.c.h.b16 %v5751
    %v7142 = vunpack.c.l.b16 %v5752
    %v7143 = vunpack.c.l.b16 %v5753
    %v7144 = vunpack.c.h.b16 %v5753
    %v7145 = vunpack.c.l.b16 %v5754
    %v7146 = vunpack.c.l.b16 %v5755
    %v7147 = vunpack.c.h.b16 %v5755
    %v7148 = vunpack.c.l.b16 %v5756
    %v7149 = vunpack.c.l.b16 %v5757
    %v7150 = vunpack.c.h.b16 %v5757
    %v7151 = vunpack.c.l.b16 %v5758
    %v7152 = vunpack.c.l.b16 %v5759
    %v7153 = vunpack.c.h.b16 %v5759
    %v7154 = vunpack.c.l.b16 %v5760
    %v7155 = vunpack.c.l.b16 %v5761
    %v7156 = vunpack.c.h.b16 %v5761
    %v7157 = vunpack.c.l.b16 %v5762
    %v7158 = vunpack.c.l.b16 %v5763
    %v7159 = vunpack.c.h.b16 %v5763
    %v7160 = vunpack.c.l.b16 %v5764
    %v7161 = vunpack.c.l.b16 %v5765
    %v7162 = vunpack.c.h.b16 %v5765
    %v7163 = vunpack.c.l.b16 %v5766
    %v7164 = vunpack.c.l.b16 %v5767
    %v7165 = vunpack.c.h.b16 %v5767
    %v7166 = vunpack.c.l.b16 %v5768
    %v7167 = vunpack.c.l.b16 %v5769
    %v7168 = vunpack.c.h.b16 %v5769
    %v7169 = vunpack.c.l.b16 %v5770
    %v7170 = vunpack.c.l.b16 %v5771
    %v7171 = vunpack.c.h.b16 %v5771
    %v7172 = vunpack.c.l.b16 %v5772
    %v7173 = vunpack.c.l.b16 %v5773
    %v7174 = vunpack.c.h.b16 %v5773
    %v7175 = vunpack.c.l.b16 %v5774
    %v7176 = vunpack.c.l.b16 %v5775
    %v7177 = vunpack.c.h.b16 %v5775
    %v7178 = vunpack.c.l.b16 %v5776
    %v7179 = vunpack.c.l.b16 %v5777
    %v7180 = vunpack.c.h.b16 %v5777
    %v7181 = vunpack.c.l.b16 %v5778
    %v7182 = vunpack.c.l.b16 %v5779
    %v7183 = vunpack.c.h.b16 %v5779
    %v7184 = vunpack.c.l.b16 %v5780
    %v7185 = vunpack.c.l.b16 %v5781
    %v7186 = vunpack.c.h.b16 %v5781
    %v7187 = vunpack.c.l.b16 %v5782
    %v7188 = vunpack.c.l.b16 %v5783
    %v7189 = vunpack.c.h.b16 %v5783
    %v7190 = vunpack.c.l.b16 %v5784
    %v7191 = vunpack.c.l.b16 %v5785
    %v7192 = vunpack.c.h.b16 %v5785
    %v7193 = vunpack.c.l.b16 %v5786
    %v7194 = vunpack.c.l.b16 %v5787
    %v7195 = vunpack.c.h.b16 %v5787
    %v7196 = vunpack.c.l.b16 %v5788
    %v7197 = vunpack.c.l.b16 %v5789
    %v7198 = vunpack.c.h.b16 %v5789
    %v7199 = vunpack.c.l.b16 %v5790
    %v7200 = vunpack.c.l.b16 %v5791
    %v7201 = vunpack.c.h.b16 %v5791
    %v7202 = vunpack.c.l.b16 %v5792
    %v7203 = vunpack.c.l.b16 %v5793
    %v7204 = vunpack.c.h.b16 %v5793
    %v7205 = vunpack.c.l.b16 %v5794
    %v7206 = vunpack.c.l.b16 %v5795
    %v7207 = vunpack.c.h.b16 %v5795
    %v7208 = vunpack.c.l.b16 %v5796
    %v7209 = vunpack.c.l.b16 %v5797
    %v7210 = vunpack.c.h.b16 %v5797
    %v7211 = vunpack.c.l.b16 %v5798
    %v7212 = vunpack.c.l.b16 %v5799
    %v7213 = vunpack.c.h.b16 %v5799
    %v7214 = vunpack.c.l.b16 %v5800
    %v7215 = vunpack.c.l.b16 %v5801
    %v7216 = vunpack.c.h.b16 %v5801
    %v7217 = vunpack.c.l.b16 %v5802
    %v7218 = vunpack.c.l.b16 %v5803
    %v7219 = vunpack.c.h.b16 %v5803
    %v7220 = vunpack.c.l.b16 %v5804
    %v7221 = vunpack.c.l.b16 %v5805
    %v7222 = vunpack.c.h.b16 %v5805
    %v7223 = vunpack.c.l.b16 %v5806
    %v7224 = vunpack.c.l.b16 %v5807
    %v7225 = vunpack.c.h.b16 %v5807
    %v7226 = vunpack.c.l.b16 %v5808
    %v7227 = vunpack.c.l.b16 %v5809
    %v7228 = vunpack.c.h.b16 %v5809
    %v7229 = vunpack.c.l.b16 %v5810
    %v7230 = vunpack.c.l.b16 %v5811
    %v7231 = vunpack.c.h.b16 %v5811
    %v7232 = vunpack.c.l.b16 %v5812
    %v7233 = vunpack.c.l.b16 %v5813
    %v7234 = vunpack.c.h.b16 %v5813
    %v7235 = vunpack.c.l.b16 %v5814
    %v7236 = vunpack.c.l.b16 %v5815
    %v7237 = vunpack.c.h.b16 %v5815
    %v7238 = vunpack.c.l.b16 %v5816
    %v7239 = vunpack.c.l.b16 %v5817
    %v7240 = vunpack.c.h.b16 %v5817
    %v7241 = vunpack.c.l.b16 %v5818
    %v7242 = vunpack.c.l.b16 %v5819
    %v7243 = vunpack.c.h.b16 %v5819
    %v7244 = vunpack.c.l.b16 %v5820
    %v7245 = vunpack.c.l.b16 %v5821
    %v7246 = vunpack.c.h.b16 %v5821
    %v7247 = vunpack.c.l.b16 %v5822
    %v7248 = vunpack.c.l.b16 %v5823
    %v7249 = vunpack.c.h.b16 %v5823
    %v7250 = vunpack.c.l.b16 %v5824
    %v7251 = vunpack.c.l.b16 %v5825
    %v7252 = vunpack.c.h.b16 %v5825
    %v7253 = vunpack.c.l.b16 %v5826
    %v7254 = vunpack.c.l.b16 %v5827
    %v7255 = vunpack.c.h.b16 %v5827
    %v7256 = vunpack.c.l.b16 %v5828
    %v7257 = vunpack.c.l.b16 %v5829
    %v7258 = vunpack.c.h.b16 %v5829
    %v7259 = vunpack.c.l.b16 %v5830
    %v7260 = vunpack.c.l.b16 %v5831
    %v7261 = vunpack.c.h.b16 %v5831
    %v7262 = vunpack.c.l.b16 %v5832
    %v7263 = vunpack.c.l.b16 %v5833
    %v7264 = vunpack.c.h.b16 %v5833
    %v7265 = vunpack.c.l.b16 %v5834
    %v7266 = vunpack.c.l.b16 %v5835
    %v7267 = vunpack.c.h.b16 %v5835
    %v7268 = vunpack.c.l.b16 %v5836
    %v7269 = vunpack.c.l.b16 %v5837
    %v7270 = vunpack.c.h.b16 %v5837
    %v7271 = vunpack.c.l.b16 %v5838
    %v7272 = vunpack.c.l.b16 %v5839
    %v7273 = vunpack.c.h.b16 %v5839
    %v7274 = vunpack.c.l.b16 %v5840
    %v7275 = vunpack.c.l.b16 %v5841
    %v7276 = vunpack.c.h.b16 %v5841
    %v7277 = vunpack.c.l.b16 %v5842
    %v7278 = vunpack.c.l.b16 %v5843
    %v7279 = vunpack.c.h.b16 %v5843
    %v7280 = vunpack.c.l.b16 %v5844
    %v7281 = vunpack.c.l.b16 %v5845
    %v7282 = vunpack.c.h.b16 %v5845
    %v7283 = vunpack.c.l.b16 %v5846
    %v7284 = vunpack.c.l.b16 %v5847
    %v7285 = vunpack.c.h.b16 %v5847
    %v7286 = vunpack.c.l.b16 %v5848
    %v7287 = vunpack.c.l.b16 %v5849
    %v7288 = vunpack.c.h.b16 %v5849
    %v7289 = vunpack.c.l.b16 %v5850
    %v7290 = vunpack.c.l.b16 %v5851
    %v7291 = vunpack.c.h.b16 %v5851
    %v7292 = vunpack.c.l.b16 %v5852
    %v7293 = vunpack.c.l.b16 %v5853
    %v7294 = vunpack.c.h.b16 %v5853
    %v7295 = vunpack.c.l.b16 %v5854
    %v7296 = vunpack.c.l.b16 %v5855
    %v7297 = vunpack.c.h.b16 %v5855
    %v7298 = vunpack.c.l.b16 %v5856
    %v7299 = vunpack.c.l.b16 %v5857
    %v7300 = vunpack.c.h.b16 %v5857
    %v7301 = vunpack.c.l.b16 %v5858
    %v7302 = vunpack.c.l.b16 %v5859
    %v7303 = vunpack.c.h.b16 %v5859
    %v7304 = vunpack.c.l.b16 %v5860
    %v7305 = vunpack.c.l.b16 %v5861
    %v7306 = vunpack.c.h.b16 %v5861
    %v7307 = vunpack.c.l.b16 %v5862
    %v7308 = vunpack.c.l.b16 %v5863
    %v7309 = vunpack.c.h.b16 %v5863
    %v7310 = vunpack.c.l.b16 %v5864
    %v7311 = vunpack.c.l.b16 %v5865
    %v7312 = vunpack.c.h.b16 %v5865
    %v7313 = vunpack.c.l.b16 %v5866
    %v7314 = vunpack.c.l.b16 %v5867
    %v7315 = vunpack.c.h.b16 %v5867
    %v7316 = vunpack.c.l.b16 %v5868
    %v7317 = vunpack.c.l.b16 %v5869
    %v7318 = vunpack.c.h.b16 %v5869
    %v7319 = vunpack.c.l.b16 %v5870
    %v7320 = vunpack.c.l.b16 %v5871
    %v7321 = vunpack.c.h.b16 %v5871
    %v7322 = vunpack.c.l.b16 %v5872
    %v7323 = vunpack.c.l.b16 %v5873
    %v7324 = vunpack.c.h.b16 %v5873
    %v7325 = vunpack.c.l.b16 %v5874
    %v7326 = vunpack.c.l.b16 %v5875
    %v7327 = vunpack.c.h.b16 %v5875
    %v7328 = vunpack.c.l.b16 %v5876
    %v7329 = vunpack.c.l.b16 %v5877
    %v7330 = vunpack.c.h.b16 %v5877
    %v7331 = vunpack.c.l.b16 %v5878
    %v7332 = vunpack.c.l.b16 %v5879
    %v7333 = vunpack.c.h.b16 %v5879
    %v7334 = vunpack.c.l.b16 %v5880
    %v7335 = vunpack.c.l.b16 %v5881
    %v7336 = vunpack.c.h.b16 %v5881
    %v7337 = vunpack.c.l.b16 %v5882
    %v7338 = vunpack.c.l.b16 %v5883
    %v7339 = vunpack.c.h.b16 %v5883
    %v7340 = vunpack.c.l.b16 %v5884
    %v7341 = vunpack.c.l.b16 %v5885
    %v7342 = vunpack.c.h.b16 %v5885
    %v7343 = vunpack.c.l.b16 %v5886
    %v7344 = vunpack.c.l.b16 %v5887
    %v7345 = vunpack.c.h.b16 %v5887
    %v7346 = vunpack.c.l.b16 %v5888
    %v7347 = vunpack.c.l.b16 %v5889
    %v7348 = vunpack.c.h.b16 %v5889
    %v7349 = vunpack.c.l.b16 %v5890
    %v7350 = vunpack.c.l.b16 %v5891
    %v7351 = vunpack.c.h.b16 %v5891
    %v7352 = vunpack.c.l.b16 %v5892
    %v7353 = vunpack.c.l.b16 %v5893
    %v7354 = vunpack.c.h.b16 %v5893
    %v7355 = vunpack.c.l.b16 %v5894
    %v7356 = vunpack.c.l.b16 %v5895
    %v7357 = vunpack.c.h.b16 %v5895
    %v7358 = vunpack.c.l.b16 %v5896
    %v7359 = vunpack.c.l.b16 %v5897
    %v7360 = vunpack.c.h.b16 %v5897
    %v7361 = vunpack.c.l.b16 %v5898
    %v7362 = vunpack.c.l.b16 %v5899
    %v7363 = vunpack.c.h.b16 %v5899
    %v7364 = vunpack.c.l.b16 %v5900
    %v7365 = vunpack.c.l.b16 %v5901
    %v7366 = vunpack.c.h.b16 %v5901
    %v7367 = vunpack.c.l.b16 %v5902
    %v7368 = vunpack.c.l.b16 %v5903
    %v7369 = vunpack.c.h.b16 %v5903
    %v7370 = vunpack.c.l.b16 %v5904
    %v7371 = vunpack.c.l.b16 %v5905
    %v7372 = vunpack.c.h.b16 %v5905
    %v7373 = vunpack.c.l.b16 %v5906
    %v7374 = vunpack.c.l.b16 %v5907
    %v7375 = vunpack.c.h.b16 %v5907
    %v7376 = vunpack.c.l.b16 %v5908
    %v7377 = vunpack.c.l.b16 %v5909
    %v7378 = vunpack.c.h.b16 %v5909
    %v7379 = vunpack.c.l.b16 %v5910
    %v7380 = vunpack.c.l.b16 %v5911
    %v7381 = vunpack.c.h.b16 %v5911
    %v7382 = vunpack.c.l.b16 %v5912
    %v7383 = vunpack.c.l.b16 %v5913
    %v7384 = vunpack.c.h.b16 %v5913
    %v7385 = vunpack.c.l.b16 %v5914
    %v7386 = vunpack.c.l.b16 %v5915
    %v7387 = vunpack.c.h.b16 %v5915
    %v7388 = vunpack.c.l.b16 %v5916
    %v7389 = vunpack.c.l.b16 %v5917
    %v7390 = vunpack.c.h.b16 %v5917
    %v7391 = vunpack.c.l.b16 %v5918
    %v7392 = vunpack.c.l.b16 %v5919
    %v7393 = vunpack.c.h.b16 %v5919
    %v7394 = vunpack.c.l.b16 %v5920
    %v7395 = vunpack.c.l.b16 %v5921
    %v7396 = vunpack.c.h.b16 %v5921
    %v7397 = vunpack.c.l.b16 %v5922
    %v7398 = vunpack.c.l.b16 %v5923
    %v7399 = vunpack.c.h.b16 %v5923
    %v7400 = vunpack.c.l.b16 %v5924
    %v7401 = vunpack.c.l.b16 %v5925
    %v7402 = vunpack.c.h.b16 %v5925
    %v7403 = vunpack.c.l.b16 %v5926
    %v7404 = vunpack.c.l.b16 %v5927
    %v7405 = vunpack.c.h.b16 %v5927
    %v7406 = vunpack.c.l.b16 %v5928
    %v7407 = vunpack.c.l.b16 %v5929
    %v7408 = vunpack.c.h.b16 %v5929
    %v7409 = vunpack.c.l.b16 %v5930
    %v7410 = vunpack.c.l.b16 %v5931
    %v7411 = vunpack.c.h.b16 %v5931
    %v7412 = vunpack.c.l.b16 %v5932
    %v7413 = vunpack.c.l.b16 %v5933
    %v7414 = vunpack.c.h.b16 %v5933
    %v7415 = vunpack.c.l.b16 %v5934
    %v7416 = vunpack.c.l.b16 %v5935
    %v7417 = vunpack.c.h.b16 %v5935
    %v7418 = vunpack.c.l.b16 %v5936
    %v7419 = vunpack.c.l.b16 %v5937
    %v7420 = vunpack.c.h.b16 %v5937
    %v7421 = vunpack.c.l.b16 %v5938
    %v7422 = vunpack.c.l.b16 %v5939
    %v7423 = vunpack.c.h.b16 %v5939
    %v7424 = vunpack.c.l.b16 %v5940
    %v7425 = vunpack.c.l.b16 %v5941
    %v7426 = vunpack.c.h.b16 %v5941
    %v7427 = vunpack.c.l.b16 %v5942
    %v7428 = vunpack.c.l.b16 %v5943
    %v7429 = vunpack.c.h.b16 %v5943
    %v7430 = vunpack.c.l.b16 %v5944
    %v7431 = vunpack.c.l.b16 %v5945
    %v7432 = vunpack.c.h.b16 %v5945
    %v7433 = vunpack.c.l.b16 %v5946
    %v7434 = vunpack.c.l.b16 %v5947
    %v7435 = vunpack.c.h.b16 %v5947
    %v7436 = vunpack.c.l.b16 %v5948
    %v7437 = vunpack.c.l.b16 %v5949
    %v7438 = vunpack.c.h.b16 %v5949
    %v7439 = vunpack.c.l.b16 %v5950
    %v7440 = vunpack.c.l.b16 %v5951
    %v7441 = vunpack.c.h.b16 %v5951
    %v7442 = vunpack.c.l.b16 %v5952
    %v7443 = vunpack.c.l.b16 %v5953
    %v7444 = vunpack.c.h.b16 %v5953
    %v7445 = vunpack.c.l.b16 %v5954
    %v7446 = vunpack.c.l.b16 %v5955
    %v7447 = vunpack.c.h.b16 %v5955
    %v7448 = vunpack.c.l.b16 %v5956
    %v7449 = vunpack.c.l.b16 %v5957
    %v7450 = vunpack.c.h.b16 %v5957
    %v7451 = vunpack.c.l.b16 %v5958
    %v7452 = vunpack.c.l.b16 %v5959
    %v7453 = vunpack.c.h.b16 %v5959
    %v7454 = vunpack.c.l.b16 %v5960
    %v7455 = vunpack.c.l.b16 %v5961
    %v7456 = vunpack.c.h.b16 %v5961
    %v7457 = vunpack.c.l.b16 %v5962
    %v7458 = vunpack.c.l.b16 %v5963
    %v7459 = vunpack.c.h.b16 %v5963
    %v7460 = vunpack.c.l.b16 %v5964
    %v7461 = vunpack.c.l.b16 %v5965
    %v7462 = vunpack.c.h.b16 %v5965
    %v7463 = vunpack.c.l.b16 %v5966
    %v7464 = vunpack.c.l.b16 %v5967
    %v7465 = vunpack.c.h.b16 %v5967
    %v7466 = vunpack.c.l.b16 %v5968
    %v7467 = vunpack.c.l.b16 %v5969
    %v7468 = vunpack.c.h.b16 %v5969
    %v7469 = vunpack.c.l.b16 %v5970
    %v7470 = vunpack.c.l.b16 %v5971
    %v7471 = vunpack.c.h.b16 %v5971
    %v7472 = vunpack.c.l.b16 %v5972
    %v7473 = vunpack.c.l.b16 %v5973
    %v7474 = vunpack.c.h.b16 %v5973
    %v7475 = vunpack.c.l.b16 %v5974
    %v7476 = vunpack.c.l.b16 %v5975
    %v7477 = vunpack.c.h.b16 %v5975
    %v7478 = vunpack.c.l.b16 %v5976
    %v7479 = vunpack.c.l.b16 %v5977
    %v7480 = vunpack.c.h.b16 %v5977
    %v7481 = vunpack.c.l.b16 %v5978
    %v7482 = vunpack.c.l.b16 %v5979
    %v7483 = vunpack.c.h.b16 %v5979
    %v7484 = vunpack.c.l.b16 %v5980
    %v7485 = vunpack.c.l.b16 %v5981
    %v7486 = vunpack.c.h.b16 %v5981
    %v7487 = vunpack.c.l.b16 %v5982
    %v7488 = vunpack.c.l.b16 %v5983
    %v7489 = vunpack.c.h.b16 %v5983
    %v7490 = vunpack.c.l.b16 %v5984
    %v7491 = vunpack.c.l.b16 %v5985
    %v7492 = vunpack.c.h.b16 %v5985
    %v7493 = vunpack.c.l.b16 %v5986
    %v7494 = vunpack.c.l.b16 %v5987
    %v7495 = vunpack.c.h.b16 %v5987
    %v7496 = vunpack.c.l.b16 %v5988
    %v7497 = vunpack.c.l.b16 %v5989
    %v7498 = vunpack.c.h.b16 %v5989
    %v7499 = vunpack.c.l.b16 %v5990
    %v7500 = vunpack.c.l.b16 %v5991
    %v7501 = vunpack.c.h.b16 %v5991
    %v7502 = vunpack.c.l.b16 %v5992
    %v7503 = vunpack.c.l.b16 %v5993
    %v7504 = vunpack.c.h.b16 %v5993
    %v7505 = vunpack.c.l.b16 %v5994
    %v7506 = vunpack.c.l.b16 %v5995
    %v7507 = vunpack.c.h.b16 %v5995
    %v7508 = vunpack.c.l.b16 %v5996
    %v7509 = vunpack.c.l.b16 %v5997
    %v7510 = vunpack.c.h.b16 %v5997
    %v7511 = vunpack.c.l.b16 %v5998
    %v7512 = vunpack.c.l.b16 %v5999
    %v7513 = vunpack.c.h.b16 %v5999
    %v7514 = vunpack.c.l.b16 %v6000
    %v7515 = vunpack.c.l.b16 %v6001
    %v7516 = vunpack.c.h.b16 %v6001
    %v7517 = vunpack.c.l.b16 %v6002
    %v7518 = vunpack.c.l.b16 %v6003
    %v7519 = vunpack.c.h.b16 %v6003
    %v7520 = vunpack.c.l.b16 %v6004
    %v7521 = vunpack.c.l.b16 %v6005
    %v7522 = vunpack.c.h.b16 %v6005
    %v7523 = vunpack.c.l.b16 %v6006
    %v7524 = vunpack.c.l.b16 %v6007
    %v7525 = vunpack.c.h.b16 %v6007
    %v7526 = vunpack.c.l.b16 %v6008
    %v7527 = vunpack.c.l.b16 %v6009
    %v7528 = vunpack.c.h.b16 %v6009
    %v7529 = vunpack.c.l.b16 %v6010
    %v7530 = vunpack.c.l.b16 %v6011
    %v7531 = vunpack.c.h.b16 %v6011
    %v7532 = vunpack.c.l.b16 %v6012
    %v7533 = vunpack.c.l.b16 %v6013
    %v7534 = vunpack.c.h.b16 %v6013
    %v7535 = vunpack.c.l.b16 %v6014
    %v7536 = vunpack.c.l.b16 %v6015
    %v7537 = vunpack.c.h.b16 %v6015
    %v7538 = vunpack.c.l.b16 %v6016
    %v7539 = vunpack.c.l.b16 %v6017
    %v7540 = vunpack.c.h.b16 %v6017
    %v7541 = vunpack.c.l.b16 %v6018
    %v7542 = vunpack.c.l.b16 %v6019
    %v7543 = vunpack.c.h.b16 %v6019
    %v7544 = vunpack.c.l.b16 %v6020
    %v7545 = vunpack.c.l.b16 %v6021
    %v7546 = vunpack.c.h.b16 %v6021
    %v7547 = vunpack.c.l.b16 %v6022
    %v7548 = vunpack.c.l.b16 %v6023
    %v7549 = vunpack.c.h.b16 %v6023
    %v7550 = vunpack.c.l.b16 %v6024
    %v7551 = vunpack.c.l.b16 %v6025
    %v7552 = vunpack.c.h.b16 %v6025
    %v7553 = vunpack.c.l.b16 %v6026
    %v7554 = vunpack.c.l.b16 %v6027
    %v7555 = vunpack.c.h.b16 %v6027
    %v7556 = vunpack.c.l.b16 %v6028
    %v7557 = vunpack.c.l.b16 %v6029
    %v7558 = vunpack.c.h.b16 %v6029
    %v7559 = vunpack.c.l.b16 %v6030
    %v7560 = vunpack.c.l.b16 %v6031
    %v7561 = vunpack.c.h.b16 %v6031
    %v7562 = vunpack.c.l.b16 %v6032
    %v7563 = vunpack.c.l.b16 %v6033
    %v7564 = vunpack.c.h.b16 %v6033
    %v7565 = vunpack.c.l.b16 %v6034
    %v7566 = vunpack.c.l.b16 %v6035
    %v7567 = vunpack.c.h.b16 %v6035
    %v7568 = vunpack.c.l.b16 %v6036
    %v7569 = vunpack.c.l.b16 %v6037
    %v7570 = vunpack.c.h.b16 %v6037
    %v7571 = vunpack.c.l.b16 %v6038
    %v7572 = vunpack.c.l.b16 %v6039
    %v7573 = vunpack.c.h.b16 %v6039
    %v7574 = vunpack.c.l.b16 %v6040
    %v7575 = vunpack.c.l.b16 %v6041
    %v7576 = vunpack.c.h.b16 %v6041
    %v7577 = vunpack.c.l.b16 %v6042
    %v7578 = vunpack.c.l.b16 %v6043
    %v7579 = vunpack.c.h.b16 %v6043
    %v7580 = vunpack.c.l.b16 %v6044
    %v7581 = vunpack.c.l.b16 %v6045
    %v7582 = vunpack.c.h.b16 %v6045
    %v7583 = vunpack.c.l.b16 %v6046
    %v7584 = vunpack.c.l.b16 %v6047
    %v7585 = vunpack.c.h.b16 %v6047
    %v7586 = vunpack.c.l.b16 %v6048
    %v7587 = vunpack.c.l.b16 %v6049
    %v7588 = vunpack.c.h.b16 %v6049
    %v7589 = vunpack.c.l.b16 %v6050
    %v7590 = vunpack.c.l.b16 %v6051
    %v7591 = vunpack.c.h.b16 %v6051
    %v7592 = vunpack.c.l.b16 %v6052
    %v7593 = vunpack.c.l.b16 %v6053
    %v7594 = vunpack.c.h.b16 %v6053
    %v7595 = vunpack.c.l.b16 %v6054
    %v7596 = vunpack.c.l.b16 %v6055
    %v7597 = vunpack.c.h.b16 %v6055
    %v7598 = vunpack.c.l.b16 %v6056
    %v7599 = vunpack.c.l.b16 %v6057
    %v7600 = vunpack.c.h.b16 %v6057
    %v7601 = vunpack.c.l.b16 %v6058
    %v7602 = vunpack.c.l.b16 %v6059
    %v7603 = vunpack.c.h.b16 %v6059
    %v7604 = vunpack.c.l.b16 %v6060
    %v7605 = vunpack.c.l.b16 %v6061
    %v7606 = vunpack.c.h.b16 %v6061
    %v7607 = vunpack.c.l.b16 %v6062
    %v7608 = vunpack.c.l.b16 %v6063
    %v7609 = vunpack.c.h.b16 %v6063
    %v7610 = vunpack.c.l.b16 %v6064
    %v7611 = vunpack.c.l.b16 %v6065
    %v7612 = vunpack.c.h.b16 %v6065
    %v7613 = vunpack.c.l.b16 %v6066
    %v7614 = vunpack.c.l.b16 %v6067
    %v7615 = vunpack.c.h.b16 %v6067
    %v7616 = vunpack.c.l.b16 %v6068
    %v7617 = vunpack.c.l.b16 %v6069
    %v7618 = vunpack.c.h.b16 %v6069
    %v7619 = vunpack.c.l.b16 %v6070
    %v7620 = vunpack.c.l.b16 %v6071
    %v7621 = vunpack.c.h.b16 %v6071
    %v7622 = vunpack.c.l.b16 %v6072
    %v7623 = vunpack.c.l.b16 %v6073
    %v7624 = vunpack.c.h.b16 %v6073
    %v7625 = vunpack.c.l.b16 %v6074
    %v7626 = vunpack.c.l.b16 %v6075
    %v7627 = vunpack.c.h.b16 %v6075
    %v7628 = vunpack.c.l.b16 %v6076
    %v7629 = vunpack.c.l.b16 %v6077
    %v7630 = vunpack.c.h.b16 %v6077
    %v7631 = vunpack.c.l.b16 %v6078
    %v7632 = vunpack.c.l.b16 %v6079
    %v7633 = vunpack.c.h.b16 %v6079
    %v7634 = vunpack.c.l.b16 %v6080
    %v7635 = vunpack.c.l.b16 %v6081
    %v7636 = vunpack.c.h.b16 %v6081
    %v7637 = vunpack.c.l.b16 %v6082
    %v7638 = vunpack.c.l.b16 %v6083
    %v7639 = vunpack.c.h.b16 %v6083
    %v7640 = vunpack.c.l.b16 %v6084
    %v7641 = vunpack.c.l.b16 %v6085
    %v7642 = vunpack.c.h.b16 %v6085
    %v7643 = vunpack.c.l.b16 %v6086
    %v7644 = vunpack.c.l.b16 %v6087
    %v7645 = vunpack.c.h.b16 %v6087
    %v7646 = vunpack.c.l.b16 %v6088
    %v7647 = vunpack.c.l.b16 %v6089
    %v7648 = vunpack.c.h.b16 %v6089
    %v7649 = vunpack.c.l.b16 %v6090
    %v7650 = vunpack.c.l.b16 %v6091
    %v7651 = vunpack.c.h.b16 %v6091
    %v7652 = vunpack.c.l.b16 %v6092
    %v7653 = vunpack.c.l.b16 %v6093
    %v7654 = vunpack.c.h.b16 %v6093
    %v7655 = vunpack.c.l.b16 %v6094
    %v7656 = vunpack.c.l.b16 %v6095
    %v7657 = vunpack.c.h.b16 %v6095
    %v7658 = vunpack.c.l.b16 %v6096
    %v7659 = vunpack.c.l.b16 %v6097
    %v7660 = vunpack.c.h.b16 %v6097
    %v7661 = vunpack.c.l.b16 %v6098
    %v7662 = vunpack.c.l.b16 %v6099
    %v7663 = vunpack.c.h.b16 %v6099
    %v7664 = vunpack.c.l.b16 %v6100
    %v7665 = vunpack.c.l.b16 %v6101
    %v7666 = vunpack.c.h.b16 %v6101
    %v7667 = vunpack.c.l.b16 %v6102
    %v7668 = vunpack.c.l.b16 %v6103
    %v7669 = vunpack.c.h.b16 %v6103
    %v7670 = vunpack.c.l.b16 %v6104
    %v7671 = vunpack.c.l.b16 %v6105
    %v7672 = vunpack.c.h.b16 %v6105
    %v7673 = vunpack.c.l.b16 %v6106
    %v7674 = vunpack.c.l.b16 %v6107
    %v7675 = vunpack.c.h.b16 %v6107
    %v7676 = vunpack.c.l.b16 %v6108
    %v7677 = vunpack.c.l.b16 %v6109
    %v7678 = vunpack.c.h.b16 %v6109
    %v7679 = vunpack.c.l.b16 %v6110
    %v7680 = vunpack.c.l.b16 %v6111
    %v7681 = vunpack.c.h.b16 %v6111
    %v7682 = vunpack.c.l.b16 %v6112
    %v7683 = vunpack.c.l.b16 %v6113
    %v7684 = vunpack.c.h.b16 %v6113
    %v7685 = vunpack.c.l.b16 %v6114
    %v7686 = vunpack.c.l.b16 %v6115
    %v7687 = vunpack.c.h.b16 %v6115
    %v7688 = vunpack.c.l.b16 %v6116
    %v7689 = vunpack.c.l.b16 %v6117
    %v7690 = vunpack.c.h.b16 %v6117
    %v7691 = vunpack.c.l.b16 %v6118
    %v7692 = vunpack.c.l.b16 %v6119
    %v7693 = vunpack.c.h.b16 %v6119
    %v7694 = vunpack.c.l.b16 %v6120
    %v7695 = vunpack.c.l.b16 %v6121
    %v7696 = vunpack.c.h.b16 %v6121
    %v7697 = vunpack.c.l.b16 %v6122
    %v7698 = vunpack.c.l.b16 %v6123
    %v7699 = vunpack.c.h.b16 %v6123
    %v7700 = vunpack.c.l.b16 %v6124
    %v7701 = vunpack.c.l.b16 %v6125
    %v7702 = vunpack.c.h.b16 %v6125
    %v7703 = vunpack.c.l.b16 %v6126
    %v7704 = vunpack.c.l.b16 %v6127
    %v7705 = vunpack.c.h.b16 %v6127
    %v7706 = vunpack.c.l.b16 %v6128
    %v7707 = vunpack.c.l.b16 %v6129
    %v7708 = vunpack.c.h.b16 %v6129
    %v7709 = vunpack.c.l.b16 %v6130
    %v7710 = vunpack.c.l.b16 %v6131
    %v7711 = vunpack.c.h.b16 %v6131
    %v7712 = vunpack.c.l.b16 %v6132
    %v7713 = vunpack.c.l.b16 %v6133
    %v7714 = vunpack.c.h.b16 %v6133
    %v7715 = vunpack.c.l.b16 %v6134
    %v7716 = vunpack.c.l.b16 %v6135
    %v7717 = vunpack.c.h.b16 %v6135
    %v7718 = vunpack.c.l.b16 %v6136
    %v7719 = vunpack.c.l.b16 %v6137
    %v7720 = vunpack.c.h.b16 %v6137
    %v7721 = vunpack.c.l.b16 %v6138
    %v7722 = vunpack.c.l.b16 %v6139
    %v7723 = vunpack.c.h.b16 %v6139
    %v7724 = vunpack.c.l.b16 %v6140
    %v7725 = vunpack.c.l.b16 %v6141
    %v7726 = vunpack.c.h.b16 %v6141
    %v7727 = vunpack.c.l.b16 %v6142
    %v7728 = vunpack.c.l.b16 %v6143
    %v7729 = vunpack.c.h.b16 %v6143
    %v7730 = vunpack.c.l.b16 %v6144
    %v7731 = vunpack.c.l.b16 %v6145
    %v7732 = vunpack.c.h.b16 %v6145
    %v7733 = vunpack.c.l.b16 %v6146
    %v7734 = vunpack.c.l.b16 %v6147
    %v7735 = vunpack.c.h.b16 %v6147
    %v7736 = vunpack.c.l.b16 %v6148
    %v7737 = vunpack.c.l.b16 %v6149
    %v7738 = vunpack.c.h.b16 %v6149
    %v7739 = vunpack.c.l.b16 %v6150
    %v7740 = vunpack.c.l.b16 %v6151
    %v7741 = vunpack.c.h.b16 %v6151
    %v7742 = vunpack.c.l.b16 %v6152
    %v7743 = vunpack.c.l.b16 %v6153
    %v7744 = vunpack.c.h.b16 %v6153
    %v7745 = vunpack.c.l.b16 %v6154
    %v7746 = vunpack.c.l.b16 %v6155
    %v7747 = vunpack.c.h.b16 %v6155
    %v7748 = vunpack.c.l.b16 %v6156
    %v7749 = vunpack.c.l.b16 %v6157
    %v7750 = vunpack.c.h.b16 %v6157
    %v7751 = vunpack.c.l.b16 %v6158
    %v7752 = vunpack.c.l.b16 %v6159
    %v7753 = vunpack.c.h.b16 %v6159
    %v7754 = vunpack.c.l.b16 %v6160
    %v7755 = vunpack.c.l.b16 %v6161
    %v7756 = vunpack.c.h.b16 %v6161
    %v7757 = vunpack.c.l.b16 %v6162
    %v7758 = vunpack.c.l.b16 %v6163
    %v7759 = vunpack.c.h.b16 %v6163
    %v7760 = vunpack.c.l.b16 %v6164
    %v7761 = vunpack.c.l.b16 %v6165
    %v7762 = vunpack.c.h.b16 %v6165
    %v7763 = vunpack.c.l.b16 %v6166
    %v7764 = vunpack.c.l.b16 %v6167
    %v7765 = vunpack.c.h.b16 %v6167
    %v7766 = vunpack.c.l.b16 %v6168
    %v7767 = vunpack.c.l.b16 %v6169
    %v7768 = vunpack.c.h.b16 %v6169
    %v7769 = vunpack.c.l.b16 %v6170
    %v7770 = vunpack.c.l.b16 %v6171
    %v7771 = vunpack.c.h.b16 %v6171
    %v7772 = vunpack.c.l.b16 %v6172
    %v7773 = vunpack.c.l.b16 %v6173
    %v7774 = vunpack.c.h.b16 %v6173
    %v7775 = vunpack.c.l.b16 %v6174
    %v7776 = vunpack.c.l.b16 %v6175
    %v7777 = vunpack.c.h.b16 %v6175
    %v7778 = vunpack.c.l.b16 %v6176
    %v7779 = vunpack.c.l.b16 %v6177
    %v7780 = vunpack.c.h.b16 %v6177
    %v7781 = vunpack.c.l.b16 %v6178
    %v7782 = vunpack.c.l.b16 %v6179
    %v7783 = vunpack.c.h.b16 %v6179
    %v7784 = vunpack.c.l.b16 %v6180
    %v7785 = vunpack.c.l.b16 %v6181
    %v7786 = vunpack.c.h.b16 %v6181
    %v7787 = vunpack.c.l.b16 %v6182
    %v7788 = vunpack.c.l.b16 %v6183
    %v7789 = vunpack.c.h.b16 %v6183
    %v7790 = vunpack.c.l.b16 %v6184
    %v7791 = vunpack.c.l.b16 %v6185
    %v7792 = vunpack.c.h.b16 %v6185
    %v7793 = vunpack.c.l.b16 %v6186
    %v7794 = vunpack.c.l.b16 %v6187
    %v7795 = vunpack.c.h.b16 %v6187
    %v7796 = vunpack.c.l.b16 %v6188
    %v7797 = vunpack.c.l.b16 %v6189
    %v7798 = vunpack.c.h.b16 %v6189
    %v7799 = vunpack.c.l.b16 %v6190
    %v7800 = vunpack.c.l.b16 %v6191
    %v7801 = vunpack.c.h.b16 %v6191
    %v7802 = vunpack.c.l.b16 %v6192
    %v7803 = vunpack.c.l.b16 %v6193
    %v7804 = vunpack.c.h.b16 %v6193
    %v7805 = vunpack.c.l.b16 %v6194
    %v7806 = vunpack.c.l.b16 %v6195
    %v7807 = vunpack.c.h.b16 %v6195
    %v7808 = vunpack.c.l.b16 %v6196
    %v7809 = vunpack.c.l.b16 %v6197
    %v7810 = vunpack.c.h.b16 %v6197
    %v7811 = vunpack.c.l.b16 %v6198
    %v7812 = vunpack.c.l.b16 %v6199
    %v7813 = vunpack.c.h.b16 %v6199
    %v7814 = vunpack.c.l.b16 %v6200
    %v7815 = vunpack.c.l.b16 %v6201
    %v7816 = vunpack.c.h.b16 %v6201
    %v7817 = vunpack.c.l.b16 %v6202
    %v7818 = vunpack.c.l.b16 %v6203
    %v7819 = vunpack.c.h.b16 %v6203
    %v7820 = vunpack.c.l.b16 %v6204
    %v7821 = vunpack.c.l.b16 %v6205
    %v7822 = vunpack.c.h.b16 %v6205
    %v7823 = vunpack.c.l.b16 %v6206
    %v7824 = vunpack.c.l.b16 %v6207
    %v7825 = vunpack.c.h.b16 %v6207
    %v7826 = vunpack.c.l.b16 %v6208
    %v7827 = vunpack.c.l.b16 %v6209
    %v7828 = vunpack.c.h.b16 %v6209
    %v7829 = vunpack.c.l.b16 %v6210
    %v7830 = vunpack.c.l.b16 %v6211
    %v7831 = vunpack.c.h.b16 %v6211
    %v7832 = vunpack.c.l.b16 %v6212
    %v7833 = vunpack.c.l.b16 %v6213
    %v7834 = vunpack.c.h.b16 %v6213
    %v7835 = vunpack.c.l.b16 %v6214
    %v7836 = vunpack.c.l.b16 %v6215
    %v7837 = vunpack.c.h.b16 %v6215
    %v7838 = vunpack.c.l.b16 %v6216
    %v7839 = vunpack.c.l.b16 %v6217
    %v7840 = vunpack.c.h.b16 %v6217
    %v7841 = vunpack.c.l.b16 %v6218
    %v7842 = vunpack.c.l.b16 %v6219
    %v7843 = vunpack.c.h.b16 %v6219
    %v7844 = vunpack.c.l.b16 %v6220
    %v7845 = vunpack.c.l.b16 %v6221
    %v7846 = vunpack.c.h.b16 %v6221
    %v7847 = vunpack.c.l.b16 %v6222
    %v7848 = vunpack.c.l.b16 %v6223
    %v7849 = vunpack.c.h.b16 %v6223
    %v7850 = vunpack.c.l.b16 %v6224
    %v7851 = vunpack.c.l.b16 %v6225
    %v7852 = vunpack.c.h.b16 %v6225
    %v7853 = vunpack.c.l.b16 %v6226
    %v7854 = vunpack.c.l.b16 %v6227
    %v7855 = vunpack.c.h.b16 %v6227
    %v7856 = vunpack.c.l.b16 %v6228
    %v7857 = vpack.c.b16 %v6996, %v6993
    %v7858 = vpack.c.b16 %v6997, %v6994
    %v7859 = vpack.c.b16 %v6998, %v6995
    %v7860 = vpack.c.b16 %v7002, %v6999
    %v7861 = vpack.c.b16 %v7003, %v7000
    %v7862 = vpack.c.b16 %v7004, %v7001
    %v7863 = vpack.c.b16 %v7008, %v7005
    %v7864 = vpack.c.b16 %v7009, %v7006
    %v7865 = vpack.c.b16 %v7010, %v7007
    %v7866 = vpack.c.b16 %v7014, %v7011
    %v7867 = vpack.c.b16 %v7015, %v7012
    %v7868 = vpack.c.b16 %v7016, %v7013
    %v7869 = vpack.c.b16 %v7020, %v7017
    %v7870 = vpack.c.b16 %v7021, %v7018
    %v7871 = vpack.c.b16 %v7022, %v7019
    %v7872 = vpack.c.b16 %v7026, %v7023
    %v7873 = vpack.c.b16 %v7027, %v7024
    %v7874 = vpack.c.b16 %v7028, %v7025
    %v7875 = vpack.c.b16 %v7032, %v7029
    %v7876 = vpack.c.b16 %v7033, %v7030
    %v7877 = vpack.c.b16 %v7034, %v7031
    %v7878 = vpack.c.b16 %v7038, %v7035
    %v7879 = vpack.c.b16 %v7039, %v7036
    %v7880 = vpack.c.b16 %v7040, %v7037
    %v7881 = vpack.c.b16 %v7044, %v7041
    %v7882 = vpack.c.b16 %v7045, %v7042
    %v7883 = vpack.c.b16 %v7046, %v7043
    %v7884 = vpack.c.b16 %v7050, %v7047
    %v7885 = vpack.c.b16 %v7051, %v7048
    %v7886 = vpack.c.b16 %v7052, %v7049
    %v7887 = vpack.c.b16 %v7056, %v7053
    %v7888 = vpack.c.b16 %v7057, %v7054
    %v7889 = vpack.c.b16 %v7058, %v7055
    %v7890 = vpack.c.b16 %v7062, %v7059
    %v7891 = vpack.c.b16 %v7063, %v7060
    %v7892 = vpack.c.b16 %v7064, %v7061
    %v7893 = vpack.c.b16 %v7068, %v7065
    %v7894 = vpack.c.b16 %v7069, %v7066
    %v7895 = vpack.c.b16 %v7070, %v7067
    %v7896 = vpack.c.b16 %v7074, %v7071
    %v7897 = vpack.c.b16 %v7075, %v7072
    %v7898 = vpack.c.b16 %v7076, %v7073
    %v7899 = vpack.c.b16 %v7080, %v7077
    %v7900 = vpack.c.b16 %v7081, %v7078
    %v7901 = vpack.c.b16 %v7082, %v7079
    %v7902 = vpack.c.b16 %v7086, %v7083
    %v7903 = vpack.c.b16 %v7087, %v7084
    %v7904 = vpack.c.b16 %v7088, %v7085
    %v7905 = vpack.c.b16 %v7092, %v7089
    %v7906 = vpack.c.b16 %v7093, %v7090
    %v7907 = vpack.c.b16 %v7094, %v7091
    %v7908 = vpack.c.b16 %v7098, %v7095
    %v7909 = vpack.c.b16 %v7099, %v7096
    %v7910 = vpack.c.b16 %v7100, %v7097
    %v7911 = vpack.c.b16 %v7104, %v7101
    %v7912 = vpack.c.b16 %v7105, %v7102
    %v7913 = vpack.c.b16 %v7106, %v7103
    %v7914 = vpack.c.b16 %v7110, %v7107
    %v7915 = vpack.c.b16 %v7111, %v7108
    %v7916 = vpack.c.b16 %v7112, %v7109
    %v7917 = vpack.c.b16 %v7116, %v7113
    %v7918 = vpack.c.b16 %v7117, %v7114
    %v7919 = vpack.c.b16 %v7118, %v7115
    %v7920 = vpack.c.b16 %v7122, %v7119
    %v7921 = vpack.c.b16 %v7123, %v7120
    %v7922 = vpack.c.b16 %v7124, %v7121
    %v7923 = vpack.c.b16 %v7128, %v7125
    %v7924 = vpack.c.b16 %v7129, %v7126
    %v7925 = vpack.c.b16 %v7130, %v7127
    %v7926 = vpack.c.b16 %v7134, %v7131
    %v7927 = vpack.c.b16 %v7135, %v7132
    %v7928 = vpack.c.b16 %v7136, %v7133
    %v7929 = vpack.c.b16 %v7140, %v7137
    %v7930 = vpack.c.b16 %v7141, %v7138
    %v7931 = vpack.c.b16 %v7142, %v7139
    %v7932 = vpack.c.b16 %v7146, %v7143
    %v7933 = vpack.c.b16 %v7147, %v7144
    %v7934 = vpack.c.b16 %v7148, %v7145
    %v7935 = vpack.c.b16 %v7152, %v7149
    %v7936 = vpack.c.b16 %v7153, %v7150
    %v7937 = vpack.c.b16 %v7154, %v7151
    %v7938 = vpack.c.b16 %v7158, %v7155
    %v7939 = vpack.c.b16 %v7159, %v7156
    %v7940 = vpack.c.b16 %v7160, %v7157
    %v7941 = vpack.c.b16 %v7164, %v7161
    %v7942 = vpack.c.b16 %v7165, %v7162
    %v7943 = vpack.c.b16 %v7166, %v7163
    %v7944 = vpack.c.b16 %v7170, %v7167
    %v7945 = vpack.c.b16 %v7171, %v7168
    %v7946 = vpack.c.b16 %v7172, %v7169
    %v7947 = vpack.c.b16 %v7176, %v7173
    %v7948 = vpack.c.b16 %v7177, %v7174
    %v7949 = vpack.c.b16 %v7178, %v7175
    %v7950 = vpack.c.b16 %v7182, %v7179
    %v7951 = vpack.c.b16 %v7183, %v7180
    %v7952 = vpack.c.b16 %v7184, %v7181
    %v7953 = vpack.c.b16 %v7188, %v7185
    %v7954 = vpack.c.b16 %v7189, %v7186
    %v7955 = vpack.c.b16 %v7190, %v7187
    %v7956 = vpack.c.b16 %v7194, %v7191
    %v7957 = vpack.c.b16 %v7195, %v7192
    %v7958 = vpack.c.b16 %v7196, %v7193
    %v7959 = vpack.c.b16 %v7200, %v7197
    %v7960 = vpack.c.b16 %v7201, %v7198
    %v7961 = vpack.c.b16 %v7202, %v7199
    %v7962 = vpack.c.b16 %v7206, %v7203
    %v7963 = vpack.c.b16 %v7207, %v7204
    %v7964 = vpack.c.b16 %v7208, %v7205
    %v7965 = vpack.c.b16 %v7212, %v7209
    %v7966 = vpack.c.b16 %v7213, %v7210
    %v7967 = vpack.c.b16 %v7214, %v7211
    %v7968 = vpack.c.b16 %v7218, %v7215
    %v7969 = vpack.c.b16 %v7219, %v7216
    %v7970 = vpack.c.b16 %v7220, %v7217
    %v7971 = vpack.c.b16 %v7224, %v7221
    %v7972 = vpack.c.b16 %v7225, %v7222
    %v7973 = vpack.c.b16 %v7226, %v7223
    %v7974 = vpack.c.b16 %v7230, %v7227
    %v7975 = vpack.c.b16 %v7231, %v7228
    %v7976 = vpack.c.b16 %v7232, %v7229
    %v7977 = vpack.c.b16 %v7236, %v7233
    %v7978 = vpack.c.b16 %v7237, %v7234
    %v7979 = vpack.c.b16 %v7238, %v7235
    %v7980 = vpack.c.b16 %v7242, %v7239
    %v7981 = vpack.c.b16 %v7243, %v7240
    %v7982 = vpack.c.b16 %v7244, %v7241
    %v7983 = vpack.c.b16 %v7248, %v7245
    %v7984 = vpack.c.b16 %v7249, %v7246
    %v7985 = vpack.c.b16 %v7250, %v7247
    %v7986 = vpack.c.b16 %v7254, %v7251
    %v7987 = vpack.c.b16 %v7255, %v7252
    %v7988 = vpack.c.b16 %v7256, %v7253
    %v7989 = vpack.c.b16 %v7260, %v7257
    %v7990 = vpack.c.b16 %v7261, %v7258
    %v7991 = vpack.c.b16 %v7262, %v7259
    %v7992 = vpack.c.b16 %v7266, %v7263
    %v7993 = vpack.c.b16 %v7267, %v7264
    %v7994 = vpack.c.b16 %v7268, %v7265
    %v7995 = vpack.c.b16 %v7272, %v7269
    %v7996 = vpack.c.b16 %v7273, %v7270
    %v7997 = vpack.c.b16 %v7274, %v7271
    %v7998 = vpack.c.b16 %v7278, %v7275
    %v7999 = vpack.c.b16 %v7279, %v7276
    %v8000 = vpack.c.b16 %v7280, %v7277
    %v8001 = vpack.c.b16 %v7284, %v7281
    %v8002 = vpack.c.b16 %v7285, %v7282
    %v8003 = vpack.c.b16 %v7286, %v7283
    %v8004 = vpack.c.b16 %v7290, %v7287
    %v8005 = vpack.c.b16 %v7291, %v7288
    %v8006 = vpack.c.b16 %v7292, %v7289
    %v8007 = vpack.c.b16 %v7296, %v7293
    %v8008 = vpack.c.b16 %v7297, %v7294
    %v8009 = vpack.c.b16 %v7298, %v7295
    %v8010 = vpack.c.b16 %v7302, %v7299
    %v8011 = vpack.c.b16 %v7303, %v7300
    %v8012 = vpack.c.b16 %v7304, %v7301
    %v8013 = vpack.c.b16 %v7308, %v7305
    %v8014 = vpack.c.b16 %v7309, %v7306
    %v8015 = vpack.c.b16 %v7310, %v7307
    %v8016 = vpack.c.b16 %v7314, %v7311
    %v8017 = vpack.c.b16 %v7315, %v7312
    %v8018 = vpack.c.b16 %v7316, %v7313
    %v8019 = vpack.c.b16 %v7320, %v7317
    %v8020 = vpack.c.b16 %v7321, %v7318
    %v8021 = vpack.c.b16 %v7322, %v7319
    %v8022 = vpack.c.b16 %v7326, %v7323
    %v8023 = vpack.c.b16 %v7327, %v7324
    %v8024 = vpack.c.b16 %v7328, %v7325
    %v8025 = vpack.c.b16 %v7332, %v7329
    %v8026 = vpack.c.b16 %v7333, %v7330
    %v8027 = vpack.c.b16 %v7334, %v7331
    %v8028 = vpack.c.b16 %v7338, %v7335
    %v8029 = vpack.c.b16 %v7339, %v7336
    %v8030 = vpack.c.b16 %v7340, %v7337
    %v8031 = vpack.c.b16 %v7344, %v7341
    %v8032 = vpack.c.b16 %v7345, %v7342
    %v8033 = vpack.c.b16 %v7346, %v7343
    %v8034 = vpack.c.b16 %v7350, %v7347
    %v8035 = vpack.c.b16 %v7351, %v7348
    %v8036 = vpack.c.b16 %v7352, %v7349
    %v8037 = vpack.c.b16 %v7356, %v7353
    %v8038 = vpack.c.b16 %v7357, %v7354
    %v8039 = vpack.c.b16 %v7358, %v7355
    %v8040 = vpack.c.b16 %v7362, %v7359
    %v8041 = vpack.c.b16 %v7363, %v7360
    %v8042 = vpack.c.b16 %v7364, %v7361
    %v8043 = vpack.c.b16 %v7368, %v7365
    %v8044 = vpack.c.b16 %v7369, %v7366
    %v8045 = vpack.c.b16 %v7370, %v7367
    %v8046 = vpack.c.b16 %v7374, %v7371
    %v8047 = vpack.c.b16 %v7375, %v7372
    %v8048 = vpack.c.b16 %v7376, %v7373
    %v8049 = vpack.c.b16 %v7380, %v7377
    %v8050 = vpack.c.b16 %v7381, %v7378
    %v8051 = vpack.c.b16 %v7382, %v7379
    %v8052 = vpack.c.b16 %v7386, %v7383
    %v8053 = vpack.c.b16 %v7387, %v7384
    %v8054 = vpack.c.b16 %v7388, %v7385
    %v8055 = vpack.c.b16 %v7392, %v7389
    %v8056 = vpack.c.b16 %v7393, %v7390
    %v8057 = vpack.c.b16 %v7394, %v7391
    %v8058 = vpack.c.b16 %v7398, %v7395
    %v8059 = vpack.c.b16 %v7399, %v7396
    %v8060 = vpack.c.b16 %v7400, %v7397
    %v8061 = vpack.c.b16 %v7404, %v7401
    %v8062 = vpack.c.b16 %v7405, %v7402
    %v8063 = vpack.c.b16 %v7406, %v7403
    %v8064 = vpack.c.b16 %v7410, %v7407
    %v8065 = vpack.c.b16 %v7411, %v7408
    %v8066 = vpack.c.b16 %v7412, %v7409
    %v8067 = vpack.c.b16 %v7416, %v7413
    %v8068 = vpack.c.b16 %v7417, %v7414
    %v8069 = vpack.c.b16 %v7418, %v7415
    %v8070 = vpack.c.b16 %v7422, %v7419
    %v8071 = vpack.c.b16 %v7423, %v7420
    %v8072 = vpack.c.b16 %v7424, %v7421
    %v8073 = vpack.c.b16 %v7428, %v7425
    %v8074 = vpack.c.b16 %v7429, %v7426
    %v8075 = vpack.c.b16 %v7430, %v7427
    %v8076 = vpack.c.b16 %v7434, %v7431
    %v8077 = vpack.c.b16 %v7435, %v7432
    %v8078 = vpack.c.b16 %v7436, %v7433
    %v8079 = vpack.c.b16 %v7440, %v7437
    %v8080 = vpack.c.b16 %v7441, %v7438
    %v8081 = vpack.c.b16 %v7442, %v7439
    %v8082 = vpack.c.b16 %v7446, %v7443
    %v8083 = vpack.c.b16 %v7447, %v7444
    %v8084 = vpack.c.b16 %v7448, %v7445
    %v8085 = vpack.c.b16 %v7452, %v7449
    %v8086 = vpack.c.b16 %v7453, %v7450
    %v8087 = vpack.c.b16 %v7454, %v7451
    %v8088 = vpack.c.b16 %v7458, %v7455
    %v8089 = vpack.c.b16 %v7459, %v7456
    %v8090 = vpack.c.b16 %v7460, %v7457
    %v8091 = vpack.c.b16 %v7464, %v7461
    %v8092 = vpack.c.b16 %v7465, %v7462
    %v8093 = vpack.c.b16 %v7466, %v7463
    %v8094 = vpack.c.b16 %v7470, %v7467
    %v8095 = vpack.c.b16 %v7471, %v7468
    %v8096 = vpack.c.b16 %v7472, %v7469
    %v8097 = vpack.c.b16 %v7476, %v7473
    %v8098 = vpack.c.b16 %v7477, %v7474
    %v8099 = vpack.c.b16 %v7478, %v7475
    %v8100 = vpack.c.b16 %v7482, %v7479
    %v8101 = vpack.c.b16 %v7483, %v7480
    %v8102 = vpack.c.b16 %v7484, %v7481
    %v8103 = vpack.c.b16 %v7488, %v7485
    %v8104 = vpack.c.b16 %v7489, %v7486
    %v8105 = vpack.c.b16 %v7490, %v7487
    %v8106 = vpack.c.b16 %v7494, %v7491
    %v8107 = vpack.c.b16 %v7495, %v7492
    %v8108 = vpack.c.b16 %v7496, %v7493
    %v8109 = vpack.c.b16 %v7500, %v7497
    %v8110 = vpack.c.b16 %v7501, %v7498
    %v8111 = vpack.c.b16 %v7502, %v7499
    %v8112 = vpack.c.b16 %v7506, %v7503
    %v8113 = vpack.c.b16 %v7507, %v7504
    %v8114 = vpack.c.b16 %v7508, %v7505
    %v8115 = vpack.c.b16 %v7512, %v7509
    %v8116 = vpack.c.b16 %v7513, %v7510
    %v8117 = vpack.c.b16 %v7514, %v7511
    %v8118 = vpack.c.b16 %v7518, %v7515
    %v8119 = vpack.c.b16 %v7519, %v7516
    %v8120 = vpack.c.b16 %v7520, %v7517
    %v8121 = vpack.c.b16 %v7524, %v7521
    %v8122 = vpack.c.b16 %v7525, %v7522
    %v8123 = vpack.c.b16 %v7526, %v7523
    %v8124 = vpack.c.b16 %v7530, %v7527
    %v8125 = vpack.c.b16 %v7531, %v7528
    %v8126 = vpack.c.b16 %v7532, %v7529
    %v8127 = vpack.c.b16 %v7536, %v7533
    %v8128 = vpack.c.b16 %v7537, %v7534
    %v8129 = vpack.c.b16 %v7538, %v7535
    %v8130 = vpack.c.b16 %v7542, %v7539
    %v8131 = vpack.c.b16 %v7543, %v7540
    %v8132 = vpack.c.b16 %v7544, %v7541
    %v8133 = vpack.c.b16 %v7548, %v7545
    %v8134 = vpack.c.b16 %v7549, %v7546
    %v8135 = vpack.c.b16 %v7550, %v7547
    %v8136 = vpack.c.b16 %v7554, %v7551
    %v8137 = vpack.c.b16 %v7555, %v7552
    %v8138 = vpack.c.b16 %v7556, %v7553
    %v8139 = vpack.c.b16 %v7560, %v7557
    %v8140 = vpack.c.b16 %v7561, %v7558
    %v8141 = vpack.c.b16 %v7562, %v7559
    %v8142 = vpack.c.b16 %v7566, %v7563
    %v8143 = vpack.c.b16 %v7567, %v7564
    %v8144 = vpack.c.b16 %v7568, %v7565
    %v8145 = vpack.c.b16 %v7572, %v7569
    %v8146 = vpack.c.b16 %v7573, %v7570
    %v8147 = vpack.c.b16 %v7574, %v7571
    %v8148 = vpack.c.b16 %v7578, %v7575
    %v8149 = vpack.c.b16 %v7579, %v7576
    %v8150 = vpack.c.b16 %v7580, %v7577
    %v8151 = vpack.c.b16 %v7584, %v7581
    %v8152 = vpack.c.b16 %v7585, %v7582
    %v8153 = vpack.c.b16 %v7586, %v7583
    %v8154 = vpack.c.b16 %v7590, %v7587
    %v8155 = vpack.c.b16 %v7591, %v7588
    %v8156 = vpack.c.b16 %v7592, %v7589
    %v8157 = vpack.c.b16 %v7596, %v7593
    %v8158 = vpack.c.b16 %v7597, %v7594
    %v8159 = vpack.c.b16 %v7598, %v7595
    %v8160 = vpack.c.b16 %v7602, %v7599
    %v8161 = vpack.c.b16 %v7603, %v7600
    %v8162 = vpack.c.b16 %v7604, %v7601
    %v8163 = vpack.c.b16 %v7608, %v7605
    %v8164 = vpack.c.b16 %v7609, %v7606
    %v8165 = vpack.c.b16 %v7610, %v7607
    %v8166 = vpack.c.b16 %v7614, %v7611
    %v8167 = vpack.c.b16 %v7615, %v7612
    %v8168 = vpack.c.b16 %v7616, %v7613
    %v8169 = vpack.c.b16 %v7620, %v7617
    %v8170 = vpack.c.b16 %v7621, %v7618
    %v8171 = vpack.c.b16 %v7622, %v7619
    %v8172 = vpack.c.b16 %v7626, %v7623
    %v8173 = vpack.c.b16 %v7627, %v7624
    %v8174 = vpack.c.b16 %v7628, %v7625
    %v8175 = vpack.c.b16 %v7632, %v7629
    %v8176 = vpack.c.b16 %v7633, %v7630
    %v8177 = vpack.c.b16 %v7634, %v7631
    %v8178 = vpack.c.b16 %v7638, %v7635
    %v8179 = vpack.c.b16 %v7639, %v7636
    %v8180 = vpack.c.b16 %v7640, %v7637
    %v8181 = vpack.c.b16 %v7644, %v7641
    %v8182 = vpack.c.b16 %v7645, %v7642
    %v8183 = vpack.c.b16 %v7646, %v7643
    %v8184 = vpack.c.b16 %v7650, %v7647
    %v8185 = vpack.c.b16 %v7651, %v7648
    %v8186 = vpack.c.b16 %v7652, %v7649
    %v8187 = vpack.c.b16 %v7656, %v7653
    %v8188 = vpack.c.b16 %v7657, %v7654
    %v8189 = vpack.c.b16 %v7658, %v7655
    %v8190 = vpack.c.b16 %v7662, %v7659
    %v8191 = vpack.c.b16 %v7663, %v7660
    %v8192 = vpack.c.b16 %v7664, %v7661
    %v8193 = vpack.c.b16 %v7668, %v7665
    %v8194 = vpack.c.b16 %v7669, %v7666
    %v8195 = vpack.c.b16 %v7670, %v7667
    %v8196 = vpack.c.b16 %v7674, %v7671
    %v8197 = vpack.c.b16 %v7675, %v7672
    %v8198 = vpack.c.b16 %v7676, %v7673
    %v8199 = vpack.c.b16 %v7680, %v7677
    %v8200 = vpack.c.b16 %v7681, %v7678
    %v8201 = vpack.c.b16 %v7682, %v7679
    %v8202 = vpack.c.b16 %v7686, %v7683
    %v8203 = vpack.c.b16 %v7687, %v7684
    %v8204 = vpack.c.b16 %v7688, %v7685
    %v8205 = vpack.c.b16 %v7692, %v7689
    %v8206 = vpack.c.b16 %v7693, %v7690
    %v8207 = vpack.c.b16 %v7694, %v7691
    %v8208 = vpack.c.b16 %v7698, %v7695
    %v8209 = vpack.c.b16 %v7699, %v7696
    %v8210 = vpack.c.b16 %v7700, %v7697
    %v8211 = vpack.c.b16 %v7704, %v7701
    %v8212 = vpack.c.b16 %v7705, %v7702
    %v8213 = vpack.c.b16 %v7706, %v7703
    %v8214 = vpack.c.b16 %v7710, %v7707
    %v8215 = vpack.c.b16 %v7711, %v7708
    %v8216 = vpack.c.b16 %v7712, %v7709
    %v8217 = vpack.c.b16 %v7716, %v7713
    %v8218 = vpack.c.b16 %v7717, %v7714
    %v8219 = vpack.c.b16 %v7718, %v7715
    %v8220 = vpack.c.b16 %v7722, %v7719
    %v8221 = vpack.c.b16 %v7723, %v7720
    %v8222 = vpack.c.b16 %v7724, %v7721
    %v8223 = vpack.c.b16 %v7728, %v7725
    %v8224 = vpack.c.b16 %v7729, %v7726
    %v8225 = vpack.c.b16 %v7730, %v7727
    %v8226 = vpack.c.b16 %v7734, %v7731
    %v8227 = vpack.c.b16 %v7735, %v7732
    %v8228 = vpack.c.b16 %v7736, %v7733
    %v8229 = vpack.c.b16 %v7740, %v7737
    %v8230 = vpack.c.b16 %v7741, %v7738
    %v8231 = vpack.c.b16 %v7742, %v7739
    %v8232 = vpack.c.b16 %v7746, %v7743
    %v8233 = vpack.c.b16 %v7747, %v7744
    %v8234 = vpack.c.b16 %v7748, %v7745
    %v8235 = vpack.c.b16 %v7752, %v7749
    %v8236 = vpack.c.b16 %v7753, %v7750
    %v8237 = vpack.c.b16 %v7754, %v7751
    %v8238 = vpack.c.b16 %v7758, %v7755
    %v8239 = vpack.c.b16 %v7759, %v7756
    %v8240 = vpack.c.b16 %v7760, %v7757
    %v8241 = vpack.c.b16 %v7764, %v7761
    %v8242 = vpack.c.b16 %v7765, %v7762
    %v8243 = vpack.c.b16 %v7766, %v7763
    %v8244 = vpack.c.b16 %v7770, %v7767
    %v8245 = vpack.c.b16 %v7771, %v7768
    %v8246 = vpack.c.b16 %v7772, %v7769
    %v8247 = vpack.c.b16 %v7776, %v7773
    %v8248 = vpack.c.b16 %v7777, %v7774
    %v8249 = vpack.c.b16 %v7778, %v7775
    %v8250 = vpack.c.b16 %v7782, %v7779
    %v8251 = vpack.c.b16 %v7783, %v7780
    %v8252 = vpack.c.b16 %v7784, %v7781
    %v8253 = vpack.c.b16 %v7788, %v7785
    %v8254 = vpack.c.b16 %v7789, %v7786
    %v8255 = vpack.c.b16 %v7790, %v7787
    %v8256 = vpack.c.b16 %v7794, %v7791
    %v8257 = vpack.c.b16 %v7795, %v7792
    %v8258 = vpack.c.b16 %v7796, %v7793
    %v8259 = vpack.c.b16 %v7800, %v7797
    %v8260 = vpack.c.b16 %v7801, %v7798
    %v8261 = vpack.c.b16 %v7802, %v7799
    %v8262 = vpack.c.b16 %v7806, %v7803
    %v8263 = vpack.c.b16 %v7807, %v7804
    %v8264 = vpack.c.b16 %v7808, %v7805
    %v8265 = vpack.c.b16 %v7812, %v7809
    %v8266 = vpack.c.b16 %v7813, %v7810
    %v8267 = vpack.c.b16 %v7814, %v7811
    %v8268 = vpack.c.b16 %v7818, %v7815
    %v8269 = vpack.c.b16 %v7819, %v7816
    %v8270 = vpack.c.b16 %v7820, %v7817
    %v8271 = vpack.c.b16 %v7824, %v7821
    %v8272 = vpack.c.b16 %v7825, %v7822
    %v8273 = vpack.c.b16 %v7826, %v7823
    %v8274 = vpack.c.b16 %v7830, %v7827
    %v8275 = vpack.c.b16 %v7831, %v7828
    %v8276 = vpack.c.b16 %v7832, %v7829
    %v8277 = vpack.c.b16 %v7836, %v7833
    %v8278 = vpack.c.b16 %v7837, %v7834
    %v8279 = vpack.c.b16 %v7838, %v7835
    %v8280 = vpack.c.b16 %v7842, %v7839
    %v8281 = vpack.c.b16 %v7843, %v7840
    %v8282 = vpack.c.b16 %v7844, %v7841
    %v8283 = vpack.c.b16 %v7848, %v7845
    %v8284 = vpack.c.b16 %v7849, %v7846
    %v8285 = vpack.c.b16 %v7850, %v7847
    %v8286 = vpack.c.b16 %v7854, %v7851
    %v8287 = vpack.c.b16 %v7855, %v7852
    %v8288 = vpack.c.b16 %v7856, %v7853
    %8721 = vmatpush.bf16.msra.mxu0 %v7878
    %8722 = vmatpush.bf16.msra.mxu0 %v7875
    %8723 = vmatpush.bf16.msra.mxu0 %v7872
    %8724 = vmatpush.bf16.msra.mxu0 %v7869
    %8725 = vmatpush.bf16.msra.mxu0 %v7866
    %8726 = vmatpush.bf16.msra.mxu0 %v7863
    %8727 = vmatpush.bf16.msra.mxu0 %v7860
    %8728 = vmatpush.bf16.msra.mxu0 %v7857
    %8729 = vmatmul.bf16.gmra.mxu0 %v6345
    %v8730 = vpop.f32.mrf.mxu0
    %v8731 = vadd.f32 %v6231, %v8730
    %v8732 = vpop.f32.mrf.mxu0
    %v8733 = vadd.f32 %v6231, %v8732
    %8734 = vmatmul.bf16.gmra.mxu0 %v6363
    %v8735 = vpop.f32.mrf.mxu0
    %v8736 = vadd.f32 %v6231, %v8735
    %v8737 = vpop.f32.mrf.mxu0
    %v8738 = vadd.f32 %v6231, %v8737
    %8739 = vdwg.mxu0
    %8740 = vmatpush.bf16.msra.mxu0 %v7902
    %8741 = vmatpush.bf16.msra.mxu0 %v7899
    %8742 = vmatpush.bf16.msra.mxu0 %v7896
    %8743 = vmatpush.bf16.msra.mxu0 %v7893
    %8744 = vmatpush.bf16.msra.mxu0 %v7890
    %8745 = vmatpush.bf16.msra.mxu0 %v7887
    %8746 = vmatpush.bf16.msra.mxu0 %v7884
    %8747 = vmatpush.bf16.msra.mxu0 %v7881
    %8748 = vmatmul.bf16.gmra.mxu0 %v6346
    %v8749 = vpop.f32.mrf.mxu0
    %v8750 = vadd.f32 %v8731, %v8749
    %v8751 = vpop.f32.mrf.mxu0
    %v8752 = vadd.f32 %v8733, %v8751
    %8753 = vmatmul.bf16.gmra.mxu0 %v6364
    %v8754 = vpop.f32.mrf.mxu0
    %v8755 = vadd.f32 %v8736, %v8754
    %v8756 = vpop.f32.mrf.mxu0
    %v8757 = vadd.f32 %v8738, %v8756
    %8758 = vdwg.mxu0
    %8759 = vmatpush.bf16.msra.mxu0 %v7926
    %8760 = vmatpush.bf16.msra.mxu0 %v7923
    %8761 = vmatpush.bf16.msra.mxu0 %v7920
    %8762 = vmatpush.bf16.msra.mxu0 %v7917
    %8763 = vmatpush.bf16.msra.mxu0 %v7914
    %8764 = vmatpush.bf16.msra.mxu0 %v7911
    %8765 = vmatpush.bf16.msra.mxu0 %v7908
    %8766 = vmatpush.bf16.msra.mxu0 %v7905
    %8767 = vmatmul.bf16.gmra.mxu0 %v6347
    %v8768 = vpop.f32.mrf.mxu0
    %v8769 = vadd.f32 %v8750, %v8768
    %v8770 = vpop.f32.mrf.mxu0
    %v8771 = vadd.f32 %v8752, %v8770
    %8772 = vmatmul.bf16.gmra.mxu0 %v6365
    %v8773 = vpop.f32.mrf.mxu0
    %v8774 = vadd.f32 %v8755, %v8773
    %v8775 = vpop.f32.mrf.mxu0
    %v8776 = vadd.f32 %v8757, %v8775
    %8777 = vdwg.mxu0
    %8778 = vmatpush.bf16.msra.mxu0 %v7950
    %8779 = vmatpush.bf16.msra.mxu0 %v7947
    %8780 = vmatpush.bf16.msra.mxu0 %v7944
    %8781 = vmatpush.bf16.msra.mxu0 %v7941
    %8782 = vmatpush.bf16.msra.mxu0 %v7938
    %8783 = vmatpush.bf16.msra.mxu0 %v7935
    %8784 = vmatpush.bf16.msra.mxu0 %v7932
    %8785 = vmatpush.bf16.msra.mxu0 %v7929
    %8786 = vmatmul.bf16.gmra.mxu0 %v6348
    %v8787 = vpop.f32.mrf.mxu0
    %v8788 = vadd.f32 %v8769, %v8787
    %v8789 = vpop.f32.mrf.mxu0
    %v8790 = vadd.f32 %v8771, %v8789
    %8791 = vmatmul.bf16.gmra.mxu0 %v6366
    %v8792 = vpop.f32.mrf.mxu0
    %v8793 = vadd.f32 %v8774, %v8792
    %v8794 = vpop.f32.mrf.mxu0
    %v8795 = vadd.f32 %v8776, %v8794
    %8796 = vdwg.mxu0
    %8797 = vmatpush.bf16.msra.mxu0 %v7974
    %8798 = vmatpush.bf16.msra.mxu0 %v7971
    %8799 = vmatpush.bf16.msra.mxu0 %v7968
    %8800 = vmatpush.bf16.msra.mxu0 %v7965
    %8801 = vmatpush.bf16.msra.mxu0 %v7962
    %8802 = vmatpush.bf16.msra.mxu0 %v7959
    %8803 = vmatpush.bf16.msra.mxu0 %v7956
    %8804 = vmatpush.bf16.msra.mxu0 %v7953
    %8805 = vmatmul.bf16.gmra.mxu0 %v6349
    %v8806 = vpop.f32.mrf.mxu0
    %v8807 = vadd.f32 %v8788, %v8806
    %v8808 = vpop.f32.mrf.mxu0
    %v8809 = vadd.f32 %v8790, %v8808
    %8810 = vmatmul.bf16.gmra.mxu0 %v6367
    %v8811 = vpop.f32.mrf.mxu0
    %v8812 = vadd.f32 %v8793, %v8811
    %v8813 = vpop.f32.mrf.mxu0
    %v8814 = vadd.f32 %v8795, %v8813
    %8815 = vdwg.mxu0
    %8816 = vmatpush.bf16.msra.mxu0 %v7998
    %8817 = vmatpush.bf16.msra.mxu0 %v7995
    %8818 = vmatpush.bf16.msra.mxu0 %v7992
    %8819 = vmatpush.bf16.msra.mxu0 %v7989
    %8820 = vmatpush.bf16.msra.mxu0 %v7986
    %8821 = vmatpush.bf16.msra.mxu0 %v7983
    %8822 = vmatpush.bf16.msra.mxu0 %v7980
    %8823 = vmatpush.bf16.msra.mxu0 %v7977
    %8824 = vmatmul.bf16.gmra.mxu0 %v6350
    %v8825 = vpop.f32.mrf.mxu0
    %v8826 = vadd.f32 %v8807, %v8825
    %v8827 = vpop.f32.mrf.mxu0
    %v8828 = vadd.f32 %v8809, %v8827
    %8829 = vmatmul.bf16.gmra.mxu0 %v6368
    %v8830 = vpop.f32.mrf.mxu0
    %v8831 = vadd.f32 %v8812, %v8830
    %v8832 = vpop.f32.mrf.mxu0
    %v8833 = vadd.f32 %v8814, %v8832
    %8834 = vdwg.mxu0
    %8835 = vmatpush.bf16.msra.mxu0 %v8022
    %8836 = vmatpush.bf16.msra.mxu0 %v8019
    %8837 = vmatpush.bf16.msra.mxu0 %v8016
    %8838 = vmatpush.bf16.msra.mxu0 %v8013
    %8839 = vmatpush.bf16.msra.mxu0 %v8010
    %8840 = vmatpush.bf16.msra.mxu0 %v8007
    %8841 = vmatpush.bf16.msra.mxu0 %v8004
    %8842 = vmatpush.bf16.msra.mxu0 %v8001
    %8843 = vmatmul.bf16.gmra.mxu0 %v6351
    %v8844 = vpop.f32.mrf.mxu0
    %v8845 = vadd.f32 %v8826, %v8844
    %v8846 = vpop.f32.mrf.mxu0
    %v8847 = vadd.f32 %v8828, %v8846
    %8848 = vmatmul.bf16.gmra.mxu0 %v6369
    %v8849 = vpop.f32.mrf.mxu0
    %v8850 = vadd.f32 %v8831, %v8849
    %v8851 = vpop.f32.mrf.mxu0
    %v8852 = vadd.f32 %v8833, %v8851
    %8853 = vdwg.mxu0
    %8854 = vmatpush.bf16.msra.mxu0 %v8046
    %8855 = vmatpush.bf16.msra.mxu0 %v8043
    %8856 = vmatpush.bf16.msra.mxu0 %v8040
    %8857 = vmatpush.bf16.msra.mxu0 %v8037
    %8858 = vmatpush.bf16.msra.mxu0 %v8034
    %8859 = vmatpush.bf16.msra.mxu0 %v8031
    %8860 = vmatpush.bf16.msra.mxu0 %v8028
    %8861 = vmatpush.bf16.msra.mxu0 %v8025
    %8862 = vmatmul.bf16.gmra.mxu0 %v6352
    %v8863 = vpop.f32.mrf.mxu0
    %v8864 = vadd.f32 %v8845, %v8863
    %v8865 = vpop.f32.mrf.mxu0
    %v8866 = vadd.f32 %v8847, %v8865
    %8867 = vmatmul.bf16.gmra.mxu0 %v6370
    %v8868 = vpop.f32.mrf.mxu0
    %v8869 = vadd.f32 %v8850, %v8868
    %v8870 = vpop.f32.mrf.mxu0
    %v8871 = vadd.f32 %v8852, %v8870
    %8872 = vdwg.mxu0
    %8873 = vmatpush.bf16.msra.mxu0 %v8070
    %8874 = vmatpush.bf16.msra.mxu0 %v8067
    %8875 = vmatpush.bf16.msra.mxu0 %v8064
    %8876 = vmatpush.bf16.msra.mxu0 %v8061
    %8877 = vmatpush.bf16.msra.mxu0 %v8058
    %8878 = vmatpush.bf16.msra.mxu0 %v8055
    %8879 = vmatpush.bf16.msra.mxu0 %v8052
    %8880 = vmatpush.bf16.msra.mxu0 %v8049
    %8881 = vmatmul.bf16.gmra.mxu0 %v6353
    %v8882 = vpop.f32.mrf.mxu0
    %v8883 = vadd.f32 %v8864, %v8882
    %v8884 = vpop.f32.mrf.mxu0
    %v8885 = vadd.f32 %v8866, %v8884
    %8886 = vmatmul.bf16.gmra.mxu0 %v6371
    %v8887 = vpop.f32.mrf.mxu0
    %v8888 = vadd.f32 %v8869, %v8887
    %v8889 = vpop.f32.mrf.mxu0
    %v8890 = vadd.f32 %v8871, %v8889
    %8891 = vdwg.mxu0
    %8892 = vmatpush.bf16.msra.mxu0 %v8094
    %8893 = vmatpush.bf16.msra.mxu0 %v8091
    %8894 = vmatpush.bf16.msra.mxu0 %v8088
    %8895 = vmatpush.bf16.msra.mxu0 %v8085
    %8896 = vmatpush.bf16.msra.mxu0 %v8082
    %8897 = vmatpush.bf16.msra.mxu0 %v8079
    %8898 = vmatpush.bf16.msra.mxu0 %v8076
    %8899 = vmatpush.bf16.msra.mxu0 %v8073
    %8900 = vmatmul.bf16.gmra.mxu0 %v6354
    %v8901 = vpop.f32.mrf.mxu0
    %v8902 = vadd.f32 %v8883, %v8901
    %v8903 = vpop.f32.mrf.mxu0
    %v8904 = vadd.f32 %v8885, %v8903
    %8905 = vmatmul.bf16.gmra.mxu0 %v6372
    %v8906 = vpop.f32.mrf.mxu0
    %v8907 = vadd.f32 %v8888, %v8906
    %v8908 = vpop.f32.mrf.mxu0
    %v8909 = vadd.f32 %v8890, %v8908
    %8910 = vdwg.mxu0
    %8911 = vmatpush.bf16.msra.mxu0 %v8118
    %8912 = vmatpush.bf16.msra.mxu0 %v8115
    %8913 = vmatpush.bf16.msra.mxu0 %v8112
    %8914 = vmatpush.bf16.msra.mxu0 %v8109
    %8915 = vmatpush.bf16.msra.mxu0 %v8106
    %8916 = vmatpush.bf16.msra.mxu0 %v8103
    %8917 = vmatpush.bf16.msra.mxu0 %v8100
    %8918 = vmatpush.bf16.msra.mxu0 %v8097
    %8919 = vmatmul.bf16.gmra.mxu0 %v6355
    %v8920 = vpop.f32.mrf.mxu0
    %v8921 = vadd.f32 %v8902, %v8920
    %v8922 = vpop.f32.mrf.mxu0
    %v8923 = vadd.f32 %v8904, %v8922
    %8924 = vmatmul.bf16.gmra.mxu0 %v6373
    %v8925 = vpop.f32.mrf.mxu0
    %v8926 = vadd.f32 %v8907, %v8925
    %v8927 = vpop.f32.mrf.mxu0
    %v8928 = vadd.f32 %v8909, %v8927
    %8929 = vdwg.mxu0
    %8930 = vmatpush.bf16.msra.mxu0 %v8142
    %8931 = vmatpush.bf16.msra.mxu0 %v8139
    %8932 = vmatpush.bf16.msra.mxu0 %v8136
    %8933 = vmatpush.bf16.msra.mxu0 %v8133
    %8934 = vmatpush.bf16.msra.mxu0 %v8130
    %8935 = vmatpush.bf16.msra.mxu0 %v8127
    %8936 = vmatpush.bf16.msra.mxu0 %v8124
    %8937 = vmatpush.bf16.msra.mxu0 %v8121
    %8938 = vmatmul.bf16.gmra.mxu0 %v6356
    %v8939 = vpop.f32.mrf.mxu0
    %v8940 = vadd.f32 %v8921, %v8939
    %v8941 = vpop.f32.mrf.mxu0
    %v8942 = vadd.f32 %v8923, %v8941
    %8943 = vmatmul.bf16.gmra.mxu0 %v6374
    %v8944 = vpop.f32.mrf.mxu0
    %v8945 = vadd.f32 %v8926, %v8944
    %v8946 = vpop.f32.mrf.mxu0
    %v8947 = vadd.f32 %v8928, %v8946
    %8948 = vdwg.mxu0
    %8949 = vmatpush.bf16.msra.mxu0 %v8166
    %8950 = vmatpush.bf16.msra.mxu0 %v8163
    %8951 = vmatpush.bf16.msra.mxu0 %v8160
    %8952 = vmatpush.bf16.msra.mxu0 %v8157
    %8953 = vmatpush.bf16.msra.mxu0 %v8154
    %8954 = vmatpush.bf16.msra.mxu0 %v8151
    %8955 = vmatpush.bf16.msra.mxu0 %v8148
    %8956 = vmatpush.bf16.msra.mxu0 %v8145
    %8957 = vmatmul.bf16.gmra.mxu0 %v6357
    %v8958 = vpop.f32.mrf.mxu0
    %v8959 = vadd.f32 %v8940, %v8958
    %v8960 = vpop.f32.mrf.mxu0
    %v8961 = vadd.f32 %v8942, %v8960
    %8962 = vmatmul.bf16.gmra.mxu0 %v6375
    %v8963 = vpop.f32.mrf.mxu0
    %v8964 = vadd.f32 %v8945, %v8963
    %v8965 = vpop.f32.mrf.mxu0
    %v8966 = vadd.f32 %v8947, %v8965
    %8967 = vdwg.mxu0
    %8968 = vmatpush.bf16.msra.mxu0 %v8190
    %8969 = vmatpush.bf16.msra.mxu0 %v8187
    %8970 = vmatpush.bf16.msra.mxu0 %v8184
    %8971 = vmatpush.bf16.msra.mxu0 %v8181
    %8972 = vmatpush.bf16.msra.mxu0 %v8178
    %8973 = vmatpush.bf16.msra.mxu0 %v8175
    %8974 = vmatpush.bf16.msra.mxu0 %v8172
    %8975 = vmatpush.bf16.msra.mxu0 %v8169
    %8976 = vmatmul.bf16.gmra.mxu0 %v6358
    %v8977 = vpop.f32.mrf.mxu0
    %v8978 = vadd.f32 %v8959, %v8977
    %v8979 = vpop.f32.mrf.mxu0
    %v8980 = vadd.f32 %v8961, %v8979
    %8981 = vmatmul.bf16.gmra.mxu0 %v6376
    %v8982 = vpop.f32.mrf.mxu0
    %v8983 = vadd.f32 %v8964, %v8982
    %v8984 = vpop.f32.mrf.mxu0
    %v8985 = vadd.f32 %v8966, %v8984
    %8986 = vdwg.mxu0
    %8987 = vmatpush.bf16.msra.mxu0 %v8214
    %8988 = vmatpush.bf16.msra.mxu0 %v8211
    %8989 = vmatpush.bf16.msra.mxu0 %v8208
    %8990 = vmatpush.bf16.msra.mxu0 %v8205
    %8991 = vmatpush.bf16.msra.mxu0 %v8202
    %8992 = vmatpush.bf16.msra.mxu0 %v8199
    %8993 = vmatpush.bf16.msra.mxu0 %v8196
    %8994 = vmatpush.bf16.msra.mxu0 %v8193
    %8995 = vmatmul.bf16.gmra.mxu0 %v6359
    %v8996 = vpop.f32.mrf.mxu0
    %v8997 = vadd.f32 %v8978, %v8996
    %v8998 = vpop.f32.mrf.mxu0
    %v8999 = vadd.f32 %v8980, %v8998
    %9000 = vmatmul.bf16.gmra.mxu0 %v6377
    %v9001 = vpop.f32.mrf.mxu0
    %v9002 = vadd.f32 %v8983, %v9001
    %v9003 = vpop.f32.mrf.mxu0
    %v9004 = vadd.f32 %v8985, %v9003
    %9005 = vdwg.mxu0
    %9006 = vmatpush.bf16.msra.mxu0 %v8238
    %9007 = vmatpush.bf16.msra.mxu0 %v8235
    %9008 = vmatpush.bf16.msra.mxu0 %v8232
    %9009 = vmatpush.bf16.msra.mxu0 %v8229
    %9010 = vmatpush.bf16.msra.mxu0 %v8226
    %9011 = vmatpush.bf16.msra.mxu0 %v8223
    %9012 = vmatpush.bf16.msra.mxu0 %v8220
    %9013 = vmatpush.bf16.msra.mxu0 %v8217
    %9014 = vmatmul.bf16.gmra.mxu0 %v6360
    %v9015 = vpop.f32.mrf.mxu0
    %v9016 = vadd.f32 %v8997, %v9015
    %v9017 = vpop.f32.mrf.mxu0
    %v9018 = vadd.f32 %v8999, %v9017
    %9019 = vmatmul.bf16.gmra.mxu0 %v6378
    %v9020 = vpop.f32.mrf.mxu0
    %v9021 = vadd.f32 %v9002, %v9020
    %v9022 = vpop.f32.mrf.mxu0
    %v9023 = vadd.f32 %v9004, %v9022
    %9024 = vdwg.mxu0
    %9025 = vmatpush.bf16.msra.mxu0 %v8262
    %9026 = vmatpush.bf16.msra.mxu0 %v8259
    %9027 = vmatpush.bf16.msra.mxu0 %v8256
    %9028 = vmatpush.bf16.msra.mxu0 %v8253
    %9029 = vmatpush.bf16.msra.mxu0 %v8250
    %9030 = vmatpush.bf16.msra.mxu0 %v8247
    %9031 = vmatpush.bf16.msra.mxu0 %v8244
    %9032 = vmatpush.bf16.msra.mxu0 %v8241
    %9033 = vmatmul.bf16.gmra.mxu0 %v6361
    %v9034 = vpop.f32.mrf.mxu0
    %v9035 = vadd.f32 %v9016, %v9034
    %v9036 = vpop.f32.mrf.mxu0
    %v9037 = vadd.f32 %v9018, %v9036
    %9038 = vmatmul.bf16.gmra.mxu0 %v6379
    %v9039 = vpop.f32.mrf.mxu0
    %v9040 = vadd.f32 %v9021, %v9039
    %v9041 = vpop.f32.mrf.mxu0
    %v9042 = vadd.f32 %v9023, %v9041
    %9043 = vdwg.mxu0
    %9044 = vmatpush.bf16.msra.mxu0 %v8286
    %9045 = vmatpush.bf16.msra.mxu0 %v8283
    %9046 = vmatpush.bf16.msra.mxu0 %v8280
    %9047 = vmatpush.bf16.msra.mxu0 %v8277
    %9048 = vmatpush.bf16.msra.mxu0 %v8274
    %9049 = vmatpush.bf16.msra.mxu0 %v8271
    %9050 = vmatpush.bf16.msra.mxu0 %v8268
    %9051 = vmatpush.bf16.msra.mxu0 %v8265
    %9052 = vmatmul.bf16.gmra.mxu0 %v6362
    %v9053 = vpop.f32.mrf.mxu0
    %v9054 = vadd.f32 %v9035, %v9053
    %v9055 = vpop.f32.mrf.mxu0
    %v9056 = vadd.f32 %v9037, %v9055
    %9057 = vmatmul.bf16.gmra.mxu0 %v6380
    %v9058 = vpop.f32.mrf.mxu0
    %v9059 = vadd.f32 %v9040, %v9058
    %v9060 = vpop.f32.mrf.mxu0
    %v9061 = vadd.f32 %v9042, %v9060
    %9062 = vdwg.mxu0
    %9063 = vmatpush.bf16.msra.mxu0 %v7879
    %9064 = vmatpush.bf16.msra.mxu0 %v7876
    %9065 = vmatpush.bf16.msra.mxu0 %v7873
    %9066 = vmatpush.bf16.msra.mxu0 %v7870
    %9067 = vmatpush.bf16.msra.mxu0 %v7867
    %9068 = vmatpush.bf16.msra.mxu0 %v7864
    %9069 = vmatpush.bf16.msra.mxu0 %v7861
    %9070 = vmatpush.bf16.msra.mxu0 %v7858
    %9071 = vmatmul.bf16.gmra.mxu0 %v6345
    %v9072 = vpop.f32.mrf.mxu0
    %v9073 = vadd.f32 %v6232, %v9072
    %v9074 = vpop.f32.mrf.mxu0
    %v9075 = vadd.f32 %v6232, %v9074
    %9076 = vmatmul.bf16.gmra.mxu0 %v6363
    %v9077 = vpop.f32.mrf.mxu0
    %v9078 = vadd.f32 %v6232, %v9077
    %v9079 = vpop.f32.mrf.mxu0
    %v9080 = vadd.f32 %v6232, %v9079
    %9081 = vdwg.mxu0
    %9082 = vmatpush.bf16.msra.mxu0 %v7903
    %9083 = vmatpush.bf16.msra.mxu0 %v7900
    %9084 = vmatpush.bf16.msra.mxu0 %v7897
    %9085 = vmatpush.bf16.msra.mxu0 %v7894
    %9086 = vmatpush.bf16.msra.mxu0 %v7891
    %9087 = vmatpush.bf16.msra.mxu0 %v7888
    %9088 = vmatpush.bf16.msra.mxu0 %v7885
    %9089 = vmatpush.bf16.msra.mxu0 %v7882
    %9090 = vmatmul.bf16.gmra.mxu0 %v6346
    %v9091 = vpop.f32.mrf.mxu0
    %v9092 = vadd.f32 %v9073, %v9091
    %v9093 = vpop.f32.mrf.mxu0
    %v9094 = vadd.f32 %v9075, %v9093
    %9095 = vmatmul.bf16.gmra.mxu0 %v6364
    %v9096 = vpop.f32.mrf.mxu0
    %v9097 = vadd.f32 %v9078, %v9096
    %v9098 = vpop.f32.mrf.mxu0
    %v9099 = vadd.f32 %v9080, %v9098
    %9100 = vdwg.mxu0
    %9101 = vmatpush.bf16.msra.mxu0 %v7927
    %9102 = vmatpush.bf16.msra.mxu0 %v7924
    %9103 = vmatpush.bf16.msra.mxu0 %v7921
    %9104 = vmatpush.bf16.msra.mxu0 %v7918
    %9105 = vmatpush.bf16.msra.mxu0 %v7915
    %9106 = vmatpush.bf16.msra.mxu0 %v7912
    %9107 = vmatpush.bf16.msra.mxu0 %v7909
    %9108 = vmatpush.bf16.msra.mxu0 %v7906
    %9109 = vmatmul.bf16.gmra.mxu0 %v6347
    %v9110 = vpop.f32.mrf.mxu0
    %v9111 = vadd.f32 %v9092, %v9110
    %v9112 = vpop.f32.mrf.mxu0
    %v9113 = vadd.f32 %v9094, %v9112
    %9114 = vmatmul.bf16.gmra.mxu0 %v6365
    %v9115 = vpop.f32.mrf.mxu0
    %v9116 = vadd.f32 %v9097, %v9115
    %v9117 = vpop.f32.mrf.mxu0
    %v9118 = vadd.f32 %v9099, %v9117
    %9119 = vdwg.mxu0
    %9120 = vmatpush.bf16.msra.mxu0 %v7951
    %9121 = vmatpush.bf16.msra.mxu0 %v7948
    %9122 = vmatpush.bf16.msra.mxu0 %v7945
    %9123 = vmatpush.bf16.msra.mxu0 %v7942
    %9124 = vmatpush.bf16.msra.mxu0 %v7939
    %9125 = vmatpush.bf16.msra.mxu0 %v7936
    %9126 = vmatpush.bf16.msra.mxu0 %v7933
    %9127 = vmatpush.bf16.msra.mxu0 %v7930
    %9128 = vmatmul.bf16.gmra.mxu0 %v6348
    %v9129 = vpop.f32.mrf.mxu0
    %v9130 = vadd.f32 %v9111, %v9129
    %v9131 = vpop.f32.mrf.mxu0
    %v9132 = vadd.f32 %v9113, %v9131
    %9133 = vmatmul.bf16.gmra.mxu0 %v6366
    %v9134 = vpop.f32.mrf.mxu0
    %v9135 = vadd.f32 %v9116, %v9134
    %v9136 = vpop.f32.mrf.mxu0
    %v9137 = vadd.f32 %v9118, %v9136
    %9138 = vdwg.mxu0
    %9139 = vmatpush.bf16.msra.mxu0 %v7975
    %9140 = vmatpush.bf16.msra.mxu0 %v7972
    %9141 = vmatpush.bf16.msra.mxu0 %v7969
    %9142 = vmatpush.bf16.msra.mxu0 %v7966
    %9143 = vmatpush.bf16.msra.mxu0 %v7963
    %9144 = vmatpush.bf16.msra.mxu0 %v7960
    %9145 = vmatpush.bf16.msra.mxu0 %v7957
    %9146 = vmatpush.bf16.msra.mxu0 %v7954
    %9147 = vmatmul.bf16.gmra.mxu0 %v6349
    %v9148 = vpop.f32.mrf.mxu0
    %v9149 = vadd.f32 %v9130, %v9148
    %v9150 = vpop.f32.mrf.mxu0
    %v9151 = vadd.f32 %v9132, %v9150
    %9152 = vmatmul.bf16.gmra.mxu0 %v6367
    %v9153 = vpop.f32.mrf.mxu0
    %v9154 = vadd.f32 %v9135, %v9153
    %v9155 = vpop.f32.mrf.mxu0
    %v9156 = vadd.f32 %v9137, %v9155
    %9157 = vdwg.mxu0
    %9158 = vmatpush.bf16.msra.mxu0 %v7999
    %9159 = vmatpush.bf16.msra.mxu0 %v7996
    %9160 = vmatpush.bf16.msra.mxu0 %v7993
    %9161 = vmatpush.bf16.msra.mxu0 %v7990
    %9162 = vmatpush.bf16.msra.mxu0 %v7987
    %9163 = vmatpush.bf16.msra.mxu0 %v7984
    %9164 = vmatpush.bf16.msra.mxu0 %v7981
    %9165 = vmatpush.bf16.msra.mxu0 %v7978
    %9166 = vmatmul.bf16.gmra.mxu0 %v6350
    %v9167 = vpop.f32.mrf.mxu0
    %v9168 = vadd.f32 %v9149, %v9167
    %v9169 = vpop.f32.mrf.mxu0
    %v9170 = vadd.f32 %v9151, %v9169
    %9171 = vmatmul.bf16.gmra.mxu0 %v6368
    %v9172 = vpop.f32.mrf.mxu0
    %v9173 = vadd.f32 %v9154, %v9172
    %v9174 = vpop.f32.mrf.mxu0
    %v9175 = vadd.f32 %v9156, %v9174
    %9176 = vdwg.mxu0
    %9177 = vmatpush.bf16.msra.mxu0 %v8023
    %9178 = vmatpush.bf16.msra.mxu0 %v8020
    %9179 = vmatpush.bf16.msra.mxu0 %v8017
    %9180 = vmatpush.bf16.msra.mxu0 %v8014
    %9181 = vmatpush.bf16.msra.mxu0 %v8011
    %9182 = vmatpush.bf16.msra.mxu0 %v8008
    %9183 = vmatpush.bf16.msra.mxu0 %v8005
    %9184 = vmatpush.bf16.msra.mxu0 %v8002
    %9185 = vmatmul.bf16.gmra.mxu0 %v6351
    %v9186 = vpop.f32.mrf.mxu0
    %v9187 = vadd.f32 %v9168, %v9186
    %v9188 = vpop.f32.mrf.mxu0
    %v9189 = vadd.f32 %v9170, %v9188
    %9190 = vmatmul.bf16.gmra.mxu0 %v6369
    %v9191 = vpop.f32.mrf.mxu0
    %v9192 = vadd.f32 %v9173, %v9191
    %v9193 = vpop.f32.mrf.mxu0
    %v9194 = vadd.f32 %v9175, %v9193
    %9195 = vdwg.mxu0
    %9196 = vmatpush.bf16.msra.mxu0 %v8047
    %9197 = vmatpush.bf16.msra.mxu0 %v8044
    %9198 = vmatpush.bf16.msra.mxu0 %v8041
    %9199 = vmatpush.bf16.msra.mxu0 %v8038
    %9200 = vmatpush.bf16.msra.mxu0 %v8035
    %9201 = vmatpush.bf16.msra.mxu0 %v8032
    %9202 = vmatpush.bf16.msra.mxu0 %v8029
    %9203 = vmatpush.bf16.msra.mxu0 %v8026
    %9204 = vmatmul.bf16.gmra.mxu0 %v6352
    %v9205 = vpop.f32.mrf.mxu0
    %v9206 = vadd.f32 %v9187, %v9205
    %v9207 = vpop.f32.mrf.mxu0
    %v9208 = vadd.f32 %v9189, %v9207
    %9209 = vmatmul.bf16.gmra.mxu0 %v6370
    %v9210 = vpop.f32.mrf.mxu0
    %v9211 = vadd.f32 %v9192, %v9210
    %v9212 = vpop.f32.mrf.mxu0
    %v9213 = vadd.f32 %v9194, %v9212
    %9214 = vdwg.mxu0
    %9215 = vmatpush.bf16.msra.mxu0 %v8071
    %9216 = vmatpush.bf16.msra.mxu0 %v8068
    %9217 = vmatpush.bf16.msra.mxu0 %v8065
    %9218 = vmatpush.bf16.msra.mxu0 %v8062
    %9219 = vmatpush.bf16.msra.mxu0 %v8059
    %9220 = vmatpush.bf16.msra.mxu0 %v8056
    %9221 = vmatpush.bf16.msra.mxu0 %v8053
    %9222 = vmatpush.bf16.msra.mxu0 %v8050
    %9223 = vmatmul.bf16.gmra.mxu0 %v6353
    %v9224 = vpop.f32.mrf.mxu0
    %v9225 = vadd.f32 %v9206, %v9224
    %v9226 = vpop.f32.mrf.mxu0
    %v9227 = vadd.f32 %v9208, %v9226
    %9228 = vmatmul.bf16.gmra.mxu0 %v6371
    %v9229 = vpop.f32.mrf.mxu0
    %v9230 = vadd.f32 %v9211, %v9229
    %v9231 = vpop.f32.mrf.mxu0
    %v9232 = vadd.f32 %v9213, %v9231
    %9233 = vdwg.mxu0
    %9234 = vmatpush.bf16.msra.mxu0 %v8095
    %9235 = vmatpush.bf16.msra.mxu0 %v8092
    %9236 = vmatpush.bf16.msra.mxu0 %v8089
    %9237 = vmatpush.bf16.msra.mxu0 %v8086
    %9238 = vmatpush.bf16.msra.mxu0 %v8083
    %9239 = vmatpush.bf16.msra.mxu0 %v8080
    %9240 = vmatpush.bf16.msra.mxu0 %v8077
    %9241 = vmatpush.bf16.msra.mxu0 %v8074
    %9242 = vmatmul.bf16.gmra.mxu0 %v6354
    %v9243 = vpop.f32.mrf.mxu0
    %v9244 = vadd.f32 %v9225, %v9243
    %v9245 = vpop.f32.mrf.mxu0
    %v9246 = vadd.f32 %v9227, %v9245
    %9247 = vmatmul.bf16.gmra.mxu0 %v6372
    %v9248 = vpop.f32.mrf.mxu0
    %v9249 = vadd.f32 %v9230, %v9248
    %v9250 = vpop.f32.mrf.mxu0
    %v9251 = vadd.f32 %v9232, %v9250
    %9252 = vdwg.mxu0
    %9253 = vmatpush.bf16.msra.mxu0 %v8119
    %9254 = vmatpush.bf16.msra.mxu0 %v8116
    %9255 = vmatpush.bf16.msra.mxu0 %v8113
    %9256 = vmatpush.bf16.msra.mxu0 %v8110
    %9257 = vmatpush.bf16.msra.mxu0 %v8107
    %9258 = vmatpush.bf16.msra.mxu0 %v8104
    %9259 = vmatpush.bf16.msra.mxu0 %v8101
    %9260 = vmatpush.bf16.msra.mxu0 %v8098
    %9261 = vmatmul.bf16.gmra.mxu0 %v6355
    %v9262 = vpop.f32.mrf.mxu0
    %v9263 = vadd.f32 %v9244, %v9262
    %v9264 = vpop.f32.mrf.mxu0
    %v9265 = vadd.f32 %v9246, %v9264
    %9266 = vmatmul.bf16.gmra.mxu0 %v6373
    %v9267 = vpop.f32.mrf.mxu0
    %v9268 = vadd.f32 %v9249, %v9267
    %v9269 = vpop.f32.mrf.mxu0
    %v9270 = vadd.f32 %v9251, %v9269
    %9271 = vdwg.mxu0
    %9272 = vmatpush.bf16.msra.mxu0 %v8143
    %9273 = vmatpush.bf16.msra.mxu0 %v8140
    %9274 = vmatpush.bf16.msra.mxu0 %v8137
    %9275 = vmatpush.bf16.msra.mxu0 %v8134
    %9276 = vmatpush.bf16.msra.mxu0 %v8131
    %9277 = vmatpush.bf16.msra.mxu0 %v8128
    %9278 = vmatpush.bf16.msra.mxu0 %v8125
    %9279 = vmatpush.bf16.msra.mxu0 %v8122
    %9280 = vmatmul.bf16.gmra.mxu0 %v6356
    %v9281 = vpop.f32.mrf.mxu0
    %v9282 = vadd.f32 %v9263, %v9281
    %v9283 = vpop.f32.mrf.mxu0
    %v9284 = vadd.f32 %v9265, %v9283
    %9285 = vmatmul.bf16.gmra.mxu0 %v6374
    %v9286 = vpop.f32.mrf.mxu0
    %v9287 = vadd.f32 %v9268, %v9286
    %v9288 = vpop.f32.mrf.mxu0
    %v9289 = vadd.f32 %v9270, %v9288
    %9290 = vdwg.mxu0
    %9291 = vmatpush.bf16.msra.mxu0 %v8167
    %9292 = vmatpush.bf16.msra.mxu0 %v8164
    %9293 = vmatpush.bf16.msra.mxu0 %v8161
    %9294 = vmatpush.bf16.msra.mxu0 %v8158
    %9295 = vmatpush.bf16.msra.mxu0 %v8155
    %9296 = vmatpush.bf16.msra.mxu0 %v8152
    %9297 = vmatpush.bf16.msra.mxu0 %v8149
    %9298 = vmatpush.bf16.msra.mxu0 %v8146
    %9299 = vmatmul.bf16.gmra.mxu0 %v6357
    %v9300 = vpop.f32.mrf.mxu0
    %v9301 = vadd.f32 %v9282, %v9300
    %v9302 = vpop.f32.mrf.mxu0
    %v9303 = vadd.f32 %v9284, %v9302
    %9304 = vmatmul.bf16.gmra.mxu0 %v6375
    %v9305 = vpop.f32.mrf.mxu0
    %v9306 = vadd.f32 %v9287, %v9305
    %v9307 = vpop.f32.mrf.mxu0
    %v9308 = vadd.f32 %v9289, %v9307
    %9309 = vdwg.mxu0
    %9310 = vmatpush.bf16.msra.mxu0 %v8191
    %9311 = vmatpush.bf16.msra.mxu0 %v8188
    %9312 = vmatpush.bf16.msra.mxu0 %v8185
    %9313 = vmatpush.bf16.msra.mxu0 %v8182
    %9314 = vmatpush.bf16.msra.mxu0 %v8179
    %9315 = vmatpush.bf16.msra.mxu0 %v8176
    %9316 = vmatpush.bf16.msra.mxu0 %v8173
    %9317 = vmatpush.bf16.msra.mxu0 %v8170
    %9318 = vmatmul.bf16.gmra.mxu0 %v6358
    %v9319 = vpop.f32.mrf.mxu0
    %v9320 = vadd.f32 %v9301, %v9319
    %v9321 = vpop.f32.mrf.mxu0
    %v9322 = vadd.f32 %v9303, %v9321
    %9323 = vmatmul.bf16.gmra.mxu0 %v6376
    %v9324 = vpop.f32.mrf.mxu0
    %v9325 = vadd.f32 %v9306, %v9324
    %v9326 = vpop.f32.mrf.mxu0
    %v9327 = vadd.f32 %v9308, %v9326
    %9328 = vdwg.mxu0
    %9329 = vmatpush.bf16.msra.mxu0 %v8215
    %9330 = vmatpush.bf16.msra.mxu0 %v8212
    %9331 = vmatpush.bf16.msra.mxu0 %v8209
    %9332 = vmatpush.bf16.msra.mxu0 %v8206
    %9333 = vmatpush.bf16.msra.mxu0 %v8203
    %9334 = vmatpush.bf16.msra.mxu0 %v8200
    %9335 = vmatpush.bf16.msra.mxu0 %v8197
    %9336 = vmatpush.bf16.msra.mxu0 %v8194
    %9337 = vmatmul.bf16.gmra.mxu0 %v6359
    %v9338 = vpop.f32.mrf.mxu0
    %v9339 = vadd.f32 %v9320, %v9338
    %v9340 = vpop.f32.mrf.mxu0
    %v9341 = vadd.f32 %v9322, %v9340
    %9342 = vmatmul.bf16.gmra.mxu0 %v6377
    %v9343 = vpop.f32.mrf.mxu0
    %v9344 = vadd.f32 %v9325, %v9343
    %v9345 = vpop.f32.mrf.mxu0
    %v9346 = vadd.f32 %v9327, %v9345
    %9347 = vdwg.mxu0
    %9348 = vmatpush.bf16.msra.mxu0 %v8239
    %9349 = vmatpush.bf16.msra.mxu0 %v8236
    %9350 = vmatpush.bf16.msra.mxu0 %v8233
    %9351 = vmatpush.bf16.msra.mxu0 %v8230
    %9352 = vmatpush.bf16.msra.mxu0 %v8227
    %9353 = vmatpush.bf16.msra.mxu0 %v8224
    %9354 = vmatpush.bf16.msra.mxu0 %v8221
    %9355 = vmatpush.bf16.msra.mxu0 %v8218
    %9356 = vmatmul.bf16.gmra.mxu0 %v6360
    %v9357 = vpop.f32.mrf.mxu0
    %v9358 = vadd.f32 %v9339, %v9357
    %v9359 = vpop.f32.mrf.mxu0
    %v9360 = vadd.f32 %v9341, %v9359
    %9361 = vmatmul.bf16.gmra.mxu0 %v6378
    %v9362 = vpop.f32.mrf.mxu0
    %v9363 = vadd.f32 %v9344, %v9362
    %v9364 = vpop.f32.mrf.mxu0
    %v9365 = vadd.f32 %v9346, %v9364
    %9366 = vdwg.mxu0
    %9367 = vmatpush.bf16.msra.mxu0 %v8263
    %9368 = vmatpush.bf16.msra.mxu0 %v8260
    %9369 = vmatpush.bf16.msra.mxu0 %v8257
    %9370 = vmatpush.bf16.msra.mxu0 %v8254
    %9371 = vmatpush.bf16.msra.mxu0 %v8251
    %9372 = vmatpush.bf16.msra.mxu0 %v8248
    %9373 = vmatpush.bf16.msra.mxu0 %v8245
    %9374 = vmatpush.bf16.msra.mxu0 %v8242
    %9375 = vmatmul.bf16.gmra.mxu0 %v6361
    %v9376 = vpop.f32.mrf.mxu0
    %v9377 = vadd.f32 %v9358, %v9376
    %v9378 = vpop.f32.mrf.mxu0
    %v9379 = vadd.f32 %v9360, %v9378
    %9380 = vmatmul.bf16.gmra.mxu0 %v6379
    %v9381 = vpop.f32.mrf.mxu0
    %v9382 = vadd.f32 %v9363, %v9381
    %v9383 = vpop.f32.mrf.mxu0
    %v9384 = vadd.f32 %v9365, %v9383
    %9385 = vdwg.mxu0
    %9386 = vmatpush.bf16.msra.mxu0 %v8287
    %9387 = vmatpush.bf16.msra.mxu0 %v8284
    %9388 = vmatpush.bf16.msra.mxu0 %v8281
    %9389 = vmatpush.bf16.msra.mxu0 %v8278
    %9390 = vmatpush.bf16.msra.mxu0 %v8275
    %9391 = vmatpush.bf16.msra.mxu0 %v8272
    %9392 = vmatpush.bf16.msra.mxu0 %v8269
    %9393 = vmatpush.bf16.msra.mxu0 %v8266
    %9394 = vmatmul.bf16.gmra.mxu0 %v6362
    %v9395 = vpop.f32.mrf.mxu0
    %v9396 = vadd.f32 %v9377, %v9395
    %v9397 = vpop.f32.mrf.mxu0
    %v9398 = vadd.f32 %v9379, %v9397
    %9399 = vmatmul.bf16.gmra.mxu0 %v6380
    %v9400 = vpop.f32.mrf.mxu0
    %v9401 = vadd.f32 %v9382, %v9400
    %v9402 = vpop.f32.mrf.mxu0
    %v9403 = vadd.f32 %v9384, %v9402
    %9404 = vdwg.mxu0
    %9405 = vmatpush.bf16.msra.mxu0 %v7880
    %9406 = vmatpush.bf16.msra.mxu0 %v7877
    %9407 = vmatpush.bf16.msra.mxu0 %v7874
    %9408 = vmatpush.bf16.msra.mxu0 %v7871
    %9409 = vmatpush.bf16.msra.mxu0 %v7868
    %9410 = vmatpush.bf16.msra.mxu0 %v7865
    %9411 = vmatpush.bf16.msra.mxu0 %v7862
    %9412 = vmatpush.bf16.msra.mxu0 %v7859
    %9413 = vmatmul.bf16.gmra.mxu0 %v6345
    %v9414 = vpop.f32.mrf.mxu0
    %v9415 = vadd.f32 %v6233, %v9414
    %v9416 = vpop.f32.mrf.mxu0
    %v9417 = vadd.f32 %v6233, %v9416
    %9418 = vmatmul.bf16.gmra.mxu0 %v6363
    %v9419 = vpop.f32.mrf.mxu0
    %v9420 = vadd.f32 %v6233, %v9419
    %v9421 = vpop.f32.mrf.mxu0
    %v9422 = vadd.f32 %v6233, %v9421
    %9423 = vdwg.mxu0
    %9424 = vmatpush.bf16.msra.mxu0 %v7904
    %9425 = vmatpush.bf16.msra.mxu0 %v7901
    %9426 = vmatpush.bf16.msra.mxu0 %v7898
    %9427 = vmatpush.bf16.msra.mxu0 %v7895
    %9428 = vmatpush.bf16.msra.mxu0 %v7892
    %9429 = vmatpush.bf16.msra.mxu0 %v7889
    %9430 = vmatpush.bf16.msra.mxu0 %v7886
    %9431 = vmatpush.bf16.msra.mxu0 %v7883
    %9432 = vmatmul.bf16.gmra.mxu0 %v6346
    %v9433 = vpop.f32.mrf.mxu0
    %v9434 = vadd.f32 %v9415, %v9433
    %v9435 = vpop.f32.mrf.mxu0
    %v9436 = vadd.f32 %v9417, %v9435
    %9437 = vmatmul.bf16.gmra.mxu0 %v6364
    %v9438 = vpop.f32.mrf.mxu0
    %v9439 = vadd.f32 %v9420, %v9438
    %v9440 = vpop.f32.mrf.mxu0
    %v9441 = vadd.f32 %v9422, %v9440
    %9442 = vdwg.mxu0
    %9443 = vmatpush.bf16.msra.mxu0 %v7928
    %9444 = vmatpush.bf16.msra.mxu0 %v7925
    %9445 = vmatpush.bf16.msra.mxu0 %v7922
    %9446 = vmatpush.bf16.msra.mxu0 %v7919
    %9447 = vmatpush.bf16.msra.mxu0 %v7916
    %9448 = vmatpush.bf16.msra.mxu0 %v7913
    %9449 = vmatpush.bf16.msra.mxu0 %v7910
    %9450 = vmatpush.bf16.msra.mxu0 %v7907
    %9451 = vmatmul.bf16.gmra.mxu0 %v6347
    %v9452 = vpop.f32.mrf.mxu0
    %v9453 = vadd.f32 %v9434, %v9452
    %v9454 = vpop.f32.mrf.mxu0
    %v9455 = vadd.f32 %v9436, %v9454
    %9456 = vmatmul.bf16.gmra.mxu0 %v6365
    %v9457 = vpop.f32.mrf.mxu0
    %v9458 = vadd.f32 %v9439, %v9457
    %v9459 = vpop.f32.mrf.mxu0
    %v9460 = vadd.f32 %v9441, %v9459
    %9461 = vdwg.mxu0
    %9462 = vmatpush.bf16.msra.mxu0 %v7952
    %9463 = vmatpush.bf16.msra.mxu0 %v7949
    %9464 = vmatpush.bf16.msra.mxu0 %v7946
    %9465 = vmatpush.bf16.msra.mxu0 %v7943
    %9466 = vmatpush.bf16.msra.mxu0 %v7940
    %9467 = vmatpush.bf16.msra.mxu0 %v7937
    %9468 = vmatpush.bf16.msra.mxu0 %v7934
    %9469 = vmatpush.bf16.msra.mxu0 %v7931
    %9470 = vmatmul.bf16.gmra.mxu0 %v6348
    %v9471 = vpop.f32.mrf.mxu0
    %v9472 = vadd.f32 %v9453, %v9471
    %v9473 = vpop.f32.mrf.mxu0
    %v9474 = vadd.f32 %v9455, %v9473
    %9475 = vmatmul.bf16.gmra.mxu0 %v6366
    %v9476 = vpop.f32.mrf.mxu0
    %v9477 = vadd.f32 %v9458, %v9476
    %v9478 = vpop.f32.mrf.mxu0
    %v9479 = vadd.f32 %v9460, %v9478
    %9480 = vdwg.mxu0
    %9481 = vmatpush.bf16.msra.mxu0 %v7976
    %9482 = vmatpush.bf16.msra.mxu0 %v7973
    %9483 = vmatpush.bf16.msra.mxu0 %v7970
    %9484 = vmatpush.bf16.msra.mxu0 %v7967
    %9485 = vmatpush.bf16.msra.mxu0 %v7964
    %9486 = vmatpush.bf16.msra.mxu0 %v7961
    %9487 = vmatpush.bf16.msra.mxu0 %v7958
    %9488 = vmatpush.bf16.msra.mxu0 %v7955
    %9489 = vmatmul.bf16.gmra.mxu0 %v6349
    %v9490 = vpop.f32.mrf.mxu0
    %v9491 = vadd.f32 %v9472, %v9490
    %v9492 = vpop.f32.mrf.mxu0
    %v9493 = vadd.f32 %v9474, %v9492
    %9494 = vmatmul.bf16.gmra.mxu0 %v6367
    %v9495 = vpop.f32.mrf.mxu0
    %v9496 = vadd.f32 %v9477, %v9495
    %v9497 = vpop.f32.mrf.mxu0
    %v9498 = vadd.f32 %v9479, %v9497
    %9499 = vdwg.mxu0
    %9500 = vmatpush.bf16.msra.mxu0 %v8000
    %9501 = vmatpush.bf16.msra.mxu0 %v7997
    %9502 = vmatpush.bf16.msra.mxu0 %v7994
    %9503 = vmatpush.bf16.msra.mxu0 %v7991
    %9504 = vmatpush.bf16.msra.mxu0 %v7988
    %9505 = vmatpush.bf16.msra.mxu0 %v7985
    %9506 = vmatpush.bf16.msra.mxu0 %v7982
    %9507 = vmatpush.bf16.msra.mxu0 %v7979
    %9508 = vmatmul.bf16.gmra.mxu0 %v6350
    %v9509 = vpop.f32.mrf.mxu0
    %v9510 = vadd.f32 %v9491, %v9509
    %v9511 = vpop.f32.mrf.mxu0
    %v9512 = vadd.f32 %v9493, %v9511
    %9513 = vmatmul.bf16.gmra.mxu0 %v6368
    %v9514 = vpop.f32.mrf.mxu0
    %v9515 = vadd.f32 %v9496, %v9514
    %v9516 = vpop.f32.mrf.mxu0
    %v9517 = vadd.f32 %v9498, %v9516
    %9518 = vdwg.mxu0
    %9519 = vmatpush.bf16.msra.mxu0 %v8024
    %9520 = vmatpush.bf16.msra.mxu0 %v8021
    %9521 = vmatpush.bf16.msra.mxu0 %v8018
    %9522 = vmatpush.bf16.msra.mxu0 %v8015
    %9523 = vmatpush.bf16.msra.mxu0 %v8012
    %9524 = vmatpush.bf16.msra.mxu0 %v8009
    %9525 = vmatpush.bf16.msra.mxu0 %v8006
    %9526 = vmatpush.bf16.msra.mxu0 %v8003
    %9527 = vmatmul.bf16.gmra.mxu0 %v6351
    %v9528 = vpop.f32.mrf.mxu0
    %v9529 = vadd.f32 %v9510, %v9528
    %v9530 = vpop.f32.mrf.mxu0
    %v9531 = vadd.f32 %v9512, %v9530
    %9532 = vmatmul.bf16.gmra.mxu0 %v6369
    %v9533 = vpop.f32.mrf.mxu0
    %v9534 = vadd.f32 %v9515, %v9533
    %v9535 = vpop.f32.mrf.mxu0
    %v9536 = vadd.f32 %v9517, %v9535
    %9537 = vdwg.mxu0
    %9538 = vmatpush.bf16.msra.mxu0 %v8048
    %9539 = vmatpush.bf16.msra.mxu0 %v8045
    %9540 = vmatpush.bf16.msra.mxu0 %v8042
    %9541 = vmatpush.bf16.msra.mxu0 %v8039
    %9542 = vmatpush.bf16.msra.mxu0 %v8036
    %9543 = vmatpush.bf16.msra.mxu0 %v8033
    %9544 = vmatpush.bf16.msra.mxu0 %v8030
    %9545 = vmatpush.bf16.msra.mxu0 %v8027
    %9546 = vmatmul.bf16.gmra.mxu0 %v6352
    %v9547 = vpop.f32.mrf.mxu0
    %v9548 = vadd.f32 %v9529, %v9547
    %v9549 = vpop.f32.mrf.mxu0
    %v9550 = vadd.f32 %v9531, %v9549
    %9551 = vmatmul.bf16.gmra.mxu0 %v6370
    %v9552 = vpop.f32.mrf.mxu0
    %v9553 = vadd.f32 %v9534, %v9552
    %v9554 = vpop.f32.mrf.mxu0
    %v9555 = vadd.f32 %v9536, %v9554
    %9556 = vdwg.mxu0
    %9557 = vmatpush.bf16.msra.mxu0 %v8072
    %9558 = vmatpush.bf16.msra.mxu0 %v8069
    %9559 = vmatpush.bf16.msra.mxu0 %v8066
    %9560 = vmatpush.bf16.msra.mxu0 %v8063
    %9561 = vmatpush.bf16.msra.mxu0 %v8060
    %9562 = vmatpush.bf16.msra.mxu0 %v8057
    %9563 = vmatpush.bf16.msra.mxu0 %v8054
    %9564 = vmatpush.bf16.msra.mxu0 %v8051
    %9565 = vmatmul.bf16.gmra.mxu0 %v6353
    %v9566 = vpop.f32.mrf.mxu0
    %v9567 = vadd.f32 %v9548, %v9566
    %v9568 = vpop.f32.mrf.mxu0
    %v9569 = vadd.f32 %v9550, %v9568
    %9570 = vmatmul.bf16.gmra.mxu0 %v6371
    %v9571 = vpop.f32.mrf.mxu0
    %v9572 = vadd.f32 %v9553, %v9571
    %v9573 = vpop.f32.mrf.mxu0
    %v9574 = vadd.f32 %v9555, %v9573
    %9575 = vdwg.mxu0
    %9576 = vmatpush.bf16.msra.mxu0 %v8096
    %9577 = vmatpush.bf16.msra.mxu0 %v8093
    %9578 = vmatpush.bf16.msra.mxu0 %v8090
    %9579 = vmatpush.bf16.msra.mxu0 %v8087
    %9580 = vmatpush.bf16.msra.mxu0 %v8084
    %9581 = vmatpush.bf16.msra.mxu0 %v8081
    %9582 = vmatpush.bf16.msra.mxu0 %v8078
    %9583 = vmatpush.bf16.msra.mxu0 %v8075
    %9584 = vmatmul.bf16.gmra.mxu0 %v6354
    %v9585 = vpop.f32.mrf.mxu0
    %v9586 = vadd.f32 %v9567, %v9585
    %v9587 = vpop.f32.mrf.mxu0
    %v9588 = vadd.f32 %v9569, %v9587
    %9589 = vmatmul.bf16.gmra.mxu0 %v6372
    %v9590 = vpop.f32.mrf.mxu0
    %v9591 = vadd.f32 %v9572, %v9590
    %v9592 = vpop.f32.mrf.mxu0
    %v9593 = vadd.f32 %v9574, %v9592
    %9594 = vdwg.mxu0
    %9595 = vmatpush.bf16.msra.mxu0 %v8120
    %9596 = vmatpush.bf16.msra.mxu0 %v8117
    %9597 = vmatpush.bf16.msra.mxu0 %v8114
    %9598 = vmatpush.bf16.msra.mxu0 %v8111
    %9599 = vmatpush.bf16.msra.mxu0 %v8108
    %9600 = vmatpush.bf16.msra.mxu0 %v8105
    %9601 = vmatpush.bf16.msra.mxu0 %v8102
    %9602 = vmatpush.bf16.msra.mxu0 %v8099
    %9603 = vmatmul.bf16.gmra.mxu0 %v6355
    %v9604 = vpop.f32.mrf.mxu0
    %v9605 = vadd.f32 %v9586, %v9604
    %v9606 = vpop.f32.mrf.mxu0
    %v9607 = vadd.f32 %v9588, %v9606
    %9608 = vmatmul.bf16.gmra.mxu0 %v6373
    %v9609 = vpop.f32.mrf.mxu0
    %v9610 = vadd.f32 %v9591, %v9609
    %v9611 = vpop.f32.mrf.mxu0
    %v9612 = vadd.f32 %v9593, %v9611
    %9613 = vdwg.mxu0
    %9614 = vmatpush.bf16.msra.mxu0 %v8144
    %9615 = vmatpush.bf16.msra.mxu0 %v8141
    %9616 = vmatpush.bf16.msra.mxu0 %v8138
    %9617 = vmatpush.bf16.msra.mxu0 %v8135
    %9618 = vmatpush.bf16.msra.mxu0 %v8132
    %9619 = vmatpush.bf16.msra.mxu0 %v8129
    %9620 = vmatpush.bf16.msra.mxu0 %v8126
    %9621 = vmatpush.bf16.msra.mxu0 %v8123
    %9622 = vmatmul.bf16.gmra.mxu0 %v6356
    %v9623 = vpop.f32.mrf.mxu0
    %v9624 = vadd.f32 %v9605, %v9623
    %v9625 = vpop.f32.mrf.mxu0
    %v9626 = vadd.f32 %v9607, %v9625
    %9627 = vmatmul.bf16.gmra.mxu0 %v6374
    %v9628 = vpop.f32.mrf.mxu0
    %v9629 = vadd.f32 %v9610, %v9628
    %v9630 = vpop.f32.mrf.mxu0
    %v9631 = vadd.f32 %v9612, %v9630
    %9632 = vdwg.mxu0
    %9633 = vmatpush.bf16.msra.mxu0 %v8168
    %9634 = vmatpush.bf16.msra.mxu0 %v8165
    %9635 = vmatpush.bf16.msra.mxu0 %v8162
    %9636 = vmatpush.bf16.msra.mxu0 %v8159
    %9637 = vmatpush.bf16.msra.mxu0 %v8156
    %9638 = vmatpush.bf16.msra.mxu0 %v8153
    %9639 = vmatpush.bf16.msra.mxu0 %v8150
    %9640 = vmatpush.bf16.msra.mxu0 %v8147
    %9641 = vmatmul.bf16.gmra.mxu0 %v6357
    %v9642 = vpop.f32.mrf.mxu0
    %v9643 = vadd.f32 %v9624, %v9642
    %v9644 = vpop.f32.mrf.mxu0
    %v9645 = vadd.f32 %v9626, %v9644
    %9646 = vmatmul.bf16.gmra.mxu0 %v6375
    %v9647 = vpop.f32.mrf.mxu0
    %v9648 = vadd.f32 %v9629, %v9647
    %v9649 = vpop.f32.mrf.mxu0
    %v9650 = vadd.f32 %v9631, %v9649
    %9651 = vdwg.mxu0
    %9652 = vmatpush.bf16.msra.mxu0 %v8192
    %9653 = vmatpush.bf16.msra.mxu0 %v8189
    %9654 = vmatpush.bf16.msra.mxu0 %v8186
    %9655 = vmatpush.bf16.msra.mxu0 %v8183
    %9656 = vmatpush.bf16.msra.mxu0 %v8180
    %9657 = vmatpush.bf16.msra.mxu0 %v8177
    %9658 = vmatpush.bf16.msra.mxu0 %v8174
    %9659 = vmatpush.bf16.msra.mxu0 %v8171
    %9660 = vmatmul.bf16.gmra.mxu0 %v6358
    %v9661 = vpop.f32.mrf.mxu0
    %v9662 = vadd.f32 %v9643, %v9661
    %v9663 = vpop.f32.mrf.mxu0
    %v9664 = vadd.f32 %v9645, %v9663
    %9665 = vmatmul.bf16.gmra.mxu0 %v6376
    %v9666 = vpop.f32.mrf.mxu0
    %v9667 = vadd.f32 %v9648, %v9666
    %v9668 = vpop.f32.mrf.mxu0
    %v9669 = vadd.f32 %v9650, %v9668
    %9670 = vdwg.mxu0
    %9671 = vmatpush.bf16.msra.mxu0 %v8216
    %9672 = vmatpush.bf16.msra.mxu0 %v8213
    %9673 = vmatpush.bf16.msra.mxu0 %v8210
    %9674 = vmatpush.bf16.msra.mxu0 %v8207
    %9675 = vmatpush.bf16.msra.mxu0 %v8204
    %9676 = vmatpush.bf16.msra.mxu0 %v8201
    %9677 = vmatpush.bf16.msra.mxu0 %v8198
    %9678 = vmatpush.bf16.msra.mxu0 %v8195
    %9679 = vmatmul.bf16.gmra.mxu0 %v6359
    %v9680 = vpop.f32.mrf.mxu0
    %v9681 = vadd.f32 %v9662, %v9680
    %v9682 = vpop.f32.mrf.mxu0
    %v9683 = vadd.f32 %v9664, %v9682
    %9684 = vmatmul.bf16.gmra.mxu0 %v6377
    %v9685 = vpop.f32.mrf.mxu0
    %v9686 = vadd.f32 %v9667, %v9685
    %v9687 = vpop.f32.mrf.mxu0
    %v9688 = vadd.f32 %v9669, %v9687
    %9689 = vdwg.mxu0
    %9690 = vmatpush.bf16.msra.mxu0 %v8240
    %9691 = vmatpush.bf16.msra.mxu0 %v8237
    %9692 = vmatpush.bf16.msra.mxu0 %v8234
    %9693 = vmatpush.bf16.msra.mxu0 %v8231
    %9694 = vmatpush.bf16.msra.mxu0 %v8228
    %9695 = vmatpush.bf16.msra.mxu0 %v8225
    %9696 = vmatpush.bf16.msra.mxu0 %v8222
    %9697 = vmatpush.bf16.msra.mxu0 %v8219
    %9698 = vmatmul.bf16.gmra.mxu0 %v6360
    %v9699 = vpop.f32.mrf.mxu0
    %v9700 = vadd.f32 %v9681, %v9699
    %v9701 = vpop.f32.mrf.mxu0
    %v9702 = vadd.f32 %v9683, %v9701
    %9703 = vmatmul.bf16.gmra.mxu0 %v6378
    %v9704 = vpop.f32.mrf.mxu0
    %v9705 = vadd.f32 %v9686, %v9704
    %v9706 = vpop.f32.mrf.mxu0
    %v9707 = vadd.f32 %v9688, %v9706
    %9708 = vdwg.mxu0
    %9709 = vmatpush.bf16.msra.mxu0 %v8264
    %9710 = vmatpush.bf16.msra.mxu0 %v8261
    %9711 = vmatpush.bf16.msra.mxu0 %v8258
    %9712 = vmatpush.bf16.msra.mxu0 %v8255
    %9713 = vmatpush.bf16.msra.mxu0 %v8252
    %9714 = vmatpush.bf16.msra.mxu0 %v8249
    %9715 = vmatpush.bf16.msra.mxu0 %v8246
    %9716 = vmatpush.bf16.msra.mxu0 %v8243
    %9717 = vmatmul.bf16.gmra.mxu0 %v6361
    %v9718 = vpop.f32.mrf.mxu0
    %v9719 = vadd.f32 %v9700, %v9718
    %v9720 = vpop.f32.mrf.mxu0
    %v9721 = vadd.f32 %v9702, %v9720
    %9722 = vmatmul.bf16.gmra.mxu0 %v6379
    %v9723 = vpop.f32.mrf.mxu0
    %v9724 = vadd.f32 %v9705, %v9723
    %v9725 = vpop.f32.mrf.mxu0
    %v9726 = vadd.f32 %v9707, %v9725
    %9727 = vdwg.mxu0
    %9728 = vmatpush.bf16.msra.mxu0 %v8288
    %9729 = vmatpush.bf16.msra.mxu0 %v8285
    %9730 = vmatpush.bf16.msra.mxu0 %v8282
    %9731 = vmatpush.bf16.msra.mxu0 %v8279
    %9732 = vmatpush.bf16.msra.mxu0 %v8276
    %9733 = vmatpush.bf16.msra.mxu0 %v8273
    %9734 = vmatpush.bf16.msra.mxu0 %v8270
    %9735 = vmatpush.bf16.msra.mxu0 %v8267
    %9736 = vmatmul.bf16.gmra.mxu0 %v6362
    %v9737 = vpop.f32.mrf.mxu0
    %v9738 = vadd.f32 %v9719, %v9737
    %v9739 = vpop.f32.mrf.mxu0
    %v9740 = vadd.f32 %v9721, %v9739
    %9741 = vmatmul.bf16.gmra.mxu0 %v6380
    %v9742 = vpop.f32.mrf.mxu0
    %v9743 = vadd.f32 %v9724, %v9742
    %v9744 = vpop.f32.mrf.mxu0
    %v9745 = vadd.f32 %v9726, %v9744
    %9746 = vdwg.mxu0
    %v9747 = vmax.f32 %v9054, 0.0
    %v9748 = vmax.f32 %v9396, 0.0
    %v9749 = vmax.f32 %v9738, 0.0
    %v9750 = vmax.f32 %v9056, 0.0
    %v9751 = vmax.f32 %v9398, 0.0
    %v9752 = vmax.f32 %v9740, 0.0
    %v9753 = vmax.f32 %v9059, 0.0
    %v9754 = vmax.f32 %v9401, 0.0
    %v9755 = vmax.f32 %v9743, 0.0
    %v9756 = vmax.f32 %v9061, 0.0
    %v9757 = vmax.f32 %v9403, 0.0
    %v9758 = vmax.f32 %v9745, 0.0
    %v9759 = vpack.c.bf16 %v9748, %v9747
    %v9760 = vpack.c.bf16 %v9749, %v9749
    %v9761 = vpack.c.bf16 %v9751, %v9750
    %v9762 = vpack.c.bf16 %v9752, %v9752
    %v9763 = vpack.c.bf16 %v9754, %v9753
    %v9764 = vpack.c.bf16 %v9755, %v9755
    %v9765 = vpack.c.bf16 %v9757, %v9756
    %v9766 = vpack.c.bf16 %v9758, %v9758
    %9767 = vst [vmem:[#allocation7] sm:$0xff] %v9759
    %9768 = vst.msk [vmem:[#allocation7 + $0x8] sm:$0xf] %vm59, %v9760
    %9769 = vst [vmem:[#allocation7 + $0xc] sm:$0xff] %v9761
    %9770 = vst.msk [vmem:[#allocation7 + $0x14] sm:$0xf] %vm59, %v9762
    %9771 = vst [vmem:[#allocation7 + $0x18] sm:$0xff] %v9763
    %9772 = vst.msk [vmem:[#allocation7 + $0x20] sm:$0xf] %vm59, %v9764
    %9773 = vst [vmem:[#allocation7 + $0x24] sm:$0xff] %v9765
    %9774 = vst.msk [vmem:[#allocation7 + $0x2c] sm:$0xf] %vm59, %v9766
    %v9775 = vld [vmem:[#allocation7] sm:$0x11]
    %v9776 = vld [vmem:[#allocation7 + $0x8] sm:$0x1]
    %v9777 = vld [vmem:[#allocation7 + $0x18] sm:$0x11]
    %v9778 = vld [vmem:[#allocation7 + $0x20] sm:$0x1]
    %v9783 = vrot.slane %v9775, 3
    %v9784 = vrot.slane %v9776, 6
    %v9785 = vrot.slane %v9776, 1
    %v9786 = vrot.slane %v9777, 3
    %v9787 = vrot.slane %v9778, 6
    %v9788 = vrot.slane %v9778, 1
    %vm9789 = vcmask 1040384
    %v9792 = vsel %vm9789, %v9775, %v9783
    %vm9793 = vcmask 1042434
    %v9796 = vsel %vm9793, %v9784, %v9785
    %v9797 = vsel %vm682, %v9792, %v9796
    %v9800 = vsel %vm9789, %v9777, %v9786
    %v9803 = vsel %vm9793, %v9787, %v9788
    %v9804 = vsel %vm682, %v9800, %v9803
    %9805 = vst [vmem:[#allocation1] ss:$4 sm:$0xff] %v9797
    %v9806 = vld [vmem:[#allocation1] sm:$0xff]
    %v9808 = vld [vmem:[#allocation1 + $0x8] sm:$0xff]
    %s9810 = scalar_lea.vmem [#allocation1], 32
    %9811 = vst [vmem:[%s9810] ss:$4 sm:$0xff] %v9804
    %v9812 = vld [vmem:[#allocation1 + $0x20] sm:$0xff]
    %v9814 = vld [vmem:[#allocation1 + $0x28] sm:$0xff]
    %v9816 = vunpack.c.l.b16 %v9806
    %v9817 = vunpack.c.h.b16 %v9806
    %v9818 = vunpack.c.l.b16 %v9808
    %v9819 = vunpack.c.l.b16 %v9812
    %v9820 = vunpack.c.h.b16 %v9812
    %v9821 = vunpack.c.l.b16 %v9814
    %v9822 = vrot.slane %v9819, 7
    %vm9823 = vcmask 1041409
    %v9824 = vsel %vm9823, %v9822, %v9816
    %v9825 = vrot.slane %v9820, 7
    %v9826 = vsel %vm9823, %v9825, %v9817
    %v9827 = vrot.slane %v9821, 7
    %v9828 = vsel %vm9823, %v9827, %v9818
    %v9829 = vpack.c.b16 %v9826, %v9824
    %v9830 = vpack.c.b16 %v9828, %v9828
    %v9831 = vrot.slane %v9829, 3
    %v9832 = vrot.slane %v9830, 6
    %v9833 = vrot.slane %v9830, 1
    %v9836 = vsel %vm9789, %v9829, %v9831
    %v9839 = vsel %vm9793, %v9832, %v9833
    %v9840 = vsel %vm682, %v9836, %v9839
    %vm9842 = vmor %vm9823, %vm9789
    %vm9843 = vcmask 518146
    %vm9844 = vmor %vm9843, %vm9842
    %9845 = vst.msk [vmem:[#allocation8] sm:$0x7] %vm9844, %v9840
    %v9846 = vld [vmem:[#allocation7] sm:$0x11]
    %v9847 = vld [vmem:[#allocation7 + $0x8] sm:$0x1]
    %v9848 = vld [vmem:[#allocation7 + $0x18] sm:$0x11]
    %v9849 = vld [vmem:[#allocation7 + $0x20] sm:$0x1]
    %v9854 = vrot.slane %v9846, 3
    %v9855 = vrot.slane %v9847, 6
    %v9856 = vrot.slane %v9847, 1
    %v9857 = vrot.slane %v9848, 3
    %v9858 = vrot.slane %v9849, 6
    %v9859 = vrot.slane %v9849, 1
    %v9862 = vsel %vm9789, %v9846, %v9854
    %v9865 = vsel %vm9793, %v9855, %v9856
    %v9866 = vsel %vm682, %v9862, %v9865
    %v9869 = vsel %vm9789, %v9848, %v9857
    %v9872 = vsel %vm9793, %v9858, %v9859
    %v9873 = vsel %vm682, %v9869, %v9872
    %9874 = vst [vmem:[#allocation1] ss:$4 sm:$0xff] %v9866
    %v9875 = vld [vmem:[#allocation1] sm:$0xff]
    %v9877 = vld [vmem:[#allocation1 + $0x8] sm:$0xff]
    %s9879 = scalar_lea.vmem [#allocation1], 32
    %9880 = vst [vmem:[%s9879] ss:$4 sm:$0xff] %v9873
    %v9881 = vld [vmem:[#allocation1 + $0x20] sm:$0xff]
    %v9883 = vld [vmem:[#allocation1 + $0x28] sm:$0xff]
    %v9885 = vunpack.c.l.b16 %v9875
    %v9886 = vunpack.c.h.b16 %v9875
    %v9887 = vunpack.c.l.b16 %v9877
    %v9888 = vunpack.c.l.b16 %v9881
    %v9889 = vunpack.c.h.b16 %v9881
    %v9890 = vunpack.c.l.b16 %v9883
    %v9891 = vrot.slane %v9885, 1
    %v9892 = vsel %vm9823, %v9888, %v9891
    %v9893 = vrot.slane %v9886, 1
    %v9894 = vsel %vm9823, %v9889, %v9893
    %v9895 = vrot.slane %v9887, 1
    %v9896 = vsel %vm9823, %v9890, %v9895
    %v9897 = vpack.c.b16 %v9894, %v9892
    %v9898 = vpack.c.b16 %v9896, %v9896
    %v9899 = vrot.slane %v9897, 3
    %v9900 = vrot.slane %v9898, 6
    %v9901 = vrot.slane %v9898, 1
    %v9904 = vsel %vm9789, %v9897, %v9899
    %v9907 = vsel %vm9793, %v9900, %v9901
    %v9908 = vsel %vm682, %v9904, %v9907
    %9910 = vrot.lane.b32.xlu0 %v9908, 64
    %v9911 = vpop.permute.xlu0 %9910
    %v9912 = vrot.slane %v9911, 7
    %v9913 = vsel %vm798, %v9912, %v9911
    %vm9915 = vcmask 1040896
    %vm9916 = vmor %vm9823, %vm9915
    %vm9917 = vmor %vm9793, %vm9916
    %9918 = vst.msk [vmem:[#allocation8 + $0x2] sm:$0x7] %vm9917, %v9913
    %v9919 = vld [vmem:[#allocation7] sm:$0x22]
    %v9920 = vld [vmem:[#allocation7 + $0x8] sm:$0x2]
    %v9921 = vld [vmem:[#allocation7 + $0x18] sm:$0x22]
    %v9922 = vld [vmem:[#allocation7 + $0x20] sm:$0x2]
    %9924 = vst [vmem:[#allocation1] sm:$0xff] %v9919
    %9926 = vst [vmem:[#allocation1 + $0x8] sm:$0xff] %v9920
    %s9927 = scalar_lea.vmem [#allocation1], 1
    %v9928 = vld [vmem:[%s9927] ss:$4 sm:$0xff]
    %9930 = vst [vmem:[#allocation1 + $0x20] sm:$0xff] %v9921
    %9932 = vst [vmem:[#allocation1 + $0x28] sm:$0xff] %v9922
    %s9933 = scalar_lea.vmem [#allocation1], 33
    %v9934 = vld [vmem:[%s9933] ss:$4 sm:$0xff]
    %9935 = vst [vmem:[#allocation1] ss:$4 sm:$0xff] %v9928
    %v9936 = vld [vmem:[#allocation1] sm:$0xff]
    %v9938 = vld [vmem:[#allocation1 + $0x8] sm:$0xff]
    %s9940 = scalar_lea.vmem [#allocation1], 32
    %9941 = vst [vmem:[%s9940] ss:$4 sm:$0xff] %v9934
    %v9942 = vld [vmem:[#allocation1 + $0x20] sm:$0xff]
    %v9944 = vld [vmem:[#allocation1 + $0x28] sm:$0xff]
    %v9946 = vunpack.c.l.b16 %v9936
    %v9947 = vunpack.c.h.b16 %v9936
    %v9948 = vunpack.c.l.b16 %v9938
    %v9949 = vunpack.c.l.b16 %v9942
    %v9950 = vunpack.c.h.b16 %v9942
    %v9951 = vunpack.c.l.b16 %v9944
    %v9952 = vrot.slane %v9949, 7
    %v9953 = vsel %vm9823, %v9952, %v9946
    %v9954 = vrot.slane %v9950, 7
    %v9955 = vsel %vm9823, %v9954, %v9947
    %v9956 = vrot.slane %v9951, 7
    %v9957 = vsel %vm9823, %v9956, %v9948
    %v9958 = vpack.c.b16 %v9955, %v9953
    %v9959 = vpack.c.b16 %v9957, %v9957
    %v9960 = vrot.slane %v9958, 3
    %v9961 = vrot.slane %v9959, 6
    %v9962 = vrot.slane %v9959, 1
    %v9965 = vsel %vm9789, %v9958, %v9960
    %v9968 = vsel %vm9793, %v9961, %v9962
    %v9969 = vsel %vm682, %v9965, %v9968
    %9971 = vst.msk [vmem:[#allocation8 + $0x5] sm:$0x7] %vm9844, %v9969
    %v9972 = vld [vmem:[#allocation7] sm:$0x22]
    %v9973 = vld [vmem:[#allocation7 + $0x8] sm:$0x2]
    %v9974 = vld [vmem:[#allocation7 + $0x18] sm:$0x22]
    %v9975 = vld [vmem:[#allocation7 + $0x20] sm:$0x2]
    %9977 = vst [vmem:[#allocation1] sm:$0xff] %v9972
    %9979 = vst [vmem:[#allocation1 + $0x8] sm:$0xff] %v9973
    %s9980 = scalar_lea.vmem [#allocation1], 1
    %v9981 = vld [vmem:[%s9980] ss:$4 sm:$0xff]
    %9983 = vst [vmem:[#allocation1 + $0x20] sm:$0xff] %v9974
    %9985 = vst [vmem:[#allocation1 + $0x28] sm:$0xff] %v9975
    %s9986 = scalar_lea.vmem [#allocation1], 33
    %v9987 = vld [vmem:[%s9986] ss:$4 sm:$0xff]
    %9988 = vst [vmem:[#allocation1] ss:$4 sm:$0xff] %v9981
    %v9989 = vld [vmem:[#allocation1] sm:$0xff]
    %v9991 = vld [vmem:[#allocation1 + $0x8] sm:$0xff]
    %s9993 = scalar_lea.vmem [#allocation1], 32
    %9994 = vst [vmem:[%s9993] ss:$4 sm:$0xff] %v9987
    %v9995 = vld [vmem:[#allocation1 + $0x20] sm:$0xff]
    %v9997 = vld [vmem:[#allocation1 + $0x28] sm:$0xff]
    %v9999 = vunpack.c.l.b16 %v9989
    %v10000 = vunpack.c.h.b16 %v9989
    %v10001 = vunpack.c.l.b16 %v9991
    %v10002 = vunpack.c.l.b16 %v9995
    %v10003 = vunpack.c.h.b16 %v9995
    %v10004 = vunpack.c.l.b16 %v9997
    %v10005 = vrot.slane %v9999, 1
    %v10006 = vsel %vm9823, %v10002, %v10005
    %v10007 = vrot.slane %v10000, 1
    %v10008 = vsel %vm9823, %v10003, %v10007
    %v10009 = vrot.slane %v10001, 1
    %v10010 = vsel %vm9823, %v10004, %v10009
    %v10011 = vpack.c.b16 %v10008, %v10006
    %v10012 = vpack.c.b16 %v10010, %v10010
    %v10013 = vrot.slane %v10011, 3
    %v10014 = vrot.slane %v10012, 6
    %v10015 = vrot.slane %v10012, 1
    %v10018 = vsel %vm9789, %v10011, %v10013
    %v10021 = vsel %vm9793, %v10014, %v10015
    %v10022 = vsel %vm682, %v10018, %v10021
    %10024 = vrot.lane.b32.xlu0 %v10022, 64
    %v10025 = vpop.permute.xlu0 %10024
    %v10026 = vrot.slane %v10025, 7
    %v10027 = vsel %vm798, %v10026, %v10025
    %10029 = vst.msk [vmem:[#allocation8 + $0x7] sm:$0x7] %vm9917, %v10027
    %v10030 = vld [vmem:[#allocation7] sm:$0x44]
    %v10031 = vld [vmem:[#allocation7 + $0x8] sm:$0x4]
    %v10032 = vld [vmem:[#allocation7 + $0x18] sm:$0x44]
    %v10033 = vld [vmem:[#allocation7 + $0x20] sm:$0x4]
    %10035 = vst [vmem:[#allocation1] sm:$0xff] %v10030
    %10037 = vst [vmem:[#allocation1 + $0x8] sm:$0xff] %v10031
    %s10038 = scalar_lea.vmem [#allocation1], 2
    %v10039 = vld [vmem:[%s10038] ss:$4 sm:$0xff]
    %10041 = vst [vmem:[#allocation1 + $0x20] sm:$0xff] %v10032
    %10043 = vst [vmem:[#allocation1 + $0x28] sm:$0xff] %v10033
    %s10044 = scalar_lea.vmem [#allocation1], 34
    %v10045 = vld [vmem:[%s10044] ss:$4 sm:$0xff]
    %10046 = vst [vmem:[#allocation1] ss:$4 sm:$0xff] %v10039
    %v10047 = vld [vmem:[#allocation1] sm:$0xff]
    %v10049 = vld [vmem:[#allocation1 + $0x8] sm:$0xff]
    %s10051 = scalar_lea.vmem [#allocation1], 32
    %10052 = vst [vmem:[%s10051] ss:$4 sm:$0xff] %v10045
    %v10053 = vld [vmem:[#allocation1 + $0x20] sm:$0xff]
    %v10055 = vld [vmem:[#allocation1 + $0x28] sm:$0xff]
    %v10057 = vunpack.c.l.b16 %v10047
    %v10058 = vunpack.c.h.b16 %v10047
    %v10059 = vunpack.c.l.b16 %v10049
    %v10060 = vunpack.c.l.b16 %v10053
    %v10061 = vunpack.c.h.b16 %v10053
    %v10062 = vunpack.c.l.b16 %v10055
    %v10063 = vrot.slane %v10060, 7
    %v10064 = vsel %vm9823, %v10063, %v10057
    %v10065 = vrot.slane %v10061, 7
    %v10066 = vsel %vm9823, %v10065, %v10058
    %v10067 = vrot.slane %v10062, 7
    %v10068 = vsel %vm9823, %v10067, %v10059
    %v10069 = vpack.c.b16 %v10066, %v10064
    %v10070 = vpack.c.b16 %v10068, %v10068
    %v10071 = vrot.slane %v10069, 3
    %v10072 = vrot.slane %v10070, 6
    %v10073 = vrot.slane %v10070, 1
    %v10076 = vsel %vm9789, %v10069, %v10071
    %v10079 = vsel %vm9793, %v10072, %v10073
    %v10080 = vsel %vm682, %v10076, %v10079
    %10082 = vst.msk [vmem:[#allocation8 + $0xa] sm:$0x7] %vm9844, %v10080
    %v10083 = vld [vmem:[#allocation7] sm:$0x44]
    %v10084 = vld [vmem:[#allocation7 + $0x8] sm:$0x4]
    %v10085 = vld [vmem:[#allocation7 + $0x18] sm:$0x44]
    %v10086 = vld [vmem:[#allocation7 + $0x20] sm:$0x4]
    %10088 = vst [vmem:[#allocation1] sm:$0xff] %v10083
    %10090 = vst [vmem:[#allocation1 + $0x8] sm:$0xff] %v10084
    %s10091 = scalar_lea.vmem [#allocation1], 2
    %v10092 = vld [vmem:[%s10091] ss:$4 sm:$0xff]
    %10094 = vst [vmem:[#allocation1 + $0x20] sm:$0xff] %v10085
    %10096 = vst [vmem:[#allocation1 + $0x28] sm:$0xff] %v10086
    %s10097 = scalar_lea.vmem [#allocation1], 34
    %v10098 = vld [vmem:[%s10097] ss:$4 sm:$0xff]
    %10099 = vst [vmem:[#allocation1] ss:$4 sm:$0xff] %v10092
    %v10100 = vld [vmem:[#allocation1] sm:$0xff]
    %v10102 = vld [vmem:[#allocation1 + $0x8] sm:$0xff]
    %s10104 = scalar_lea.vmem [#allocation1], 32
    %10105 = vst [vmem:[%s10104] ss:$4 sm:$0xff] %v10098
    %v10106 = vld [vmem:[#allocation1 + $0x20] sm:$0xff]
    %v10108 = vld [vmem:[#allocation1 + $0x28] sm:$0xff]
    %v10110 = vunpack.c.l.b16 %v10100
    %v10111 = vunpack.c.h.b16 %v10100
    %v10112 = vunpack.c.l.b16 %v10102
    %v10113 = vunpack.c.l.b16 %v10106
    %v10114 = vunpack.c.h.b16 %v10106
    %v10115 = vunpack.c.l.b16 %v10108
    %v10116 = vrot.slane %v10110, 1
    %v10117 = vsel %vm9823, %v10113, %v10116
    %v10118 = vrot.slane %v10111, 1
    %v10119 = vsel %vm9823, %v10114, %v10118
    %v10120 = vrot.slane %v10112, 1
    %v10121 = vsel %vm9823, %v10115, %v10120
    %v10122 = vpack.c.b16 %v10119, %v10117
    %v10123 = vpack.c.b16 %v10121, %v10121
    %v10124 = vrot.slane %v10122, 3
    %v10125 = vrot.slane %v10123, 6
    %v10126 = vrot.slane %v10123, 1
    %v10129 = vsel %vm9789, %v10122, %v10124
    %v10132 = vsel %vm9793, %v10125, %v10126
    %v10133 = vsel %vm682, %v10129, %v10132
    %10135 = vrot.lane.b32.xlu0 %v10133, 64
    %v10136 = vpop.permute.xlu0 %10135
    %v10137 = vrot.slane %v10136, 7
    %v10138 = vsel %vm798, %v10137, %v10136
    %10140 = vst.msk [vmem:[#allocation8 + $0xc] sm:$0x7] %vm9917, %v10138
    %v10141 = vld [vmem:[#allocation7] sm:$0x88]
    %v10142 = vld [vmem:[#allocation7 + $0x8] sm:$0x8]
    %v10143 = vld [vmem:[#allocation7 + $0x18] sm:$0x88]
    %v10144 = vld [vmem:[#allocation7 + $0x20] sm:$0x8]
    %10146 = vst [vmem:[#allocation1] sm:$0xff] %v10141
    %10148 = vst [vmem:[#allocation1 + $0x8] sm:$0xff] %v10142
    %s10149 = scalar_lea.vmem [#allocation1], 3
    %v10150 = vld [vmem:[%s10149] ss:$4 sm:$0xff]
    %10152 = vst [vmem:[#allocation1 + $0x20] sm:$0xff] %v10143
    %10154 = vst [vmem:[#allocation1 + $0x28] sm:$0xff] %v10144
    %s10155 = scalar_lea.vmem [#allocation1], 35
    %v10156 = vld [vmem:[%s10155] ss:$4 sm:$0xff]
    %10157 = vst [vmem:[#allocation1] ss:$4 sm:$0xff] %v10150
    %v10158 = vld [vmem:[#allocation1] sm:$0xff]
    %v10160 = vld [vmem:[#allocation1 + $0x8] sm:$0xff]
    %s10162 = scalar_lea.vmem [#allocation1], 32
    %10163 = vst [vmem:[%s10162] ss:$4 sm:$0xff] %v10156
    %v10164 = vld [vmem:[#allocation1 + $0x20] sm:$0xff]
    %v10166 = vld [vmem:[#allocation1 + $0x28] sm:$0xff]
    %v10168 = vunpack.c.l.b16 %v10158
    %v10169 = vunpack.c.h.b16 %v10158
    %v10170 = vunpack.c.l.b16 %v10160
    %v10171 = vunpack.c.l.b16 %v10164
    %v10172 = vunpack.c.h.b16 %v10164
    %v10173 = vunpack.c.l.b16 %v10166
    %v10174 = vrot.slane %v10171, 7
    %v10175 = vsel %vm9823, %v10174, %v10168
    %v10176 = vrot.slane %v10172, 7
    %v10177 = vsel %vm9823, %v10176, %v10169
    %v10178 = vrot.slane %v10173, 7
    %v10179 = vsel %vm9823, %v10178, %v10170
    %v10180 = vpack.c.b16 %v10177, %v10175
    %v10181 = vpack.c.b16 %v10179, %v10179
    %v10182 = vrot.slane %v10180, 3
    %v10183 = vrot.slane %v10181, 6
    %v10184 = vrot.slane %v10181, 1
    %v10187 = vsel %vm9789, %v10180, %v10182
    %v10190 = vsel %vm9793, %v10183, %v10184
    %v10191 = vsel %vm682, %v10187, %v10190
    %10193 = vst.msk [vmem:[#allocation8 + $0xf] sm:$0x7] %vm9844, %v10191
    %v10194 = vld [vmem:[#allocation7] sm:$0x88]
    %v10195 = vld [vmem:[#allocation7 + $0x8] sm:$0x8]
    %v10196 = vld [vmem:[#allocation7 + $0x18] sm:$0x88]
    %v10197 = vld [vmem:[#allocation7 + $0x20] sm:$0x8]
    %10199 = vst [vmem:[#allocation1] sm:$0xff] %v10194
    %10201 = vst [vmem:[#allocation1 + $0x8] sm:$0xff] %v10195
    %s10202 = scalar_lea.vmem [#allocation1], 3
    %v10203 = vld [vmem:[%s10202] ss:$4 sm:$0xff]
    %10205 = vst [vmem:[#allocation1 + $0x20] sm:$0xff] %v10196
    %10207 = vst [vmem:[#allocation1 + $0x28] sm:$0xff] %v10197
    %s10208 = scalar_lea.vmem [#allocation1], 35
    %v10209 = vld [vmem:[%s10208] ss:$4 sm:$0xff]
    %10210 = vst [vmem:[#allocation1] ss:$4 sm:$0xff] %v10203
    %v10211 = vld [vmem:[#allocation1] sm:$0xff]
    %v10213 = vld [vmem:[#allocation1 + $0x8] sm:$0xff]
    %s10215 = scalar_lea.vmem [#allocation1], 32
    %10216 = vst [vmem:[%s10215] ss:$4 sm:$0xff] %v10209
    %v10217 = vld [vmem:[#allocation1 + $0x20] sm:$0xff]
    %v10219 = vld [vmem:[#allocation1 + $0x28] sm:$0xff]
    %v10221 = vunpack.c.l.b16 %v10211
    %v10222 = vunpack.c.h.b16 %v10211
    %v10223 = vunpack.c.l.b16 %v10213
    %v10224 = vunpack.c.l.b16 %v10217
    %v10225 = vunpack.c.h.b16 %v10217
    %v10226 = vunpack.c.l.b16 %v10219
    %v10227 = vrot.slane %v10221, 1
    %v10228 = vsel %vm9823, %v10224, %v10227
    %v10229 = vrot.slane %v10222, 1
    %v10230 = vsel %vm9823, %v10225, %v10229
    %v10231 = vrot.slane %v10223, 1
    %v10232 = vsel %vm9823, %v10226, %v10231
    %v10233 = vpack.c.b16 %v10230, %v10228
    %v10234 = vpack.c.b16 %v10232, %v10232
    %v10235 = vrot.slane %v10233, 3
    %v10236 = vrot.slane %v10234, 6
    %v10237 = vrot.slane %v10234, 1
    %v10240 = vsel %vm9789, %v10233, %v10235
    %v10243 = vsel %vm9793, %v10236, %v10237
    %v10244 = vsel %vm682, %v10240, %v10243
    %10246 = vrot.lane.b32.xlu0 %v10244, 64
    %v10247 = vpop.permute.xlu0 %10246
    %v10248 = vrot.slane %v10247, 7
    %v10249 = vsel %vm798, %v10248, %v10247
    %10251 = vst.msk [vmem:[#allocation8 + $0x11] sm:$0x7] %vm9917, %v10249
    %v10252 = vld [vmem:[#allocation7 + $0xc] sm:$0x11]
    %v10253 = vld [vmem:[#allocation7 + $0x14] sm:$0x1]
    %v10254 = vld [vmem:[#allocation7 + $0x24] sm:$0x11]
    %v10255 = vld [vmem:[#allocation7 + $0x2c] sm:$0x1]
    %v10260 = vrot.slane %v10252, 3
    %v10261 = vrot.slane %v10253, 6
    %v10262 = vrot.slane %v10253, 1
    %v10263 = vrot.slane %v10254, 3
    %v10264 = vrot.slane %v10255, 6
    %v10265 = vrot.slane %v10255, 1
    %v10268 = vsel %vm9789, %v10252, %v10260
    %v10271 = vsel %vm9793, %v10261, %v10262
    %v10272 = vsel %vm682, %v10268, %v10271
    %v10275 = vsel %vm9789, %v10254, %v10263
    %v10278 = vsel %vm9793, %v10264, %v10265
    %v10279 = vsel %vm682, %v10275, %v10278
    %10280 = vst [vmem:[#allocation1] ss:$4 sm:$0xff] %v10272
    %v10281 = vld [vmem:[#allocation1] sm:$0xff]
    %v10283 = vld [vmem:[#allocation1 + $0x8] sm:$0xff]
    %s10285 = scalar_lea.vmem [#allocation1], 32
    %10286 = vst [vmem:[%s10285] ss:$4 sm:$0xff] %v10279
    %v10287 = vld [vmem:[#allocation1 + $0x20] sm:$0xff]
    %v10289 = vld [vmem:[#allocation1 + $0x28] sm:$0xff]
    %v10291 = vunpack.c.l.b16 %v10281
    %v10292 = vunpack.c.h.b16 %v10281
    %v10293 = vunpack.c.l.b16 %v10283
    %v10294 = vunpack.c.l.b16 %v10287
    %v10295 = vunpack.c.h.b16 %v10287
    %v10296 = vunpack.c.l.b16 %v10289
    %v10297 = vrot.slane %v10294, 7
    %v10298 = vsel %vm9823, %v10297, %v10291
    %v10299 = vrot.slane %v10295, 7
    %v10300 = vsel %vm9823, %v10299, %v10292
    %v10301 = vrot.slane %v10296, 7
    %v10302 = vsel %vm9823, %v10301, %v10293
    %v10303 = vpack.c.b16 %v10300, %v10298
    %v10304 = vpack.c.b16 %v10302, %v10302
    %v10305 = vrot.slane %v10303, 3
    %v10306 = vrot.slane %v10304, 6
    %v10307 = vrot.slane %v10304, 1
    %v10310 = vsel %vm9789, %v10303, %v10305
    %v10313 = vsel %vm9793, %v10306, %v10307
    %v10314 = vsel %vm682, %v10310, %v10313
    %10316 = vst.msk [vmem:[#allocation8 + $0x14] sm:$0x7] %vm9844, %v10314
    %v10317 = vld [vmem:[#allocation7 + $0xc] sm:$0x11]
    %v10318 = vld [vmem:[#allocation7 + $0x14] sm:$0x1]
    %v10319 = vld [vmem:[#allocation7 + $0x24] sm:$0x11]
    %v10320 = vld [vmem:[#allocation7 + $0x2c] sm:$0x1]
    %v10325 = vrot.slane %v10317, 3
    %v10326 = vrot.slane %v10318, 6
    %v10327 = vrot.slane %v10318, 1
    %v10328 = vrot.slane %v10319, 3
    %v10329 = vrot.slane %v10320, 6
    %v10330 = vrot.slane %v10320, 1
    %v10333 = vsel %vm9789, %v10317, %v10325
    %v10336 = vsel %vm9793, %v10326, %v10327
    %v10337 = vsel %vm682, %v10333, %v10336
    %v10340 = vsel %vm9789, %v10319, %v10328
    %v10343 = vsel %vm9793, %v10329, %v10330
    %v10344 = vsel %vm682, %v10340, %v10343
    %10345 = vst [vmem:[#allocation1] ss:$4 sm:$0xff] %v10337
    %v10346 = vld [vmem:[#allocation1] sm:$0xff]
    %v10348 = vld [vmem:[#allocation1 + $0x8] sm:$0xff]
    %s10350 = scalar_lea.vmem [#allocation1], 32
    %10351 = vst [vmem:[%s10350] ss:$4 sm:$0xff] %v10344
    %v10352 = vld [vmem:[#allocation1 + $0x20] sm:$0xff]
    %v10354 = vld [vmem:[#allocation1 + $0x28] sm:$0xff]
    %v10356 = vunpack.c.l.b16 %v10346
    %v10357 = vunpack.c.h.b16 %v10346
    %v10358 = vunpack.c.l.b16 %v10348
    %v10359 = vunpack.c.l.b16 %v10352
    %v10360 = vunpack.c.h.b16 %v10352
    %v10361 = vunpack.c.l.b16 %v10354
    %v10362 = vrot.slane %v10356, 1
    %v10363 = vsel %vm9823, %v10359, %v10362
    %v10364 = vrot.slane %v10357, 1
    %v10365 = vsel %vm9823, %v10360, %v10364
    %v10366 = vrot.slane %v10358, 1
    %v10367 = vsel %vm9823, %v10361, %v10366
    %v10368 = vpack.c.b16 %v10365, %v10363
    %v10369 = vpack.c.b16 %v10367, %v10367
    %v10370 = vrot.slane %v10368, 3
    %v10371 = vrot.slane %v10369, 6
    %v10372 = vrot.slane %v10369, 1
    %v10375 = vsel %vm9789, %v10368, %v10370
    %v10378 = vsel %vm9793, %v10371, %v10372
    %v10379 = vsel %vm682, %v10375, %v10378
    %10381 = vrot.lane.b32.xlu0 %v10379, 64
    %v10382 = vpop.permute.xlu0 %10381
    %v10383 = vrot.slane %v10382, 7
    %v10384 = vsel %vm798, %v10383, %v10382
    %10386 = vst.msk [vmem:[#allocation8 + $0x16] sm:$0x7] %vm9917, %v10384
    %v10387 = vld [vmem:[#allocation8] sm:$0xff]
    %v10388 = vld [vmem:[#allocation8 + $0x8] sm:$0xff]
    %v10389 = vld [vmem:[#allocation8 + $0x10] sm:$0xff]
    %v10390 = vld [vmem:[#allocation8 + $0x18] sm:$0x1]
    %v10391 = vld [vmem:[#allocation9] sm:$0xff]
    %v10392 = vld [vmem:[#allocation9 + $0x8] sm:$0xff]
    %v10393 = vld [vmem:[#allocation9 + $0x10] sm:$0xff]
    %v10394 = vld [vmem:[#allocation9 + $0x18] sm:$0xff]
    %v10395 = vld [vmem:[#allocation9 + $0x20] sm:$0xff]
    %v10396 = vld [vmem:[#allocation9 + $0x28] sm:$0xff]
    %v10397 = vld [vmem:[#allocation9 + $0x30] sm:$0xff]
    %v10398 = vld [vmem:[#allocation9 + $0x38] sm:$0xff]
    %v10399 = vld [vmem:[#allocation9 + $0x40] sm:$0xff]
    %v10400 = vld [vmem:[#allocation9 + $0x48] sm:$0xff]
    %v10401 = vld [vmem:[#allocation9 + $0x50] sm:$0xff]
    %v10402 = vld [vmem:[#allocation9 + $0x58] sm:$0xff]
    %v10403 = vld [vmem:[#allocation9 + $0x60] sm:$0xff]
    %v10404 = vld [vmem:[#allocation9 + $0x68] sm:$0xff]
    %v10405 = vld [vmem:[#allocation9 + $0x70] sm:$0xff]
    %v10406 = vld [vmem:[#allocation9 + $0x78] sm:$0xff]
    %v10407 = vld [vmem:[#allocation9 + $0x80] sm:$0xff]
    %v10408 = vld [vmem:[#allocation9 + $0x88] sm:$0xff]
    %v10409 = vld [vmem:[#allocation9 + $0x90] sm:$0xff]
    %v10410 = vld [vmem:[#allocation9 + $0x98] sm:$0xff]
    %v10411 = vld [vmem:[#allocation9 + $0xa0] sm:$0xff]
    %v10412 = vld [vmem:[#allocation9 + $0xa8] sm:$0xff]
    %v10413 = vld [vmem:[#allocation9 + $0xb0] sm:$0xff]
    %v10414 = vld [vmem:[#allocation9 + $0xb8] sm:$0xff]
    %v10415 = vld [vmem:[#allocation9 + $0xc0] sm:$0xff]
    %v10416 = vld [vmem:[#allocation9 + $0xc8] sm:$0xff]
    %v10417 = vld [vmem:[#allocation9 + $0xd0] sm:$0xff]
    %v10418 = vld [vmem:[#allocation9 + $0xd8] sm:$0xff]
    %v10419 = vld [vmem:[#allocation9 + $0xe0] sm:$0xff]
    %v10420 = vld [vmem:[#allocation9 + $0xe8] sm:$0xff]
    %v10421 = vld [vmem:[#allocation9 + $0xf0] sm:$0xff]
    %v10422 = vld [vmem:[#allocation9 + $0xf8] sm:$0xff]
    %v10423 = vld [vmem:[#allocation9 + $0x100] sm:$0xff]
    %v10424 = vld [vmem:[#allocation9 + $0x108] sm:$0xff]
    %v10425 = vld [vmem:[#allocation9 + $0x110] sm:$0xff]
    %v10426 = vld [vmem:[#allocation9 + $0x118] sm:$0xff]
    %v10427 = vld [vmem:[#allocation9 + $0x120] sm:$0xff]
    %v10428 = vld [vmem:[#allocation9 + $0x128] sm:$0xff]
    %v10429 = vld [vmem:[#allocation9 + $0x130] sm:$0xff]
    %v10430 = vld [vmem:[#allocation9 + $0x138] sm:$0xff]
    %v10431 = vld [vmem:[#allocation9 + $0x140] sm:$0xff]
    %v10432 = vld [vmem:[#allocation9 + $0x148] sm:$0xff]
    %v10433 = vld [vmem:[#allocation9 + $0x150] sm:$0xff]
    %v10434 = vld [vmem:[#allocation9 + $0x158] sm:$0xff]
    %v10435 = vld [vmem:[#allocation9 + $0x160] sm:$0xff]
    %v10436 = vld [vmem:[#allocation9 + $0x168] sm:$0xff]
    %v10437 = vld [vmem:[#allocation9 + $0x170] sm:$0xff]
    %v10438 = vld [vmem:[#allocation9 + $0x178] sm:$0xff]
    %v10439 = vld [vmem:[#allocation9 + $0x180] sm:$0xff]
    %v10440 = vld [vmem:[#allocation9 + $0x188] sm:$0xff]
    %v10441 = vld [vmem:[#allocation9 + $0x190] sm:$0xff]
    %v10442 = vld [vmem:[#allocation9 + $0x198] sm:$0xff]
    %v10443 = vld [vmem:[#allocation9 + $0x1a0] sm:$0xff]
    %v10444 = vld [vmem:[#allocation9 + $0x1a8] sm:$0xff]
    %v10445 = vld [vmem:[#allocation9 + $0x1b0] sm:$0xff]
    %v10446 = vld [vmem:[#allocation9 + $0x1b8] sm:$0xff]
    %v10447 = vld [vmem:[#allocation9 + $0x1c0] sm:$0xff]
    %v10448 = vld [vmem:[#allocation9 + $0x1c8] sm:$0xff]
    %v10449 = vld [vmem:[#allocation9 + $0x1d0] sm:$0xff]
    %v10450 = vld [vmem:[#allocation9 + $0x1d8] sm:$0xff]
    %v10451 = vld [vmem:[#allocation9 + $0x1e0] sm:$0xff]
    %v10452 = vld [vmem:[#allocation9 + $0x1e8] sm:$0xff]
    %v10453 = vld [vmem:[#allocation9 + $0x1f0] sm:$0xff]
    %v10454 = vld [vmem:[#allocation9 + $0x1f8] sm:$0xff]
    %v10455 = vld [vmem:[#allocation9 + $0x200] sm:$0xff]
    %v10456 = vld [vmem:[#allocation9 + $0x208] sm:$0xff]
    %v10457 = vld [vmem:[#allocation9 + $0x210] sm:$0xff]
    %v10458 = vld [vmem:[#allocation9 + $0x218] sm:$0xff]
    %v10459 = vld [vmem:[#allocation9 + $0x220] sm:$0xff]
    %v10460 = vld [vmem:[#allocation9 + $0x228] sm:$0xff]
    %v10461 = vld [vmem:[#allocation9 + $0x230] sm:$0xff]
    %v10462 = vld [vmem:[#allocation9 + $0x238] sm:$0xff]
    %v10463 = vld [vmem:[#allocation9 + $0x240] sm:$0xff]
    %v10464 = vld [vmem:[#allocation9 + $0x248] sm:$0xff]
    %v10465 = vld [vmem:[#allocation9 + $0x250] sm:$0xff]
    %v10466 = vld [vmem:[#allocation9 + $0x258] sm:$0xff]
    %v10467 = vld [vmem:[#allocation9 + $0x260] sm:$0xff]
    %v10468 = vld [vmem:[#allocation9 + $0x268] sm:$0xff]
    %v10469 = vld [vmem:[#allocation9 + $0x270] sm:$0xff]
    %v10470 = vld [vmem:[#allocation9 + $0x278] sm:$0xff]
    %v10471 = vld [vmem:[#allocation9 + $0x280] sm:$0xff]
    %v10472 = vld [vmem:[#allocation9 + $0x288] sm:$0xff]
    %v10473 = vld [vmem:[#allocation9 + $0x290] sm:$0xff]
    %v10474 = vld [vmem:[#allocation9 + $0x298] sm:$0xff]
    %v10475 = vld [vmem:[#allocation9 + $0x2a0] sm:$0xff]
    %v10476 = vld [vmem:[#allocation9 + $0x2a8] sm:$0xff]
    %v10477 = vld [vmem:[#allocation9 + $0x2b0] sm:$0xff]
    %v10478 = vld [vmem:[#allocation9 + $0x2b8] sm:$0xff]
    %v10479 = vld [vmem:[#allocation9 + $0x2c0] sm:$0xff]
    %v10480 = vld [vmem:[#allocation9 + $0x2c8] sm:$0xff]
    %v10481 = vld [vmem:[#allocation9 + $0x2d0] sm:$0xff]
    %v10482 = vld [vmem:[#allocation9 + $0x2d8] sm:$0xff]
    %v10483 = vld [vmem:[#allocation9 + $0x2e0] sm:$0xff]
    %v10484 = vld [vmem:[#allocation9 + $0x2e8] sm:$0xff]
    %v10485 = vld [vmem:[#allocation9 + $0x2f0] sm:$0xff]
    %v10486 = vld [vmem:[#allocation9 + $0x2f8] sm:$0xff]
    %v10487 = vld [vmem:[#allocation9 + $0x300] sm:$0xff]
    %v10488 = vld [vmem:[#allocation9 + $0x308] sm:$0xff]
    %v10489 = vld [vmem:[#allocation9 + $0x310] sm:$0xff]
    %v10490 = vld [vmem:[#allocation9 + $0x318] sm:$0xff]
    %v10491 = vld [vmem:[#allocation9 + $0x320] sm:$0xff]
    %v10492 = vld [vmem:[#allocation9 + $0x328] sm:$0xff]
    %v10493 = vld [vmem:[#allocation9 + $0x330] sm:$0xff]
    %v10494 = vld [vmem:[#allocation9 + $0x338] sm:$0xff]
    %v10495 = vld [vmem:[#allocation9 + $0x340] sm:$0xff]
    %v10496 = vld [vmem:[#allocation9 + $0x348] sm:$0xff]
    %v10497 = vld [vmem:[#allocation9 + $0x350] sm:$0xff]
    %v10498 = vld [vmem:[#allocation9 + $0x358] sm:$0xff]
    %v10499 = vld [vmem:[#allocation9 + $0x360] sm:$0xff]
    %v10500 = vld [vmem:[#allocation9 + $0x368] sm:$0xff]
    %v10501 = vld [vmem:[#allocation9 + $0x370] sm:$0xff]
    %v10502 = vld [vmem:[#allocation9 + $0x378] sm:$0xff]
    %v10503 = vld [vmem:[#allocation9 + $0x380] sm:$0xff]
    %v10504 = vld [vmem:[#allocation9 + $0x388] sm:$0xff]
    %v10505 = vld [vmem:[#allocation9 + $0x390] sm:$0xff]
    %v10506 = vld [vmem:[#allocation9 + $0x398] sm:$0xff]
    %v10507 = vld [vmem:[#allocation9 + $0x3a0] sm:$0xff]
    %v10508 = vld [vmem:[#allocation9 + $0x3a8] sm:$0xff]
    %v10509 = vld [vmem:[#allocation9 + $0x3b0] sm:$0xff]
    %v10510 = vld [vmem:[#allocation9 + $0x3b8] sm:$0xff]
    %v10511 = vld [vmem:[#allocation9 + $0x3c0] sm:$0xff]
    %v10512 = vld [vmem:[#allocation9 + $0x3c8] sm:$0xff]
    %v10513 = vld [vmem:[#allocation9 + $0x3d0] sm:$0xff]
    %v10514 = vld [vmem:[#allocation9 + $0x3d8] sm:$0xff]
    %v10515 = vld [vmem:[#allocation9 + $0x3e0] sm:$0xff]
    %v10516 = vld [vmem:[#allocation9 + $0x3e8] sm:$0xff]
    %v10517 = vld [vmem:[#allocation9 + $0x3f0] sm:$0xff]
    %v10518 = vld [vmem:[#allocation9 + $0x3f8] sm:$0xff]
    %v10519 = vld [vmem:[#allocation9 + $0x400] sm:$0xff]
    %v10520 = vld [vmem:[#allocation9 + $0x408] sm:$0xff]
    %v10521 = vld [vmem:[#allocation9 + $0x410] sm:$0xff]
    %v10522 = vld [vmem:[#allocation9 + $0x418] sm:$0xff]
    %v10523 = vld [vmem:[#allocation9 + $0x420] sm:$0xff]
    %v10524 = vld [vmem:[#allocation9 + $0x428] sm:$0xff]
    %v10525 = vld [vmem:[#allocation9 + $0x430] sm:$0xff]
    %v10526 = vld [vmem:[#allocation9 + $0x438] sm:$0xff]
    %v10527 = vld [vmem:[#allocation9 + $0x440] sm:$0xff]
    %v10528 = vld [vmem:[#allocation9 + $0x448] sm:$0xff]
    %v10529 = vld [vmem:[#allocation9 + $0x450] sm:$0xff]
    %v10530 = vld [vmem:[#allocation9 + $0x458] sm:$0xff]
    %v10531 = vld [vmem:[#allocation9 + $0x460] sm:$0xff]
    %v10532 = vld [vmem:[#allocation9 + $0x468] sm:$0xff]
    %v10533 = vld [vmem:[#allocation9 + $0x470] sm:$0xff]
    %v10534 = vld [vmem:[#allocation9 + $0x478] sm:$0xff]
    %v10535 = vld [vmem:[#allocation9 + $0x480] sm:$0xff]
    %v10536 = vld [vmem:[#allocation9 + $0x488] sm:$0xff]
    %v10537 = vld [vmem:[#allocation9 + $0x490] sm:$0xff]
    %v10538 = vld [vmem:[#allocation9 + $0x498] sm:$0xff]
    %v10539 = vld [vmem:[#allocation9 + $0x4a0] sm:$0xff]
    %v10540 = vld [vmem:[#allocation9 + $0x4a8] sm:$0xff]
    %v10541 = vld [vmem:[#allocation9 + $0x4b0] sm:$0xff]
    %v10542 = vld [vmem:[#allocation9 + $0x4b8] sm:$0xff]
    %v10543 = vld [vmem:[#allocation9 + $0x4c0] sm:$0xff]
    %v10544 = vld [vmem:[#allocation9 + $0x4c8] sm:$0xff]
    %v10545 = vld [vmem:[#allocation9 + $0x4d0] sm:$0xff]
    %v10546 = vld [vmem:[#allocation9 + $0x4d8] sm:$0xff]
    %v10547 = vld [vmem:[#allocation9 + $0x4e0] sm:$0xff]
    %v10548 = vld [vmem:[#allocation9 + $0x4e8] sm:$0xff]
    %v10549 = vld [vmem:[#allocation9 + $0x4f0] sm:$0xff]
    %v10550 = vld [vmem:[#allocation9 + $0x4f8] sm:$0xff]
    %v10551 = vld [vmem:[#allocation9 + $0x500] sm:$0xff]
    %v10552 = vld [vmem:[#allocation9 + $0x508] sm:$0xff]
    %v10553 = vld [vmem:[#allocation9 + $0x510] sm:$0xff]
    %v10554 = vld [vmem:[#allocation9 + $0x518] sm:$0xff]
    %v10555 = vld [vmem:[#allocation9 + $0x520] sm:$0xff]
    %v10556 = vld [vmem:[#allocation9 + $0x528] sm:$0xff]
    %v10557 = vld [vmem:[#allocation9 + $0x530] sm:$0xff]
    %v10558 = vld [vmem:[#allocation9 + $0x538] sm:$0xff]
    %v10559 = vld [vmem:[#allocation9 + $0x540] sm:$0xff]
    %v10560 = vld [vmem:[#allocation9 + $0x548] sm:$0xff]
    %v10561 = vld [vmem:[#allocation9 + $0x550] sm:$0xff]
    %v10562 = vld [vmem:[#allocation9 + $0x558] sm:$0xff]
    %v10563 = vld [vmem:[#allocation9 + $0x560] sm:$0xff]
    %v10564 = vld [vmem:[#allocation9 + $0x568] sm:$0xff]
    %v10565 = vld [vmem:[#allocation9 + $0x570] sm:$0xff]
    %v10566 = vld [vmem:[#allocation9 + $0x578] sm:$0xff]
    %v10567 = vld [vmem:[#allocation9 + $0x580] sm:$0xff]
    %v10568 = vld [vmem:[#allocation9 + $0x588] sm:$0xff]
    %v10569 = vld [vmem:[#allocation9 + $0x590] sm:$0xff]
    %v10570 = vld [vmem:[#allocation9 + $0x598] sm:$0xff]
    %v10571 = vld [vmem:[#allocation9 + $0x5a0] sm:$0xff]
    %v10572 = vld [vmem:[#allocation9 + $0x5a8] sm:$0xff]
    %v10573 = vld [vmem:[#allocation9 + $0x5b0] sm:$0xff]
    %v10574 = vld [vmem:[#allocation9 + $0x5b8] sm:$0xff]
    %v10575 = vld [vmem:[#allocation9 + $0x5c0] sm:$0xff]
    %v10576 = vld [vmem:[#allocation9 + $0x5c8] sm:$0xff]
    %v10577 = vld [vmem:[#allocation9 + $0x5d0] sm:$0xff]
    %v10578 = vld [vmem:[#allocation9 + $0x5d8] sm:$0xff]
    %v10579 = vld [vmem:[#allocation9 + $0x5e0] sm:$0xff]
    %v10580 = vld [vmem:[#allocation9 + $0x5e8] sm:$0xff]
    %v10581 = vld [vmem:[#allocation9 + $0x5f0] sm:$0xff]
    %v10582 = vld [vmem:[#allocation9 + $0x5f8] sm:$0xff]
    %v10583 = vld [vmem:[#allocation9 + $0x600] sm:$0xff]
    %v10584 = vld [vmem:[#allocation9 + $0x608] sm:$0xff]
    %v10585 = vld [vmem:[#allocation9 + $0x610] sm:$0xff]
    %v10586 = vld [vmem:[#allocation9 + $0x618] sm:$0xff]
    %v10587 = vld [vmem:[#allocation9 + $0x620] sm:$0xff]
    %v10588 = vld [vmem:[#allocation9 + $0x628] sm:$0xff]
    %v10589 = vld [vmem:[#allocation9 + $0x630] sm:$0xff]
    %v10590 = vld [vmem:[#allocation9 + $0x638] sm:$0xff]
    %v10591 = vld [vmem:[#allocation9 + $0x640] sm:$0xff]
    %v10592 = vld [vmem:[#allocation9 + $0x648] sm:$0xff]
    %v10593 = vld [vmem:[#allocation9 + $0x650] sm:$0xff]
    %v10594 = vld [vmem:[#allocation9 + $0x658] sm:$0xff]
    %v10595 = vld [vmem:[#allocation9 + $0x660] sm:$0xff]
    %v10596 = vld [vmem:[#allocation9 + $0x668] sm:$0xff]
    %v10597 = vld [vmem:[#allocation9 + $0x670] sm:$0xff]
    %v10598 = vld [vmem:[#allocation9 + $0x678] sm:$0xff]
    %v10599 = vld [vmem:[#allocation9 + $0x680] sm:$0xff]
    %v10600 = vld [vmem:[#allocation9 + $0x688] sm:$0xff]
    %v10601 = vld [vmem:[#allocation9 + $0x690] sm:$0xff]
    %v10602 = vld [vmem:[#allocation9 + $0x698] sm:$0xff]
    %v10603 = vld [vmem:[#allocation9 + $0x6a0] sm:$0xff]
    %v10604 = vld [vmem:[#allocation9 + $0x6a8] sm:$0xff]
    %v10605 = vld [vmem:[#allocation9 + $0x6b0] sm:$0xff]
    %v10606 = vld [vmem:[#allocation9 + $0x6b8] sm:$0xff]
    %v10607 = vld [vmem:[#allocation9 + $0x6c0] sm:$0xff]
    %v10608 = vld [vmem:[#allocation9 + $0x6c8] sm:$0xff]
    %v10609 = vld [vmem:[#allocation9 + $0x6d0] sm:$0xff]
    %v10610 = vld [vmem:[#allocation9 + $0x6d8] sm:$0xff]
    %v10611 = vld [vmem:[#allocation9 + $0x6e0] sm:$0xff]
    %v10612 = vld [vmem:[#allocation9 + $0x6e8] sm:$0xff]
    %v10613 = vld [vmem:[#allocation9 + $0x6f0] sm:$0xff]
    %v10614 = vld [vmem:[#allocation9 + $0x6f8] sm:$0xff]
    %v10615 = vld [vmem:[#allocation9 + $0x700] sm:$0xff]
    %v10616 = vld [vmem:[#allocation9 + $0x708] sm:$0xff]
    %v10617 = vld [vmem:[#allocation9 + $0x710] sm:$0xff]
    %v10618 = vld [vmem:[#allocation9 + $0x718] sm:$0xff]
    %v10619 = vld [vmem:[#allocation9 + $0x720] sm:$0xff]
    %v10620 = vld [vmem:[#allocation9 + $0x728] sm:$0xff]
    %v10621 = vld [vmem:[#allocation9 + $0x730] sm:$0xff]
    %v10622 = vld [vmem:[#allocation9 + $0x738] sm:$0xff]
    %v10623 = vld [vmem:[#allocation9 + $0x740] sm:$0xff]
    %v10624 = vld [vmem:[#allocation9 + $0x748] sm:$0xff]
    %v10625 = vld [vmem:[#allocation9 + $0x750] sm:$0xff]
    %v10626 = vld [vmem:[#allocation9 + $0x758] sm:$0xff]
    %v10627 = vld [vmem:[#allocation9 + $0x760] sm:$0xff]
    %v10628 = vld [vmem:[#allocation9 + $0x768] sm:$0xff]
    %v10629 = vld [vmem:[#allocation9 + $0x770] sm:$0xff]
    %v10630 = vld [vmem:[#allocation9 + $0x778] sm:$0xff]
    %v10631 = vld [vmem:[#allocation9 + $0x780] sm:$0xff]
    %v10632 = vld [vmem:[#allocation9 + $0x788] sm:$0xff]
    %v10633 = vld [vmem:[#allocation9 + $0x790] sm:$0xff]
    %v10634 = vld [vmem:[#allocation9 + $0x798] sm:$0xff]
    %v10635 = vld [vmem:[#allocation9 + $0x7a0] sm:$0xff]
    %v10636 = vld [vmem:[#allocation9 + $0x7a8] sm:$0xff]
    %v10637 = vld [vmem:[#allocation9 + $0x7b0] sm:$0xff]
    %v10638 = vld [vmem:[#allocation9 + $0x7b8] sm:$0xff]
    %v10639 = vld [vmem:[#allocation9 + $0x7c0] sm:$0xff]
    %v10640 = vld [vmem:[#allocation9 + $0x7c8] sm:$0xff]
    %v10641 = vld [vmem:[#allocation9 + $0x7d0] sm:$0xff]
    %v10642 = vld [vmem:[#allocation9 + $0x7d8] sm:$0xff]
    %v10643 = vld [vmem:[#allocation9 + $0x7e0] sm:$0xff]
    %v10644 = vld [vmem:[#allocation9 + $0x7e8] sm:$0xff]
    %v10645 = vld [vmem:[#allocation9 + $0x7f0] sm:$0xff]
    %v10646 = vld [vmem:[#allocation9 + $0x7f8] sm:$0xff]
    %v10647 = vld [vmem:[#allocation9 + $0x800] sm:$0xff]
    %v10648 = vld [vmem:[#allocation9 + $0x808] sm:$0xff]
    %v10649 = vld [vmem:[#allocation9 + $0x810] sm:$0xff]
    %v10650 = vld [vmem:[#allocation9 + $0x818] sm:$0xff]
    %v10651 = vld [vmem:[#allocation9 + $0x820] sm:$0xff]
    %v10652 = vld [vmem:[#allocation9 + $0x828] sm:$0xff]
    %v10653 = vld [vmem:[#allocation9 + $0x830] sm:$0xff]
    %v10654 = vld [vmem:[#allocation9 + $0x838] sm:$0xff]
    %v10655 = vld [vmem:[#allocation9 + $0x840] sm:$0xff]
    %v10656 = vld [vmem:[#allocation9 + $0x848] sm:$0xff]
    %v10657 = vld [vmem:[#allocation9 + $0x850] sm:$0xff]
    %v10658 = vld [vmem:[#allocation9 + $0x858] sm:$0xff]
    %v10659 = vld [vmem:[#allocation9 + $0x860] sm:$0xff]
    %v10660 = vld [vmem:[#allocation9 + $0x868] sm:$0xff]
    %v10661 = vld [vmem:[#allocation9 + $0x870] sm:$0xff]
    %v10662 = vld [vmem:[#allocation9 + $0x878] sm:$0xff]
    %v10663 = vld [vmem:[#allocation9 + $0x880] sm:$0xff]
    %v10664 = vld [vmem:[#allocation9 + $0x888] sm:$0xff]
    %v10665 = vld [vmem:[#allocation9 + $0x890] sm:$0xff]
    %v10666 = vld [vmem:[#allocation9 + $0x898] sm:$0xff]
    %v10667 = vld [vmem:[#allocation9 + $0x8a0] sm:$0xff]
    %v10668 = vld [vmem:[#allocation9 + $0x8a8] sm:$0xff]
    %v10669 = vld [vmem:[#allocation9 + $0x8b0] sm:$0xff]
    %v10670 = vld [vmem:[#allocation9 + $0x8b8] sm:$0xff]
    %v10671 = vld [vmem:[#allocation9 + $0x8c0] sm:$0xff]
    %v10672 = vld [vmem:[#allocation9 + $0x8c8] sm:$0xff]
    %v10673 = vld [vmem:[#allocation9 + $0x8d0] sm:$0xff]
    %v10674 = vld [vmem:[#allocation9 + $0x8d8] sm:$0xff]
    %v10675 = vld [vmem:[#allocation9 + $0x8e0] sm:$0xff]
    %v10676 = vld [vmem:[#allocation9 + $0x8e8] sm:$0xff]
    %v10677 = vld [vmem:[#allocation9 + $0x8f0] sm:$0xff]
    %v10678 = vld [vmem:[#allocation9 + $0x8f8] sm:$0xff]
    %v10679 = vld [vmem:[#allocation9 + $0x900] sm:$0xff]
    %v10680 = vld [vmem:[#allocation9 + $0x908] sm:$0xff]
    %v10681 = vld [vmem:[#allocation9 + $0x910] sm:$0xff]
    %v10682 = vld [vmem:[#allocation9 + $0x918] sm:$0xff]
    %v10683 = vld [vmem:[#allocation9 + $0x920] sm:$0xff]
    %v10684 = vld [vmem:[#allocation9 + $0x928] sm:$0xff]
    %v10685 = vld [vmem:[#allocation9 + $0x930] sm:$0xff]
    %v10686 = vld [vmem:[#allocation9 + $0x938] sm:$0xff]
    %v10687 = vld [vmem:[#allocation9 + $0x940] sm:$0xff]
    %v10688 = vld [vmem:[#allocation9 + $0x948] sm:$0xff]
    %v10689 = vld [vmem:[#allocation9 + $0x950] sm:$0xff]
    %v10690 = vld [vmem:[#allocation9 + $0x958] sm:$0xff]
    %v10691 = vld [vmem:[#allocation9 + $0x960] sm:$0xff]
    %v10692 = vld [vmem:[#allocation9 + $0x968] sm:$0xff]
    %v10693 = vld [vmem:[#allocation9 + $0x970] sm:$0xff]
    %v10694 = vld [vmem:[#allocation9 + $0x978] sm:$0xff]
    %v10695 = vld [vmem:[#allocation9 + $0x980] sm:$0xff]
    %v10696 = vld [vmem:[#allocation9 + $0x988] sm:$0xff]
    %v10697 = vld [vmem:[#allocation9 + $0x990] sm:$0xff]
    %v10698 = vld [vmem:[#allocation9 + $0x998] sm:$0xff]
    %v10699 = vld [vmem:[#allocation9 + $0x9a0] sm:$0xff]
    %v10700 = vld [vmem:[#allocation9 + $0x9a8] sm:$0xff]
    %v10701 = vld [vmem:[#allocation9 + $0x9b0] sm:$0xff]
    %v10702 = vld [vmem:[#allocation9 + $0x9b8] sm:$0xff]
    %v10703 = vld [vmem:[#allocation9 + $0x9c0] sm:$0xff]
    %v10704 = vld [vmem:[#allocation9 + $0x9c8] sm:$0xff]
    %v10705 = vld [vmem:[#allocation9 + $0x9d0] sm:$0xff]
    %v10706 = vld [vmem:[#allocation9 + $0x9d8] sm:$0xff]
    %v10707 = vld [vmem:[#allocation9 + $0x9e0] sm:$0xff]
    %v10708 = vld [vmem:[#allocation9 + $0x9e8] sm:$0xff]
    %v10709 = vld [vmem:[#allocation9 + $0x9f0] sm:$0xff]
    %v10710 = vld [vmem:[#allocation9 + $0x9f8] sm:$0xff]
    %v10711 = vld [vmem:[#allocation9 + $0xa00] sm:$0xff]
    %v10712 = vld [vmem:[#allocation9 + $0xa08] sm:$0xff]
    %v10713 = vld [vmem:[#allocation9 + $0xa10] sm:$0xff]
    %v10714 = vld [vmem:[#allocation9 + $0xa18] sm:$0xff]
    %v10715 = vld [vmem:[#allocation9 + $0xa20] sm:$0xff]
    %v10716 = vld [vmem:[#allocation9 + $0xa28] sm:$0xff]
    %v10717 = vld [vmem:[#allocation9 + $0xa30] sm:$0xff]
    %v10718 = vld [vmem:[#allocation9 + $0xa38] sm:$0xff]
    %v10719 = vld [vmem:[#allocation9 + $0xa40] sm:$0xff]
    %v10720 = vld [vmem:[#allocation9 + $0xa48] sm:$0xff]
    %v10721 = vld [vmem:[#allocation9 + $0xa50] sm:$0xff]
    %v10722 = vld [vmem:[#allocation9 + $0xa58] sm:$0xff]
    %v10723 = vld [vmem:[#allocation9 + $0xa60] sm:$0xff]
    %v10724 = vld [vmem:[#allocation9 + $0xa68] sm:$0xff]
    %v10725 = vld [vmem:[#allocation9 + $0xa70] sm:$0xff]
    %v10726 = vld [vmem:[#allocation9 + $0xa78] sm:$0xff]
    %v10727 = vld [vmem:[#allocation9 + $0xa80] sm:$0xff]
    %v10728 = vld [vmem:[#allocation9 + $0xa88] sm:$0xff]
    %v10729 = vld [vmem:[#allocation9 + $0xa90] sm:$0xff]
    %v10730 = vld [vmem:[#allocation9 + $0xa98] sm:$0xff]
    %v10731 = vld [vmem:[#allocation9 + $0xaa0] sm:$0xff]
    %v10732 = vld [vmem:[#allocation9 + $0xaa8] sm:$0xff]
    %v10733 = vld [vmem:[#allocation9 + $0xab0] sm:$0xff]
    %v10734 = vld [vmem:[#allocation9 + $0xab8] sm:$0xff]
    %v10735 = vld [vmem:[#allocation9 + $0xac0] sm:$0xff]
    %v10736 = vld [vmem:[#allocation9 + $0xac8] sm:$0xff]
    %v10737 = vld [vmem:[#allocation9 + $0xad0] sm:$0xff]
    %v10738 = vld [vmem:[#allocation9 + $0xad8] sm:$0xff]
    %v10739 = vld [vmem:[#allocation9 + $0xae0] sm:$0xff]
    %v10740 = vld [vmem:[#allocation9 + $0xae8] sm:$0xff]
    %v10741 = vld [vmem:[#allocation9 + $0xaf0] sm:$0xff]
    %v10742 = vld [vmem:[#allocation9 + $0xaf8] sm:$0xff]
    %v10743 = vld [vmem:[#allocation9 + $0xb00] sm:$0xff]
    %v10744 = vld [vmem:[#allocation9 + $0xb08] sm:$0xff]
    %v10745 = vld [vmem:[#allocation9 + $0xb10] sm:$0xff]
    %v10746 = vld [vmem:[#allocation9 + $0xb18] sm:$0xff]
    %v10747 = vld [vmem:[#allocation9 + $0xb20] sm:$0xff]
    %v10748 = vld [vmem:[#allocation9 + $0xb28] sm:$0xff]
    %v10749 = vld [vmem:[#allocation9 + $0xb30] sm:$0xff]
    %v10750 = vld [vmem:[#allocation9 + $0xb38] sm:$0xff]
    %v10751 = vld [vmem:[#allocation9 + $0xb40] sm:$0xff]
    %v10752 = vld [vmem:[#allocation9 + $0xb48] sm:$0xff]
    %v10753 = vld [vmem:[#allocation9 + $0xb50] sm:$0xff]
    %v10754 = vld [vmem:[#allocation9 + $0xb58] sm:$0xff]
    %v10755 = vld [vmem:[#allocation9 + $0xb60] sm:$0xff]
    %v10756 = vld [vmem:[#allocation9 + $0xb68] sm:$0xff]
    %v10757 = vld [vmem:[#allocation9 + $0xb70] sm:$0xff]
    %v10758 = vld [vmem:[#allocation9 + $0xb78] sm:$0xff]
    %v10759 = vld [vmem:[#allocation9 + $0xb80] sm:$0xff]
    %v10760 = vld [vmem:[#allocation9 + $0xb88] sm:$0xff]
    %v10761 = vld [vmem:[#allocation9 + $0xb90] sm:$0xff]
    %v10762 = vld [vmem:[#allocation9 + $0xb98] sm:$0xff]
    %v10763 = vld [vmem:[#allocation9 + $0xba0] sm:$0xff]
    %v10764 = vld [vmem:[#allocation9 + $0xba8] sm:$0xff]
    %v10765 = vld [vmem:[#allocation9 + $0xbb0] sm:$0xff]
    %v10766 = vld [vmem:[#allocation9 + $0xbb8] sm:$0xff]
    %v10767 = vld [vmem:[#allocation9 + $0xbc0] sm:$0xff]
    %v10768 = vld [vmem:[#allocation9 + $0xbc8] sm:$0xff]
    %v10769 = vld [vmem:[#allocation9 + $0xbd0] sm:$0xff]
    %v10770 = vld [vmem:[#allocation9 + $0xbd8] sm:$0xff]
    %v10771 = vld [vmem:[#allocation9 + $0xbe0] sm:$0xff]
    %v10772 = vld [vmem:[#allocation9 + $0xbe8] sm:$0xff]
    %v10773 = vld [vmem:[#allocation9 + $0xbf0] sm:$0xff]
    %v10774 = vld [vmem:[#allocation9 + $0xbf8] sm:$0xff]
    %v10775 = vld [vmem:[#allocation9 + $0xc00] sm:$0xff]
    %v10776 = vld [vmem:[#allocation9 + $0xc08] sm:$0xff]
    %v10777 = vld [vmem:[#allocation9 + $0xc10] sm:$0xff]
    %v10778 = vld [vmem:[#allocation9 + $0xc18] sm:$0xff]
    %v10779 = vld [vmem:[#allocation9 + $0xc20] sm:$0xff]
    %v10780 = vld [vmem:[#allocation9 + $0xc28] sm:$0xff]
    %v10781 = vld [vmem:[#allocation9 + $0xc30] sm:$0xff]
    %v10782 = vld [vmem:[#allocation9 + $0xc38] sm:$0xff]
    %v10783 = vld [vmem:[#allocation9 + $0xc40] sm:$0xff]
    %v10784 = vld [vmem:[#allocation9 + $0xc48] sm:$0xff]
    %v10785 = vld [vmem:[#allocation9 + $0xc50] sm:$0xff]
    %v10786 = vld [vmem:[#allocation9 + $0xc58] sm:$0xff]
    %v10787 = vld [vmem:[#allocation9 + $0xc60] sm:$0xff]
    %v10788 = vld [vmem:[#allocation9 + $0xc68] sm:$0xff]
    %v10789 = vld [vmem:[#allocation9 + $0xc70] sm:$0xff]
    %v10790 = vld [vmem:[#allocation9 + $0xc78] sm:$0xff]
    %v10791 = vld [vmem:[%s8] sm:$0x3]
    %v10793 = vperm.slane %v10791, 0
    %v10794 = vperm.slane %v10791, 1
    %10798 = vst [vmem:[#allocation1] ss:$9 sm:$0xff] %v10387
    %v10799 = vld [vmem:[#allocation1] sm:$0xff]
    %v10800 = vld [vmem:[#allocation1 + $0x9] sm:$0xff]
    %v10801 = vld [vmem:[#allocation1 + $0x12] sm:$0xff]
    %v10802 = vld [vmem:[#allocation1 + $0x1b] sm:$0xff]
    %v10803 = vld [vmem:[#allocation1 + $0x24] sm:$0xff]
    %v10804 = vld [vmem:[#allocation1 + $0x2d] sm:$0xff]
    %v10805 = vld [vmem:[#allocation1 + $0x36] sm:$0xff]
    %v10806 = vld [vmem:[#allocation1 + $0x3f] sm:$0xff]
    %10808 = vst [vmem:[#allocation1] ss:$9 sm:$0xff] %v10388
    %v10809 = vld [vmem:[#allocation1] sm:$0xff]
    %v10810 = vld [vmem:[#allocation1 + $0x9] sm:$0xff]
    %v10811 = vld [vmem:[#allocation1 + $0x12] sm:$0xff]
    %v10812 = vld [vmem:[#allocation1 + $0x1b] sm:$0xff]
    %v10813 = vld [vmem:[#allocation1 + $0x24] sm:$0xff]
    %v10814 = vld [vmem:[#allocation1 + $0x2d] sm:$0xff]
    %v10815 = vld [vmem:[#allocation1 + $0x36] sm:$0xff]
    %v10816 = vld [vmem:[#allocation1 + $0x3f] sm:$0xff]
    %10818 = vst [vmem:[#allocation1] ss:$9 sm:$0xff] %v10389
    %v10819 = vld [vmem:[#allocation1] sm:$0xff]
    %v10820 = vld [vmem:[#allocation1 + $0x9] sm:$0xff]
    %v10821 = vld [vmem:[#allocation1 + $0x12] sm:$0xff]
    %v10822 = vld [vmem:[#allocation1 + $0x1b] sm:$0xff]
    %v10823 = vld [vmem:[#allocation1 + $0x24] sm:$0xff]
    %v10824 = vld [vmem:[#allocation1 + $0x2d] sm:$0xff]
    %v10825 = vld [vmem:[#allocation1 + $0x36] sm:$0xff]
    %v10826 = vld [vmem:[#allocation1 + $0x3f] sm:$0xff]
    %10828 = vst [vmem:[#allocation1] ss:$9 sm:$0xff] %v10390
    %v10829 = vld [vmem:[#allocation1] sm:$0xff]
    %v11255 = vunpack.c.l.b16 %v10391
    %v11256 = vunpack.c.h.b16 %v10391
    %v11257 = vunpack.c.l.b16 %v10392
    %v11258 = vunpack.c.h.b16 %v10392
    %v11259 = vunpack.c.l.b16 %v10393
    %v11260 = vunpack.c.h.b16 %v10393
    %v11261 = vunpack.c.l.b16 %v10394
    %v11262 = vunpack.c.h.b16 %v10394
    %v11263 = vunpack.c.l.b16 %v10395
    %v11264 = vunpack.c.h.b16 %v10395
    %v11265 = vunpack.c.l.b16 %v10396
    %v11266 = vunpack.c.h.b16 %v10396
    %v11267 = vunpack.c.l.b16 %v10397
    %v11268 = vunpack.c.h.b16 %v10397
    %v11269 = vunpack.c.l.b16 %v10398
    %v11270 = vunpack.c.h.b16 %v10398
    %v11271 = vunpack.c.l.b16 %v10399
    %v11272 = vunpack.c.h.b16 %v10399
    %v11273 = vunpack.c.l.b16 %v10400
    %v11274 = vunpack.c.h.b16 %v10400
    %v11275 = vunpack.c.l.b16 %v10401
    %v11276 = vunpack.c.h.b16 %v10401
    %v11277 = vunpack.c.l.b16 %v10402
    %v11278 = vunpack.c.h.b16 %v10402
    %v11279 = vunpack.c.l.b16 %v10403
    %v11280 = vunpack.c.h.b16 %v10403
    %v11281 = vunpack.c.l.b16 %v10404
    %v11282 = vunpack.c.h.b16 %v10404
    %v11283 = vunpack.c.l.b16 %v10405
    %v11284 = vunpack.c.h.b16 %v10405
    %v11285 = vunpack.c.l.b16 %v10406
    %v11286 = vunpack.c.h.b16 %v10406
    %v11287 = vunpack.c.l.b16 %v10407
    %v11288 = vunpack.c.h.b16 %v10407
    %v11289 = vunpack.c.l.b16 %v10408
    %v11290 = vunpack.c.h.b16 %v10408
    %v11291 = vunpack.c.l.b16 %v10409
    %v11292 = vunpack.c.h.b16 %v10409
    %v11293 = vunpack.c.l.b16 %v10410
    %v11294 = vunpack.c.h.b16 %v10410
    %v11295 = vunpack.c.l.b16 %v10411
    %v11296 = vunpack.c.h.b16 %v10411
    %v11297 = vunpack.c.l.b16 %v10412
    %v11298 = vunpack.c.h.b16 %v10412
    %v11299 = vunpack.c.l.b16 %v10413
    %v11300 = vunpack.c.h.b16 %v10413
    %v11301 = vunpack.c.l.b16 %v10414
    %v11302 = vunpack.c.h.b16 %v10414
    %v11303 = vunpack.c.l.b16 %v10415
    %v11304 = vunpack.c.h.b16 %v10415
    %v11305 = vunpack.c.l.b16 %v10416
    %v11306 = vunpack.c.h.b16 %v10416
    %v11307 = vunpack.c.l.b16 %v10417
    %v11308 = vunpack.c.h.b16 %v10417
    %v11309 = vunpack.c.l.b16 %v10418
    %v11310 = vunpack.c.h.b16 %v10418
    %v11311 = vunpack.c.l.b16 %v10419
    %v11312 = vunpack.c.h.b16 %v10419
    %v11313 = vunpack.c.l.b16 %v10420
    %v11314 = vunpack.c.h.b16 %v10420
    %v11315 = vunpack.c.l.b16 %v10421
    %v11316 = vunpack.c.h.b16 %v10421
    %v11317 = vunpack.c.l.b16 %v10422
    %v11318 = vunpack.c.h.b16 %v10422
    %v11319 = vunpack.c.l.b16 %v10423
    %v11320 = vunpack.c.h.b16 %v10423
    %v11321 = vunpack.c.l.b16 %v10424
    %v11322 = vunpack.c.h.b16 %v10424
    %v11323 = vunpack.c.l.b16 %v10425
    %v11324 = vunpack.c.h.b16 %v10425
    %v11325 = vunpack.c.l.b16 %v10426
    %v11326 = vunpack.c.h.b16 %v10426
    %v11327 = vunpack.c.l.b16 %v10427
    %v11328 = vunpack.c.h.b16 %v10427
    %v11329 = vunpack.c.l.b16 %v10428
    %v11330 = vunpack.c.h.b16 %v10428
    %v11331 = vunpack.c.l.b16 %v10429
    %v11332 = vunpack.c.h.b16 %v10429
    %v11333 = vunpack.c.l.b16 %v10430
    %v11334 = vunpack.c.h.b16 %v10430
    %v11335 = vunpack.c.l.b16 %v10431
    %v11336 = vunpack.c.h.b16 %v10431
    %v11337 = vunpack.c.l.b16 %v10432
    %v11338 = vunpack.c.h.b16 %v10432
    %v11339 = vunpack.c.l.b16 %v10433
    %v11340 = vunpack.c.h.b16 %v10433
    %v11341 = vunpack.c.l.b16 %v10434
    %v11342 = vunpack.c.h.b16 %v10434
    %v11343 = vunpack.c.l.b16 %v10435
    %v11344 = vunpack.c.h.b16 %v10435
    %v11345 = vunpack.c.l.b16 %v10436
    %v11346 = vunpack.c.h.b16 %v10436
    %v11347 = vunpack.c.l.b16 %v10437
    %v11348 = vunpack.c.h.b16 %v10437
    %v11349 = vunpack.c.l.b16 %v10438
    %v11350 = vunpack.c.h.b16 %v10438
    %v11351 = vunpack.c.l.b16 %v10439
    %v11352 = vunpack.c.h.b16 %v10439
    %v11353 = vunpack.c.l.b16 %v10440
    %v11354 = vunpack.c.h.b16 %v10440
    %v11355 = vunpack.c.l.b16 %v10441
    %v11356 = vunpack.c.h.b16 %v10441
    %v11357 = vunpack.c.l.b16 %v10442
    %v11358 = vunpack.c.h.b16 %v10442
    %v11359 = vunpack.c.l.b16 %v10443
    %v11360 = vunpack.c.h.b16 %v10443
    %v11361 = vunpack.c.l.b16 %v10444
    %v11362 = vunpack.c.h.b16 %v10444
    %v11363 = vunpack.c.l.b16 %v10445
    %v11364 = vunpack.c.h.b16 %v10445
    %v11365 = vunpack.c.l.b16 %v10446
    %v11366 = vunpack.c.h.b16 %v10446
    %v11367 = vunpack.c.l.b16 %v10447
    %v11368 = vunpack.c.h.b16 %v10447
    %v11369 = vunpack.c.l.b16 %v10448
    %v11370 = vunpack.c.h.b16 %v10448
    %v11371 = vunpack.c.l.b16 %v10449
    %v11372 = vunpack.c.h.b16 %v10449
    %v11373 = vunpack.c.l.b16 %v10450
    %v11374 = vunpack.c.h.b16 %v10450
    %v11375 = vunpack.c.l.b16 %v10451
    %v11376 = vunpack.c.h.b16 %v10451
    %v11377 = vunpack.c.l.b16 %v10452
    %v11378 = vunpack.c.h.b16 %v10452
    %v11379 = vunpack.c.l.b16 %v10453
    %v11380 = vunpack.c.h.b16 %v10453
    %v11381 = vunpack.c.l.b16 %v10454
    %v11382 = vunpack.c.h.b16 %v10454
    %v11383 = vunpack.c.l.b16 %v10455
    %v11384 = vunpack.c.h.b16 %v10455
    %v11385 = vunpack.c.l.b16 %v10456
    %v11386 = vunpack.c.h.b16 %v10456
    %v11387 = vunpack.c.l.b16 %v10457
    %v11388 = vunpack.c.h.b16 %v10457
    %v11389 = vunpack.c.l.b16 %v10458
    %v11390 = vunpack.c.h.b16 %v10458
    %v11391 = vunpack.c.l.b16 %v10459
    %v11392 = vunpack.c.h.b16 %v10459
    %v11393 = vunpack.c.l.b16 %v10460
    %v11394 = vunpack.c.h.b16 %v10460
    %v11395 = vunpack.c.l.b16 %v10461
    %v11396 = vunpack.c.h.b16 %v10461
    %v11397 = vunpack.c.l.b16 %v10462
    %v11398 = vunpack.c.h.b16 %v10462
    %v11399 = vunpack.c.l.b16 %v10463
    %v11400 = vunpack.c.h.b16 %v10463
    %v11401 = vunpack.c.l.b16 %v10464
    %v11402 = vunpack.c.h.b16 %v10464
    %v11403 = vunpack.c.l.b16 %v10465
    %v11404 = vunpack.c.h.b16 %v10465
    %v11405 = vunpack.c.l.b16 %v10466
    %v11406 = vunpack.c.h.b16 %v10466
    %v11407 = vunpack.c.l.b16 %v10467
    %v11408 = vunpack.c.h.b16 %v10467
    %v11409 = vunpack.c.l.b16 %v10468
    %v11410 = vunpack.c.h.b16 %v10468
    %v11411 = vunpack.c.l.b16 %v10469
    %v11412 = vunpack.c.h.b16 %v10469
    %v11413 = vunpack.c.l.b16 %v10470
    %v11414 = vunpack.c.h.b16 %v10470
    %v11415 = vunpack.c.l.b16 %v10471
    %v11416 = vunpack.c.h.b16 %v10471
    %v11417 = vunpack.c.l.b16 %v10472
    %v11418 = vunpack.c.h.b16 %v10472
    %v11419 = vunpack.c.l.b16 %v10473
    %v11420 = vunpack.c.h.b16 %v10473
    %v11421 = vunpack.c.l.b16 %v10474
    %v11422 = vunpack.c.h.b16 %v10474
    %v11423 = vunpack.c.l.b16 %v10475
    %v11424 = vunpack.c.h.b16 %v10475
    %v11425 = vunpack.c.l.b16 %v10476
    %v11426 = vunpack.c.h.b16 %v10476
    %v11427 = vunpack.c.l.b16 %v10477
    %v11428 = vunpack.c.h.b16 %v10477
    %v11429 = vunpack.c.l.b16 %v10478
    %v11430 = vunpack.c.h.b16 %v10478
    %v11431 = vunpack.c.l.b16 %v10479
    %v11432 = vunpack.c.h.b16 %v10479
    %v11433 = vunpack.c.l.b16 %v10480
    %v11434 = vunpack.c.h.b16 %v10480
    %v11435 = vunpack.c.l.b16 %v10481
    %v11436 = vunpack.c.h.b16 %v10481
    %v11437 = vunpack.c.l.b16 %v10482
    %v11438 = vunpack.c.h.b16 %v10482
    %v11439 = vunpack.c.l.b16 %v10483
    %v11440 = vunpack.c.h.b16 %v10483
    %v11441 = vunpack.c.l.b16 %v10484
    %v11442 = vunpack.c.h.b16 %v10484
    %v11443 = vunpack.c.l.b16 %v10485
    %v11444 = vunpack.c.h.b16 %v10485
    %v11445 = vunpack.c.l.b16 %v10486
    %v11446 = vunpack.c.h.b16 %v10486
    %v11447 = vunpack.c.l.b16 %v10487
    %v11448 = vunpack.c.h.b16 %v10487
    %v11449 = vunpack.c.l.b16 %v10488
    %v11450 = vunpack.c.h.b16 %v10488
    %v11451 = vunpack.c.l.b16 %v10489
    %v11452 = vunpack.c.h.b16 %v10489
    %v11453 = vunpack.c.l.b16 %v10490
    %v11454 = vunpack.c.h.b16 %v10490
    %v11455 = vunpack.c.l.b16 %v10491
    %v11456 = vunpack.c.h.b16 %v10491
    %v11457 = vunpack.c.l.b16 %v10492
    %v11458 = vunpack.c.h.b16 %v10492
    %v11459 = vunpack.c.l.b16 %v10493
    %v11460 = vunpack.c.h.b16 %v10493
    %v11461 = vunpack.c.l.b16 %v10494
    %v11462 = vunpack.c.h.b16 %v10494
    %v11463 = vunpack.c.l.b16 %v10495
    %v11464 = vunpack.c.h.b16 %v10495
    %v11465 = vunpack.c.l.b16 %v10496
    %v11466 = vunpack.c.h.b16 %v10496
    %v11467 = vunpack.c.l.b16 %v10497
    %v11468 = vunpack.c.h.b16 %v10497
    %v11469 = vunpack.c.l.b16 %v10498
    %v11470 = vunpack.c.h.b16 %v10498
    %v11471 = vunpack.c.l.b16 %v10499
    %v11472 = vunpack.c.h.b16 %v10499
    %v11473 = vunpack.c.l.b16 %v10500
    %v11474 = vunpack.c.h.b16 %v10500
    %v11475 = vunpack.c.l.b16 %v10501
    %v11476 = vunpack.c.h.b16 %v10501
    %v11477 = vunpack.c.l.b16 %v10502
    %v11478 = vunpack.c.h.b16 %v10502
    %v11479 = vunpack.c.l.b16 %v10503
    %v11480 = vunpack.c.h.b16 %v10503
    %v11481 = vunpack.c.l.b16 %v10504
    %v11482 = vunpack.c.h.b16 %v10504
    %v11483 = vunpack.c.l.b16 %v10505
    %v11484 = vunpack.c.h.b16 %v10505
    %v11485 = vunpack.c.l.b16 %v10506
    %v11486 = vunpack.c.h.b16 %v10506
    %v11487 = vunpack.c.l.b16 %v10507
    %v11488 = vunpack.c.h.b16 %v10507
    %v11489 = vunpack.c.l.b16 %v10508
    %v11490 = vunpack.c.h.b16 %v10508
    %v11491 = vunpack.c.l.b16 %v10509
    %v11492 = vunpack.c.h.b16 %v10509
    %v11493 = vunpack.c.l.b16 %v10510
    %v11494 = vunpack.c.h.b16 %v10510
    %v11495 = vunpack.c.l.b16 %v10511
    %v11496 = vunpack.c.h.b16 %v10511
    %v11497 = vunpack.c.l.b16 %v10512
    %v11498 = vunpack.c.h.b16 %v10512
    %v11499 = vunpack.c.l.b16 %v10513
    %v11500 = vunpack.c.h.b16 %v10513
    %v11501 = vunpack.c.l.b16 %v10514
    %v11502 = vunpack.c.h.b16 %v10514
    %v11503 = vunpack.c.l.b16 %v10515
    %v11504 = vunpack.c.h.b16 %v10515
    %v11505 = vunpack.c.l.b16 %v10516
    %v11506 = vunpack.c.h.b16 %v10516
    %v11507 = vunpack.c.l.b16 %v10517
    %v11508 = vunpack.c.h.b16 %v10517
    %v11509 = vunpack.c.l.b16 %v10518
    %v11510 = vunpack.c.h.b16 %v10518
    %v11511 = vunpack.c.l.b16 %v10519
    %v11512 = vunpack.c.h.b16 %v10519
    %v11513 = vunpack.c.l.b16 %v10520
    %v11514 = vunpack.c.h.b16 %v10520
    %v11515 = vunpack.c.l.b16 %v10521
    %v11516 = vunpack.c.h.b16 %v10521
    %v11517 = vunpack.c.l.b16 %v10522
    %v11518 = vunpack.c.h.b16 %v10522
    %v11519 = vunpack.c.l.b16 %v10523
    %v11520 = vunpack.c.h.b16 %v10523
    %v11521 = vunpack.c.l.b16 %v10524
    %v11522 = vunpack.c.h.b16 %v10524
    %v11523 = vunpack.c.l.b16 %v10525
    %v11524 = vunpack.c.h.b16 %v10525
    %v11525 = vunpack.c.l.b16 %v10526
    %v11526 = vunpack.c.h.b16 %v10526
    %v11527 = vunpack.c.l.b16 %v10527
    %v11528 = vunpack.c.h.b16 %v10527
    %v11529 = vunpack.c.l.b16 %v10528
    %v11530 = vunpack.c.h.b16 %v10528
    %v11531 = vunpack.c.l.b16 %v10529
    %v11532 = vunpack.c.h.b16 %v10529
    %v11533 = vunpack.c.l.b16 %v10530
    %v11534 = vunpack.c.h.b16 %v10530
    %v11535 = vunpack.c.l.b16 %v10531
    %v11536 = vunpack.c.h.b16 %v10531
    %v11537 = vunpack.c.l.b16 %v10532
    %v11538 = vunpack.c.h.b16 %v10532
    %v11539 = vunpack.c.l.b16 %v10533
    %v11540 = vunpack.c.h.b16 %v10533
    %v11541 = vunpack.c.l.b16 %v10534
    %v11542 = vunpack.c.h.b16 %v10534
    %v11543 = vunpack.c.l.b16 %v10535
    %v11544 = vunpack.c.h.b16 %v10535
    %v11545 = vunpack.c.l.b16 %v10536
    %v11546 = vunpack.c.h.b16 %v10536
    %v11547 = vunpack.c.l.b16 %v10537
    %v11548 = vunpack.c.h.b16 %v10537
    %v11549 = vunpack.c.l.b16 %v10538
    %v11550 = vunpack.c.h.b16 %v10538
    %v11551 = vunpack.c.l.b16 %v10539
    %v11552 = vunpack.c.h.b16 %v10539
    %v11553 = vunpack.c.l.b16 %v10540
    %v11554 = vunpack.c.h.b16 %v10540
    %v11555 = vunpack.c.l.b16 %v10541
    %v11556 = vunpack.c.h.b16 %v10541
    %v11557 = vunpack.c.l.b16 %v10542
    %v11558 = vunpack.c.h.b16 %v10542
    %v11559 = vunpack.c.l.b16 %v10543
    %v11560 = vunpack.c.h.b16 %v10543
    %v11561 = vunpack.c.l.b16 %v10544
    %v11562 = vunpack.c.h.b16 %v10544
    %v11563 = vunpack.c.l.b16 %v10545
    %v11564 = vunpack.c.h.b16 %v10545
    %v11565 = vunpack.c.l.b16 %v10546
    %v11566 = vunpack.c.h.b16 %v10546
    %v11567 = vunpack.c.l.b16 %v10547
    %v11568 = vunpack.c.h.b16 %v10547
    %v11569 = vunpack.c.l.b16 %v10548
    %v11570 = vunpack.c.h.b16 %v10548
    %v11571 = vunpack.c.l.b16 %v10549
    %v11572 = vunpack.c.h.b16 %v10549
    %v11573 = vunpack.c.l.b16 %v10550
    %v11574 = vunpack.c.h.b16 %v10550
    %v11575 = vunpack.c.l.b16 %v10551
    %v11576 = vunpack.c.h.b16 %v10551
    %v11577 = vunpack.c.l.b16 %v10552
    %v11578 = vunpack.c.h.b16 %v10552
    %v11579 = vunpack.c.l.b16 %v10553
    %v11580 = vunpack.c.h.b16 %v10553
    %v11581 = vunpack.c.l.b16 %v10554
    %v11582 = vunpack.c.h.b16 %v10554
    %v11583 = vunpack.c.l.b16 %v10555
    %v11584 = vunpack.c.h.b16 %v10555
    %v11585 = vunpack.c.l.b16 %v10556
    %v11586 = vunpack.c.h.b16 %v10556
    %v11587 = vunpack.c.l.b16 %v10557
    %v11588 = vunpack.c.h.b16 %v10557
    %v11589 = vunpack.c.l.b16 %v10558
    %v11590 = vunpack.c.h.b16 %v10558
    %v11591 = vunpack.c.l.b16 %v10559
    %v11592 = vunpack.c.h.b16 %v10559
    %v11593 = vunpack.c.l.b16 %v10560
    %v11594 = vunpack.c.h.b16 %v10560
    %v11595 = vunpack.c.l.b16 %v10561
    %v11596 = vunpack.c.h.b16 %v10561
    %v11597 = vunpack.c.l.b16 %v10562
    %v11598 = vunpack.c.h.b16 %v10562
    %v11599 = vunpack.c.l.b16 %v10563
    %v11600 = vunpack.c.h.b16 %v10563
    %v11601 = vunpack.c.l.b16 %v10564
    %v11602 = vunpack.c.h.b16 %v10564
    %v11603 = vunpack.c.l.b16 %v10565
    %v11604 = vunpack.c.h.b16 %v10565
    %v11605 = vunpack.c.l.b16 %v10566
    %v11606 = vunpack.c.h.b16 %v10566
    %v11607 = vunpack.c.l.b16 %v10567
    %v11608 = vunpack.c.h.b16 %v10567
    %v11609 = vunpack.c.l.b16 %v10568
    %v11610 = vunpack.c.h.b16 %v10568
    %v11611 = vunpack.c.l.b16 %v10569
    %v11612 = vunpack.c.h.b16 %v10569
    %v11613 = vunpack.c.l.b16 %v10570
    %v11614 = vunpack.c.h.b16 %v10570
    %v11615 = vunpack.c.l.b16 %v10571
    %v11616 = vunpack.c.h.b16 %v10571
    %v11617 = vunpack.c.l.b16 %v10572
    %v11618 = vunpack.c.h.b16 %v10572
    %v11619 = vunpack.c.l.b16 %v10573
    %v11620 = vunpack.c.h.b16 %v10573
    %v11621 = vunpack.c.l.b16 %v10574
    %v11622 = vunpack.c.h.b16 %v10574
    %v11623 = vunpack.c.l.b16 %v10575
    %v11624 = vunpack.c.h.b16 %v10575
    %v11625 = vunpack.c.l.b16 %v10576
    %v11626 = vunpack.c.h.b16 %v10576
    %v11627 = vunpack.c.l.b16 %v10577
    %v11628 = vunpack.c.h.b16 %v10577
    %v11629 = vunpack.c.l.b16 %v10578
    %v11630 = vunpack.c.h.b16 %v10578
    %v11631 = vunpack.c.l.b16 %v10579
    %v11632 = vunpack.c.h.b16 %v10579
    %v11633 = vunpack.c.l.b16 %v10580
    %v11634 = vunpack.c.h.b16 %v10580
    %v11635 = vunpack.c.l.b16 %v10581
    %v11636 = vunpack.c.h.b16 %v10581
    %v11637 = vunpack.c.l.b16 %v10582
    %v11638 = vunpack.c.h.b16 %v10582
    %v11639 = vunpack.c.l.b16 %v10583
    %v11640 = vunpack.c.h.b16 %v10583
    %v11641 = vunpack.c.l.b16 %v10584
    %v11642 = vunpack.c.h.b16 %v10584
    %v11643 = vunpack.c.l.b16 %v10585
    %v11644 = vunpack.c.h.b16 %v10585
    %v11645 = vunpack.c.l.b16 %v10586
    %v11646 = vunpack.c.h.b16 %v10586
    %v11647 = vunpack.c.l.b16 %v10587
    %v11648 = vunpack.c.h.b16 %v10587
    %v11649 = vunpack.c.l.b16 %v10588
    %v11650 = vunpack.c.h.b16 %v10588
    %v11651 = vunpack.c.l.b16 %v10589
    %v11652 = vunpack.c.h.b16 %v10589
    %v11653 = vunpack.c.l.b16 %v10590
    %v11654 = vunpack.c.h.b16 %v10590
    %v11655 = vunpack.c.l.b16 %v10591
    %v11656 = vunpack.c.h.b16 %v10591
    %v11657 = vunpack.c.l.b16 %v10592
    %v11658 = vunpack.c.h.b16 %v10592
    %v11659 = vunpack.c.l.b16 %v10593
    %v11660 = vunpack.c.h.b16 %v10593
    %v11661 = vunpack.c.l.b16 %v10594
    %v11662 = vunpack.c.h.b16 %v10594
    %v11663 = vunpack.c.l.b16 %v10595
    %v11664 = vunpack.c.h.b16 %v10595
    %v11665 = vunpack.c.l.b16 %v10596
    %v11666 = vunpack.c.h.b16 %v10596
    %v11667 = vunpack.c.l.b16 %v10597
    %v11668 = vunpack.c.h.b16 %v10597
    %v11669 = vunpack.c.l.b16 %v10598
    %v11670 = vunpack.c.h.b16 %v10598
    %v11671 = vunpack.c.l.b16 %v10599
    %v11672 = vunpack.c.h.b16 %v10599
    %v11673 = vunpack.c.l.b16 %v10600
    %v11674 = vunpack.c.h.b16 %v10600
    %v11675 = vunpack.c.l.b16 %v10601
    %v11676 = vunpack.c.h.b16 %v10601
    %v11677 = vunpack.c.l.b16 %v10602
    %v11678 = vunpack.c.h.b16 %v10602
    %v11679 = vunpack.c.l.b16 %v10603
    %v11680 = vunpack.c.h.b16 %v10603
    %v11681 = vunpack.c.l.b16 %v10604
    %v11682 = vunpack.c.h.b16 %v10604
    %v11683 = vunpack.c.l.b16 %v10605
    %v11684 = vunpack.c.h.b16 %v10605
    %v11685 = vunpack.c.l.b16 %v10606
    %v11686 = vunpack.c.h.b16 %v10606
    %v11687 = vunpack.c.l.b16 %v10607
    %v11688 = vunpack.c.h.b16 %v10607
    %v11689 = vunpack.c.l.b16 %v10608
    %v11690 = vunpack.c.h.b16 %v10608
    %v11691 = vunpack.c.l.b16 %v10609
    %v11692 = vunpack.c.h.b16 %v10609
    %v11693 = vunpack.c.l.b16 %v10610
    %v11694 = vunpack.c.h.b16 %v10610
    %v11695 = vunpack.c.l.b16 %v10611
    %v11696 = vunpack.c.h.b16 %v10611
    %v11697 = vunpack.c.l.b16 %v10612
    %v11698 = vunpack.c.h.b16 %v10612
    %v11699 = vunpack.c.l.b16 %v10613
    %v11700 = vunpack.c.h.b16 %v10613
    %v11701 = vunpack.c.l.b16 %v10614
    %v11702 = vunpack.c.h.b16 %v10614
    %v11703 = vunpack.c.l.b16 %v10615
    %v11704 = vunpack.c.h.b16 %v10615
    %v11705 = vunpack.c.l.b16 %v10616
    %v11706 = vunpack.c.h.b16 %v10616
    %v11707 = vunpack.c.l.b16 %v10617
    %v11708 = vunpack.c.h.b16 %v10617
    %v11709 = vunpack.c.l.b16 %v10618
    %v11710 = vunpack.c.h.b16 %v10618
    %v11711 = vunpack.c.l.b16 %v10619
    %v11712 = vunpack.c.h.b16 %v10619
    %v11713 = vunpack.c.l.b16 %v10620
    %v11714 = vunpack.c.h.b16 %v10620
    %v11715 = vunpack.c.l.b16 %v10621
    %v11716 = vunpack.c.h.b16 %v10621
    %v11717 = vunpack.c.l.b16 %v10622
    %v11718 = vunpack.c.h.b16 %v10622
    %v11719 = vunpack.c.l.b16 %v10623
    %v11720 = vunpack.c.h.b16 %v10623
    %v11721 = vunpack.c.l.b16 %v10624
    %v11722 = vunpack.c.h.b16 %v10624
    %v11723 = vunpack.c.l.b16 %v10625
    %v11724 = vunpack.c.h.b16 %v10625
    %v11725 = vunpack.c.l.b16 %v10626
    %v11726 = vunpack.c.h.b16 %v10626
    %v11727 = vunpack.c.l.b16 %v10627
    %v11728 = vunpack.c.h.b16 %v10627
    %v11729 = vunpack.c.l.b16 %v10628
    %v11730 = vunpack.c.h.b16 %v10628
    %v11731 = vunpack.c.l.b16 %v10629
    %v11732 = vunpack.c.h.b16 %v10629
    %v11733 = vunpack.c.l.b16 %v10630
    %v11734 = vunpack.c.h.b16 %v10630
    %v11735 = vunpack.c.l.b16 %v10631
    %v11736 = vunpack.c.h.b16 %v10631
    %v11737 = vunpack.c.l.b16 %v10632
    %v11738 = vunpack.c.h.b16 %v10632
    %v11739 = vunpack.c.l.b16 %v10633
    %v11740 = vunpack.c.h.b16 %v10633
    %v11741 = vunpack.c.l.b16 %v10634
    %v11742 = vunpack.c.h.b16 %v10634
    %v11743 = vunpack.c.l.b16 %v10635
    %v11744 = vunpack.c.h.b16 %v10635
    %v11745 = vunpack.c.l.b16 %v10636
    %v11746 = vunpack.c.h.b16 %v10636
    %v11747 = vunpack.c.l.b16 %v10637
    %v11748 = vunpack.c.h.b16 %v10637
    %v11749 = vunpack.c.l.b16 %v10638
    %v11750 = vunpack.c.h.b16 %v10638
    %v11751 = vunpack.c.l.b16 %v10639
    %v11752 = vunpack.c.h.b16 %v10639
    %v11753 = vunpack.c.l.b16 %v10640
    %v11754 = vunpack.c.h.b16 %v10640
    %v11755 = vunpack.c.l.b16 %v10641
    %v11756 = vunpack.c.h.b16 %v10641
    %v11757 = vunpack.c.l.b16 %v10642
    %v11758 = vunpack.c.h.b16 %v10642
    %v11759 = vunpack.c.l.b16 %v10643
    %v11760 = vunpack.c.h.b16 %v10643
    %v11761 = vunpack.c.l.b16 %v10644
    %v11762 = vunpack.c.h.b16 %v10644
    %v11763 = vunpack.c.l.b16 %v10645
    %v11764 = vunpack.c.h.b16 %v10645
    %v11765 = vunpack.c.l.b16 %v10646
    %v11766 = vunpack.c.h.b16 %v10646
    %v11767 = vunpack.c.l.b16 %v10647
    %v11768 = vunpack.c.h.b16 %v10647
    %v11769 = vunpack.c.l.b16 %v10648
    %v11770 = vunpack.c.h.b16 %v10648
    %v11771 = vunpack.c.l.b16 %v10649
    %v11772 = vunpack.c.h.b16 %v10649
    %v11773 = vunpack.c.l.b16 %v10650
    %v11774 = vunpack.c.h.b16 %v10650
    %v11775 = vunpack.c.l.b16 %v10651
    %v11776 = vunpack.c.h.b16 %v10651
    %v11777 = vunpack.c.l.b16 %v10652
    %v11778 = vunpack.c.h.b16 %v10652
    %v11779 = vunpack.c.l.b16 %v10653
    %v11780 = vunpack.c.h.b16 %v10653
    %v11781 = vunpack.c.l.b16 %v10654
    %v11782 = vunpack.c.h.b16 %v10654
    %v11783 = vunpack.c.l.b16 %v10655
    %v11784 = vunpack.c.h.b16 %v10655
    %v11785 = vunpack.c.l.b16 %v10656
    %v11786 = vunpack.c.h.b16 %v10656
    %v11787 = vunpack.c.l.b16 %v10657
    %v11788 = vunpack.c.h.b16 %v10657
    %v11789 = vunpack.c.l.b16 %v10658
    %v11790 = vunpack.c.h.b16 %v10658
    %v11791 = vunpack.c.l.b16 %v10659
    %v11792 = vunpack.c.h.b16 %v10659
    %v11793 = vunpack.c.l.b16 %v10660
    %v11794 = vunpack.c.h.b16 %v10660
    %v11795 = vunpack.c.l.b16 %v10661
    %v11796 = vunpack.c.h.b16 %v10661
    %v11797 = vunpack.c.l.b16 %v10662
    %v11798 = vunpack.c.h.b16 %v10662
    %v11799 = vunpack.c.l.b16 %v10663
    %v11800 = vunpack.c.h.b16 %v10663
    %v11801 = vunpack.c.l.b16 %v10664
    %v11802 = vunpack.c.h.b16 %v10664
    %v11803 = vunpack.c.l.b16 %v10665
    %v11804 = vunpack.c.h.b16 %v10665
    %v11805 = vunpack.c.l.b16 %v10666
    %v11806 = vunpack.c.h.b16 %v10666
    %v11807 = vunpack.c.l.b16 %v10667
    %v11808 = vunpack.c.h.b16 %v10667
    %v11809 = vunpack.c.l.b16 %v10668
    %v11810 = vunpack.c.h.b16 %v10668
    %v11811 = vunpack.c.l.b16 %v10669
    %v11812 = vunpack.c.h.b16 %v10669
    %v11813 = vunpack.c.l.b16 %v10670
    %v11814 = vunpack.c.h.b16 %v10670
    %v11815 = vunpack.c.l.b16 %v10671
    %v11816 = vunpack.c.h.b16 %v10671
    %v11817 = vunpack.c.l.b16 %v10672
    %v11818 = vunpack.c.h.b16 %v10672
    %v11819 = vunpack.c.l.b16 %v10673
    %v11820 = vunpack.c.h.b16 %v10673
    %v11821 = vunpack.c.l.b16 %v10674
    %v11822 = vunpack.c.h.b16 %v10674
    %v11823 = vunpack.c.l.b16 %v10675
    %v11824 = vunpack.c.h.b16 %v10675
    %v11825 = vunpack.c.l.b16 %v10676
    %v11826 = vunpack.c.h.b16 %v10676
    %v11827 = vunpack.c.l.b16 %v10677
    %v11828 = vunpack.c.h.b16 %v10677
    %v11829 = vunpack.c.l.b16 %v10678
    %v11830 = vunpack.c.h.b16 %v10678
    %v11831 = vunpack.c.l.b16 %v10679
    %v11832 = vunpack.c.h.b16 %v10679
    %v11833 = vunpack.c.l.b16 %v10680
    %v11834 = vunpack.c.h.b16 %v10680
    %v11835 = vunpack.c.l.b16 %v10681
    %v11836 = vunpack.c.h.b16 %v10681
    %v11837 = vunpack.c.l.b16 %v10682
    %v11838 = vunpack.c.h.b16 %v10682
    %v11839 = vunpack.c.l.b16 %v10683
    %v11840 = vunpack.c.h.b16 %v10683
    %v11841 = vunpack.c.l.b16 %v10684
    %v11842 = vunpack.c.h.b16 %v10684
    %v11843 = vunpack.c.l.b16 %v10685
    %v11844 = vunpack.c.h.b16 %v10685
    %v11845 = vunpack.c.l.b16 %v10686
    %v11846 = vunpack.c.h.b16 %v10686
    %v11847 = vunpack.c.l.b16 %v10687
    %v11848 = vunpack.c.h.b16 %v10687
    %v11849 = vunpack.c.l.b16 %v10688
    %v11850 = vunpack.c.h.b16 %v10688
    %v11851 = vunpack.c.l.b16 %v10689
    %v11852 = vunpack.c.h.b16 %v10689
    %v11853 = vunpack.c.l.b16 %v10690
    %v11854 = vunpack.c.h.b16 %v10690
    %v11855 = vunpack.c.l.b16 %v10691
    %v11856 = vunpack.c.h.b16 %v10691
    %v11857 = vunpack.c.l.b16 %v10692
    %v11858 = vunpack.c.h.b16 %v10692
    %v11859 = vunpack.c.l.b16 %v10693
    %v11860 = vunpack.c.h.b16 %v10693
    %v11861 = vunpack.c.l.b16 %v10694
    %v11862 = vunpack.c.h.b16 %v10694
    %v11863 = vunpack.c.l.b16 %v10695
    %v11864 = vunpack.c.h.b16 %v10695
    %v11865 = vunpack.c.l.b16 %v10696
    %v11866 = vunpack.c.h.b16 %v10696
    %v11867 = vunpack.c.l.b16 %v10697
    %v11868 = vunpack.c.h.b16 %v10697
    %v11869 = vunpack.c.l.b16 %v10698
    %v11870 = vunpack.c.h.b16 %v10698
    %v11871 = vunpack.c.l.b16 %v10699
    %v11872 = vunpack.c.h.b16 %v10699
    %v11873 = vunpack.c.l.b16 %v10700
    %v11874 = vunpack.c.h.b16 %v10700
    %v11875 = vunpack.c.l.b16 %v10701
    %v11876 = vunpack.c.h.b16 %v10701
    %v11877 = vunpack.c.l.b16 %v10702
    %v11878 = vunpack.c.h.b16 %v10702
    %v11879 = vunpack.c.l.b16 %v10703
    %v11880 = vunpack.c.h.b16 %v10703
    %v11881 = vunpack.c.l.b16 %v10704
    %v11882 = vunpack.c.h.b16 %v10704
    %v11883 = vunpack.c.l.b16 %v10705
    %v11884 = vunpack.c.h.b16 %v10705
    %v11885 = vunpack.c.l.b16 %v10706
    %v11886 = vunpack.c.h.b16 %v10706
    %v11887 = vunpack.c.l.b16 %v10707
    %v11888 = vunpack.c.h.b16 %v10707
    %v11889 = vunpack.c.l.b16 %v10708
    %v11890 = vunpack.c.h.b16 %v10708
    %v11891 = vunpack.c.l.b16 %v10709
    %v11892 = vunpack.c.h.b16 %v10709
    %v11893 = vunpack.c.l.b16 %v10710
    %v11894 = vunpack.c.h.b16 %v10710
    %v11895 = vunpack.c.l.b16 %v10711
    %v11896 = vunpack.c.h.b16 %v10711
    %v11897 = vunpack.c.l.b16 %v10712
    %v11898 = vunpack.c.h.b16 %v10712
    %v11899 = vunpack.c.l.b16 %v10713
    %v11900 = vunpack.c.h.b16 %v10713
    %v11901 = vunpack.c.l.b16 %v10714
    %v11902 = vunpack.c.h.b16 %v10714
    %v11903 = vunpack.c.l.b16 %v10715
    %v11904 = vunpack.c.h.b16 %v10715
    %v11905 = vunpack.c.l.b16 %v10716
    %v11906 = vunpack.c.h.b16 %v10716
    %v11907 = vunpack.c.l.b16 %v10717
    %v11908 = vunpack.c.h.b16 %v10717
    %v11909 = vunpack.c.l.b16 %v10718
    %v11910 = vunpack.c.h.b16 %v10718
    %v11911 = vunpack.c.l.b16 %v10719
    %v11912 = vunpack.c.h.b16 %v10719
    %v11913 = vunpack.c.l.b16 %v10720
    %v11914 = vunpack.c.h.b16 %v10720
    %v11915 = vunpack.c.l.b16 %v10721
    %v11916 = vunpack.c.h.b16 %v10721
    %v11917 = vunpack.c.l.b16 %v10722
    %v11918 = vunpack.c.h.b16 %v10722
    %v11919 = vunpack.c.l.b16 %v10723
    %v11920 = vunpack.c.h.b16 %v10723
    %v11921 = vunpack.c.l.b16 %v10724
    %v11922 = vunpack.c.h.b16 %v10724
    %v11923 = vunpack.c.l.b16 %v10725
    %v11924 = vunpack.c.h.b16 %v10725
    %v11925 = vunpack.c.l.b16 %v10726
    %v11926 = vunpack.c.h.b16 %v10726
    %v11927 = vunpack.c.l.b16 %v10727
    %v11928 = vunpack.c.h.b16 %v10727
    %v11929 = vunpack.c.l.b16 %v10728
    %v11930 = vunpack.c.h.b16 %v10728
    %v11931 = vunpack.c.l.b16 %v10729
    %v11932 = vunpack.c.h.b16 %v10729
    %v11933 = vunpack.c.l.b16 %v10730
    %v11934 = vunpack.c.h.b16 %v10730
    %v11935 = vunpack.c.l.b16 %v10731
    %v11936 = vunpack.c.h.b16 %v10731
    %v11937 = vunpack.c.l.b16 %v10732
    %v11938 = vunpack.c.h.b16 %v10732
    %v11939 = vunpack.c.l.b16 %v10733
    %v11940 = vunpack.c.h.b16 %v10733
    %v11941 = vunpack.c.l.b16 %v10734
    %v11942 = vunpack.c.h.b16 %v10734
    %v11943 = vunpack.c.l.b16 %v10735
    %v11944 = vunpack.c.h.b16 %v10735
    %v11945 = vunpack.c.l.b16 %v10736
    %v11946 = vunpack.c.h.b16 %v10736
    %v11947 = vunpack.c.l.b16 %v10737
    %v11948 = vunpack.c.h.b16 %v10737
    %v11949 = vunpack.c.l.b16 %v10738
    %v11950 = vunpack.c.h.b16 %v10738
    %v11951 = vunpack.c.l.b16 %v10739
    %v11952 = vunpack.c.h.b16 %v10739
    %v11953 = vunpack.c.l.b16 %v10740
    %v11954 = vunpack.c.h.b16 %v10740
    %v11955 = vunpack.c.l.b16 %v10741
    %v11956 = vunpack.c.h.b16 %v10741
    %v11957 = vunpack.c.l.b16 %v10742
    %v11958 = vunpack.c.h.b16 %v10742
    %v11959 = vunpack.c.l.b16 %v10743
    %v11960 = vunpack.c.h.b16 %v10743
    %v11961 = vunpack.c.l.b16 %v10744
    %v11962 = vunpack.c.h.b16 %v10744
    %v11963 = vunpack.c.l.b16 %v10745
    %v11964 = vunpack.c.h.b16 %v10745
    %v11965 = vunpack.c.l.b16 %v10746
    %v11966 = vunpack.c.h.b16 %v10746
    %v11967 = vunpack.c.l.b16 %v10747
    %v11968 = vunpack.c.h.b16 %v10747
    %v11969 = vunpack.c.l.b16 %v10748
    %v11970 = vunpack.c.h.b16 %v10748
    %v11971 = vunpack.c.l.b16 %v10749
    %v11972 = vunpack.c.h.b16 %v10749
    %v11973 = vunpack.c.l.b16 %v10750
    %v11974 = vunpack.c.h.b16 %v10750
    %v11975 = vunpack.c.l.b16 %v10751
    %v11976 = vunpack.c.h.b16 %v10751
    %v11977 = vunpack.c.l.b16 %v10752
    %v11978 = vunpack.c.h.b16 %v10752
    %v11979 = vunpack.c.l.b16 %v10753
    %v11980 = vunpack.c.h.b16 %v10753
    %v11981 = vunpack.c.l.b16 %v10754
    %v11982 = vunpack.c.h.b16 %v10754
    %v11983 = vunpack.c.l.b16 %v10755
    %v11984 = vunpack.c.h.b16 %v10755
    %v11985 = vunpack.c.l.b16 %v10756
    %v11986 = vunpack.c.h.b16 %v10756
    %v11987 = vunpack.c.l.b16 %v10757
    %v11988 = vunpack.c.h.b16 %v10757
    %v11989 = vunpack.c.l.b16 %v10758
    %v11990 = vunpack.c.h.b16 %v10758
    %v11991 = vunpack.c.l.b16 %v10759
    %v11992 = vunpack.c.h.b16 %v10759
    %v11993 = vunpack.c.l.b16 %v10760
    %v11994 = vunpack.c.h.b16 %v10760
    %v11995 = vunpack.c.l.b16 %v10761
    %v11996 = vunpack.c.h.b16 %v10761
    %v11997 = vunpack.c.l.b16 %v10762
    %v11998 = vunpack.c.h.b16 %v10762
    %v11999 = vunpack.c.l.b16 %v10763
    %v12000 = vunpack.c.h.b16 %v10763
    %v12001 = vunpack.c.l.b16 %v10764
    %v12002 = vunpack.c.h.b16 %v10764
    %v12003 = vunpack.c.l.b16 %v10765
    %v12004 = vunpack.c.h.b16 %v10765
    %v12005 = vunpack.c.l.b16 %v10766
    %v12006 = vunpack.c.h.b16 %v10766
    %v12007 = vunpack.c.l.b16 %v10767
    %v12008 = vunpack.c.h.b16 %v10767
    %v12009 = vunpack.c.l.b16 %v10768
    %v12010 = vunpack.c.h.b16 %v10768
    %v12011 = vunpack.c.l.b16 %v10769
    %v12012 = vunpack.c.h.b16 %v10769
    %v12013 = vunpack.c.l.b16 %v10770
    %v12014 = vunpack.c.h.b16 %v10770
    %v12015 = vunpack.c.l.b16 %v10771
    %v12016 = vunpack.c.h.b16 %v10771
    %v12017 = vunpack.c.l.b16 %v10772
    %v12018 = vunpack.c.h.b16 %v10772
    %v12019 = vunpack.c.l.b16 %v10773
    %v12020 = vunpack.c.h.b16 %v10773
    %v12021 = vunpack.c.l.b16 %v10774
    %v12022 = vunpack.c.h.b16 %v10774
    %v12023 = vunpack.c.l.b16 %v10775
    %v12024 = vunpack.c.h.b16 %v10775
    %v12025 = vunpack.c.l.b16 %v10776
    %v12026 = vunpack.c.h.b16 %v10776
    %v12027 = vunpack.c.l.b16 %v10777
    %v12028 = vunpack.c.h.b16 %v10777
    %v12029 = vunpack.c.l.b16 %v10778
    %v12030 = vunpack.c.h.b16 %v10778
    %v12031 = vunpack.c.l.b16 %v10779
    %v12032 = vunpack.c.h.b16 %v10779
    %v12033 = vunpack.c.l.b16 %v10780
    %v12034 = vunpack.c.h.b16 %v10780
    %v12035 = vunpack.c.l.b16 %v10781
    %v12036 = vunpack.c.h.b16 %v10781
    %v12037 = vunpack.c.l.b16 %v10782
    %v12038 = vunpack.c.h.b16 %v10782
    %v12039 = vunpack.c.l.b16 %v10783
    %v12040 = vunpack.c.h.b16 %v10783
    %v12041 = vunpack.c.l.b16 %v10784
    %v12042 = vunpack.c.h.b16 %v10784
    %v12043 = vunpack.c.l.b16 %v10785
    %v12044 = vunpack.c.h.b16 %v10785
    %v12045 = vunpack.c.l.b16 %v10786
    %v12046 = vunpack.c.h.b16 %v10786
    %v12047 = vunpack.c.l.b16 %v10787
    %v12048 = vunpack.c.h.b16 %v10787
    %v12049 = vunpack.c.l.b16 %v10788
    %v12050 = vunpack.c.h.b16 %v10788
    %v12051 = vunpack.c.l.b16 %v10789
    %v12052 = vunpack.c.h.b16 %v10789
    %v12053 = vunpack.c.l.b16 %v10790
    %v12054 = vunpack.c.h.b16 %v10790
    %v12055 = vpack.c.b16 %v11257, %v11255
    %v12056 = vpack.c.b16 %v11258, %v11256
    %v12057 = vpack.c.b16 %v11261, %v11259
    %v12058 = vpack.c.b16 %v11262, %v11260
    %v12059 = vpack.c.b16 %v11265, %v11263
    %v12060 = vpack.c.b16 %v11266, %v11264
    %v12061 = vpack.c.b16 %v11269, %v11267
    %v12062 = vpack.c.b16 %v11270, %v11268
    %v12063 = vpack.c.b16 %v11273, %v11271
    %v12064 = vpack.c.b16 %v11274, %v11272
    %v12065 = vpack.c.b16 %v11277, %v11275
    %v12066 = vpack.c.b16 %v11278, %v11276
    %v12067 = vpack.c.b16 %v11281, %v11279
    %v12068 = vpack.c.b16 %v11282, %v11280
    %v12069 = vpack.c.b16 %v11285, %v11283
    %v12070 = vpack.c.b16 %v11286, %v11284
    %v12071 = vpack.c.b16 %v11289, %v11287
    %v12072 = vpack.c.b16 %v11290, %v11288
    %v12073 = vpack.c.b16 %v11293, %v11291
    %v12074 = vpack.c.b16 %v11294, %v11292
    %v12075 = vpack.c.b16 %v11297, %v11295
    %v12076 = vpack.c.b16 %v11298, %v11296
    %v12077 = vpack.c.b16 %v11301, %v11299
    %v12078 = vpack.c.b16 %v11302, %v11300
    %v12079 = vpack.c.b16 %v11305, %v11303
    %v12080 = vpack.c.b16 %v11306, %v11304
    %v12081 = vpack.c.b16 %v11309, %v11307
    %v12082 = vpack.c.b16 %v11310, %v11308
    %v12083 = vpack.c.b16 %v11313, %v11311
    %v12084 = vpack.c.b16 %v11314, %v11312
    %v12085 = vpack.c.b16 %v11317, %v11315
    %v12086 = vpack.c.b16 %v11318, %v11316
    %v12087 = vpack.c.b16 %v11321, %v11319
    %v12088 = vpack.c.b16 %v11322, %v11320
    %v12089 = vpack.c.b16 %v11325, %v11323
    %v12090 = vpack.c.b16 %v11326, %v11324
    %v12091 = vpack.c.b16 %v11329, %v11327
    %v12092 = vpack.c.b16 %v11330, %v11328
    %v12093 = vpack.c.b16 %v11333, %v11331
    %v12094 = vpack.c.b16 %v11334, %v11332
    %v12095 = vpack.c.b16 %v11337, %v11335
    %v12096 = vpack.c.b16 %v11338, %v11336
    %v12097 = vpack.c.b16 %v11341, %v11339
    %v12098 = vpack.c.b16 %v11342, %v11340
    %v12099 = vpack.c.b16 %v11345, %v11343
    %v12100 = vpack.c.b16 %v11346, %v11344
    %v12101 = vpack.c.b16 %v11349, %v11347
    %v12102 = vpack.c.b16 %v11350, %v11348
    %v12103 = vpack.c.b16 %v11353, %v11351
    %v12104 = vpack.c.b16 %v11354, %v11352
    %v12105 = vpack.c.b16 %v11357, %v11355
    %v12106 = vpack.c.b16 %v11358, %v11356
    %v12107 = vpack.c.b16 %v11361, %v11359
    %v12108 = vpack.c.b16 %v11362, %v11360
    %v12109 = vpack.c.b16 %v11365, %v11363
    %v12110 = vpack.c.b16 %v11366, %v11364
    %v12111 = vpack.c.b16 %v11369, %v11367
    %v12112 = vpack.c.b16 %v11370, %v11368
    %v12113 = vpack.c.b16 %v11373, %v11371
    %v12114 = vpack.c.b16 %v11374, %v11372
    %v12115 = vpack.c.b16 %v11377, %v11375
    %v12116 = vpack.c.b16 %v11378, %v11376
    %v12117 = vpack.c.b16 %v11381, %v11379
    %v12118 = vpack.c.b16 %v11382, %v11380
    %v12119 = vpack.c.b16 %v11385, %v11383
    %v12120 = vpack.c.b16 %v11386, %v11384
    %v12121 = vpack.c.b16 %v11389, %v11387
    %v12122 = vpack.c.b16 %v11390, %v11388
    %v12123 = vpack.c.b16 %v11393, %v11391
    %v12124 = vpack.c.b16 %v11394, %v11392
    %v12125 = vpack.c.b16 %v11397, %v11395
    %v12126 = vpack.c.b16 %v11398, %v11396
    %v12127 = vpack.c.b16 %v11401, %v11399
    %v12128 = vpack.c.b16 %v11402, %v11400
    %v12129 = vpack.c.b16 %v11405, %v11403
    %v12130 = vpack.c.b16 %v11406, %v11404
    %v12131 = vpack.c.b16 %v11409, %v11407
    %v12132 = vpack.c.b16 %v11410, %v11408
    %v12133 = vpack.c.b16 %v11413, %v11411
    %v12134 = vpack.c.b16 %v11414, %v11412
    %v12135 = vpack.c.b16 %v11417, %v11415
    %v12136 = vpack.c.b16 %v11418, %v11416
    %v12137 = vpack.c.b16 %v11421, %v11419
    %v12138 = vpack.c.b16 %v11422, %v11420
    %v12139 = vpack.c.b16 %v11425, %v11423
    %v12140 = vpack.c.b16 %v11426, %v11424
    %v12141 = vpack.c.b16 %v11429, %v11427
    %v12142 = vpack.c.b16 %v11430, %v11428
    %v12143 = vpack.c.b16 %v11433, %v11431
    %v12144 = vpack.c.b16 %v11434, %v11432
    %v12145 = vpack.c.b16 %v11437, %v11435
    %v12146 = vpack.c.b16 %v11438, %v11436
    %v12147 = vpack.c.b16 %v11441, %v11439
    %v12148 = vpack.c.b16 %v11442, %v11440
    %v12149 = vpack.c.b16 %v11445, %v11443
    %v12150 = vpack.c.b16 %v11446, %v11444
    %v12151 = vpack.c.b16 %v11449, %v11447
    %v12152 = vpack.c.b16 %v11450, %v11448
    %v12153 = vpack.c.b16 %v11453, %v11451
    %v12154 = vpack.c.b16 %v11454, %v11452
    %v12155 = vpack.c.b16 %v11457, %v11455
    %v12156 = vpack.c.b16 %v11458, %v11456
    %v12157 = vpack.c.b16 %v11461, %v11459
    %v12158 = vpack.c.b16 %v11462, %v11460
    %v12159 = vpack.c.b16 %v11465, %v11463
    %v12160 = vpack.c.b16 %v11466, %v11464
    %v12161 = vpack.c.b16 %v11469, %v11467
    %v12162 = vpack.c.b16 %v11470, %v11468
    %v12163 = vpack.c.b16 %v11473, %v11471
    %v12164 = vpack.c.b16 %v11474, %v11472
    %v12165 = vpack.c.b16 %v11477, %v11475
    %v12166 = vpack.c.b16 %v11478, %v11476
    %v12167 = vpack.c.b16 %v11481, %v11479
    %v12168 = vpack.c.b16 %v11482, %v11480
    %v12169 = vpack.c.b16 %v11485, %v11483
    %v12170 = vpack.c.b16 %v11486, %v11484
    %v12171 = vpack.c.b16 %v11489, %v11487
    %v12172 = vpack.c.b16 %v11490, %v11488
    %v12173 = vpack.c.b16 %v11493, %v11491
    %v12174 = vpack.c.b16 %v11494, %v11492
    %v12175 = vpack.c.b16 %v11497, %v11495
    %v12176 = vpack.c.b16 %v11498, %v11496
    %v12177 = vpack.c.b16 %v11501, %v11499
    %v12178 = vpack.c.b16 %v11502, %v11500
    %v12179 = vpack.c.b16 %v11505, %v11503
    %v12180 = vpack.c.b16 %v11506, %v11504
    %v12181 = vpack.c.b16 %v11509, %v11507
    %v12182 = vpack.c.b16 %v11510, %v11508
    %v12183 = vpack.c.b16 %v11513, %v11511
    %v12184 = vpack.c.b16 %v11514, %v11512
    %v12185 = vpack.c.b16 %v11517, %v11515
    %v12186 = vpack.c.b16 %v11518, %v11516
    %v12187 = vpack.c.b16 %v11521, %v11519
    %v12188 = vpack.c.b16 %v11522, %v11520
    %v12189 = vpack.c.b16 %v11525, %v11523
    %v12190 = vpack.c.b16 %v11526, %v11524
    %v12191 = vpack.c.b16 %v11529, %v11527
    %v12192 = vpack.c.b16 %v11530, %v11528
    %v12193 = vpack.c.b16 %v11533, %v11531
    %v12194 = vpack.c.b16 %v11534, %v11532
    %v12195 = vpack.c.b16 %v11537, %v11535
    %v12196 = vpack.c.b16 %v11538, %v11536
    %v12197 = vpack.c.b16 %v11541, %v11539
    %v12198 = vpack.c.b16 %v11542, %v11540
    %v12199 = vpack.c.b16 %v11545, %v11543
    %v12200 = vpack.c.b16 %v11546, %v11544
    %v12201 = vpack.c.b16 %v11549, %v11547
    %v12202 = vpack.c.b16 %v11550, %v11548
    %v12203 = vpack.c.b16 %v11553, %v11551
    %v12204 = vpack.c.b16 %v11554, %v11552
    %v12205 = vpack.c.b16 %v11557, %v11555
    %v12206 = vpack.c.b16 %v11558, %v11556
    %v12207 = vpack.c.b16 %v11561, %v11559
    %v12208 = vpack.c.b16 %v11562, %v11560
    %v12209 = vpack.c.b16 %v11565, %v11563
    %v12210 = vpack.c.b16 %v11566, %v11564
    %v12211 = vpack.c.b16 %v11569, %v11567
    %v12212 = vpack.c.b16 %v11570, %v11568
    %v12213 = vpack.c.b16 %v11573, %v11571
    %v12214 = vpack.c.b16 %v11574, %v11572
    %v12215 = vpack.c.b16 %v11577, %v11575
    %v12216 = vpack.c.b16 %v11578, %v11576
    %v12217 = vpack.c.b16 %v11581, %v11579
    %v12218 = vpack.c.b16 %v11582, %v11580
    %v12219 = vpack.c.b16 %v11585, %v11583
    %v12220 = vpack.c.b16 %v11586, %v11584
    %v12221 = vpack.c.b16 %v11589, %v11587
    %v12222 = vpack.c.b16 %v11590, %v11588
    %v12223 = vpack.c.b16 %v11593, %v11591
    %v12224 = vpack.c.b16 %v11594, %v11592
    %v12225 = vpack.c.b16 %v11597, %v11595
    %v12226 = vpack.c.b16 %v11598, %v11596
    %v12227 = vpack.c.b16 %v11601, %v11599
    %v12228 = vpack.c.b16 %v11602, %v11600
    %v12229 = vpack.c.b16 %v11605, %v11603
    %v12230 = vpack.c.b16 %v11606, %v11604
    %v12231 = vpack.c.b16 %v11609, %v11607
    %v12232 = vpack.c.b16 %v11610, %v11608
    %v12233 = vpack.c.b16 %v11613, %v11611
    %v12234 = vpack.c.b16 %v11614, %v11612
    %v12235 = vpack.c.b16 %v11617, %v11615
    %v12236 = vpack.c.b16 %v11618, %v11616
    %v12237 = vpack.c.b16 %v11621, %v11619
    %v12238 = vpack.c.b16 %v11622, %v11620
    %v12239 = vpack.c.b16 %v11625, %v11623
    %v12240 = vpack.c.b16 %v11626, %v11624
    %v12241 = vpack.c.b16 %v11629, %v11627
    %v12242 = vpack.c.b16 %v11630, %v11628
    %v12243 = vpack.c.b16 %v11633, %v11631
    %v12244 = vpack.c.b16 %v11634, %v11632
    %v12245 = vpack.c.b16 %v11637, %v11635
    %v12246 = vpack.c.b16 %v11638, %v11636
    %v12247 = vpack.c.b16 %v11641, %v11639
    %v12248 = vpack.c.b16 %v11642, %v11640
    %v12249 = vpack.c.b16 %v11645, %v11643
    %v12250 = vpack.c.b16 %v11646, %v11644
    %v12251 = vpack.c.b16 %v11649, %v11647
    %v12252 = vpack.c.b16 %v11650, %v11648
    %v12253 = vpack.c.b16 %v11653, %v11651
    %v12254 = vpack.c.b16 %v11654, %v11652
    %v12255 = vpack.c.b16 %v11657, %v11655
    %v12256 = vpack.c.b16 %v11658, %v11656
    %v12257 = vpack.c.b16 %v11661, %v11659
    %v12258 = vpack.c.b16 %v11662, %v11660
    %v12259 = vpack.c.b16 %v11665, %v11663
    %v12260 = vpack.c.b16 %v11666, %v11664
    %v12261 = vpack.c.b16 %v11669, %v11667
    %v12262 = vpack.c.b16 %v11670, %v11668
    %v12263 = vpack.c.b16 %v11673, %v11671
    %v12264 = vpack.c.b16 %v11674, %v11672
    %v12265 = vpack.c.b16 %v11677, %v11675
    %v12266 = vpack.c.b16 %v11678, %v11676
    %v12267 = vpack.c.b16 %v11681, %v11679
    %v12268 = vpack.c.b16 %v11682, %v11680
    %v12269 = vpack.c.b16 %v11685, %v11683
    %v12270 = vpack.c.b16 %v11686, %v11684
    %v12271 = vpack.c.b16 %v11689, %v11687
    %v12272 = vpack.c.b16 %v11690, %v11688
    %v12273 = vpack.c.b16 %v11693, %v11691
    %v12274 = vpack.c.b16 %v11694, %v11692
    %v12275 = vpack.c.b16 %v11697, %v11695
    %v12276 = vpack.c.b16 %v11698, %v11696
    %v12277 = vpack.c.b16 %v11701, %v11699
    %v12278 = vpack.c.b16 %v11702, %v11700
    %v12279 = vpack.c.b16 %v11705, %v11703
    %v12280 = vpack.c.b16 %v11706, %v11704
    %v12281 = vpack.c.b16 %v11709, %v11707
    %v12282 = vpack.c.b16 %v11710, %v11708
    %v12283 = vpack.c.b16 %v11713, %v11711
    %v12284 = vpack.c.b16 %v11714, %v11712
    %v12285 = vpack.c.b16 %v11717, %v11715
    %v12286 = vpack.c.b16 %v11718, %v11716
    %v12287 = vpack.c.b16 %v11721, %v11719
    %v12288 = vpack.c.b16 %v11722, %v11720
    %v12289 = vpack.c.b16 %v11725, %v11723
    %v12290 = vpack.c.b16 %v11726, %v11724
    %v12291 = vpack.c.b16 %v11729, %v11727
    %v12292 = vpack.c.b16 %v11730, %v11728
    %v12293 = vpack.c.b16 %v11733, %v11731
    %v12294 = vpack.c.b16 %v11734, %v11732
    %v12295 = vpack.c.b16 %v11737, %v11735
    %v12296 = vpack.c.b16 %v11738, %v11736
    %v12297 = vpack.c.b16 %v11741, %v11739
    %v12298 = vpack.c.b16 %v11742, %v11740
    %v12299 = vpack.c.b16 %v11745, %v11743
    %v12300 = vpack.c.b16 %v11746, %v11744
    %v12301 = vpack.c.b16 %v11749, %v11747
    %v12302 = vpack.c.b16 %v11750, %v11748
    %v12303 = vpack.c.b16 %v11753, %v11751
    %v12304 = vpack.c.b16 %v11754, %v11752
    %v12305 = vpack.c.b16 %v11757, %v11755
    %v12306 = vpack.c.b16 %v11758, %v11756
    %v12307 = vpack.c.b16 %v11761, %v11759
    %v12308 = vpack.c.b16 %v11762, %v11760
    %v12309 = vpack.c.b16 %v11765, %v11763
    %v12310 = vpack.c.b16 %v11766, %v11764
    %v12311 = vpack.c.b16 %v11769, %v11767
    %v12312 = vpack.c.b16 %v11770, %v11768
    %v12313 = vpack.c.b16 %v11773, %v11771
    %v12314 = vpack.c.b16 %v11774, %v11772
    %v12315 = vpack.c.b16 %v11777, %v11775
    %v12316 = vpack.c.b16 %v11778, %v11776
    %v12317 = vpack.c.b16 %v11781, %v11779
    %v12318 = vpack.c.b16 %v11782, %v11780
    %v12319 = vpack.c.b16 %v11785, %v11783
    %v12320 = vpack.c.b16 %v11786, %v11784
    %v12321 = vpack.c.b16 %v11789, %v11787
    %v12322 = vpack.c.b16 %v11790, %v11788
    %v12323 = vpack.c.b16 %v11793, %v11791
    %v12324 = vpack.c.b16 %v11794, %v11792
    %v12325 = vpack.c.b16 %v11797, %v11795
    %v12326 = vpack.c.b16 %v11798, %v11796
    %v12327 = vpack.c.b16 %v11801, %v11799
    %v12328 = vpack.c.b16 %v11802, %v11800
    %v12329 = vpack.c.b16 %v11805, %v11803
    %v12330 = vpack.c.b16 %v11806, %v11804
    %v12331 = vpack.c.b16 %v11809, %v11807
    %v12332 = vpack.c.b16 %v11810, %v11808
    %v12333 = vpack.c.b16 %v11813, %v11811
    %v12334 = vpack.c.b16 %v11814, %v11812
    %v12335 = vpack.c.b16 %v11817, %v11815
    %v12336 = vpack.c.b16 %v11818, %v11816
    %v12337 = vpack.c.b16 %v11821, %v11819
    %v12338 = vpack.c.b16 %v11822, %v11820
    %v12339 = vpack.c.b16 %v11825, %v11823
    %v12340 = vpack.c.b16 %v11826, %v11824
    %v12341 = vpack.c.b16 %v11829, %v11827
    %v12342 = vpack.c.b16 %v11830, %v11828
    %v12343 = vpack.c.b16 %v11833, %v11831
    %v12344 = vpack.c.b16 %v11834, %v11832
    %v12345 = vpack.c.b16 %v11837, %v11835
    %v12346 = vpack.c.b16 %v11838, %v11836
    %v12347 = vpack.c.b16 %v11841, %v11839
    %v12348 = vpack.c.b16 %v11842, %v11840
    %v12349 = vpack.c.b16 %v11845, %v11843
    %v12350 = vpack.c.b16 %v11846, %v11844
    %v12351 = vpack.c.b16 %v11849, %v11847
    %v12352 = vpack.c.b16 %v11850, %v11848
    %v12353 = vpack.c.b16 %v11853, %v11851
    %v12354 = vpack.c.b16 %v11854, %v11852
    %v12355 = vpack.c.b16 %v11857, %v11855
    %v12356 = vpack.c.b16 %v11858, %v11856
    %v12357 = vpack.c.b16 %v11861, %v11859
    %v12358 = vpack.c.b16 %v11862, %v11860
    %v12359 = vpack.c.b16 %v11865, %v11863
    %v12360 = vpack.c.b16 %v11866, %v11864
    %v12361 = vpack.c.b16 %v11869, %v11867
    %v12362 = vpack.c.b16 %v11870, %v11868
    %v12363 = vpack.c.b16 %v11873, %v11871
    %v12364 = vpack.c.b16 %v11874, %v11872
    %v12365 = vpack.c.b16 %v11877, %v11875
    %v12366 = vpack.c.b16 %v11878, %v11876
    %v12367 = vpack.c.b16 %v11881, %v11879
    %v12368 = vpack.c.b16 %v11882, %v11880
    %v12369 = vpack.c.b16 %v11885, %v11883
    %v12370 = vpack.c.b16 %v11886, %v11884
    %v12371 = vpack.c.b16 %v11889, %v11887
    %v12372 = vpack.c.b16 %v11890, %v11888
    %v12373 = vpack.c.b16 %v11893, %v11891
    %v12374 = vpack.c.b16 %v11894, %v11892
    %v12375 = vpack.c.b16 %v11897, %v11895
    %v12376 = vpack.c.b16 %v11898, %v11896
    %v12377 = vpack.c.b16 %v11901, %v11899
    %v12378 = vpack.c.b16 %v11902, %v11900
    %v12379 = vpack.c.b16 %v11905, %v11903
    %v12380 = vpack.c.b16 %v11906, %v11904
    %v12381 = vpack.c.b16 %v11909, %v11907
    %v12382 = vpack.c.b16 %v11910, %v11908
    %v12383 = vpack.c.b16 %v11913, %v11911
    %v12384 = vpack.c.b16 %v11914, %v11912
    %v12385 = vpack.c.b16 %v11917, %v11915
    %v12386 = vpack.c.b16 %v11918, %v11916
    %v12387 = vpack.c.b16 %v11921, %v11919
    %v12388 = vpack.c.b16 %v11922, %v11920
    %v12389 = vpack.c.b16 %v11925, %v11923
    %v12390 = vpack.c.b16 %v11926, %v11924
    %v12391 = vpack.c.b16 %v11929, %v11927
    %v12392 = vpack.c.b16 %v11930, %v11928
    %v12393 = vpack.c.b16 %v11933, %v11931
    %v12394 = vpack.c.b16 %v11934, %v11932
    %v12395 = vpack.c.b16 %v11937, %v11935
    %v12396 = vpack.c.b16 %v11938, %v11936
    %v12397 = vpack.c.b16 %v11941, %v11939
    %v12398 = vpack.c.b16 %v11942, %v11940
    %v12399 = vpack.c.b16 %v11945, %v11943
    %v12400 = vpack.c.b16 %v11946, %v11944
    %v12401 = vpack.c.b16 %v11949, %v11947
    %v12402 = vpack.c.b16 %v11950, %v11948
    %v12403 = vpack.c.b16 %v11953, %v11951
    %v12404 = vpack.c.b16 %v11954, %v11952
    %v12405 = vpack.c.b16 %v11957, %v11955
    %v12406 = vpack.c.b16 %v11958, %v11956
    %v12407 = vpack.c.b16 %v11961, %v11959
    %v12408 = vpack.c.b16 %v11962, %v11960
    %v12409 = vpack.c.b16 %v11965, %v11963
    %v12410 = vpack.c.b16 %v11966, %v11964
    %v12411 = vpack.c.b16 %v11969, %v11967
    %v12412 = vpack.c.b16 %v11970, %v11968
    %v12413 = vpack.c.b16 %v11973, %v11971
    %v12414 = vpack.c.b16 %v11974, %v11972
    %v12415 = vpack.c.b16 %v11977, %v11975
    %v12416 = vpack.c.b16 %v11978, %v11976
    %v12417 = vpack.c.b16 %v11981, %v11979
    %v12418 = vpack.c.b16 %v11982, %v11980
    %v12419 = vpack.c.b16 %v11985, %v11983
    %v12420 = vpack.c.b16 %v11986, %v11984
    %v12421 = vpack.c.b16 %v11989, %v11987
    %v12422 = vpack.c.b16 %v11990, %v11988
    %v12423 = vpack.c.b16 %v11993, %v11991
    %v12424 = vpack.c.b16 %v11994, %v11992
    %v12425 = vpack.c.b16 %v11997, %v11995
    %v12426 = vpack.c.b16 %v11998, %v11996
    %v12427 = vpack.c.b16 %v12001, %v11999
    %v12428 = vpack.c.b16 %v12002, %v12000
    %v12429 = vpack.c.b16 %v12005, %v12003
    %v12430 = vpack.c.b16 %v12006, %v12004
    %v12431 = vpack.c.b16 %v12009, %v12007
    %v12432 = vpack.c.b16 %v12010, %v12008
    %v12433 = vpack.c.b16 %v12013, %v12011
    %v12434 = vpack.c.b16 %v12014, %v12012
    %v12435 = vpack.c.b16 %v12017, %v12015
    %v12436 = vpack.c.b16 %v12018, %v12016
    %v12437 = vpack.c.b16 %v12021, %v12019
    %v12438 = vpack.c.b16 %v12022, %v12020
    %v12439 = vpack.c.b16 %v12025, %v12023
    %v12440 = vpack.c.b16 %v12026, %v12024
    %v12441 = vpack.c.b16 %v12029, %v12027
    %v12442 = vpack.c.b16 %v12030, %v12028
    %v12443 = vpack.c.b16 %v12033, %v12031
    %v12444 = vpack.c.b16 %v12034, %v12032
    %v12445 = vpack.c.b16 %v12037, %v12035
    %v12446 = vpack.c.b16 %v12038, %v12036
    %v12447 = vpack.c.b16 %v12041, %v12039
    %v12448 = vpack.c.b16 %v12042, %v12040
    %v12449 = vpack.c.b16 %v12045, %v12043
    %v12450 = vpack.c.b16 %v12046, %v12044
    %v12451 = vpack.c.b16 %v12049, %v12047
    %v12452 = vpack.c.b16 %v12050, %v12048
    %v12453 = vpack.c.b16 %v12053, %v12051
    %v12454 = vpack.c.b16 %v12054, %v12052
    %12855 = vmatpush.bf16.msra.mxu0 %v12069
    %12856 = vmatpush.bf16.msra.mxu0 %v12067
    %12857 = vmatpush.bf16.msra.mxu0 %v12065
    %12858 = vmatpush.bf16.msra.mxu0 %v12063
    %12859 = vmatpush.bf16.msra.mxu0 %v12061
    %12860 = vmatpush.bf16.msra.mxu0 %v12059
    %12861 = vmatpush.bf16.msra.mxu0 %v12057
    %12862 = vmatpush.bf16.msra.mxu0 %v12055
    %12863 = vmatmul.bf16.gmra.mxu0 %v10799
    %v12864 = vpop.f32.mrf.mxu0
    %v12865 = vadd.f32 %v10793, %v12864
    %v12866 = vpop.f32.mrf.mxu0
    %12867 = vdwg.mxu0
    %12868 = vmatpush.bf16.msra.mxu0 %v12085
    %12869 = vmatpush.bf16.msra.mxu0 %v12083
    %12870 = vmatpush.bf16.msra.mxu0 %v12081
    %12871 = vmatpush.bf16.msra.mxu0 %v12079
    %12872 = vmatpush.bf16.msra.mxu0 %v12077
    %12873 = vmatpush.bf16.msra.mxu0 %v12075
    %12874 = vmatpush.bf16.msra.mxu0 %v12073
    %12875 = vmatpush.bf16.msra.mxu0 %v12071
    %12876 = vmatmul.bf16.gmra.mxu0 %v10800
    %v12877 = vpop.f32.mrf.mxu0
    %v12878 = vadd.f32 %v12865, %v12877
    %v12879 = vpop.f32.mrf.mxu0
    %12880 = vdwg.mxu0
    %12881 = vmatpush.bf16.msra.mxu0 %v12101
    %12882 = vmatpush.bf16.msra.mxu0 %v12099
    %12883 = vmatpush.bf16.msra.mxu0 %v12097
    %12884 = vmatpush.bf16.msra.mxu0 %v12095
    %12885 = vmatpush.bf16.msra.mxu0 %v12093
    %12886 = vmatpush.bf16.msra.mxu0 %v12091
    %12887 = vmatpush.bf16.msra.mxu0 %v12089
    %12888 = vmatpush.bf16.msra.mxu0 %v12087
    %12889 = vmatmul.bf16.gmra.mxu0 %v10801
    %v12890 = vpop.f32.mrf.mxu0
    %v12891 = vadd.f32 %v12878, %v12890
    %v12892 = vpop.f32.mrf.mxu0
    %12893 = vdwg.mxu0
    %12894 = vmatpush.bf16.msra.mxu0 %v12117
    %12895 = vmatpush.bf16.msra.mxu0 %v12115
    %12896 = vmatpush.bf16.msra.mxu0 %v12113
    %12897 = vmatpush.bf16.msra.mxu0 %v12111
    %12898 = vmatpush.bf16.msra.mxu0 %v12109
    %12899 = vmatpush.bf16.msra.mxu0 %v12107
    %12900 = vmatpush.bf16.msra.mxu0 %v12105
    %12901 = vmatpush.bf16.msra.mxu0 %v12103
    %12902 = vmatmul.bf16.gmra.mxu0 %v10802
    %v12903 = vpop.f32.mrf.mxu0
    %v12904 = vadd.f32 %v12891, %v12903
    %v12905 = vpop.f32.mrf.mxu0
    %12906 = vdwg.mxu0
    %12907 = vmatpush.bf16.msra.mxu0 %v12133
    %12908 = vmatpush.bf16.msra.mxu0 %v12131
    %12909 = vmatpush.bf16.msra.mxu0 %v12129
    %12910 = vmatpush.bf16.msra.mxu0 %v12127
    %12911 = vmatpush.bf16.msra.mxu0 %v12125
    %12912 = vmatpush.bf16.msra.mxu0 %v12123
    %12913 = vmatpush.bf16.msra.mxu0 %v12121
    %12914 = vmatpush.bf16.msra.mxu0 %v12119
    %12915 = vmatmul.bf16.gmra.mxu0 %v10803
    %v12916 = vpop.f32.mrf.mxu0
    %v12917 = vadd.f32 %v12904, %v12916
    %v12918 = vpop.f32.mrf.mxu0
    %12919 = vdwg.mxu0
    %12920 = vmatpush.bf16.msra.mxu0 %v12149
    %12921 = vmatpush.bf16.msra.mxu0 %v12147
    %12922 = vmatpush.bf16.msra.mxu0 %v12145
    %12923 = vmatpush.bf16.msra.mxu0 %v12143
    %12924 = vmatpush.bf16.msra.mxu0 %v12141
    %12925 = vmatpush.bf16.msra.mxu0 %v12139
    %12926 = vmatpush.bf16.msra.mxu0 %v12137
    %12927 = vmatpush.bf16.msra.mxu0 %v12135
    %12928 = vmatmul.bf16.gmra.mxu0 %v10804
    %v12929 = vpop.f32.mrf.mxu0
    %v12930 = vadd.f32 %v12917, %v12929
    %v12931 = vpop.f32.mrf.mxu0
    %12932 = vdwg.mxu0
    %12933 = vmatpush.bf16.msra.mxu0 %v12165
    %12934 = vmatpush.bf16.msra.mxu0 %v12163
    %12935 = vmatpush.bf16.msra.mxu0 %v12161
    %12936 = vmatpush.bf16.msra.mxu0 %v12159
    %12937 = vmatpush.bf16.msra.mxu0 %v12157
    %12938 = vmatpush.bf16.msra.mxu0 %v12155
    %12939 = vmatpush.bf16.msra.mxu0 %v12153
    %12940 = vmatpush.bf16.msra.mxu0 %v12151
    %12941 = vmatmul.bf16.gmra.mxu0 %v10805
    %v12942 = vpop.f32.mrf.mxu0
    %v12943 = vadd.f32 %v12930, %v12942
    %v12944 = vpop.f32.mrf.mxu0
    %12945 = vdwg.mxu0
    %12946 = vmatpush.bf16.msra.mxu0 %v12181
    %12947 = vmatpush.bf16.msra.mxu0 %v12179
    %12948 = vmatpush.bf16.msra.mxu0 %v12177
    %12949 = vmatpush.bf16.msra.mxu0 %v12175
    %12950 = vmatpush.bf16.msra.mxu0 %v12173
    %12951 = vmatpush.bf16.msra.mxu0 %v12171
    %12952 = vmatpush.bf16.msra.mxu0 %v12169
    %12953 = vmatpush.bf16.msra.mxu0 %v12167
    %12954 = vmatmul.bf16.gmra.mxu0 %v10806
    %v12955 = vpop.f32.mrf.mxu0
    %v12956 = vadd.f32 %v12943, %v12955
    %v12957 = vpop.f32.mrf.mxu0
    %12958 = vdwg.mxu0
    %12959 = vmatpush.bf16.msra.mxu0 %v12197
    %12960 = vmatpush.bf16.msra.mxu0 %v12195
    %12961 = vmatpush.bf16.msra.mxu0 %v12193
    %12962 = vmatpush.bf16.msra.mxu0 %v12191
    %12963 = vmatpush.bf16.msra.mxu0 %v12189
    %12964 = vmatpush.bf16.msra.mxu0 %v12187
    %12965 = vmatpush.bf16.msra.mxu0 %v12185
    %12966 = vmatpush.bf16.msra.mxu0 %v12183
    %12967 = vmatmul.bf16.gmra.mxu0 %v10809
    %v12968 = vpop.f32.mrf.mxu0
    %v12969 = vadd.f32 %v12956, %v12968
    %v12970 = vpop.f32.mrf.mxu0
    %12971 = vdwg.mxu0
    %12972 = vmatpush.bf16.msra.mxu0 %v12213
    %12973 = vmatpush.bf16.msra.mxu0 %v12211
    %12974 = vmatpush.bf16.msra.mxu0 %v12209
    %12975 = vmatpush.bf16.msra.mxu0 %v12207
    %12976 = vmatpush.bf16.msra.mxu0 %v12205
    %12977 = vmatpush.bf16.msra.mxu0 %v12203
    %12978 = vmatpush.bf16.msra.mxu0 %v12201
    %12979 = vmatpush.bf16.msra.mxu0 %v12199
    %12980 = vmatmul.bf16.gmra.mxu0 %v10810
    %v12981 = vpop.f32.mrf.mxu0
    %v12982 = vadd.f32 %v12969, %v12981
    %v12983 = vpop.f32.mrf.mxu0
    %12984 = vdwg.mxu0
    %12985 = vmatpush.bf16.msra.mxu0 %v12229
    %12986 = vmatpush.bf16.msra.mxu0 %v12227
    %12987 = vmatpush.bf16.msra.mxu0 %v12225
    %12988 = vmatpush.bf16.msra.mxu0 %v12223
    %12989 = vmatpush.bf16.msra.mxu0 %v12221
    %12990 = vmatpush.bf16.msra.mxu0 %v12219
    %12991 = vmatpush.bf16.msra.mxu0 %v12217
    %12992 = vmatpush.bf16.msra.mxu0 %v12215
    %12993 = vmatmul.bf16.gmra.mxu0 %v10811
    %v12994 = vpop.f32.mrf.mxu0
    %v12995 = vadd.f32 %v12982, %v12994
    %v12996 = vpop.f32.mrf.mxu0
    %12997 = vdwg.mxu0
    %12998 = vmatpush.bf16.msra.mxu0 %v12245
    %12999 = vmatpush.bf16.msra.mxu0 %v12243
    %13000 = vmatpush.bf16.msra.mxu0 %v12241
    %13001 = vmatpush.bf16.msra.mxu0 %v12239
    %13002 = vmatpush.bf16.msra.mxu0 %v12237
    %13003 = vmatpush.bf16.msra.mxu0 %v12235
    %13004 = vmatpush.bf16.msra.mxu0 %v12233
    %13005 = vmatpush.bf16.msra.mxu0 %v12231
    %13006 = vmatmul.bf16.gmra.mxu0 %v10812
    %v13007 = vpop.f32.mrf.mxu0
    %v13008 = vadd.f32 %v12995, %v13007
    %v13009 = vpop.f32.mrf.mxu0
    %13010 = vdwg.mxu0
    %13011 = vmatpush.bf16.msra.mxu0 %v12261
    %13012 = vmatpush.bf16.msra.mxu0 %v12259
    %13013 = vmatpush.bf16.msra.mxu0 %v12257
    %13014 = vmatpush.bf16.msra.mxu0 %v12255
    %13015 = vmatpush.bf16.msra.mxu0 %v12253
    %13016 = vmatpush.bf16.msra.mxu0 %v12251
    %13017 = vmatpush.bf16.msra.mxu0 %v12249
    %13018 = vmatpush.bf16.msra.mxu0 %v12247
    %13019 = vmatmul.bf16.gmra.mxu0 %v10813
    %v13020 = vpop.f32.mrf.mxu0
    %v13021 = vadd.f32 %v13008, %v13020
    %v13022 = vpop.f32.mrf.mxu0
    %13023 = vdwg.mxu0
    %13024 = vmatpush.bf16.msra.mxu0 %v12277
    %13025 = vmatpush.bf16.msra.mxu0 %v12275
    %13026 = vmatpush.bf16.msra.mxu0 %v12273
    %13027 = vmatpush.bf16.msra.mxu0 %v12271
    %13028 = vmatpush.bf16.msra.mxu0 %v12269
    %13029 = vmatpush.bf16.msra.mxu0 %v12267
    %13030 = vmatpush.bf16.msra.mxu0 %v12265
    %13031 = vmatpush.bf16.msra.mxu0 %v12263
    %13032 = vmatmul.bf16.gmra.mxu0 %v10814
    %v13033 = vpop.f32.mrf.mxu0
    %v13034 = vadd.f32 %v13021, %v13033
    %v13035 = vpop.f32.mrf.mxu0
    %13036 = vdwg.mxu0
    %13037 = vmatpush.bf16.msra.mxu0 %v12293
    %13038 = vmatpush.bf16.msra.mxu0 %v12291
    %13039 = vmatpush.bf16.msra.mxu0 %v12289
    %13040 = vmatpush.bf16.msra.mxu0 %v12287
    %13041 = vmatpush.bf16.msra.mxu0 %v12285
    %13042 = vmatpush.bf16.msra.mxu0 %v12283
    %13043 = vmatpush.bf16.msra.mxu0 %v12281
    %13044 = vmatpush.bf16.msra.mxu0 %v12279
    %13045 = vmatmul.bf16.gmra.mxu0 %v10815
    %v13046 = vpop.f32.mrf.mxu0
    %v13047 = vadd.f32 %v13034, %v13046
    %v13048 = vpop.f32.mrf.mxu0
    %13049 = vdwg.mxu0
    %13050 = vmatpush.bf16.msra.mxu0 %v12309
    %13051 = vmatpush.bf16.msra.mxu0 %v12307
    %13052 = vmatpush.bf16.msra.mxu0 %v12305
    %13053 = vmatpush.bf16.msra.mxu0 %v12303
    %13054 = vmatpush.bf16.msra.mxu0 %v12301
    %13055 = vmatpush.bf16.msra.mxu0 %v12299
    %13056 = vmatpush.bf16.msra.mxu0 %v12297
    %13057 = vmatpush.bf16.msra.mxu0 %v12295
    %13058 = vmatmul.bf16.gmra.mxu0 %v10816
    %v13059 = vpop.f32.mrf.mxu0
    %v13060 = vadd.f32 %v13047, %v13059
    %v13061 = vpop.f32.mrf.mxu0
    %13062 = vdwg.mxu0
    %13063 = vmatpush.bf16.msra.mxu0 %v12325
    %13064 = vmatpush.bf16.msra.mxu0 %v12323
    %13065 = vmatpush.bf16.msra.mxu0 %v12321
    %13066 = vmatpush.bf16.msra.mxu0 %v12319
    %13067 = vmatpush.bf16.msra.mxu0 %v12317
    %13068 = vmatpush.bf16.msra.mxu0 %v12315
    %13069 = vmatpush.bf16.msra.mxu0 %v12313
    %13070 = vmatpush.bf16.msra.mxu0 %v12311
    %13071 = vmatmul.bf16.gmra.mxu0 %v10819
    %v13072 = vpop.f32.mrf.mxu0
    %v13073 = vadd.f32 %v13060, %v13072
    %v13074 = vpop.f32.mrf.mxu0
    %13075 = vdwg.mxu0
    %13076 = vmatpush.bf16.msra.mxu0 %v12341
    %13077 = vmatpush.bf16.msra.mxu0 %v12339
    %13078 = vmatpush.bf16.msra.mxu0 %v12337
    %13079 = vmatpush.bf16.msra.mxu0 %v12335
    %13080 = vmatpush.bf16.msra.mxu0 %v12333
    %13081 = vmatpush.bf16.msra.mxu0 %v12331
    %13082 = vmatpush.bf16.msra.mxu0 %v12329
    %13083 = vmatpush.bf16.msra.mxu0 %v12327
    %13084 = vmatmul.bf16.gmra.mxu0 %v10820
    %v13085 = vpop.f32.mrf.mxu0
    %v13086 = vadd.f32 %v13073, %v13085
    %v13087 = vpop.f32.mrf.mxu0
    %13088 = vdwg.mxu0
    %13089 = vmatpush.bf16.msra.mxu0 %v12357
    %13090 = vmatpush.bf16.msra.mxu0 %v12355
    %13091 = vmatpush.bf16.msra.mxu0 %v12353
    %13092 = vmatpush.bf16.msra.mxu0 %v12351
    %13093 = vmatpush.bf16.msra.mxu0 %v12349
    %13094 = vmatpush.bf16.msra.mxu0 %v12347
    %13095 = vmatpush.bf16.msra.mxu0 %v12345
    %13096 = vmatpush.bf16.msra.mxu0 %v12343
    %13097 = vmatmul.bf16.gmra.mxu0 %v10821
    %v13098 = vpop.f32.mrf.mxu0
    %v13099 = vadd.f32 %v13086, %v13098
    %v13100 = vpop.f32.mrf.mxu0
    %13101 = vdwg.mxu0
    %13102 = vmatpush.bf16.msra.mxu0 %v12373
    %13103 = vmatpush.bf16.msra.mxu0 %v12371
    %13104 = vmatpush.bf16.msra.mxu0 %v12369
    %13105 = vmatpush.bf16.msra.mxu0 %v12367
    %13106 = vmatpush.bf16.msra.mxu0 %v12365
    %13107 = vmatpush.bf16.msra.mxu0 %v12363
    %13108 = vmatpush.bf16.msra.mxu0 %v12361
    %13109 = vmatpush.bf16.msra.mxu0 %v12359
    %13110 = vmatmul.bf16.gmra.mxu0 %v10822
    %v13111 = vpop.f32.mrf.mxu0
    %v13112 = vadd.f32 %v13099, %v13111
    %v13113 = vpop.f32.mrf.mxu0
    %13114 = vdwg.mxu0
    %13115 = vmatpush.bf16.msra.mxu0 %v12389
    %13116 = vmatpush.bf16.msra.mxu0 %v12387
    %13117 = vmatpush.bf16.msra.mxu0 %v12385
    %13118 = vmatpush.bf16.msra.mxu0 %v12383
    %13119 = vmatpush.bf16.msra.mxu0 %v12381
    %13120 = vmatpush.bf16.msra.mxu0 %v12379
    %13121 = vmatpush.bf16.msra.mxu0 %v12377
    %13122 = vmatpush.bf16.msra.mxu0 %v12375
    %13123 = vmatmul.bf16.gmra.mxu0 %v10823
    %v13124 = vpop.f32.mrf.mxu0
    %v13125 = vadd.f32 %v13112, %v13124
    %v13126 = vpop.f32.mrf.mxu0
    %13127 = vdwg.mxu0
    %13128 = vmatpush.bf16.msra.mxu0 %v12405
    %13129 = vmatpush.bf16.msra.mxu0 %v12403
    %13130 = vmatpush.bf16.msra.mxu0 %v12401
    %13131 = vmatpush.bf16.msra.mxu0 %v12399
    %13132 = vmatpush.bf16.msra.mxu0 %v12397
    %13133 = vmatpush.bf16.msra.mxu0 %v12395
    %13134 = vmatpush.bf16.msra.mxu0 %v12393
    %13135 = vmatpush.bf16.msra.mxu0 %v12391
    %13136 = vmatmul.bf16.gmra.mxu0 %v10824
    %v13137 = vpop.f32.mrf.mxu0
    %v13138 = vadd.f32 %v13125, %v13137
    %v13139 = vpop.f32.mrf.mxu0
    %13140 = vdwg.mxu0
    %13141 = vmatpush.bf16.msra.mxu0 %v12421
    %13142 = vmatpush.bf16.msra.mxu0 %v12419
    %13143 = vmatpush.bf16.msra.mxu0 %v12417
    %13144 = vmatpush.bf16.msra.mxu0 %v12415
    %13145 = vmatpush.bf16.msra.mxu0 %v12413
    %13146 = vmatpush.bf16.msra.mxu0 %v12411
    %13147 = vmatpush.bf16.msra.mxu0 %v12409
    %13148 = vmatpush.bf16.msra.mxu0 %v12407
    %13149 = vmatmul.bf16.gmra.mxu0 %v10825
    %v13150 = vpop.f32.mrf.mxu0
    %v13151 = vadd.f32 %v13138, %v13150
    %v13152 = vpop.f32.mrf.mxu0
    %13153 = vdwg.mxu0
    %13154 = vmatpush.bf16.msra.mxu0 %v12437
    %13155 = vmatpush.bf16.msra.mxu0 %v12435
    %13156 = vmatpush.bf16.msra.mxu0 %v12433
    %13157 = vmatpush.bf16.msra.mxu0 %v12431
    %13158 = vmatpush.bf16.msra.mxu0 %v12429
    %13159 = vmatpush.bf16.msra.mxu0 %v12427
    %13160 = vmatpush.bf16.msra.mxu0 %v12425
    %13161 = vmatpush.bf16.msra.mxu0 %v12423
    %13162 = vmatmul.bf16.gmra.mxu0 %v10826
    %v13163 = vpop.f32.mrf.mxu0
    %v13164 = vadd.f32 %v13151, %v13163
    %v13165 = vpop.f32.mrf.mxu0
    %13166 = vdwg.mxu0
    %13167 = vmatpush.bf16.msra.mxu0 %v12453
    %13168 = vmatpush.bf16.msra.mxu0 %v12451
    %13169 = vmatpush.bf16.msra.mxu0 %v12449
    %13170 = vmatpush.bf16.msra.mxu0 %v12447
    %13171 = vmatpush.bf16.msra.mxu0 %v12445
    %13172 = vmatpush.bf16.msra.mxu0 %v12443
    %13173 = vmatpush.bf16.msra.mxu0 %v12441
    %13174 = vmatpush.bf16.msra.mxu0 %v12439
    %13175 = vmatmul.bf16.gmra.mxu0 %v10829
    %v13176 = vpop.f32.mrf.mxu0
    %v13177 = vadd.f32 %v13164, %v13176
    %v13178 = vpop.f32.mrf.mxu0
    %13179 = vdwg.mxu0
    %13180 = vmatpush.bf16.msra.mxu0 %v12070
    %13181 = vmatpush.bf16.msra.mxu0 %v12068
    %13182 = vmatpush.bf16.msra.mxu0 %v12066
    %13183 = vmatpush.bf16.msra.mxu0 %v12064
    %13184 = vmatpush.bf16.msra.mxu0 %v12062
    %13185 = vmatpush.bf16.msra.mxu0 %v12060
    %13186 = vmatpush.bf16.msra.mxu0 %v12058
    %13187 = vmatpush.bf16.msra.mxu0 %v12056
    %13188 = vmatmul.bf16.gmra.mxu0 %v10799
    %v13189 = vpop.f32.mrf.mxu0
    %v13190 = vadd.f32 %v10794, %v13189
    %v13191 = vpop.f32.mrf.mxu0
    %13192 = vdwg.mxu0
    %13193 = vmatpush.bf16.msra.mxu0 %v12086
    %13194 = vmatpush.bf16.msra.mxu0 %v12084
    %13195 = vmatpush.bf16.msra.mxu0 %v12082
    %13196 = vmatpush.bf16.msra.mxu0 %v12080
    %13197 = vmatpush.bf16.msra.mxu0 %v12078
    %13198 = vmatpush.bf16.msra.mxu0 %v12076
    %13199 = vmatpush.bf16.msra.mxu0 %v12074
    %13200 = vmatpush.bf16.msra.mxu0 %v12072
    %13201 = vmatmul.bf16.gmra.mxu0 %v10800
    %v13202 = vpop.f32.mrf.mxu0
    %v13203 = vadd.f32 %v13190, %v13202
    %v13204 = vpop.f32.mrf.mxu0
    %13205 = vdwg.mxu0
    %13206 = vmatpush.bf16.msra.mxu0 %v12102
    %13207 = vmatpush.bf16.msra.mxu0 %v12100
    %13208 = vmatpush.bf16.msra.mxu0 %v12098
    %13209 = vmatpush.bf16.msra.mxu0 %v12096
    %13210 = vmatpush.bf16.msra.mxu0 %v12094
    %13211 = vmatpush.bf16.msra.mxu0 %v12092
    %13212 = vmatpush.bf16.msra.mxu0 %v12090
    %13213 = vmatpush.bf16.msra.mxu0 %v12088
    %13214 = vmatmul.bf16.gmra.mxu0 %v10801
    %v13215 = vpop.f32.mrf.mxu0
    %v13216 = vadd.f32 %v13203, %v13215
    %v13217 = vpop.f32.mrf.mxu0
    %13218 = vdwg.mxu0
    %13219 = vmatpush.bf16.msra.mxu0 %v12118
    %13220 = vmatpush.bf16.msra.mxu0 %v12116
    %13221 = vmatpush.bf16.msra.mxu0 %v12114
    %13222 = vmatpush.bf16.msra.mxu0 %v12112
    %13223 = vmatpush.bf16.msra.mxu0 %v12110
    %13224 = vmatpush.bf16.msra.mxu0 %v12108
    %13225 = vmatpush.bf16.msra.mxu0 %v12106
    %13226 = vmatpush.bf16.msra.mxu0 %v12104
    %13227 = vmatmul.bf16.gmra.mxu0 %v10802
    %v13228 = vpop.f32.mrf.mxu0
    %v13229 = vadd.f32 %v13216, %v13228
    %v13230 = vpop.f32.mrf.mxu0
    %13231 = vdwg.mxu0
    %13232 = vmatpush.bf16.msra.mxu0 %v12134
    %13233 = vmatpush.bf16.msra.mxu0 %v12132
    %13234 = vmatpush.bf16.msra.mxu0 %v12130
    %13235 = vmatpush.bf16.msra.mxu0 %v12128
    %13236 = vmatpush.bf16.msra.mxu0 %v12126
    %13237 = vmatpush.bf16.msra.mxu0 %v12124
    %13238 = vmatpush.bf16.msra.mxu0 %v12122
    %13239 = vmatpush.bf16.msra.mxu0 %v12120
    %13240 = vmatmul.bf16.gmra.mxu0 %v10803
    %v13241 = vpop.f32.mrf.mxu0
    %v13242 = vadd.f32 %v13229, %v13241
    %v13243 = vpop.f32.mrf.mxu0
    %13244 = vdwg.mxu0
    %13245 = vmatpush.bf16.msra.mxu0 %v12150
    %13246 = vmatpush.bf16.msra.mxu0 %v12148
    %13247 = vmatpush.bf16.msra.mxu0 %v12146
    %13248 = vmatpush.bf16.msra.mxu0 %v12144
    %13249 = vmatpush.bf16.msra.mxu0 %v12142
    %13250 = vmatpush.bf16.msra.mxu0 %v12140
    %13251 = vmatpush.bf16.msra.mxu0 %v12138
    %13252 = vmatpush.bf16.msra.mxu0 %v12136
    %13253 = vmatmul.bf16.gmra.mxu0 %v10804
    %v13254 = vpop.f32.mrf.mxu0
    %v13255 = vadd.f32 %v13242, %v13254
    %v13256 = vpop.f32.mrf.mxu0
    %13257 = vdwg.mxu0
    %13258 = vmatpush.bf16.msra.mxu0 %v12166
    %13259 = vmatpush.bf16.msra.mxu0 %v12164
    %13260 = vmatpush.bf16.msra.mxu0 %v12162
    %13261 = vmatpush.bf16.msra.mxu0 %v12160
    %13262 = vmatpush.bf16.msra.mxu0 %v12158
    %13263 = vmatpush.bf16.msra.mxu0 %v12156
    %13264 = vmatpush.bf16.msra.mxu0 %v12154
    %13265 = vmatpush.bf16.msra.mxu0 %v12152
    %13266 = vmatmul.bf16.gmra.mxu0 %v10805
    %v13267 = vpop.f32.mrf.mxu0
    %v13268 = vadd.f32 %v13255, %v13267
    %v13269 = vpop.f32.mrf.mxu0
    %13270 = vdwg.mxu0
    %13271 = vmatpush.bf16.msra.mxu0 %v12182
    %13272 = vmatpush.bf16.msra.mxu0 %v12180
    %13273 = vmatpush.bf16.msra.mxu0 %v12178
    %13274 = vmatpush.bf16.msra.mxu0 %v12176
    %13275 = vmatpush.bf16.msra.mxu0 %v12174
    %13276 = vmatpush.bf16.msra.mxu0 %v12172
    %13277 = vmatpush.bf16.msra.mxu0 %v12170
    %13278 = vmatpush.bf16.msra.mxu0 %v12168
    %13279 = vmatmul.bf16.gmra.mxu0 %v10806
    %v13280 = vpop.f32.mrf.mxu0
    %v13281 = vadd.f32 %v13268, %v13280
    %v13282 = vpop.f32.mrf.mxu0
    %13283 = vdwg.mxu0
    %13284 = vmatpush.bf16.msra.mxu0 %v12198
    %13285 = vmatpush.bf16.msra.mxu0 %v12196
    %13286 = vmatpush.bf16.msra.mxu0 %v12194
    %13287 = vmatpush.bf16.msra.mxu0 %v12192
    %13288 = vmatpush.bf16.msra.mxu0 %v12190
    %13289 = vmatpush.bf16.msra.mxu0 %v12188
    %13290 = vmatpush.bf16.msra.mxu0 %v12186
    %13291 = vmatpush.bf16.msra.mxu0 %v12184
    %13292 = vmatmul.bf16.gmra.mxu0 %v10809
    %v13293 = vpop.f32.mrf.mxu0
    %v13294 = vadd.f32 %v13281, %v13293
    %v13295 = vpop.f32.mrf.mxu0
    %13296 = vdwg.mxu0
    %13297 = vmatpush.bf16.msra.mxu0 %v12214
    %13298 = vmatpush.bf16.msra.mxu0 %v12212
    %13299 = vmatpush.bf16.msra.mxu0 %v12210
    %13300 = vmatpush.bf16.msra.mxu0 %v12208
    %13301 = vmatpush.bf16.msra.mxu0 %v12206
    %13302 = vmatpush.bf16.msra.mxu0 %v12204
    %13303 = vmatpush.bf16.msra.mxu0 %v12202
    %13304 = vmatpush.bf16.msra.mxu0 %v12200
    %13305 = vmatmul.bf16.gmra.mxu0 %v10810
    %v13306 = vpop.f32.mrf.mxu0
    %v13307 = vadd.f32 %v13294, %v13306
    %v13308 = vpop.f32.mrf.mxu0
    %13309 = vdwg.mxu0
    %13310 = vmatpush.bf16.msra.mxu0 %v12230
    %13311 = vmatpush.bf16.msra.mxu0 %v12228
    %13312 = vmatpush.bf16.msra.mxu0 %v12226
    %13313 = vmatpush.bf16.msra.mxu0 %v12224
    %13314 = vmatpush.bf16.msra.mxu0 %v12222
    %13315 = vmatpush.bf16.msra.mxu0 %v12220
    %13316 = vmatpush.bf16.msra.mxu0 %v12218
    %13317 = vmatpush.bf16.msra.mxu0 %v12216
    %13318 = vmatmul.bf16.gmra.mxu0 %v10811
    %v13319 = vpop.f32.mrf.mxu0
    %v13320 = vadd.f32 %v13307, %v13319
    %v13321 = vpop.f32.mrf.mxu0
    %13322 = vdwg.mxu0
    %13323 = vmatpush.bf16.msra.mxu0 %v12246
    %13324 = vmatpush.bf16.msra.mxu0 %v12244
    %13325 = vmatpush.bf16.msra.mxu0 %v12242
    %13326 = vmatpush.bf16.msra.mxu0 %v12240
    %13327 = vmatpush.bf16.msra.mxu0 %v12238
    %13328 = vmatpush.bf16.msra.mxu0 %v12236
    %13329 = vmatpush.bf16.msra.mxu0 %v12234
    %13330 = vmatpush.bf16.msra.mxu0 %v12232
    %13331 = vmatmul.bf16.gmra.mxu0 %v10812
    %v13332 = vpop.f32.mrf.mxu0
    %v13333 = vadd.f32 %v13320, %v13332
    %v13334 = vpop.f32.mrf.mxu0
    %13335 = vdwg.mxu0
    %13336 = vmatpush.bf16.msra.mxu0 %v12262
    %13337 = vmatpush.bf16.msra.mxu0 %v12260
    %13338 = vmatpush.bf16.msra.mxu0 %v12258
    %13339 = vmatpush.bf16.msra.mxu0 %v12256
    %13340 = vmatpush.bf16.msra.mxu0 %v12254
    %13341 = vmatpush.bf16.msra.mxu0 %v12252
    %13342 = vmatpush.bf16.msra.mxu0 %v12250
    %13343 = vmatpush.bf16.msra.mxu0 %v12248
    %13344 = vmatmul.bf16.gmra.mxu0 %v10813
    %v13345 = vpop.f32.mrf.mxu0
    %v13346 = vadd.f32 %v13333, %v13345
    %v13347 = vpop.f32.mrf.mxu0
    %13348 = vdwg.mxu0
    %13349 = vmatpush.bf16.msra.mxu0 %v12278
    %13350 = vmatpush.bf16.msra.mxu0 %v12276
    %13351 = vmatpush.bf16.msra.mxu0 %v12274
    %13352 = vmatpush.bf16.msra.mxu0 %v12272
    %13353 = vmatpush.bf16.msra.mxu0 %v12270
    %13354 = vmatpush.bf16.msra.mxu0 %v12268
    %13355 = vmatpush.bf16.msra.mxu0 %v12266
    %13356 = vmatpush.bf16.msra.mxu0 %v12264
    %13357 = vmatmul.bf16.gmra.mxu0 %v10814
    %v13358 = vpop.f32.mrf.mxu0
    %v13359 = vadd.f32 %v13346, %v13358
    %v13360 = vpop.f32.mrf.mxu0
    %13361 = vdwg.mxu0
    %13362 = vmatpush.bf16.msra.mxu0 %v12294
    %13363 = vmatpush.bf16.msra.mxu0 %v12292
    %13364 = vmatpush.bf16.msra.mxu0 %v12290
    %13365 = vmatpush.bf16.msra.mxu0 %v12288
    %13366 = vmatpush.bf16.msra.mxu0 %v12286
    %13367 = vmatpush.bf16.msra.mxu0 %v12284
    %13368 = vmatpush.bf16.msra.mxu0 %v12282
    %13369 = vmatpush.bf16.msra.mxu0 %v12280
    %13370 = vmatmul.bf16.gmra.mxu0 %v10815
    %v13371 = vpop.f32.mrf.mxu0
    %v13372 = vadd.f32 %v13359, %v13371
    %v13373 = vpop.f32.mrf.mxu0
    %13374 = vdwg.mxu0
    %13375 = vmatpush.bf16.msra.mxu0 %v12310
    %13376 = vmatpush.bf16.msra.mxu0 %v12308
    %13377 = vmatpush.bf16.msra.mxu0 %v12306
    %13378 = vmatpush.bf16.msra.mxu0 %v12304
    %13379 = vmatpush.bf16.msra.mxu0 %v12302
    %13380 = vmatpush.bf16.msra.mxu0 %v12300
    %13381 = vmatpush.bf16.msra.mxu0 %v12298
    %13382 = vmatpush.bf16.msra.mxu0 %v12296
    %13383 = vmatmul.bf16.gmra.mxu0 %v10816
    %v13384 = vpop.f32.mrf.mxu0
    %v13385 = vadd.f32 %v13372, %v13384
    %v13386 = vpop.f32.mrf.mxu0
    %13387 = vdwg.mxu0
    %13388 = vmatpush.bf16.msra.mxu0 %v12326
    %13389 = vmatpush.bf16.msra.mxu0 %v12324
    %13390 = vmatpush.bf16.msra.mxu0 %v12322
    %13391 = vmatpush.bf16.msra.mxu0 %v12320
    %13392 = vmatpush.bf16.msra.mxu0 %v12318
    %13393 = vmatpush.bf16.msra.mxu0 %v12316
    %13394 = vmatpush.bf16.msra.mxu0 %v12314
    %13395 = vmatpush.bf16.msra.mxu0 %v12312
    %13396 = vmatmul.bf16.gmra.mxu0 %v10819
    %v13397 = vpop.f32.mrf.mxu0
    %v13398 = vadd.f32 %v13385, %v13397
    %v13399 = vpop.f32.mrf.mxu0
    %13400 = vdwg.mxu0
    %13401 = vmatpush.bf16.msra.mxu0 %v12342
    %13402 = vmatpush.bf16.msra.mxu0 %v12340
    %13403 = vmatpush.bf16.msra.mxu0 %v12338
    %13404 = vmatpush.bf16.msra.mxu0 %v12336
    %13405 = vmatpush.bf16.msra.mxu0 %v12334
    %13406 = vmatpush.bf16.msra.mxu0 %v12332
    %13407 = vmatpush.bf16.msra.mxu0 %v12330
    %13408 = vmatpush.bf16.msra.mxu0 %v12328
    %13409 = vmatmul.bf16.gmra.mxu0 %v10820
    %v13410 = vpop.f32.mrf.mxu0
    %v13411 = vadd.f32 %v13398, %v13410
    %v13412 = vpop.f32.mrf.mxu0
    %13413 = vdwg.mxu0
    %13414 = vmatpush.bf16.msra.mxu0 %v12358
    %13415 = vmatpush.bf16.msra.mxu0 %v12356
    %13416 = vmatpush.bf16.msra.mxu0 %v12354
    %13417 = vmatpush.bf16.msra.mxu0 %v12352
    %13418 = vmatpush.bf16.msra.mxu0 %v12350
    %13419 = vmatpush.bf16.msra.mxu0 %v12348
    %13420 = vmatpush.bf16.msra.mxu0 %v12346
    %13421 = vmatpush.bf16.msra.mxu0 %v12344
    %13422 = vmatmul.bf16.gmra.mxu0 %v10821
    %v13423 = vpop.f32.mrf.mxu0
    %v13424 = vadd.f32 %v13411, %v13423
    %v13425 = vpop.f32.mrf.mxu0
    %13426 = vdwg.mxu0
    %13427 = vmatpush.bf16.msra.mxu0 %v12374
    %13428 = vmatpush.bf16.msra.mxu0 %v12372
    %13429 = vmatpush.bf16.msra.mxu0 %v12370
    %13430 = vmatpush.bf16.msra.mxu0 %v12368
    %13431 = vmatpush.bf16.msra.mxu0 %v12366
    %13432 = vmatpush.bf16.msra.mxu0 %v12364
    %13433 = vmatpush.bf16.msra.mxu0 %v12362
    %13434 = vmatpush.bf16.msra.mxu0 %v12360
    %13435 = vmatmul.bf16.gmra.mxu0 %v10822
    %v13436 = vpop.f32.mrf.mxu0
    %v13437 = vadd.f32 %v13424, %v13436
    %v13438 = vpop.f32.mrf.mxu0
    %13439 = vdwg.mxu0
    %13440 = vmatpush.bf16.msra.mxu0 %v12390
    %13441 = vmatpush.bf16.msra.mxu0 %v12388
    %13442 = vmatpush.bf16.msra.mxu0 %v12386
    %13443 = vmatpush.bf16.msra.mxu0 %v12384
    %13444 = vmatpush.bf16.msra.mxu0 %v12382
    %13445 = vmatpush.bf16.msra.mxu0 %v12380
    %13446 = vmatpush.bf16.msra.mxu0 %v12378
    %13447 = vmatpush.bf16.msra.mxu0 %v12376
    %13448 = vmatmul.bf16.gmra.mxu0 %v10823
    %v13449 = vpop.f32.mrf.mxu0
    %v13450 = vadd.f32 %v13437, %v13449
    %v13451 = vpop.f32.mrf.mxu0
    %13452 = vdwg.mxu0
    %13453 = vmatpush.bf16.msra.mxu0 %v12406
    %13454 = vmatpush.bf16.msra.mxu0 %v12404
    %13455 = vmatpush.bf16.msra.mxu0 %v12402
    %13456 = vmatpush.bf16.msra.mxu0 %v12400
    %13457 = vmatpush.bf16.msra.mxu0 %v12398
    %13458 = vmatpush.bf16.msra.mxu0 %v12396
    %13459 = vmatpush.bf16.msra.mxu0 %v12394
    %13460 = vmatpush.bf16.msra.mxu0 %v12392
    %13461 = vmatmul.bf16.gmra.mxu0 %v10824
    %v13462 = vpop.f32.mrf.mxu0
    %v13463 = vadd.f32 %v13450, %v13462
    %v13464 = vpop.f32.mrf.mxu0
    %13465 = vdwg.mxu0
    %13466 = vmatpush.bf16.msra.mxu0 %v12422
    %13467 = vmatpush.bf16.msra.mxu0 %v12420
    %13468 = vmatpush.bf16.msra.mxu0 %v12418
    %13469 = vmatpush.bf16.msra.mxu0 %v12416
    %13470 = vmatpush.bf16.msra.mxu0 %v12414
    %13471 = vmatpush.bf16.msra.mxu0 %v12412
    %13472 = vmatpush.bf16.msra.mxu0 %v12410
    %13473 = vmatpush.bf16.msra.mxu0 %v12408
    %13474 = vmatmul.bf16.gmra.mxu0 %v10825
    %v13475 = vpop.f32.mrf.mxu0
    %v13476 = vadd.f32 %v13463, %v13475
    %v13477 = vpop.f32.mrf.mxu0
    %13478 = vdwg.mxu0
    %13479 = vmatpush.bf16.msra.mxu0 %v12438
    %13480 = vmatpush.bf16.msra.mxu0 %v12436
    %13481 = vmatpush.bf16.msra.mxu0 %v12434
    %13482 = vmatpush.bf16.msra.mxu0 %v12432
    %13483 = vmatpush.bf16.msra.mxu0 %v12430
    %13484 = vmatpush.bf16.msra.mxu0 %v12428
    %13485 = vmatpush.bf16.msra.mxu0 %v12426
    %13486 = vmatpush.bf16.msra.mxu0 %v12424
    %13487 = vmatmul.bf16.gmra.mxu0 %v10826
    %v13488 = vpop.f32.mrf.mxu0
    %v13489 = vadd.f32 %v13476, %v13488
    %v13490 = vpop.f32.mrf.mxu0
    %13491 = vdwg.mxu0
    %13492 = vmatpush.bf16.msra.mxu0 %v12454
    %13493 = vmatpush.bf16.msra.mxu0 %v12452
    %13494 = vmatpush.bf16.msra.mxu0 %v12450
    %13495 = vmatpush.bf16.msra.mxu0 %v12448
    %13496 = vmatpush.bf16.msra.mxu0 %v12446
    %13497 = vmatpush.bf16.msra.mxu0 %v12444
    %13498 = vmatpush.bf16.msra.mxu0 %v12442
    %13499 = vmatpush.bf16.msra.mxu0 %v12440
    %13500 = vmatmul.bf16.gmra.mxu0 %v10829
    %v13501 = vpop.f32.mrf.mxu0
    %v13502 = vadd.f32 %v13489, %v13501
    %v13503 = vpop.f32.mrf.mxu0
    %13504 = vdwg.mxu0
    %v13505 = vmax.f32 %v13177, 0.0
    %v13506 = vmax.f32 %v13502, 0.0
    %v13507 = vpack.c.bf16 %v13505, %v13505
    %v13508 = vpack.c.bf16 %v13506, %v13506
    %v13509 = vld [vmem:[%s9] sm:$0xf]
    %v13510 = vld [vmem:[%s9 + $0x4] sm:$0xf]
    %v13511 = vld [vmem:[%s9 + $0x8] sm:$0xf]
    %v13512 = vld [vmem:[%s9 + $0xc] sm:$0xf]
    %v13513 = vld [vmem:[%s9 + $0x10] sm:$0xf]
    %v13514 = vld [vmem:[%s9 + $0x14] sm:$0xf]
    %v13515 = vld [vmem:[%s9 + $0x18] sm:$0xf]
    %v13516 = vld [vmem:[%s9 + $0x1c] sm:$0xf]
    %v13517 = vld [vmem:[%s9 + $0x20] sm:$0xf]
    %v13518 = vld [vmem:[%s9 + $0x24] sm:$0xf]
    %v13519 = vld [vmem:[%s9 + $0x28] sm:$0xf]
    %v13520 = vld [vmem:[%s9 + $0x2c] sm:$0xf]
    %v13521 = vld [vmem:[%s9 + $0x30] sm:$0xf]
    %v13522 = vld [vmem:[%s9 + $0x34] sm:$0xf]
    %v13523 = vld [vmem:[%s9 + $0x38] sm:$0xf]
    %v13524 = vld [vmem:[%s9 + $0x3c] sm:$0xf]
    %v13525 = vld [vmem:[%s9 + $0x40] sm:$0xf]
    %v13526 = vld [vmem:[%s9 + $0x44] sm:$0xf]
    %v13527 = vld [vmem:[%s9 + $0x48] sm:$0xf]
    %v13528 = vld [vmem:[%s9 + $0x4c] sm:$0xf]
    %v13529 = vld [vmem:[%s9 + $0x50] sm:$0xf]
    %v13530 = vld [vmem:[%s9 + $0x54] sm:$0xf]
    %v13531 = vld [vmem:[%s9 + $0x58] sm:$0xf]
    %v13532 = vld [vmem:[%s9 + $0x5c] sm:$0xf]
    %v13533 = vld [vmem:[%s9 + $0x60] sm:$0xf]
    %v13534 = vld [vmem:[%s9 + $0x64] sm:$0xf]
    %v13535 = vld [vmem:[%s9 + $0x68] sm:$0xf]
    %v13536 = vld [vmem:[%s9 + $0x6c] sm:$0xf]
    %v13537 = vld [vmem:[%s9 + $0x70] sm:$0xf]
    %v13538 = vld [vmem:[%s9 + $0x74] sm:$0xf]
    %v13539 = vld [vmem:[%s9 + $0x78] sm:$0xf]
    %v13540 = vld [vmem:[%s9 + $0x7c] sm:$0xf]
    %v13541 = vld [vmem:[%s10] sm:$0x1]
    %v13543 = vperm.slane %v13541, 0
    %v13577 = vunpack.c.l.b16 %v13509
    %v13578 = vunpack.c.l.b16 %v13510
    %v13579 = vunpack.c.l.b16 %v13511
    %v13580 = vunpack.c.l.b16 %v13512
    %v13581 = vunpack.c.l.b16 %v13513
    %v13582 = vunpack.c.l.b16 %v13514
    %v13583 = vunpack.c.l.b16 %v13515
    %v13584 = vunpack.c.l.b16 %v13516
    %v13585 = vunpack.c.l.b16 %v13517
    %v13586 = vunpack.c.l.b16 %v13518
    %v13587 = vunpack.c.l.b16 %v13519
    %v13588 = vunpack.c.l.b16 %v13520
    %v13589 = vunpack.c.l.b16 %v13521
    %v13590 = vunpack.c.l.b16 %v13522
    %v13591 = vunpack.c.l.b16 %v13523
    %v13592 = vunpack.c.l.b16 %v13524
    %v13593 = vunpack.c.l.b16 %v13525
    %v13594 = vunpack.c.l.b16 %v13526
    %v13595 = vunpack.c.l.b16 %v13527
    %v13596 = vunpack.c.l.b16 %v13528
    %v13597 = vunpack.c.l.b16 %v13529
    %v13598 = vunpack.c.l.b16 %v13530
    %v13599 = vunpack.c.l.b16 %v13531
    %v13600 = vunpack.c.l.b16 %v13532
    %v13601 = vunpack.c.l.b16 %v13533
    %v13602 = vunpack.c.l.b16 %v13534
    %v13603 = vunpack.c.l.b16 %v13535
    %v13604 = vunpack.c.l.b16 %v13536
    %v13605 = vunpack.c.l.b16 %v13537
    %v13606 = vunpack.c.l.b16 %v13538
    %v13607 = vunpack.c.l.b16 %v13539
    %v13608 = vunpack.c.l.b16 %v13540
    %v13609 = vpack.c.b16 %v13578, %v13577
    %v13610 = vpack.c.b16 %v13580, %v13579
    %v13611 = vpack.c.b16 %v13582, %v13581
    %v13612 = vpack.c.b16 %v13584, %v13583
    %v13613 = vpack.c.b16 %v13586, %v13585
    %v13614 = vpack.c.b16 %v13588, %v13587
    %v13615 = vpack.c.b16 %v13590, %v13589
    %v13616 = vpack.c.b16 %v13592, %v13591
    %v13617 = vpack.c.b16 %v13594, %v13593
    %v13618 = vpack.c.b16 %v13596, %v13595
    %v13619 = vpack.c.b16 %v13598, %v13597
    %v13620 = vpack.c.b16 %v13600, %v13599
    %v13621 = vpack.c.b16 %v13602, %v13601
    %v13622 = vpack.c.b16 %v13604, %v13603
    %v13623 = vpack.c.b16 %v13606, %v13605
    %v13624 = vpack.c.b16 %v13608, %v13607
    %13641 = vmatpush.bf16.msra.mxu0 %v13616
    %13642 = vmatpush.bf16.msra.mxu0 %v13615
    %13643 = vmatpush.bf16.msra.mxu0 %v13614
    %13644 = vmatpush.bf16.msra.mxu0 %v13613
    %13645 = vmatpush.bf16.msra.mxu0 %v13612
    %13646 = vmatpush.bf16.msra.mxu0 %v13611
    %13647 = vmatpush.bf16.msra.mxu0 %v13610
    %13648 = vmatpush.bf16.msra.mxu0 %v13609
    %13649 = vmatmul.bf16.gmra.mxu0 %v13507
    %v13650 = vpop.f32.mrf.mxu0
    %v13651 = vadd.f32 %v13543, %v13650
    %v13652 = vpop.f32.mrf.mxu0
    %13653 = vdwg.mxu0
    %13654 = vmatpush.bf16.msra.mxu0 %v13624
    %13655 = vmatpush.bf16.msra.mxu0 %v13623
    %13656 = vmatpush.bf16.msra.mxu0 %v13622
    %13657 = vmatpush.bf16.msra.mxu0 %v13621
    %13658 = vmatpush.bf16.msra.mxu0 %v13620
    %13659 = vmatpush.bf16.msra.mxu0 %v13619
    %13660 = vmatpush.bf16.msra.mxu0 %v13618
    %13661 = vmatpush.bf16.msra.mxu0 %v13617
    %13662 = vmatmul.bf16.gmra.mxu0 %v13508
    %v13663 = vpop.f32.mrf.mxu0
    %v13664 = vadd.f32 %v13651, %v13663
    %v13665 = vpop.f32.mrf.mxu0
    %13666 = vdwg.mxu0
    %vm13667 = vcmask 50176
    %13668 = vst.msk [vmem:[%s11] sm:$0x3] %vm13667, %v13664
    // Predicated region
    $region50: #{rollout_policy_forward.1} parent=1 // pred_check
      _
    $region51: #{rollout_policy_forward.1} parent=1 // pred_check_branch
      %13670 = sbr.rel (0) target = $region53
    $region52: #{rollout_policy_forward.1} parent=1 // pred_region
      _
    $region53: #{rollout_policy_forward.1} parent=1 // pred_fallthru
      _
    // Predicated region
    $region54: #{rollout_policy_forward.1} parent=1 // pred_check
      _
    $region55: #{rollout_policy_forward.1} parent=1 // pred_check_branch
      %13672 = sbr.rel (0) target = $region57
    $region56: #{rollout_policy_forward.1} parent=1 // pred_region
      _
    $region57: #{rollout_policy_forward.1} parent=1 // pred_fallthru
      _
    %13673 = vsyncpa [#allocation10], 1

</llo_original>
